<compile_context>
chip_gen: v5e
topology: v5e:2x2
jax: 0.10.0
libtpu: 0.0.40
codegen_flags: <defaults>
</compile_context>

<pallas_src>
import jax
import jax.numpy as jnp
import numpy as np
from jax.experimental import pallas as pl
from jax.experimental.pallas import tpu as pltpu


def _pick_tile(n, cap):
    """Largest power-of-two tile <= cap that divides n (>= 2), else n itself."""
    t = cap
    while t >= 2:
        if n % t == 0:
            return t
        t //= 2
    return n


# ----------------------- conv 3x3 (stride 1, pad 1) + bias + ReLU, row-tiled -----------------------

def _conv3x3_relu_kernel(x_ref, halo_ref, w_ref, b_ref, o_ref, sh_ref):
    # x_ref:    (TH,   W+2, Cp)   bf16  padded-input rows [h*TH, h*TH+TH)
    # halo_ref: (2,    W+2, Cp)   bf16  padded-input rows [h*TH+TH, h*TH+TH+2)
    # w_ref:    (3, 3*Cp, Cout)   bf16  per-kh weights, kw folded into the contraction dim
    # b_ref:    (1, Cout)         f32
    # o_ref:    (TH*W, Cout)      bf16  output pixels of this row tile (matmul-native layout)
    # sh_ref:   (TH+2, W, 3*Cp)   bf16  kw-shifted windows, built once per tile
    TH, Wp2, Cp = x_ref.shape
    W = Wp2 - 2

    # Build the kw-shifted windows once: sh[r, c, kw*Cp + ch] = padded_row[r][c + kw, ch].
    # 3 tile-sized writes + 3 tiny halo writes; each kh matmul below reads a contiguous
    # leading-dim slab of sh_ref (no per-kh concat, no full-tile VMEM->VMEM copy).
    for kw in range(3):
        sh_ref[0:TH, :, kw * Cp:(kw + 1) * Cp] = x_ref[:, kw:kw + W, :]
        sh_ref[TH:TH + 2, :, kw * Cp:(kw + 1) * Cp] = halo_ref[:, kw:kw + W, :]

    acc = jnp.dot(sh_ref[0:TH].reshape(TH * W, 3 * Cp), w_ref[0],
                  preferred_element_type=jnp.float32)
    for kh in range(1, 3):
        acc = acc + jnp.dot(sh_ref[kh:kh + TH].reshape(TH * W, 3 * Cp), w_ref[kh],
                            preferred_element_type=jnp.float32)

    y = jnp.maximum(acc + b_ref[...], 0.0)
    o_ref[...] = y.astype(o_ref.dtype)


def conv3x3_relu(x, w, b):
    """x: (N,H,W,Cin); w: (3,3,Cin,Cout); b: (Cout,). 3x3 conv, stride 1, pad 1, + ReLU.
    Computes in bf16 with f32 accumulation; returns bf16 NHWC."""
    N, H, W, Cin = x.shape
    Cout = w.shape[-1]
    assert H % 2 == 0, "even H required (standard VGG resolutions)"

    # TODO(synk): layer 1 (Cin=3 -> Cp=8) could use a wrapper-side im2col to avoid its 8/128-lane
    # padding; it is <2% of total FLOPs so it stays on the common path here.
    Cp = max(8, ((Cin + 7) // 8) * 8)          # pad input channels to a sublane multiple
    x = x.astype(jnp.bfloat16)
    w = w.astype(jnp.bfloat16)
    if Cp != Cin:
        x = jnp.pad(x, ((0, 0), (0, 0), (0, 0), (0, Cp - Cin)))
        w = jnp.pad(w, ((0, 0), (0, 0), (0, Cp - Cin), (0, 0)))
    xp = jnp.pad(x, ((0, 0), (1, 1), (1, 1), (0, 0)))          # spatial padding = 1
    wk = w.reshape(3, 3 * Cp, Cout)                            # (kh, kw*Cp, Cout) == scratch K order
    bk = b.reshape(1, Cout).astype(jnp.float32)

    # Row tile: big enough to amortize per-step cost, small enough for v7x's 64 MiB VMEM;
    # keep >= 2 parallel grid steps so both v7x TensorCores get work.
    TH = _pick_tile(H, cap=32)
    while N * (H // TH) < 2 and TH >= 4:
        TH //= 2
    assert H % TH == 0 and TH % 2 == 0, (H, TH)    # halo BlockSpec trick requires even TH
    nH = H // TH
    halo_blk = TH // 2          # halo block (2 rows): block index (h+1)*TH/2 -> rows (h+1)*TH..+2

    cost = pl.CostEstimate(
        flops=int(2 * N * H * W * 9 * Cin * Cout),
        transcendentals=0,
        bytes_accessed=int(xp.size * 2 + wk.size * 2 + bk.size * 4 + N * H * W * Cout * 2),
    )

    out = pl.pallas_call(
        _conv3x3_relu_kernel,
        out_shape=jax.ShapeDtypeStruct((N, H * W, Cout), jnp.bfloat16),
        grid=(N, nH),
        in_specs=[
            # main TH rows of the padded input for this tile
            pl.BlockSpec((None, TH, W + 2, Cp), lambda n, h: (n, h, 0, 0)),
            # 2-row halo just below the tile (plain Blocked indexing; TH even => exact offset)
            pl.BlockSpec((None, 2, W + 2, Cp), lambda n, h: (n, (h + 1) * halo_blk, 0, 0)),
            pl.BlockSpec((3, 3 * Cp, Cout), lambda n, h: (0, 0, 0)),
            pl.BlockSpec((1, Cout), lambda n, h: (0, 0)),
        ],
        out_specs=pl.BlockSpec((None, TH * W, Cout), lambda n, h: (n, h, 0)),
        scratch_shapes=[pltpu.VMEM((TH + 2, W, 3 * Cp), jnp.bfloat16)],
        compiler_params=pltpu.CompilerParams(
            dimension_semantics=("parallel", "parallel")),
        cost_estimate=cost,
    )(xp, xp, wk, bk)
    return out.reshape(N, H, W, Cout)


# ----------------------------------- maxpool 2x2, stride 2 ----------------------------------------

def _maxpool2x2_kernel(x_ref, o_ref):
    # x_ref: (TB, 2, Wo, 2*C) ; o_ref: (TB, Wo, C)
    C = o_ref.shape[-1]
    xh = jnp.maximum(x_ref[:, 0], x_ref[:, 1])           # pool over the H pair -> (TB, Wo, 2*C)
    o_ref[...] = jnp.maximum(xh[..., :C], xh[..., C:])   # pool over the W pair -> (TB, Wo, C)


def maxpool2x2(x):
    # TODO(synk): this pool could be fused into the conv1_2 epilogue to save one HBM round-trip
    # of the relu1_2 map (biggest win on v5e); kept standalone with dense blocks for robustness.
    N, H, W, C = x.shape
    assert H % 2 == 0 and W % 2 == 0, "MaxPool2d(2) tiling requires even H, W here"
    Ho, Wo = H // 2, W // 2
    # Pure row-major reshape: trailing block dims become (Wo, 2*C) -- dense sublanes/lanes --
    # instead of the (2, C) trailing dims of a naive 5-D split (~16x VMEM/DMA inflation).
    xr = x.reshape(N * Ho, 2, Wo, 2 * C)
    TB = _pick_tile(N * Ho, cap=64)
    cost = pl.CostEstimate(
        flops=int(3 * N * Ho * Wo * C),
        transcendentals=0,
        bytes_accessed=int(x.size * 2 + N * Ho * Wo * C * 2),
    )
    out = pl.pallas_call(
        _maxpool2x2_kernel,
        out_shape=jax.ShapeDtypeStruct((N * Ho, Wo, C), x.dtype),
        grid=(N * Ho // TB,),
        in_specs=[pl.BlockSpec((TB, 2, Wo, 2 * C), lambda i: (i, 0, 0, 0))],
        out_specs=pl.BlockSpec((TB, Wo, C), lambda i: (i, 0, 0)),
        compiler_params=pltpu.CompilerParams(dimension_semantics=("parallel",)),
        cost_estimate=cost,
    )(xr)
    return out.reshape(N, Ho, Wo, C)


# ------------------------------------------ VGG wrapper -------------------------------------------

def init_vgg_params(key):
    # vgg16.features prefix channel plan: conv(3->64), conv(64->64), pool, conv(64->128), conv(128->128)
    plan = [(3, 64), (64, 64), (64, 128), (128, 128)]
    params = []
    for cin, cout in plan:
        key, kw, kb = jax.random.split(key, 3)
        fan_in = 3 * 3 * cin
        w = jax.random.normal(kw, (3, 3, cin, cout), jnp.float32) / np.sqrt(fan_in)
        b = jax.random.normal(kb, (cout,), jnp.float32) * 0.01
        params.append((w, b))
    return params


def vgg_forward(x_nchw, params):
    """Mirrors vgg.forward: returns [relu1_1, relu1_2, relu2_1, relu2_2] as NCHW f32 arrays."""
    x = jnp.transpose(x_nchw, (0, 2, 3, 1)).astype(jnp.bfloat16)   # NCHW -> NHWC, bf16 activations
    (w11, b11), (w12, b12), (w21, b21), (w22, b22) = params
    outputs = []
    x = conv3x3_relu(x, w11, b11); outputs.append(x)   # features[0,1]  -> 'relu1_1'
    x = conv3x3_relu(x, w12, b12); outputs.append(x)   # features[2,3]  -> 'relu1_2'
    x = maxpool2x2(x)                                  # features[4]
    x = conv3x3_relu(x, w21, b21); outputs.append(x)   # features[5,6]  -> 'relu2_1'
    x = conv3x3_relu(x, w22, b22); outputs.append(x)   # features[7,8]  -> 'relu2_2'
    # TODO(synk): vgg16 features[9:] are skipped — they cannot affect the collected outputs.
    return [jnp.transpose(o, (0, 3, 1, 2)).astype(jnp.float32) for o in outputs]


# --------------------------------------- pure-JAX reference ---------------------------------------

def _ref_conv3x3_relu(x, w, b):
    # Same bf16 rounding of activations/weights as the kernel, exact f32 accumulation.
    xb = x.astype(jnp.bfloat16).astype(jnp.float32)
    wb = w.astype(jnp.bfloat16).astype(jnp.float32)
    y = jax.lax.conv_general_dilated(
        xb, wb, window_strides=(1, 1), padding="SAME",
        dimension_numbers=("NHWC", "HWIO", "NHWC"),
        precision=jax.lax.Precision.HIGHEST)
    return jnp.maximum(y + b, 0.0)


def _ref_maxpool2x2(x):
    return jax.lax.reduce_window(x, -jnp.inf, jax.lax.max,
                                 (1, 2, 2, 1), (1, 2, 2, 1), "VALID")


if __name__ == "__main__":
    key = jax.random.PRNGKey(0)
    kx, kp = jax.random.split(key)
    x = jax.random.normal(kx, (2, 3, 16, 16), jnp.float32)   # NCHW, like the PyTorch module
    params = init_vgg_params(kp)

    feats = jax.jit(vgg_forward)(x, params)
    feats = jax.block_until_ready(feats)

    # reference check with plain XLA ops (bf16-rounded inputs, f32 math)
    xr = jnp.transpose(x, (0, 2, 3, 1))
    (w11, b11), (w12, b12), (w21, b21), (w22, b22) = params
    refs = []
    xr = _ref_conv3x3_relu(xr, w11, b11); refs.append(xr)
    xr = _ref_conv3x3_relu(xr, w12, b12); refs.append(xr)
    xr = _ref_maxpool2x2(xr)
    xr = _ref_conv3x3_relu(xr, w21, b21); refs.append(xr)
    xr = _ref_conv3x3_relu(xr, w22, b22); refs.append(xr)
    refs = [jnp.transpose(r, (0, 3, 1, 2)) for r in refs]

    expected_shapes = [(2, 64, 16, 16), (2, 64, 16, 16), (2, 128, 8, 8), (2, 128, 8, 8)]
    for f, r, s in zip(feats, refs, expected_shapes):
        assert f.shape == s, (f.shape, s)
        # kernel stores bf16 feature maps -> compare with bf16-level tolerance
        np.testing.assert_allclose(np.asarray(f), np.asarray(r), rtol=3e-2, atol=3e-2)

    print("KERNEL_OK")
</pallas_src>

<mosaic_0001>
module attributes {stable_mosaic.version = 11 : i64} {
  func.func @_conv3x3_relu_kernel(%arg0: i32, %arg1: i32, %arg2: memref<1x16x18x8xbf16, #tpu.memory_space<vmem>>, %arg3: memref<1x2x18x8xbf16, #tpu.memory_space<vmem>>, %arg4: memref<3x24x64xbf16, #tpu.memory_space<vmem>>, %arg5: memref<1x64xf32, #tpu.memory_space<vmem>>, %arg6: memref<1x256x64xbf16, #tpu.memory_space<vmem>>, %arg7: memref<18x16x24xbf16, #tpu.memory_space<vmem>>) attributes {dimension_semantics = [#tpu.dimension_semantics<parallel>, #tpu.dimension_semantics<parallel>], iteration_bounds = array<i64: 2, 1>, scalar_prefetch = 0 : i64, scratch_operands = 1 : i64, tpu.core_type = #tpu.core_type<tc>, window_params = [{transform_indices = @transform_0, window_bounds = array<i64: 1, 16, 18, 8>}, {transform_indices = @transform_1, window_bounds = array<i64: 1, 2, 18, 8>}, {pipeline_mode = #tpu.pipeline_mode<synchronous>, transform_indices = @transform_2, window_bounds = array<i64: 3, 24, 64>}, {pipeline_mode = #tpu.pipeline_mode<synchronous>, transform_indices = @transform_3, window_bounds = array<i64: 1, 64>}, {transform_indices = @transform_4, window_bounds = array<i64: 1, 256, 64>}]} {
    %c0 = arith.constant 0 : index
    %c0_0 = arith.constant 0 : index
    %c0_1 = arith.constant 0 : index
    %c0_2 = arith.constant 0 : index
    %0 = vector.load %arg2[%c0, %c0_0, %c0_1, %c0_2] : memref<1x16x18x8xbf16, #tpu.memory_space<vmem>>, vector<1x16x16x8xbf16>
    %1 = vector.shape_cast %0 : vector<1x16x16x8xbf16> to vector<16x16x8xbf16>
    %c0_3 = arith.constant 0 : index
    %c0_4 = arith.constant 0 : index
    %c0_5 = arith.constant 0 : index
    %2 = vector.load %arg7[%c0_3, %c0_4, %c0_5] : memref<18x16x24xbf16, #tpu.memory_space<vmem>>, vector<16x16x8xbf16>
    tpu.vector_store %arg7[%c0_3, %c0_4, %c0_5], %1 {strides = array<i32>} : memref<18x16x24xbf16, #tpu.memory_space<vmem>>, vector<16x16x8xbf16>,
    %c0_6 = arith.constant 0 : index
    %c0_7 = arith.constant 0 : index
    %c0_8 = arith.constant 0 : index
    %c0_9 = arith.constant 0 : index
    %3 = vector.load %arg3[%c0_6, %c0_7, %c0_8, %c0_9] : memref<1x2x18x8xbf16, #tpu.memory_space<vmem>>, vector<1x2x16x8xbf16>
    %4 = vector.shape_cast %3 : vector<1x2x16x8xbf16> to vector<2x16x8xbf16>
    %c16 = arith.constant 16 : index
    %c0_10 = arith.constant 0 : index
    %c0_11 = arith.constant 0 : index
    %5 = vector.load %arg7[%c16, %c0_10, %c0_11] : memref<18x16x24xbf16, #tpu.memory_space<vmem>>, vector<2x16x8xbf16>
    tpu.vector_store %arg7[%c16, %c0_10, %c0_11], %4 {strides = array<i32>} : memref<18x16x24xbf16, #tpu.memory_space<vmem>>, vector<2x16x8xbf16>,
    %c0_12 = arith.constant 0 : index
    %c0_13 = arith.constant 0 : index
    %c1 = arith.constant 1 : index
    %c0_14 = arith.constant 0 : index
    %6 = vector.load %arg2[%c0_12, %c0_13, %c1, %c0_14] : memref<1x16x18x8xbf16, #tpu.memory_space<vmem>>, vector<1x16x16x8xbf16>
    %7 = vector.shape_cast %6 : vector<1x16x16x8xbf16> to vector<16x16x8xbf16>
    %c0_15 = arith.constant 0 : index
    %c0_16 = arith.constant 0 : index
    %c8 = arith.constant 8 : index
    %8 = vector.load %arg7[%c0_15, %c0_16, %c8] : memref<18x16x24xbf16, #tpu.memory_space<vmem>>, vector<16x16x8xbf16>
    tpu.vector_store %arg7[%c0_15, %c0_16, %c8], %7 {strides = array<i32>} : memref<18x16x24xbf16, #tpu.memory_space<vmem>>, vector<16x16x8xbf16>,
    %c0_17 = arith.constant 0 : index
    %c0_18 = arith.constant 0 : index
    %c1_19 = arith.constant 1 : index
    %c0_20 = arith.constant 0 : index
    %9 = vector.load %arg3[%c0_17, %c0_18, %c1_19, %c0_20] : memref<1x2x18x8xbf16, #tpu.memory_space<vmem>>, vector<1x2x16x8xbf16>
    %10 = vector.shape_cast %9 : vector<1x2x16x8xbf16> to vector<2x16x8xbf16>
    %c16_21 = arith.constant 16 : index
    %c0_22 = arith.constant 0 : index
    %c8_23 = arith.constant 8 : index
    %11 = vector.load %arg7[%c16_21, %c0_22, %c8_23] : memref<18x16x24xbf16, #tpu.memory_space<vmem>>, vector<2x16x8xbf16>
    tpu.vector_store %arg7[%c16_21, %c0_22, %c8_23], %10 {strides = array<i32>} : memref<18x16x24xbf16, #tpu.memory_space<vmem>>, vector<2x16x8xbf16>,
    %c0_24 = arith.constant 0 : index
    %c0_25 = arith.constant 0 : index
    %c2 = arith.constant 2 : index
    %c0_26 = arith.constant 0 : index
    %12 = vector.load %arg2[%c0_24, %c0_25, %c2, %c0_26] : memref<1x16x18x8xbf16, #tpu.memory_space<vmem>>, vector<1x16x16x8xbf16>
    %13 = vector.shape_cast %12 : vector<1x16x16x8xbf16> to vector<16x16x8xbf16>
    %c0_27 = arith.constant 0 : index
    %c0_28 = arith.constant 0 : index
    %c16_29 = arith.constant 16 : index
    %14 = vector.load %arg7[%c0_27, %c0_28, %c16_29] : memref<18x16x24xbf16, #tpu.memory_space<vmem>>, vector<16x16x8xbf16>
    tpu.vector_store %arg7[%c0_27, %c0_28, %c16_29], %13 {strides = array<i32>} : memref<18x16x24xbf16, #tpu.memory_space<vmem>>, vector<16x16x8xbf16>,
    %c0_30 = arith.constant 0 : index
    %c0_31 = arith.constant 0 : index
    %c2_32 = arith.constant 2 : index
    %c0_33 = arith.constant 0 : index
    %15 = vector.load %arg3[%c0_30, %c0_31, %c2_32, %c0_33] : memref<1x2x18x8xbf16, #tpu.memory_space<vmem>>, vector<1x2x16x8xbf16>
    %16 = vector.shape_cast %15 : vector<1x2x16x8xbf16> to vector<2x16x8xbf16>
    %c16_34 = arith.constant 16 : index
    %c0_35 = arith.constant 0 : index
    %c16_36 = arith.constant 16 : index
    %17 = vector.load %arg7[%c16_34, %c0_35, %c16_36] : memref<18x16x24xbf16, #tpu.memory_space<vmem>>, vector<2x16x8xbf16>
    tpu.vector_store %arg7[%c16_34, %c0_35, %c16_36], %16 {strides = array<i32>} : memref<18x16x24xbf16, #tpu.memory_space<vmem>>, vector<2x16x8xbf16>,
    %c0_37 = arith.constant 0 : index
    %c0_38 = arith.constant 0 : index
    %c0_39 = arith.constant 0 : index
    %18 = vector.load %arg7[%c0_37, %c0_38, %c0_39] : memref<18x16x24xbf16, #tpu.memory_space<vmem>>, vector<16x16x24xbf16>
    %19 = vector.shape_cast %18 : vector<16x16x24xbf16> to vector<256x24xbf16>
    %c0_40 = arith.constant 0 : index
    %c0_41 = arith.constant 0 : index
    %c0_42 = arith.constant 0 : index
    %20 = vector.load %arg4[%c0_40, %c0_41, %c0_42] : memref<3x24x64xbf16, #tpu.memory_space<vmem>>, vector<1x24x64xbf16>
    %21 = vector.shape_cast %20 : vector<1x24x64xbf16> to vector<24x64xbf16>
    %cst = arith.constant dense<0.000000e+00> : vector<256x64xf32>
    %22 = tpu.matmul %19, %21, %cst {dimension_numbers = #tpu.dot_dimension_numbers<[1], [0], [0], [1], [0, 0, 1, 1], [], []>} : vector<256x24xbf16>, vector<24x64xbf16>, vector<256x64xf32> -> vector<256x64xf32>
    %c1_43 = arith.constant 1 : index
    %c0_44 = arith.constant 0 : index
    %c0_45 = arith.constant 0 : index
    %23 = vector.load %arg7[%c1_43, %c0_44, %c0_45] : memref<18x16x24xbf16, #tpu.memory_space<vmem>>, vector<16x16x24xbf16>
    %24 = vector.shape_cast %23 : vector<16x16x24xbf16> to vector<256x24xbf16>
    %c1_46 = arith.constant 1 : index
    %c0_47 = arith.constant 0 : index
    %c0_48 = arith.constant 0 : index
    %25 = vector.load %arg4[%c1_46, %c0_47, %c0_48] : memref<3x24x64xbf16, #tpu.memory_space<vmem>>, vector<1x24x64xbf16>
    %26 = vector.shape_cast %25 : vector<1x24x64xbf16> to vector<24x64xbf16>
    %cst_49 = arith.constant dense<0.000000e+00> : vector<256x64xf32>
    %27 = tpu.matmul %24, %26, %cst_49 {dimension_numbers = #tpu.dot_dimension_numbers<[1], [0], [0], [1], [0, 0, 1, 1], [], []>} : vector<256x24xbf16>, vector<24x64xbf16>, vector<256x64xf32> -> vector<256x64xf32>
    %28 = arith.addf %22, %27 : vector<256x64xf32>
    %c2_50 = arith.constant 2 : index
    %c0_51 = arith.constant 0 : index
    %c0_52 = arith.constant 0 : index
    %29 = vector.load %arg7[%c2_50, %c0_51, %c0_52] : memref<18x16x24xbf16, #tpu.memory_space<vmem>>, vector<16x16x24xbf16>
    %30 = vector.shape_cast %29 : vector<16x16x24xbf16> to vector<256x24xbf16>
    %c2_53 = arith.constant 2 : index
    %c0_54 = arith.constant 0 : index
    %c0_55 = arith.constant 0 : index
    %31 = vector.load %arg4[%c2_53, %c0_54, %c0_55] : memref<3x24x64xbf16, #tpu.memory_space<vmem>>, vector<1x24x64xbf16>
    %32 = vector.shape_cast %31 : vector<1x24x64xbf16> to vector<24x64xbf16>
    %cst_56 = arith.constant dense<0.000000e+00> : vector<256x64xf32>
    %33 = tpu.matmul %30, %32, %cst_56 {dimension_numbers = #tpu.dot_dimension_numbers<[1], [0], [0], [1], [0, 0, 1, 1], [], []>} : vector<256x24xbf16>, vector<24x64xbf16>, vector<256x64xf32> -> vector<256x64xf32>
    %34 = arith.addf %28, %33 : vector<256x64xf32>
    %c0_57 = arith.constant 0 : index
    %c0_58 = arith.constant 0 : index
    %35 = vector.load %arg5[%c0_57, %c0_58] : memref<1x64xf32, #tpu.memory_space<vmem>>, vector<1x64xf32>
    %36 = vector.broadcast %35 : vector<1x64xf32> to vector<256x64xf32>
    %37 = arith.addf %34, %36 : vector<256x64xf32>
    %cst_59 = arith.constant 0.000000e+00 : f32
    %38 = vector.broadcast %cst_59 : f32 to vector<256x64xf32>
    %39 = arith.maximumf %37, %38 : vector<256x64xf32>
    %40 = arith.truncf %39 : vector<256x64xf32> to vector<256x64xbf16>
    %c0_60 = arith.constant 0 : index
    %c0_61 = arith.constant 0 : index
    %c0_62 = arith.constant 0 : index
    %41 = vector.load %arg6[%c0_60, %c0_61, %c0_62] : memref<1x256x64xbf16, #tpu.memory_space<vmem>>, vector<1x256x64xbf16>
    %42 = vector.shape_cast %41 : vector<1x256x64xbf16> to vector<256x64xbf16>
    %43 = vector.shape_cast %40 : vector<256x64xbf16> to vector<1x256x64xbf16>
    tpu.vector_store %arg6[%c0_60, %c0_61, %c0_62], %43 {strides = array<i32>} : memref<1x256x64xbf16, #tpu.memory_space<vmem>>, vector<1x256x64xbf16>,
    return
  }
  func.func @transform_0(%arg0: i32, %arg1: i32) -> (i32, i32, i32, i32) {
    %c0_i32 = arith.constant 0 : i32
    %c0_i32_0 = arith.constant 0 : i32
    %c0_i32_1 = arith.constant 0 : i32
    return %arg0, %arg1, %c0_i32, %c0_i32_0 : i32, i32, i32, i32
  }
  func.func @transform_1(%arg0: i32, %arg1: i32) -> (i32, i32, i32, i32) {
    %c1_i32 = arith.constant 1 : i32
    %0 = arith.addi %arg1, %c1_i32 : i32
    %c8_i32 = arith.constant 8 : i32
    %1 = arith.muli %0, %c8_i32 : i32
    %c0_i32 = arith.constant 0 : i32
    %c0_i32_0 = arith.constant 0 : i32
    %c0_i32_1 = arith.constant 0 : i32
    return %arg0, %1, %c0_i32, %c0_i32_0 : i32, i32, i32, i32
  }
  func.func @transform_2(%arg0: i32, %arg1: i32) -> (i32, i32, i32) {
    %c0_i32 = arith.constant 0 : i32
    %c0_i32_0 = arith.constant 0 : i32
    %c0_i32_1 = arith.constant 0 : i32
    %c0_i32_2 = arith.constant 0 : i32
    return %c0_i32, %c0_i32_0, %c0_i32_1 : i32, i32, i32
  }
  func.func @transform_3(%arg0: i32, %arg1: i32) -> (i32, i32) {
    %c0_i32 = arith.constant 0 : i32
    %c0_i32_0 = arith.constant 0 : i32
    %c0_i32_1 = arith.constant 0 : i32
    return %c0_i32, %c0_i32_0 : i32, i32
  }
  func.func @transform_4(%arg0: i32, %arg1: i32) -> (i32, i32, i32) {
    %c0_i32 = arith.constant 0 : i32
    %c0_i32_0 = arith.constant 0 : i32
    return %arg0, %arg1, %c0_i32 : i32, i32, i32
  }
}

module attributes {stable_mosaic.version = 11 : i64} {
  func.func @_conv3x3_relu_kernel(%arg0: i32, %arg1: i32, %arg2: memref<1x16x18x64xbf16, #tpu.memory_space<vmem>>, %arg3: memref<1x2x18x64xbf16, #tpu.memory_space<vmem>>, %arg4: memref<3x192x64xbf16, #tpu.memory_space<vmem>>, %arg5: memref<1x64xf32, #tpu.memory_space<vmem>>, %arg6: memref<1x256x64xbf16, #tpu.memory_space<vmem>>, %arg7: memref<18x16x192xbf16, #tpu.memory_space<vmem>>) attributes {dimension_semantics = [#tpu.dimension_semantics<parallel>, #tpu.dimension_semantics<parallel>], iteration_bounds = array<i64: 2, 1>, scalar_prefetch = 0 : i64, scratch_operands = 1 : i64, tpu.core_type = #tpu.core_type<tc>, window_params = [{transform_indices = @transform_0, window_bounds = array<i64: 1, 16, 18, 64>}, {transform_indices = @transform_1, window_bounds = array<i64: 1, 2, 18, 64>}, {pipeline_mode = #tpu.pipeline_mode<synchronous>, transform_indices = @transform_2, window_bounds = array<i64: 3, 192, 64>}, {pipeline_mode = #tpu.pipeline_mode<synchronous>, transform_indices = @transform_3, window_bounds = array<i64: 1, 64>}, {transform_indices = @transform_4, window_bounds = array<i64: 1, 256, 64>}]} {
    %c0 = arith.constant 0 : index
    %c0_0 = arith.constant 0 : index
    %c0_1 = arith.constant 0 : index
    %c0_2 = arith.constant 0 : index
    %0 = vector.load %arg2[%c0, %c0_0, %c0_1, %c0_2] : memref<1x16x18x64xbf16, #tpu.memory_space<vmem>>, vector<1x16x16x64xbf16>
    %1 = vector.shape_cast %0 : vector<1x16x16x64xbf16> to vector<16x16x64xbf16>
    %c0_3 = arith.constant 0 : index
    %c0_4 = arith.constant 0 : index
    %c0_5 = arith.constant 0 : index
    %2 = vector.load %arg7[%c0_3, %c0_4, %c0_5] : memref<18x16x192xbf16, #tpu.memory_space<vmem>>, vector<16x16x64xbf16>
    tpu.vector_store %arg7[%c0_3, %c0_4, %c0_5], %1 {strides = array<i32>} : memref<18x16x192xbf16, #tpu.memory_space<vmem>>, vector<16x16x64xbf16>,
    %c0_6 = arith.constant 0 : index
    %c0_7 = arith.constant 0 : index
    %c0_8 = arith.constant 0 : index
    %c0_9 = arith.constant 0 : index
    %3 = vector.load %arg3[%c0_6, %c0_7, %c0_8, %c0_9] : memref<1x2x18x64xbf16, #tpu.memory_space<vmem>>, vector<1x2x16x64xbf16>
    %4 = vector.shape_cast %3 : vector<1x2x16x64xbf16> to vector<2x16x64xbf16>
    %c16 = arith.constant 16 : index
    %c0_10 = arith.constant 0 : index
    %c0_11 = arith.constant 0 : index
    %5 = vector.load %arg7[%c16, %c0_10, %c0_11] : memref<18x16x192xbf16, #tpu.memory_space<vmem>>, vector<2x16x64xbf16>
    tpu.vector_store %arg7[%c16, %c0_10, %c0_11], %4 {strides = array<i32>} : memref<18x16x192xbf16, #tpu.memory_space<vmem>>, vector<2x16x64xbf16>,
    %c0_12 = arith.constant 0 : index
    %c0_13 = arith.constant 0 : index
    %c1 = arith.constant 1 : index
    %c0_14 = arith.constant 0 : index
    %6 = vector.load %arg2[%c0_12, %c0_13, %c1, %c0_14] : memref<1x16x18x64xbf16, #tpu.memory_space<vmem>>, vector<1x16x16x64xbf16>
    %7 = vector.shape_cast %6 : vector<1x16x16x64xbf16> to vector<16x16x64xbf16>
    %c0_15 = arith.constant 0 : index
    %c0_16 = arith.constant 0 : index
    %c64 = arith.constant 64 : index
    %8 = vector.load %arg7[%c0_15, %c0_16, %c64] : memref<18x16x192xbf16, #tpu.memory_space<vmem>>, vector<16x16x64xbf16>
    tpu.vector_store %arg7[%c0_15, %c0_16, %c64], %7 {strides = array<i32>} : memref<18x16x192xbf16, #tpu.memory_space<vmem>>, vector<16x16x64xbf16>,
    %c0_17 = arith.constant 0 : index
    %c0_18 = arith.constant 0 : index
    %c1_19 = arith.constant 1 : index
    %c0_20 = arith.constant 0 : index
    %9 = vector.load %arg3[%c0_17, %c0_18, %c1_19, %c0_20] : memref<1x2x18x64xbf16, #tpu.memory_space<vmem>>, vector<1x2x16x64xbf16>
    %10 = vector.shape_cast %9 : vector<1x2x16x64xbf16> to vector<2x16x64xbf16>
    %c16_21 = arith.constant 16 : index
    %c0_22 = arith.constant 0 : index
    %c64_23 = arith.constant 64 : index
    %11 = vector.load %arg7[%c16_21, %c0_22, %c64_23] : memref<18x16x192xbf16, #tpu.memory_space<vmem>>, vector<2x16x64xbf16>
    tpu.vector_store %arg7[%c16_21, %c0_22, %c64_23], %10 {strides = array<i32>} : memref<18x16x192xbf16, #tpu.memory_space<vmem>>, vector<2x16x64xbf16>,
    %c0_24 = arith.constant 0 : index
    %c0_25 = arith.constant 0 : index
    %c2 = arith.constant 2 : index
    %c0_26 = arith.constant 0 : index
    %12 = vector.load %arg2[%c0_24, %c0_25, %c2, %c0_26] : memref<1x16x18x64xbf16, #tpu.memory_space<vmem>>, vector<1x16x16x64xbf16>
    %13 = vector.shape_cast %12 : vector<1x16x16x64xbf16> to vector<16x16x64xbf16>
    %c0_27 = arith.constant 0 : index
    %c0_28 = arith.constant 0 : index
    %c128 = arith.constant 128 : index
    %14 = vector.load %arg7[%c0_27, %c0_28, %c128] : memref<18x16x192xbf16, #tpu.memory_space<vmem>>, vector<16x16x64xbf16>
    tpu.vector_store %arg7[%c0_27, %c0_28, %c128], %13 {strides = array<i32>} : memref<18x16x192xbf16, #tpu.memory_space<vmem>>, vector<16x16x64xbf16>,
    %c0_29 = arith.constant 0 : index
    %c0_30 = arith.constant 0 : index
    %c2_31 = arith.constant 2 : index
    %c0_32 = arith.constant 0 : index
    %15 = vector.load %arg3[%c0_29, %c0_30, %c2_31, %c0_32] : memref<1x2x18x64xbf16, #tpu.memory_space<vmem>>, vector<1x2x16x64xbf16>
    %16 = vector.shape_cast %15 : vector<1x2x16x64xbf16> to vector<2x16x64xbf16>
    %c16_33 = arith.constant 16 : index
    %c0_34 = arith.constant 0 : index
    %c128_35 = arith.constant 128 : index
    %17 = vector.load %arg7[%c16_33, %c0_34, %c128_35] : memref<18x16x192xbf16, #tpu.memory_space<vmem>>, vector<2x16x64xbf16>
    tpu.vector_store %arg7[%c16_33, %c0_34, %c128_35], %16 {strides = array<i32>} : memref<18x16x192xbf16, #tpu.memory_space<vmem>>, vector<2x16x64xbf16>,
    %c0_36 = arith.constant 0 : index
    %c0_37 = arith.constant 0 : index
    %c0_38 = arith.constant 0 : index
    %18 = vector.load %arg7[%c0_36, %c0_37, %c0_38] : memref<18x16x192xbf16, #tpu.memory_space<vmem>>, vector<16x16x192xbf16>
    %19 = vector.shape_cast %18 : vector<16x16x192xbf16> to vector<256x192xbf16>
    %c0_39 = arith.constant 0 : index
    %c0_40 = arith.constant 0 : index
    %c0_41 = arith.constant 0 : index
    %20 = vector.load %arg4[%c0_39, %c0_40, %c0_41] : memref<3x192x64xbf16, #tpu.memory_space<vmem>>, vector<1x192x64xbf16>
    %21 = vector.shape_cast %20 : vector<1x192x64xbf16> to vector<192x64xbf16>
    %cst = arith.constant dense<0.000000e+00> : vector<256x64xf32>
    %22 = tpu.matmul %19, %21, %cst {dimension_numbers = #tpu.dot_dimension_numbers<[1], [0], [0], [1], [0, 0, 1, 1], [], []>} : vector<256x192xbf16>, vector<192x64xbf16>, vector<256x64xf32> -> vector<256x64xf32>
    %c1_42 = arith.constant 1 : index
    %c0_43 = arith.constant 0 : index
    %c0_44 = arith.constant 0 : index
    %23 = vector.load %arg7[%c1_42, %c0_43, %c0_44] : memref<18x16x192xbf16, #tpu.memory_space<vmem>>, vector<16x16x192xbf16>
    %24 = vector.shape_cast %23 : vector<16x16x192xbf16> to vector<256x192xbf16>
    %c1_45 = arith.constant 1 : index
    %c0_46 = arith.constant 0 : index
    %c0_47 = arith.constant 0 : index
    %25 = vector.load %arg4[%c1_45, %c0_46, %c0_47] : memref<3x192x64xbf16, #tpu.memory_space<vmem>>, vector<1x192x64xbf16>
    %26 = vector.shape_cast %25 : vector<1x192x64xbf16> to vector<192x64xbf16>
    %cst_48 = arith.constant dense<0.000000e+00> : vector<256x64xf32>
    %27 = tpu.matmul %24, %26, %cst_48 {dimension_numbers = #tpu.dot_dimension_numbers<[1], [0], [0], [1], [0, 0, 1, 1], [], []>} : vector<256x192xbf16>, vector<192x64xbf16>, vector<256x64xf32> -> vector<256x64xf32>
    %28 = arith.addf %22, %27 : vector<256x64xf32>
    %c2_49 = arith.constant 2 : index
    %c0_50 = arith.constant 0 : index
    %c0_51 = arith.constant 0 : index
    %29 = vector.load %arg7[%c2_49, %c0_50, %c0_51] : memref<18x16x192xbf16, #tpu.memory_space<vmem>>, vector<16x16x192xbf16>
    %30 = vector.shape_cast %29 : vector<16x16x192xbf16> to vector<256x192xbf16>
    %c2_52 = arith.constant 2 : index
    %c0_53 = arith.constant 0 : index
    %c0_54 = arith.constant 0 : index
    %31 = vector.load %arg4[%c2_52, %c0_53, %c0_54] : memref<3x192x64xbf16, #tpu.memory_space<vmem>>, vector<1x192x64xbf16>
    %32 = vector.shape_cast %31 : vector<1x192x64xbf16> to vector<192x64xbf16>
    %cst_55 = arith.constant dense<0.000000e+00> : vector<256x64xf32>
    %33 = tpu.matmul %30, %32, %cst_55 {dimension_numbers = #tpu.dot_dimension_numbers<[1], [0], [0], [1], [0, 0, 1, 1], [], []>} : vector<256x192xbf16>, vector<192x64xbf16>, vector<256x64xf32> -> vector<256x64xf32>
    %34 = arith.addf %28, %33 : vector<256x64xf32>
    %c0_56 = arith.constant 0 : index
    %c0_57 = arith.constant 0 : index
    %35 = vector.load %arg5[%c0_56, %c0_57] : memref<1x64xf32, #tpu.memory_space<vmem>>, vector<1x64xf32>
    %36 = vector.broadcast %35 : vector<1x64xf32> to vector<256x64xf32>
    %37 = arith.addf %34, %36 : vector<256x64xf32>
    %cst_58 = arith.constant 0.000000e+00 : f32
    %38 = vector.broadcast %cst_58 : f32 to vector<256x64xf32>
    %39 = arith.maximumf %37, %38 : vector<256x64xf32>
    %40 = arith.truncf %39 : vector<256x64xf32> to vector<256x64xbf16>
    %c0_59 = arith.constant 0 : index
    %c0_60 = arith.constant 0 : index
    %c0_61 = arith.constant 0 : index
    %41 = vector.load %arg6[%c0_59, %c0_60, %c0_61] : memref<1x256x64xbf16, #tpu.memory_space<vmem>>, vector<1x256x64xbf16>
    %42 = vector.shape_cast %41 : vector<1x256x64xbf16> to vector<256x64xbf16>
    %43 = vector.shape_cast %40 : vector<256x64xbf16> to vector<1x256x64xbf16>
    tpu.vector_store %arg6[%c0_59, %c0_60, %c0_61], %43 {strides = array<i32>} : memref<1x256x64xbf16, #tpu.memory_space<vmem>>, vector<1x256x64xbf16>,
    return
  }
  func.func @transform_0(%arg0: i32, %arg1: i32) -> (i32, i32, i32, i32) {
    %c0_i32 = arith.constant 0 : i32
    %c0_i32_0 = arith.constant 0 : i32
    %c0_i32_1 = arith.constant 0 : i32
    return %arg0, %arg1, %c0_i32, %c0_i32_0 : i32, i32, i32, i32
  }
  func.func @transform_1(%arg0: i32, %arg1: i32) -> (i32, i32, i32, i32) {
    %c1_i32 = arith.constant 1 : i32
    %0 = arith.addi %arg1, %c1_i32 : i32
    %c8_i32 = arith.constant 8 : i32
    %1 = arith.muli %0, %c8_i32 : i32
    %c0_i32 = arith.constant 0 : i32
    %c0_i32_0 = arith.constant 0 : i32
    %c0_i32_1 = arith.constant 0 : i32
    return %arg0, %1, %c0_i32, %c0_i32_0 : i32, i32, i32, i32
  }
  func.func @transform_2(%arg0: i32, %arg1: i32) -> (i32, i32, i32) {
    %c0_i32 = arith.constant 0 : i32
    %c0_i32_0 = arith.constant 0 : i32
    %c0_i32_1 = arith.constant 0 : i32
    %c0_i32_2 = arith.constant 0 : i32
    return %c0_i32, %c0_i32_0, %c0_i32_1 : i32, i32, i32
  }
  func.func @transform_3(%arg0: i32, %arg1: i32) -> (i32, i32) {
    %c0_i32 = arith.constant 0 : i32
    %c0_i32_0 = arith.constant 0 : i32
    %c0_i32_1 = arith.constant 0 : i32
    return %c0_i32, %c0_i32_0 : i32, i32
  }
  func.func @transform_4(%arg0: i32, %arg1: i32) -> (i32, i32, i32) {
    %c0_i32 = arith.constant 0 : i32
    %c0_i32_0 = arith.constant 0 : i32
    return %arg0, %arg1, %c0_i32 : i32, i32, i32
  }
}

module attributes {stable_mosaic.version = 11 : i64} {
  func.func @_maxpool2x2_kernel(%arg0: i32, %arg1: memref<16x2x8x128xbf16, #tpu.memory_space<vmem>>, %arg2: memref<16x8x64xbf16, #tpu.memory_space<vmem>>) attributes {dimension_semantics = [#tpu.dimension_semantics<parallel>], iteration_bounds = array<i64: 1>, scalar_prefetch = 0 : i64, scratch_operands = 0 : i64, tpu.core_type = #tpu.core_type<tc>, window_params = [{transform_indices = @transform_0, window_bounds = array<i64: 16, 2, 8, 128>}, {transform_indices = @transform_1, window_bounds = array<i64: 16, 8, 64>}]} {
    %c0 = arith.constant 0 : index
    %c0_0 = arith.constant 0 : index
    %c0_1 = arith.constant 0 : index
    %c0_2 = arith.constant 0 : index
    %0 = vector.load %arg1[%c0, %c0_0, %c0_1, %c0_2] : memref<16x2x8x128xbf16, #tpu.memory_space<vmem>>, vector<16x1x8x128xbf16>
    %1 = vector.shape_cast %0 : vector<16x1x8x128xbf16> to vector<16x8x128xbf16>
    %c0_3 = arith.constant 0 : index
    %c1 = arith.constant 1 : index
    %c0_4 = arith.constant 0 : index
    %c0_5 = arith.constant 0 : index
    %2 = vector.load %arg1[%c0_3, %c1, %c0_4, %c0_5] : memref<16x2x8x128xbf16, #tpu.memory_space<vmem>>, vector<16x1x8x128xbf16>
    %3 = vector.shape_cast %2 : vector<16x1x8x128xbf16> to vector<16x8x128xbf16>
    %4 = arith.maximumf %1, %3 : vector<16x8x128xbf16>
    %5 = vector.extract_strided_slice %4 {offsets = [0, 0, 0], sizes = [16, 8, 64], strides = [1, 1, 1]} : vector<16x8x128xbf16> to vector<16x8x64xbf16>
    %6 = vector.extract_strided_slice %4 {offsets = [0, 0, 64], sizes = [16, 8, 64], strides = [1, 1, 1]} : vector<16x8x128xbf16> to vector<16x8x64xbf16>
    %7 = arith.maximumf %5, %6 : vector<16x8x64xbf16>
    %c0_6 = arith.constant 0 : index
    %c0_7 = arith.constant 0 : index
    %c0_8 = arith.constant 0 : index
    %8 = vector.load %arg2[%c0_6, %c0_7, %c0_8] : memref<16x8x64xbf16, #tpu.memory_space<vmem>>, vector<16x8x64xbf16>
    tpu.vector_store %arg2[%c0_6, %c0_7, %c0_8], %7 {strides = array<i32>} : memref<16x8x64xbf16, #tpu.memory_space<vmem>>, vector<16x8x64xbf16>,
    return
  }
  func.func @transform_0(%arg0: i32) -> (i32, i32, i32, i32) {
    %c0_i32 = arith.constant 0 : i32
    %c0_i32_0 = arith.constant 0 : i32
    %c0_i32_1 = arith.constant 0 : i32
    %c0_i32_2 = arith.constant 0 : i32
    return %arg0, %c0_i32, %c0_i32_0, %c0_i32_1 : i32, i32, i32, i32
  }
  func.func @transform_1(%arg0: i32) -> (i32, i32, i32) {
    %c0_i32 = arith.constant 0 : i32
    %c0_i32_0 = arith.constant 0 : i32
    %c0_i32_1 = arith.constant 0 : i32
    return %arg0, %c0_i32, %c0_i32_0 : i32, i32, i32
  }
}

module attributes {stable_mosaic.version = 11 : i64} {
  func.func @_conv3x3_relu_kernel(%arg0: i32, %arg1: i32, %arg2: memref<1x8x10x64xbf16, #tpu.memory_space<vmem>>, %arg3: memref<1x2x10x64xbf16, #tpu.memory_space<vmem>>, %arg4: memref<3x192x128xbf16, #tpu.memory_space<vmem>>, %arg5: memref<1x128xf32, #tpu.memory_space<vmem>>, %arg6: memref<1x64x128xbf16, #tpu.memory_space<vmem>>, %arg7: memref<10x8x192xbf16, #tpu.memory_space<vmem>>) attributes {dimension_semantics = [#tpu.dimension_semantics<parallel>, #tpu.dimension_semantics<parallel>], iteration_bounds = array<i64: 2, 1>, scalar_prefetch = 0 : i64, scratch_operands = 1 : i64, tpu.core_type = #tpu.core_type<tc>, window_params = [{transform_indices = @transform_0, window_bounds = array<i64: 1, 8, 10, 64>}, {transform_indices = @transform_1, window_bounds = array<i64: 1, 2, 10, 64>}, {pipeline_mode = #tpu.pipeline_mode<synchronous>, transform_indices = @transform_2, window_bounds = array<i64: 3, 192, 128>}, {pipeline_mode = #tpu.pipeline_mode<synchronous>, transform_indices = @transform_3, window_bounds = array<i64: 1, 128>}, {transform_indices = @transform_4, window_bounds = array<i64: 1, 64, 128>}]} {
    %c0 = arith.constant 0 : index
    %c0_0 = arith.constant 0 : index
    %c0_1 = arith.constant 0 : index
    %c0_2 = arith.constant 0 : index
    %0 = vector.load %arg2[%c0, %c0_0, %c0_1, %c0_2] : memref<1x8x10x64xbf16, #tpu.memory_space<vmem>>, vector<1x8x8x64xbf16>
    %1 = vector.shape_cast %0 : vector<1x8x8x64xbf16> to vector<8x8x64xbf16>
    %c0_3 = arith.constant 0 : index
    %c0_4 = arith.constant 0 : index
    %c0_5 = arith.constant 0 : index
    %2 = vector.load %arg7[%c0_3, %c0_4, %c0_5] : memref<10x8x192xbf16, #tpu.memory_space<vmem>>, vector<8x8x64xbf16>
    tpu.vector_store %arg7[%c0_3, %c0_4, %c0_5], %1 {strides = array<i32>} : memref<10x8x192xbf16, #tpu.memory_space<vmem>>, vector<8x8x64xbf16>,
    %c0_6 = arith.constant 0 : index
    %c0_7 = arith.constant 0 : index
    %c0_8 = arith.constant 0 : index
    %c0_9 = arith.constant 0 : index
    %3 = vector.load %arg3[%c0_6, %c0_7, %c0_8, %c0_9] : memref<1x2x10x64xbf16, #tpu.memory_space<vmem>>, vector<1x2x8x64xbf16>
    %4 = vector.shape_cast %3 : vector<1x2x8x64xbf16> to vector<2x8x64xbf16>
    %c8 = arith.constant 8 : index
    %c0_10 = arith.constant 0 : index
    %c0_11 = arith.constant 0 : index
    %5 = vector.load %arg7[%c8, %c0_10, %c0_11] : memref<10x8x192xbf16, #tpu.memory_space<vmem>>, vector<2x8x64xbf16>
    tpu.vector_store %arg7[%c8, %c0_10, %c0_11], %4 {strides = array<i32>} : memref<10x8x192xbf16, #tpu.memory_space<vmem>>, vector<2x8x64xbf16>,
    %c0_12 = arith.constant 0 : index
    %c0_13 = arith.constant 0 : index
    %c1 = arith.constant 1 : index
    %c0_14 = arith.constant 0 : index
    %6 = vector.load %arg2[%c0_12, %c0_13, %c1, %c0_14] : memref<1x8x10x64xbf16, #tpu.memory_space<vmem>>, vector<1x8x8x64xbf16>
    %7 = vector.shape_cast %6 : vector<1x8x8x64xbf16> to vector<8x8x64xbf16>
    %c0_15 = arith.constant 0 : index
    %c0_16 = arith.constant 0 : index
    %c64 = arith.constant 64 : index
    %8 = vector.load %arg7[%c0_15, %c0_16, %c64] : memref<10x8x192xbf16, #tpu.memory_space<vmem>>, vector<8x8x64xbf16>
    tpu.vector_store %arg7[%c0_15, %c0_16, %c64], %7 {strides = array<i32>} : memref<10x8x192xbf16, #tpu.memory_space<vmem>>, vector<8x8x64xbf16>,
    %c0_17 = arith.constant 0 : index
    %c0_18 = arith.constant 0 : index
    %c1_19 = arith.constant 1 : index
    %c0_20 = arith.constant 0 : index
    %9 = vector.load %arg3[%c0_17, %c0_18, %c1_19, %c0_20] : memref<1x2x10x64xbf16, #tpu.memory_space<vmem>>, vector<1x2x8x64xbf16>
    %10 = vector.shape_cast %9 : vector<1x2x8x64xbf16> to vector<2x8x64xbf16>
    %c8_21 = arith.constant 8 : index
    %c0_22 = arith.constant 0 : index
    %c64_23 = arith.constant 64 : index
    %11 = vector.load %arg7[%c8_21, %c0_22, %c64_23] : memref<10x8x192xbf16, #tpu.memory_space<vmem>>, vector<2x8x64xbf16>
    tpu.vector_store %arg7[%c8_21, %c0_22, %c64_23], %10 {strides = array<i32>} : memref<10x8x192xbf16, #tpu.memory_space<vmem>>, vector<2x8x64xbf16>,
    %c0_24 = arith.constant 0 : index
    %c0_25 = arith.constant 0 : index
    %c2 = arith.constant 2 : index
    %c0_26 = arith.constant 0 : index
    %12 = vector.load %arg2[%c0_24, %c0_25, %c2, %c0_26] : memref<1x8x10x64xbf16, #tpu.memory_space<vmem>>, vector<1x8x8x64xbf16>
    %13 = vector.shape_cast %12 : vector<1x8x8x64xbf16> to vector<8x8x64xbf16>
    %c0_27 = arith.constant 0 : index
    %c0_28 = arith.constant 0 : index
    %c128 = arith.constant 128 : index
    %14 = vector.load %arg7[%c0_27, %c0_28, %c128] : memref<10x8x192xbf16, #tpu.memory_space<vmem>>, vector<8x8x64xbf16>
    tpu.vector_store %arg7[%c0_27, %c0_28, %c128], %13 {strides = array<i32>} : memref<10x8x192xbf16, #tpu.memory_space<vmem>>, vector<8x8x64xbf16>,
    %c0_29 = arith.constant 0 : index
    %c0_30 = arith.constant 0 : index
    %c2_31 = arith.constant 2 : index
    %c0_32 = arith.constant 0 : index
    %15 = vector.load %arg3[%c0_29, %c0_30, %c2_31, %c0_32] : memref<1x2x10x64xbf16, #tpu.memory_space<vmem>>, vector<1x2x8x64xbf16>
    %16 = vector.shape_cast %15 : vector<1x2x8x64xbf16> to vector<2x8x64xbf16>
    %c8_33 = arith.constant 8 : index
    %c0_34 = arith.constant 0 : index
    %c128_35 = arith.constant 128 : index
    %17 = vector.load %arg7[%c8_33, %c0_34, %c128_35] : memref<10x8x192xbf16, #tpu.memory_space<vmem>>, vector<2x8x64xbf16>
    tpu.vector_store %arg7[%c8_33, %c0_34, %c128_35], %16 {strides = array<i32>} : memref<10x8x192xbf16, #tpu.memory_space<vmem>>, vector<2x8x64xbf16>,
    %c0_36 = arith.constant 0 : index
    %c0_37 = arith.constant 0 : index
    %c0_38 = arith.constant 0 : index
    %18 = vector.load %arg7[%c0_36, %c0_37, %c0_38] : memref<10x8x192xbf16, #tpu.memory_space<vmem>>, vector<8x8x192xbf16>
    %19 = vector.shape_cast %18 : vector<8x8x192xbf16> to vector<64x192xbf16>
    %c0_39 = arith.constant 0 : index
    %c0_40 = arith.constant 0 : index
    %c0_41 = arith.constant 0 : index
    %20 = vector.load %arg4[%c0_39, %c0_40, %c0_41] : memref<3x192x128xbf16, #tpu.memory_space<vmem>>, vector<1x192x128xbf16>
    %21 = vector.shape_cast %20 : vector<1x192x128xbf16> to vector<192x128xbf16>
    %cst = arith.constant dense<0.000000e+00> : vector<64x128xf32>
    %22 = tpu.matmul %19, %21, %cst {dimension_numbers = #tpu.dot_dimension_numbers<[1], [0], [0], [1], [0, 0, 1, 1], [], []>} : vector<64x192xbf16>, vector<192x128xbf16>, vector<64x128xf32> -> vector<64x128xf32>
    %c1_42 = arith.constant 1 : index
    %c0_43 = arith.constant 0 : index
    %c0_44 = arith.constant 0 : index
    %23 = vector.load %arg7[%c1_42, %c0_43, %c0_44] : memref<10x8x192xbf16, #tpu.memory_space<vmem>>, vector<8x8x192xbf16>
    %24 = vector.shape_cast %23 : vector<8x8x192xbf16> to vector<64x192xbf16>
    %c1_45 = arith.constant 1 : index
    %c0_46 = arith.constant 0 : index
    %c0_47 = arith.constant 0 : index
    %25 = vector.load %arg4[%c1_45, %c0_46, %c0_47] : memref<3x192x128xbf16, #tpu.memory_space<vmem>>, vector<1x192x128xbf16>
    %26 = vector.shape_cast %25 : vector<1x192x128xbf16> to vector<192x128xbf16>
    %cst_48 = arith.constant dense<0.000000e+00> : vector<64x128xf32>
    %27 = tpu.matmul %24, %26, %cst_48 {dimension_numbers = #tpu.dot_dimension_numbers<[1], [0], [0], [1], [0, 0, 1, 1], [], []>} : vector<64x192xbf16>, vector<192x128xbf16>, vector<64x128xf32> -> vector<64x128xf32>
    %28 = arith.addf %22, %27 : vector<64x128xf32>
    %c2_49 = arith.constant 2 : index
    %c0_50 = arith.constant 0 : index
    %c0_51 = arith.constant 0 : index
    %29 = vector.load %arg7[%c2_49, %c0_50, %c0_51] : memref<10x8x192xbf16, #tpu.memory_space<vmem>>, vector<8x8x192xbf16>
    %30 = vector.shape_cast %29 : vector<8x8x192xbf16> to vector<64x192xbf16>
    %c2_52 = arith.constant 2 : index
    %c0_53 = arith.constant 0 : index
    %c0_54 = arith.constant 0 : index
    %31 = vector.load %arg4[%c2_52, %c0_53, %c0_54] : memref<3x192x128xbf16, #tpu.memory_space<vmem>>, vector<1x192x128xbf16>
    %32 = vector.shape_cast %31 : vector<1x192x128xbf16> to vector<192x128xbf16>
    %cst_55 = arith.constant dense<0.000000e+00> : vector<64x128xf32>
    %33 = tpu.matmul %30, %32, %cst_55 {dimension_numbers = #tpu.dot_dimension_numbers<[1], [0], [0], [1], [0, 0, 1, 1], [], []>} : vector<64x192xbf16>, vector<192x128xbf16>, vector<64x128xf32> -> vector<64x128xf32>
    %34 = arith.addf %28, %33 : vector<64x128xf32>
    %c0_56 = arith.constant 0 : index
    %c0_57 = arith.constant 0 : index
    %35 = vector.load %arg5[%c0_56, %c0_57] : memref<1x128xf32, #tpu.memory_space<vmem>>, vector<1x128xf32>
    %36 = vector.broadcast %35 : vector<1x128xf32> to vector<64x128xf32>
    %37 = arith.addf %34, %36 : vector<64x128xf32>
    %cst_58 = arith.constant 0.000000e+00 : f32
    %38 = vector.broadcast %cst_58 : f32 to vector<64x128xf32>
    %39 = arith.maximumf %37, %38 : vector<64x128xf32>
    %40 = arith.truncf %39 : vector<64x128xf32> to vector<64x128xbf16>
    %c0_59 = arith.constant 0 : index
    %c0_60 = arith.constant 0 : index
    %c0_61 = arith.constant 0 : index
    %41 = vector.load %arg6[%c0_59, %c0_60, %c0_61] : memref<1x64x128xbf16, #tpu.memory_space<vmem>>, vector<1x64x128xbf16>
    %42 = vector.shape_cast %41 : vector<1x64x128xbf16> to vector<64x128xbf16>
    %43 = vector.shape_cast %40 : vector<64x128xbf16> to vector<1x64x128xbf16>
    tpu.vector_store %arg6[%c0_59, %c0_60, %c0_61], %43 {strides = array<i32>} : memref<1x64x128xbf16, #tpu.memory_space<vmem>>, vector<1x64x128xbf16>,
    return
  }
  func.func @transform_0(%arg0: i32, %arg1: i32) -> (i32, i32, i32, i32) {
    %c0_i32 = arith.constant 0 : i32
    %c0_i32_0 = arith.constant 0 : i32
    %c0_i32_1 = arith.constant 0 : i32
    return %arg0, %arg1, %c0_i32, %c0_i32_0 : i32, i32, i32, i32
  }
  func.func @transform_1(%arg0: i32, %arg1: i32) -> (i32, i32, i32, i32) {
    %c1_i32 = arith.constant 1 : i32
    %0 = arith.addi %arg1, %c1_i32 : i32
    %c4_i32 = arith.constant 4 : i32
    %1 = arith.muli %0, %c4_i32 : i32
    %c0_i32 = arith.constant 0 : i32
    %c0_i32_0 = arith.constant 0 : i32
    %c0_i32_1 = arith.constant 0 : i32
    return %arg0, %1, %c0_i32, %c0_i32_0 : i32, i32, i32, i32
  }
  func.func @transform_2(%arg0: i32, %arg1: i32) -> (i32, i32, i32) {
    %c0_i32 = arith.constant 0 : i32
    %c0_i32_0 = arith.constant 0 : i32
    %c0_i32_1 = arith.constant 0 : i32
    %c0_i32_2 = arith.constant 0 : i32
    return %c0_i32, %c0_i32_0, %c0_i32_1 : i32, i32, i32
  }
  func.func @transform_3(%arg0: i32, %arg1: i32) -> (i32, i32) {
    %c0_i32 = arith.constant 0 : i32
    %c0_i32_0 = arith.constant 0 : i32
    %c0_i32_1 = arith.constant 0 : i32
    return %c0_i32, %c0_i32_0 : i32, i32
  }
  func.func @transform_4(%arg0: i32, %arg1: i32) -> (i32, i32, i32) {
    %c0_i32 = arith.constant 0 : i32
    %c0_i32_0 = arith.constant 0 : i32
    return %arg0, %arg1, %c0_i32 : i32, i32, i32
  }
}

module attributes {stable_mosaic.version = 11 : i64} {
  func.func @_conv3x3_relu_kernel(%arg0: i32, %arg1: i32, %arg2: memref<1x8x10x128xbf16, #tpu.memory_space<vmem>>, %arg3: memref<1x2x10x128xbf16, #tpu.memory_space<vmem>>, %arg4: memref<3x384x128xbf16, #tpu.memory_space<vmem>>, %arg5: memref<1x128xf32, #tpu.memory_space<vmem>>, %arg6: memref<1x64x128xbf16, #tpu.memory_space<vmem>>, %arg7: memref<10x8x384xbf16, #tpu.memory_space<vmem>>) attributes {dimension_semantics = [#tpu.dimension_semantics<parallel>, #tpu.dimension_semantics<parallel>], iteration_bounds = array<i64: 2, 1>, scalar_prefetch = 0 : i64, scratch_operands = 1 : i64, tpu.core_type = #tpu.core_type<tc>, window_params = [{transform_indices = @transform_0, window_bounds = array<i64: 1, 8, 10, 128>}, {transform_indices = @transform_1, window_bounds = array<i64: 1, 2, 10, 128>}, {pipeline_mode = #tpu.pipeline_mode<synchronous>, transform_indices = @transform_2, window_bounds = array<i64: 3, 384, 128>}, {pipeline_mode = #tpu.pipeline_mode<synchronous>, transform_indices = @transform_3, window_bounds = array<i64: 1, 128>}, {transform_indices = @transform_4, window_bounds = array<i64: 1, 64, 128>}]} {
    %c0 = arith.constant 0 : index
    %c0_0 = arith.constant 0 : index
    %c0_1 = arith.constant 0 : index
    %c0_2 = arith.constant 0 : index
    %0 = vector.load %arg2[%c0, %c0_0, %c0_1, %c0_2] : memref<1x8x10x128xbf16, #tpu.memory_space<vmem>>, vector<1x8x8x128xbf16>
    %1 = vector.shape_cast %0 : vector<1x8x8x128xbf16> to vector<8x8x128xbf16>
    %c0_3 = arith.constant 0 : index
    %c0_4 = arith.constant 0 : index
    %c0_5 = arith.constant 0 : index
    %2 = vector.load %arg7[%c0_3, %c0_4, %c0_5] : memref<10x8x384xbf16, #tpu.memory_space<vmem>>, vector<8x8x128xbf16>
    tpu.vector_store %arg7[%c0_3, %c0_4, %c0_5], %1 {strides = array<i32>} : memref<10x8x384xbf16, #tpu.memory_space<vmem>>, vector<8x8x128xbf16>,
    %c0_6 = arith.constant 0 : index
    %c0_7 = arith.constant 0 : index
    %c0_8 = arith.constant 0 : index
    %c0_9 = arith.constant 0 : index
    %3 = vector.load %arg3[%c0_6, %c0_7, %c0_8, %c0_9] : memref<1x2x10x128xbf16, #tpu.memory_space<vmem>>, vector<1x2x8x128xbf16>
    %4 = vector.shape_cast %3 : vector<1x2x8x128xbf16> to vector<2x8x128xbf16>
    %c8 = arith.constant 8 : index
    %c0_10 = arith.constant 0 : index
    %c0_11 = arith.constant 0 : index
    %5 = vector.load %arg7[%c8, %c0_10, %c0_11] : memref<10x8x384xbf16, #tpu.memory_space<vmem>>, vector<2x8x128xbf16>
    tpu.vector_store %arg7[%c8, %c0_10, %c0_11], %4 {strides = array<i32>} : memref<10x8x384xbf16, #tpu.memory_space<vmem>>, vector<2x8x128xbf16>,
    %c0_12 = arith.constant 0 : index
    %c0_13 = arith.constant 0 : index
    %c1 = arith.constant 1 : index
    %c0_14 = arith.constant 0 : index
    %6 = vector.load %arg2[%c0_12, %c0_13, %c1, %c0_14] : memref<1x8x10x128xbf16, #tpu.memory_space<vmem>>, vector<1x8x8x128xbf16>
    %7 = vector.shape_cast %6 : vector<1x8x8x128xbf16> to vector<8x8x128xbf16>
    %c0_15 = arith.constant 0 : index
    %c0_16 = arith.constant 0 : index
    %c128 = arith.constant 128 : index
    %8 = vector.load %arg7[%c0_15, %c0_16, %c128] : memref<10x8x384xbf16, #tpu.memory_space<vmem>>, vector<8x8x128xbf16>
    tpu.vector_store %arg7[%c0_15, %c0_16, %c128], %7 {strides = array<i32>} : memref<10x8x384xbf16, #tpu.memory_space<vmem>>, vector<8x8x128xbf16>,
    %c0_17 = arith.constant 0 : index
    %c0_18 = arith.constant 0 : index
    %c1_19 = arith.constant 1 : index
    %c0_20 = arith.constant 0 : index
    %9 = vector.load %arg3[%c0_17, %c0_18, %c1_19, %c0_20] : memref<1x2x10x128xbf16, #tpu.memory_space<vmem>>, vector<1x2x8x128xbf16>
    %10 = vector.shape_cast %9 : vector<1x2x8x128xbf16> to vector<2x8x128xbf16>
    %c8_21 = arith.constant 8 : index
    %c0_22 = arith.constant 0 : index
    %c128_23 = arith.constant 128 : index
    %11 = vector.load %arg7[%c8_21, %c0_22, %c128_23] : memref<10x8x384xbf16, #tpu.memory_space<vmem>>, vector<2x8x128xbf16>
    tpu.vector_store %arg7[%c8_21, %c0_22, %c128_23], %10 {strides = array<i32>} : memref<10x8x384xbf16, #tpu.memory_space<vmem>>, vector<2x8x128xbf16>,
    %c0_24 = arith.constant 0 : index
    %c0_25 = arith.constant 0 : index
    %c2 = arith.constant 2 : index
    %c0_26 = arith.constant 0 : index
    %12 = vector.load %arg2[%c0_24, %c0_25, %c2, %c0_26] : memref<1x8x10x128xbf16, #tpu.memory_space<vmem>>, vector<1x8x8x128xbf16>
    %13 = vector.shape_cast %12 : vector<1x8x8x128xbf16> to vector<8x8x128xbf16>
    %c0_27 = arith.constant 0 : index
    %c0_28 = arith.constant 0 : index
    %c256 = arith.constant 256 : index
    %14 = vector.load %arg7[%c0_27, %c0_28, %c256] : memref<10x8x384xbf16, #tpu.memory_space<vmem>>, vector<8x8x128xbf16>
    tpu.vector_store %arg7[%c0_27, %c0_28, %c256], %13 {strides = array<i32>} : memref<10x8x384xbf16, #tpu.memory_space<vmem>>, vector<8x8x128xbf16>,
    %c0_29 = arith.constant 0 : index
    %c0_30 = arith.constant 0 : index
    %c2_31 = arith.constant 2 : index
    %c0_32 = arith.constant 0 : index
    %15 = vector.load %arg3[%c0_29, %c0_30, %c2_31, %c0_32] : memref<1x2x10x128xbf16, #tpu.memory_space<vmem>>, vector<1x2x8x128xbf16>
    %16 = vector.shape_cast %15 : vector<1x2x8x128xbf16> to vector<2x8x128xbf16>
    %c8_33 = arith.constant 8 : index
    %c0_34 = arith.constant 0 : index
    %c256_35 = arith.constant 256 : index
    %17 = vector.load %arg7[%c8_33, %c0_34, %c256_35] : memref<10x8x384xbf16, #tpu.memory_space<vmem>>, vector<2x8x128xbf16>
    tpu.vector_store %arg7[%c8_33, %c0_34, %c256_35], %16 {strides = array<i32>} : memref<10x8x384xbf16, #tpu.memory_space<vmem>>, vector<2x8x128xbf16>,
    %c0_36 = arith.constant 0 : index
    %c0_37 = arith.constant 0 : index
    %c0_38 = arith.constant 0 : index
    %18 = vector.load %arg7[%c0_36, %c0_37, %c0_38] : memref<10x8x384xbf16, #tpu.memory_space<vmem>>, vector<8x8x384xbf16>
    %19 = vector.shape_cast %18 : vector<8x8x384xbf16> to vector<64x384xbf16>
    %c0_39 = arith.constant 0 : index
    %c0_40 = arith.constant 0 : index
    %c0_41 = arith.constant 0 : index
    %20 = vector.load %arg4[%c0_39, %c0_40, %c0_41] : memref<3x384x128xbf16, #tpu.memory_space<vmem>>, vector<1x384x128xbf16>
    %21 = vector.shape_cast %20 : vector<1x384x128xbf16> to vector<384x128xbf16>
    %cst = arith.constant dense<0.000000e+00> : vector<64x128xf32>
    %22 = tpu.matmul %19, %21, %cst {dimension_numbers = #tpu.dot_dimension_numbers<[1], [0], [0], [1], [0, 0, 1, 1], [], []>} : vector<64x384xbf16>, vector<384x128xbf16>, vector<64x128xf32> -> vector<64x128xf32>
    %c1_42 = arith.constant 1 : index
    %c0_43 = arith.constant 0 : index
    %c0_44 = arith.constant 0 : index
    %23 = vector.load %arg7[%c1_42, %c0_43, %c0_44] : memref<10x8x384xbf16, #tpu.memory_space<vmem>>, vector<8x8x384xbf16>
    %24 = vector.shape_cast %23 : vector<8x8x384xbf16> to vector<64x384xbf16>
    %c1_45 = arith.constant 1 : index
    %c0_46 = arith.constant 0 : index
    %c0_47 = arith.constant 0 : index
    %25 = vector.load %arg4[%c1_45, %c0_46, %c0_47] : memref<3x384x128xbf16, #tpu.memory_space<vmem>>, vector<1x384x128xbf16>
    %26 = vector.shape_cast %25 : vector<1x384x128xbf16> to vector<384x128xbf16>
    %cst_48 = arith.constant dense<0.000000e+00> : vector<64x128xf32>
    %27 = tpu.matmul %24, %26, %cst_48 {dimension_numbers = #tpu.dot_dimension_numbers<[1], [0], [0], [1], [0, 0, 1, 1], [], []>} : vector<64x384xbf16>, vector<384x128xbf16>, vector<64x128xf32> -> vector<64x128xf32>
    %28 = arith.addf %22, %27 : vector<64x128xf32>
    %c2_49 = arith.constant 2 : index
    %c0_50 = arith.constant 0 : index
    %c0_51 = arith.constant 0 : index
    %29 = vector.load %arg7[%c2_49, %c0_50, %c0_51] : memref<10x8x384xbf16, #tpu.memory_space<vmem>>, vector<8x8x384xbf16>
    %30 = vector.shape_cast %29 : vector<8x8x384xbf16> to vector<64x384xbf16>
    %c2_52 = arith.constant 2 : index
    %c0_53 = arith.constant 0 : index
    %c0_54 = arith.constant 0 : index
    %31 = vector.load %arg4[%c2_52, %c0_53, %c0_54] : memref<3x384x128xbf16, #tpu.memory_space<vmem>>, vector<1x384x128xbf16>
    %32 = vector.shape_cast %31 : vector<1x384x128xbf16> to vector<384x128xbf16>
    %cst_55 = arith.constant dense<0.000000e+00> : vector<64x128xf32>
    %33 = tpu.matmul %30, %32, %cst_55 {dimension_numbers = #tpu.dot_dimension_numbers<[1], [0], [0], [1], [0, 0, 1, 1], [], []>} : vector<64x384xbf16>, vector<384x128xbf16>, vector<64x128xf32> -> vector<64x128xf32>
    %34 = arith.addf %28, %33 : vector<64x128xf32>
    %c0_56 = arith.constant 0 : index
    %c0_57 = arith.constant 0 : index
    %35 = vector.load %arg5[%c0_56, %c0_57] : memref<1x128xf32, #tpu.memory_space<vmem>>, vector<1x128xf32>
    %36 = vector.broadcast %35 : vector<1x128xf32> to vector<64x128xf32>
    %37 = arith.addf %34, %36 : vector<64x128xf32>
    %cst_58 = arith.constant 0.000000e+00 : f32
    %38 = vector.broadcast %cst_58 : f32 to vector<64x128xf32>
    %39 = arith.maximumf %37, %38 : vector<64x128xf32>
    %40 = arith.truncf %39 : vector<64x128xf32> to vector<64x128xbf16>
    %c0_59 = arith.constant 0 : index
    %c0_60 = arith.constant 0 : index
    %c0_61 = arith.constant 0 : index
    %41 = vector.load %arg6[%c0_59, %c0_60, %c0_61] : memref<1x64x128xbf16, #tpu.memory_space<vmem>>, vector<1x64x128xbf16>
    %42 = vector.shape_cast %41 : vector<1x64x128xbf16> to vector<64x128xbf16>
    %43 = vector.shape_cast %40 : vector<64x128xbf16> to vector<1x64x128xbf16>
    tpu.vector_store %arg6[%c0_59, %c0_60, %c0_61], %43 {strides = array<i32>} : memref<1x64x128xbf16, #tpu.memory_space<vmem>>, vector<1x64x128xbf16>,
    return
  }
  func.func @transform_0(%arg0: i32, %arg1: i32) -> (i32, i32, i32, i32) {
    %c0_i32 = arith.constant 0 : i32
    %c0_i32_0 = arith.constant 0 : i32
    %c0_i32_1 = arith.constant 0 : i32
    return %arg0, %arg1, %c0_i32, %c0_i32_0 : i32, i32, i32, i32
  }
  func.func @transform_1(%arg0: i32, %arg1: i32) -> (i32, i32, i32, i32) {
    %c1_i32 = arith.constant 1 : i32
    %0 = arith.addi %arg1, %c1_i32 : i32
    %c4_i32 = arith.constant 4 : i32
    %1 = arith.muli %0, %c4_i32 : i32
    %c0_i32 = arith.constant 0 : i32
    %c0_i32_0 = arith.constant 0 : i32
    %c0_i32_1 = arith.constant 0 : i32
    return %arg0, %1, %c0_i32, %c0_i32_0 : i32, i32, i32, i32
  }
  func.func @transform_2(%arg0: i32, %arg1: i32) -> (i32, i32, i32) {
    %c0_i32 = arith.constant 0 : i32
    %c0_i32_0 = arith.constant 0 : i32
    %c0_i32_1 = arith.constant 0 : i32
    %c0_i32_2 = arith.constant 0 : i32
    return %c0_i32, %c0_i32_0, %c0_i32_1 : i32, i32, i32
  }
  func.func @transform_3(%arg0: i32, %arg1: i32) -> (i32, i32) {
    %c0_i32 = arith.constant 0 : i32
    %c0_i32_0 = arith.constant 0 : i32
    %c0_i32_1 = arith.constant 0 : i32
    return %c0_i32, %c0_i32_0 : i32, i32
  }
  func.func @transform_4(%arg0: i32, %arg1: i32) -> (i32, i32, i32) {
    %c0_i32 = arith.constant 0 : i32
    %c0_i32_0 = arith.constant 0 : i32
    return %arg0, %arg1, %c0_i32 : i32, i32, i32
  }
}

</mosaic_0001>

<llo_original>
// kernel: vgg_forward.7
$region0: #{vgg_forward.7}
  #allocation0 [shape = 'u32[]', space=smem, size = 0x4, offset = 0x4, fixed_abs, tag = 'smem constant byte address 0x4 - core index']
  #allocation1 [shape = 'u32[72,128]{1,0:T(1,128)}', space=vmem, size = 0x9000, scoped, tag = 'internal scratch']
  %s0 = inlined_call_operand.vmem [shape: bf16[16,2,8,128], index: 0, kind: input, shape index: {}]
  %s1 = inlined_call_operand.vmem [shape: bf16[16,8,64], index: 1, kind: output, shape index: {}]
  %s2 = sld [smem:[#allocation0]]
  $region14: #{vgg_forward.7} parent=0
    _
  %s4 = ssub.s32 1, %s2
  %s5 = scalar_select 0, %s4, %s2
  // Predicated region
  $region2: #{vgg_forward.7} parent=0 // pred_check
    _
  $region3: #{vgg_forward.7} parent=0 // pred_check_branch
    %7 = sbr.rel (0) target = $region5
  $region4: #{vgg_forward.7} parent=0 // pred_region
    _
  $region5: #{vgg_forward.7} parent=0 // pred_fallthru
    _
  %v8 = vld [vmem:[%s0] sm:$0xf]
  %v9 = vld [vmem:[%s0 + $0x8] sm:$0xf]
  %v10 = vld [vmem:[%s0 + $0x10] sm:$0xf]
  %v11 = vld [vmem:[%s0 + $0x18] sm:$0xf]
  %v12 = vld [vmem:[%s0 + $0x20] sm:$0xf]
  %v13 = vld [vmem:[%s0 + $0x28] sm:$0xf]
  %v14 = vld [vmem:[%s0 + $0x30] sm:$0xf]
  %v15 = vld [vmem:[%s0 + $0x38] sm:$0xf]
  %v16 = vld [vmem:[%s0 + $0x40] sm:$0xf]
  %v17 = vld [vmem:[%s0 + $0x48] sm:$0xf]
  %v18 = vld [vmem:[%s0 + $0x50] sm:$0xf]
  %v19 = vld [vmem:[%s0 + $0x58] sm:$0xf]
  %v20 = vld [vmem:[%s0 + $0x60] sm:$0xf]
  %v21 = vld [vmem:[%s0 + $0x68] sm:$0xf]
  %v22 = vld [vmem:[%s0 + $0x70] sm:$0xf]
  %v23 = vld [vmem:[%s0 + $0x78] sm:$0xf]
  %s24 = scalar_lea.vmem %s0, 4
  %v25 = vld [vmem:[%s24] sm:$0xf]
  %v26 = vld [vmem:[%s24 + $0x8] sm:$0xf]
  %v27 = vld [vmem:[%s24 + $0x10] sm:$0xf]
  %v28 = vld [vmem:[%s24 + $0x18] sm:$0xf]
  %v29 = vld [vmem:[%s24 + $0x20] sm:$0xf]
  %v30 = vld [vmem:[%s24 + $0x28] sm:$0xf]
  %v31 = vld [vmem:[%s24 + $0x30] sm:$0xf]
  %v32 = vld [vmem:[%s24 + $0x38] sm:$0xf]
  %v33 = vld [vmem:[%s24 + $0x40] sm:$0xf]
  %v34 = vld [vmem:[%s24 + $0x48] sm:$0xf]
  %v35 = vld [vmem:[%s24 + $0x50] sm:$0xf]
  %v36 = vld [vmem:[%s24 + $0x58] sm:$0xf]
  %v37 = vld [vmem:[%s24 + $0x60] sm:$0xf]
  %v38 = vld [vmem:[%s24 + $0x68] sm:$0xf]
  %v39 = vld [vmem:[%s24 + $0x70] sm:$0xf]
  %v40 = vld [vmem:[%s24 + $0x78] sm:$0xf]
  %v41 = vunpack.c.l.bf16 %v8
  %v42 = vunpack.c.l.bf16 %v9
  %v43 = vunpack.c.l.bf16 %v10
  %v44 = vunpack.c.l.bf16 %v11
  %v45 = vunpack.c.l.bf16 %v12
  %v46 = vunpack.c.l.bf16 %v13
  %v47 = vunpack.c.l.bf16 %v14
  %v48 = vunpack.c.l.bf16 %v15
  %v49 = vunpack.c.l.bf16 %v16
  %v50 = vunpack.c.l.bf16 %v17
  %v51 = vunpack.c.l.bf16 %v18
  %v52 = vunpack.c.l.bf16 %v19
  %v53 = vunpack.c.l.bf16 %v20
  %v54 = vunpack.c.l.bf16 %v21
  %v55 = vunpack.c.l.bf16 %v22
  %v56 = vunpack.c.l.bf16 %v23
  %v57 = vunpack.c.l.bf16 %v25
  %v58 = vunpack.c.l.bf16 %v26
  %v59 = vunpack.c.l.bf16 %v27
  %v60 = vunpack.c.l.bf16 %v28
  %v61 = vunpack.c.l.bf16 %v29
  %v62 = vunpack.c.l.bf16 %v30
  %v63 = vunpack.c.l.bf16 %v31
  %v64 = vunpack.c.l.bf16 %v32
  %v65 = vunpack.c.l.bf16 %v33
  %v66 = vunpack.c.l.bf16 %v34
  %v67 = vunpack.c.l.bf16 %v35
  %v68 = vunpack.c.l.bf16 %v36
  %v69 = vunpack.c.l.bf16 %v37
  %v70 = vunpack.c.l.bf16 %v38
  %v71 = vunpack.c.l.bf16 %v39
  %v72 = vunpack.c.l.bf16 %v40
  %v73 = vmax.f32 %v41, %v57
  %v74 = vmax.f32 %v42, %v58
  %v75 = vmax.f32 %v43, %v59
  %v76 = vmax.f32 %v44, %v60
  %v77 = vmax.f32 %v45, %v61
  %v78 = vmax.f32 %v46, %v62
  %v79 = vmax.f32 %v47, %v63
  %v80 = vmax.f32 %v48, %v64
  %v81 = vmax.f32 %v49, %v65
  %v82 = vmax.f32 %v50, %v66
  %v83 = vmax.f32 %v51, %v67
  %v84 = vmax.f32 %v52, %v68
  %v85 = vmax.f32 %v53, %v69
  %v86 = vmax.f32 %v54, %v70
  %v87 = vmax.f32 %v55, %v71
  %v88 = vmax.f32 %v56, %v72
  %v89 = vpack.c.bf16 %v73, %v73
  %v90 = vpack.c.bf16 %v74, %v74
  %v91 = vpack.c.bf16 %v75, %v75
  %v92 = vpack.c.bf16 %v76, %v76
  %v93 = vpack.c.bf16 %v77, %v77
  %v94 = vpack.c.bf16 %v78, %v78
  %v95 = vpack.c.bf16 %v79, %v79
  %v96 = vpack.c.bf16 %v80, %v80
  %v97 = vpack.c.bf16 %v81, %v81
  %v98 = vpack.c.bf16 %v82, %v82
  %v99 = vpack.c.bf16 %v83, %v83
  %v100 = vpack.c.bf16 %v84, %v84
  %v101 = vpack.c.bf16 %v85, %v85
  %v102 = vpack.c.bf16 %v86, %v86
  %v103 = vpack.c.bf16 %v87, %v87
  %v104 = vpack.c.bf16 %v88, %v88
  %v105 = vunpack.c.l.bf16 %v89
  %v106 = vunpack.c.l.bf16 %v90
  %v107 = vunpack.c.l.bf16 %v91
  %v108 = vunpack.c.l.bf16 %v92
  %v109 = vunpack.c.l.bf16 %v93
  %v110 = vunpack.c.l.bf16 %v94
  %v111 = vunpack.c.l.bf16 %v95
  %v112 = vunpack.c.l.bf16 %v96
  %v113 = vunpack.c.l.bf16 %v97
  %v114 = vunpack.c.l.bf16 %v98
  %v115 = vunpack.c.l.bf16 %v99
  %v116 = vunpack.c.l.bf16 %v100
  %v117 = vunpack.c.l.bf16 %v101
  %v118 = vunpack.c.l.bf16 %v102
  %v119 = vunpack.c.l.bf16 %v103
  %v120 = vunpack.c.l.bf16 %v104
  %137 = vrot.lane.b32.xlu0 %v105, 64
  %v138 = vpop.permute.xlu0 %137
  %139 = vrot.lane.b32.xlu0 %v106, 64
  %v140 = vpop.permute.xlu0 %139
  %141 = vrot.lane.b32.xlu0 %v107, 64
  %v142 = vpop.permute.xlu0 %141
  %143 = vrot.lane.b32.xlu0 %v108, 64
  %v144 = vpop.permute.xlu0 %143
  %145 = vrot.lane.b32.xlu0 %v109, 64
  %v146 = vpop.permute.xlu0 %145
  %147 = vrot.lane.b32.xlu0 %v110, 64
  %v148 = vpop.permute.xlu0 %147
  %149 = vrot.lane.b32.xlu0 %v111, 64
  %v150 = vpop.permute.xlu0 %149
  %151 = vrot.lane.b32.xlu0 %v112, 64
  %v152 = vpop.permute.xlu0 %151
  %153 = vrot.lane.b32.xlu0 %v113, 64
  %v154 = vpop.permute.xlu0 %153
  %155 = vrot.lane.b32.xlu0 %v114, 64
  %v156 = vpop.permute.xlu0 %155
  %157 = vrot.lane.b32.xlu0 %v115, 64
  %v158 = vpop.permute.xlu0 %157
  %159 = vrot.lane.b32.xlu0 %v116, 64
  %v160 = vpop.permute.xlu0 %159
  %161 = vrot.lane.b32.xlu0 %v117, 64
  %v162 = vpop.permute.xlu0 %161
  %163 = vrot.lane.b32.xlu0 %v118, 64
  %v164 = vpop.permute.xlu0 %163
  %165 = vrot.lane.b32.xlu0 %v119, 64
  %v166 = vpop.permute.xlu0 %165
  %167 = vrot.lane.b32.xlu0 %v120, 64
  %v168 = vpop.permute.xlu0 %167
  %v185 = vmax.f32 %v105, %v138
  %v186 = vmax.f32 %v106, %v140
  %v187 = vmax.f32 %v107, %v142
  %v188 = vmax.f32 %v108, %v144
  %v189 = vmax.f32 %v109, %v146
  %v190 = vmax.f32 %v110, %v148
  %v191 = vmax.f32 %v111, %v150
  %v192 = vmax.f32 %v112, %v152
  %v193 = vmax.f32 %v113, %v154
  %v194 = vmax.f32 %v114, %v156
  %v195 = vmax.f32 %v115, %v158
  %v196 = vmax.f32 %v116, %v160
  %v197 = vmax.f32 %v117, %v162
  %v198 = vmax.f32 %v118, %v164
  %v199 = vmax.f32 %v119, %v166
  %v200 = vmax.f32 %v120, %v168
  %v201 = vpack.c.bf16 %v185, %v185
  %v202 = vpack.c.bf16 %v186, %v186
  %v203 = vpack.c.bf16 %v187, %v187
  %v204 = vpack.c.bf16 %v188, %v188
  %v205 = vpack.c.bf16 %v189, %v189
  %v206 = vpack.c.bf16 %v190, %v190
  %v207 = vpack.c.bf16 %v191, %v191
  %v208 = vpack.c.bf16 %v192, %v192
  %v209 = vpack.c.bf16 %v193, %v193
  %v210 = vpack.c.bf16 %v194, %v194
  %v211 = vpack.c.bf16 %v195, %v195
  %v212 = vpack.c.bf16 %v196, %v196
  %v213 = vpack.c.bf16 %v197, %v197
  %v214 = vpack.c.bf16 %v198, %v198
  %v215 = vpack.c.bf16 %v199, %v199
  %v216 = vpack.c.bf16 %v200, %v200
  %vm217 = vcmask 519168
  %218 = vst.msk [vmem:[%s1] sm:$0xf] %vm217, %v201
  %219 = vst.msk [vmem:[%s1 + $0x4] sm:$0xf] %vm217, %v202
  %220 = vst.msk [vmem:[%s1 + $0x8] sm:$0xf] %vm217, %v203
  %221 = vst.msk [vmem:[%s1 + $0xc] sm:$0xf] %vm217, %v204
  %222 = vst.msk [vmem:[%s1 + $0x10] sm:$0xf] %vm217, %v205
  %223 = vst.msk [vmem:[%s1 + $0x14] sm:$0xf] %vm217, %v206
  %224 = vst.msk [vmem:[%s1 + $0x18] sm:$0xf] %vm217, %v207
  %225 = vst.msk [vmem:[%s1 + $0x1c] sm:$0xf] %vm217, %v208
  %226 = vst.msk [vmem:[%s1 + $0x20] sm:$0xf] %vm217, %v209
  %227 = vst.msk [vmem:[%s1 + $0x24] sm:$0xf] %vm217, %v210
  %228 = vst.msk [vmem:[%s1 + $0x28] sm:$0xf] %vm217, %v211
  %229 = vst.msk [vmem:[%s1 + $0x2c] sm:$0xf] %vm217, %v212
  %230 = vst.msk [vmem:[%s1 + $0x30] sm:$0xf] %vm217, %v213
  %231 = vst.msk [vmem:[%s1 + $0x34] sm:$0xf] %vm217, %v214
  %232 = vst.msk [vmem:[%s1 + $0x38] sm:$0xf] %vm217, %v215
  %233 = vst.msk [vmem:[%s1 + $0x3c] sm:$0xf] %vm217, %v216
  // Predicated region
  $region6: #{vgg_forward.7} parent=0 // pred_check
    _
  $region7: #{vgg_forward.7} parent=0 // pred_check_branch
    %235 = sbr.rel (0) target = $region9
  $region8: #{vgg_forward.7} parent=0 // pred_region
    _
  $region9: #{vgg_forward.7} parent=0 // pred_fallthru
    _
  // Predicated region
  $region10: #{vgg_forward.7} parent=0 // pred_check
    _
  $region11: #{vgg_forward.7} parent=0 // pred_check_branch
    %237 = sbr.rel (0) target = $region13
  $region12: #{vgg_forward.7} parent=0 // pred_region
    _
  $region13: #{vgg_forward.7} parent=0 // pred_fallthru
    _

// kernel: vgg_forward.8
$region0: #{vgg_forward.8}
  #allocation0 [shape = 'u32[]', space=smem, size = 0x4, offset = 0x4, fixed_abs, tag = 'smem constant byte address 0x4 - core index']
  #allocation1 [shape = 'u32[72,128]{1,0:T(1,128)}', space=vmem, size = 0x9000, scoped, tag = 'internal scratch']
  #allocation2 [shape = 'bf16[10,8,192]{2,1,0:T(8,128)(2,1)}', space=vmem, size = 0xa000, scoped, tag = 'scratch operand']
  %s0 = inlined_call_operand.vmem [shape: bf16[2,10,10,64], index: 0, kind: input, shape index: {}, may-alias: {0,1}]
  %s1 = inlined_call_operand.vmem [shape: bf16[2,10,10,64], index: 1, kind: input, shape index: {}, may-alias: {0,1}]
  %s2 = inlined_call_operand.vmem [shape: bf16[3,192,128], index: 2, kind: input, shape index: {}]
  %s3 = inlined_call_operand.vmem [shape: f32[1,128], index: 3, kind: input, shape index: {}]
  %s4 = inlined_call_operand.vmem [shape: bf16[2,64,128], index: 4, kind: output, shape index: {}]
  %s5 = sld [smem:[#allocation0]]
  $region49: #{vgg_forward.8} parent=0
    _
  %s7 = ssub.s32 1, %s5
  %s8 = scalar_select 0, %s7, %s5
  loop: start=0, step=1, limit=4
  $region2: #{vgg_forward.8} parent=0 // loop_pre_header
    _
  $region3: #{vgg_forward.8} parent=0 // loop_header
    %s10 = sphi 0, %s14
    %p11 = scmp.ge.s32.totalorder %s10, 4
    %s17 = sphi 0, %s29
    %s18 = sphi 0, %s25
    %s19 = sphi 0, %s17
    %s20 = sphi 0, %s18
    %s21 = sphi 0, %s19
    %s22 = sphi 0, %s20
    %s34 = sphi 0, %s36
    %s37 = sphi 0, %s34
    %s38 = sphi 0, %s37
    %s54 = sphi 0, %s38
    %s66 = sphi 0, %s68
    %s69 = sphi 0, %s66
    %s70 = sphi 0, %s69
    %s86 = sphi 0, %s70
    %s90 = sphi 0, %s90
    %s92 = sphi 0, %s90
    %s93 = sphi 0, %s92
    %s107 = sphi 0, %s93
    %s111 = sphi 0, %s111
    %s113 = sphi 0, %s111
    %s114 = sphi 0, %s113
    %s128 = sphi 0, %s114
    %s136 = sphi 0, %s138
    %s139 = sphi 0, %s136
    %s140 = sphi 0, %s139
    %s156 = sphi 0, %s140
  $region4: #{vgg_forward.8} parent=0 // loop_header_branch
    %13 = sbr.rel (%p11) target = $region8
  $region5: #{vgg_forward.8} parent=0 // loop_body
    %s15 = ssub.s32 %s10, 1
    %s16 = ssub.s32 %s10, 2
    %s23 = sadd.s32 1, %s18
    %p24 = scmp.ge.s32.totalorder %s23, 1
    %s25 = scalar_select %p24, 0, %s23
    %s26 = sadd.s32 1, %s17
    %s27 = scalar_select %p24, %s26, %s17
    %p28 = scmp.ge.s32.totalorder %s27, 2
    %s29 = scalar_select %p28, 0, %s27
    %s30 = ssub.s32 %s17, %s29
    %s31 = ssub.s32 %s18, %s25
    %s32 = sor.u32 %s30, %s31
    %p33 = scmp.eq.s32.totalorder %s32, 0
    %s35 = sadd.s32 %s34, 1
    %s36 = scalar_select %p33, %s34, %s35
    %p39 = pneg %p33
    %p40 = scmp.eq.s32.totalorder %s10, 1
    %p41 = por %p39, %p40
    %p42 = scmp.ne.s32.totalorder %s34, %s37
    %p43 = scmp.eq.s32.totalorder %s10, 0
    %p44 = por %p42, %p43
    %p45 = scmp.ne.s32.totalorder %s34, %s37
    %p46 = scmp.eq.s32.totalorder %s15, 1
    %p47 = por %p45, %p46
    %p48 = scmp.ne.s32.totalorder %s37, %s38
    %p49 = scmp.eq.s32.totalorder %s15, 0
    %p50 = por %p48, %p49
    %p51 = scmp.ne.s32.totalorder %s37, %s38
    %p52 = scmp.eq.s32.totalorder %s16, 1
    %p53 = por %p51, %p52
    %p55 = scmp.ne.s32.totalorder %s38, %s54
    %p56 = scmp.eq.s32.totalorder %s16, 0
    %p57 = por %p55, %p56
    %s58 = sadd.s32 %s18, 1
    %s59 = smul.u32 %s58, 4
    %s60 = sadd.s32 %s25, 1
    %s61 = smul.u32 %s60, 4
    %s62 = ssub.s32 %s17, %s29
    %s63 = ssub.s32 %s59, %s61
    %s64 = sor.u32 %s62, %s63
    %p65 = scmp.eq.s32.totalorder %s64, 0
    %s67 = sadd.s32 %s66, 1
    %s68 = scalar_select %p65, %s66, %s67
    %p71 = pneg %p65
    %p72 = scmp.eq.s32.totalorder %s10, 1
    %p73 = por %p71, %p72
    %p74 = scmp.ne.s32.totalorder %s66, %s69
    %p75 = scmp.eq.s32.totalorder %s10, 0
    %p76 = por %p74, %p75
    %p77 = scmp.ne.s32.totalorder %s66, %s69
    %p78 = scmp.eq.s32.totalorder %s15, 1
    %p79 = por %p77, %p78
    %p80 = scmp.ne.s32.totalorder %s69, %s70
    %p81 = scmp.eq.s32.totalorder %s15, 0
    %p82 = por %p80, %p81
    %p83 = scmp.ne.s32.totalorder %s69, %s70
    %p84 = scmp.eq.s32.totalorder %s16, 1
    %p85 = por %p83, %p84
    %p87 = scmp.ne.s32.totalorder %s70, %s86
    %p88 = scmp.eq.s32.totalorder %s16, 0
    %p89 = por %p87, %p88
    %s91 = sadd.s32 %s90, 1
    %p94 = scmp.eq.s32.totalorder %s10, 1
    %p95 = scmp.ne.s32.totalorder %s90, %s92
    %p96 = scmp.eq.s32.totalorder %s10, 0
    %p97 = por %p95, %p96
    %p98 = scmp.ne.s32.totalorder %s90, %s92
    %p99 = scmp.eq.s32.totalorder %s15, 1
    %p100 = por %p98, %p99
    %p101 = scmp.ne.s32.totalorder %s92, %s93
    %p102 = scmp.eq.s32.totalorder %s15, 0
    %p103 = por %p101, %p102
    %p104 = scmp.ne.s32.totalorder %s92, %s93
    %p105 = scmp.eq.s32.totalorder %s16, 1
    %p106 = por %p104, %p105
    %p108 = scmp.ne.s32.totalorder %s93, %s107
    %p109 = scmp.eq.s32.totalorder %s16, 0
    %p110 = por %p108, %p109
    %s112 = sadd.s32 %s111, 1
    %p115 = scmp.eq.s32.totalorder %s10, 1
    %p116 = scmp.ne.s32.totalorder %s111, %s113
    %p117 = scmp.eq.s32.totalorder %s10, 0
    %p118 = por %p116, %p117
    %p119 = scmp.ne.s32.totalorder %s111, %s113
    %p120 = scmp.eq.s32.totalorder %s15, 1
    %p121 = por %p119, %p120
    %p122 = scmp.ne.s32.totalorder %s113, %s114
    %p123 = scmp.eq.s32.totalorder %s15, 0
    %p124 = por %p122, %p123
    %p125 = scmp.ne.s32.totalorder %s113, %s114
    %p126 = scmp.eq.s32.totalorder %s16, 1
    %p127 = por %p125, %p126
    %p129 = scmp.ne.s32.totalorder %s114, %s128
    %p130 = scmp.eq.s32.totalorder %s16, 0
    %p131 = por %p129, %p130
    %s132 = ssub.s32 %s17, %s29
    %s133 = ssub.s32 %s18, %s25
    %s134 = sor.u32 %s132, %s133
    %p135 = scmp.eq.s32.totalorder %s134, 0
    %s137 = sadd.s32 %s136, 1
    %s138 = scalar_select %p135, %s136, %s137
    %p141 = pneg %p135
    %p142 = scmp.eq.s32.totalorder %s10, 1
    %p143 = por %p141, %p142
    %p144 = scmp.ne.s32.totalorder %s136, %s139
    %p145 = scmp.eq.s32.totalorder %s10, 0
    %p146 = por %p144, %p145
    %p147 = scmp.ne.s32.totalorder %s136, %s139
    %p148 = scmp.eq.s32.totalorder %s15, 1
    %p149 = por %p147, %p148
    %p150 = scmp.ne.s32.totalorder %s139, %s140
    %p151 = scmp.eq.s32.totalorder %s15, 0
    %p152 = por %p150, %p151
    %p153 = scmp.ne.s32.totalorder %s139, %s140
    %p154 = scmp.eq.s32.totalorder %s16, 1
    %p155 = por %p153, %p154
    %p157 = scmp.ne.s32.totalorder %s140, %s156
    %p158 = scmp.eq.s32.totalorder %s16, 0
    %p159 = por %p157, %p158
    %p160 = scmp.le.s32.totalorder 1, %s10
    %p161 = scmp.lt.s32.totalorder %s10, 3
    %p162 = pnand %p160, %p161
    %p163 = pneg %p162
    // Predicated region
    $region9: #{vgg_forward.8} parent=5 // pred_check
      _
    $region10: #{vgg_forward.8} parent=5 // pred_check_branch
      %165 = sbr.rel (%p162) target = $region12
    $region11: #{vgg_forward.8} parent=5 // pred_region
      %s166 = ssub.s32 %s10, 1
      // Predicated region
      $region13: #{vgg_forward.8} parent=11 // pred_check
        %p167 = pneg %p103
      $region14: #{vgg_forward.8} parent=11 // pred_check_branch
        %169 = sbr.rel (%p167) target = $region16
      $region15: #{vgg_forward.8} parent=11 // pred_region
        _
      $region16: #{vgg_forward.8} parent=11 // pred_fallthru
        _
      // Predicated region
      $region17: #{vgg_forward.8} parent=11 // pred_check
        %p170 = pneg %p124
      $region18: #{vgg_forward.8} parent=11 // pred_check_branch
        %172 = sbr.rel (%p170) target = $region20
      $region19: #{vgg_forward.8} parent=11 // pred_region
        _
      $region20: #{vgg_forward.8} parent=11 // pred_fallthru
        _
    $region12: #{vgg_forward.8} parent=5 // pred_fallthru
      _
    %p173 = scmp.lt.s32.totalorder %s10, 2
    // Predicated region
    $region21: #{vgg_forward.8} parent=5 // pred_check
      %p174 = pneg %p173
    $region22: #{vgg_forward.8} parent=5 // pred_check_branch
      %176 = sbr.rel (%p174) target = $region24
    $region23: #{vgg_forward.8} parent=5 // pred_region
      // Predicated region
      $region25: #{vgg_forward.8} parent=23 // pred_check
        %p177 = pneg %p44
      $region26: #{vgg_forward.8} parent=23 // pred_check_branch
        %179 = sbr.rel (%p177) target = $region28
      $region27: #{vgg_forward.8} parent=23 // pred_region
        %s180 = smul.u32 8, %s18
        %s181 = ssub.s32 10, %s180
        %p182 = scmp.lt.s32.totalorder %s181, 8
        %s183 = scalar_select %p182, %s181, 8
        %s184 = smul.u32 4, %s183
        %s185 = smul.u32 %s184, 2
        %p186 = scmp.lt.s32.totalorder %s17, 1
        %s187 = scalar_select %p186, %s17, 1
        %p188 = scmp.lt.s32.totalorder %s180, 9
        %s189 = scalar_select %p188, %s180, 9
        %s190 = smul.addr %s189, 2
        %s191 = smul.addr %s187, 20
        %s192 = sadd.s32 %s190, %s191
        %s193 = smul.addr %s192, 4
        %s194 = scalar_lea.vmem %s0, %s193
        %s195 = smul.u32 8, %s18
        %s196 = ssub.s32 10, %s195
        %p197 = scmp.lt.s32.totalorder %s196, 8
        %s198 = scalar_select %p197, %s196, 8
        %s199 = smul.u32 4, %s198
        %s200 = smul.u32 %s199, 2
      $region28: #{vgg_forward.8} parent=23 // pred_fallthru
        _
      // Predicated region
      $region29: #{vgg_forward.8} parent=23 // pred_check
        %p201 = pneg %p76
      $region30: #{vgg_forward.8} parent=23 // pred_check_branch
        %203 = sbr.rel (%p201) target = $region32
      $region31: #{vgg_forward.8} parent=23 // pred_region
        %s204 = sadd.s32 %s18, 1
        %s205 = smul.u32 %s204, 4
        %s206 = smul.u32 2, %s205
        %p207 = scmp.lt.s32.totalorder %s17, 1
        %s208 = scalar_select %p207, %s17, 1
        %p209 = scmp.lt.s32.totalorder %s206, 9
        %s210 = scalar_select %p209, %s206, 9
        %s211 = smul.addr %s210, 2
        %s212 = smul.addr %s208, 20
        %s213 = sadd.s32 %s211, %s212
        %s214 = smul.addr %s213, 4
        %s215 = scalar_lea.vmem %s1, %s214
        %s216 = sadd.s32 %s18, 1
        %s217 = smul.u32 %s216, 4
        %s218 = smul.u32 2, %s217
      $region32: #{vgg_forward.8} parent=23 // pred_fallthru
        _
    $region24: #{vgg_forward.8} parent=5 // pred_fallthru
      _
    %p219 = scmp.le.s32.totalorder 1, %s10
    %p220 = scmp.lt.s32.totalorder %s10, 3
    %p221 = pnand %p219, %p220
    %p222 = pneg %p221
    // Predicated region
    $region33: #{vgg_forward.8} parent=5 // pred_check
      _
    $region34: #{vgg_forward.8} parent=5 // pred_check_branch
      %224 = sbr.rel (%p221) target = $region36
    $region35: #{vgg_forward.8} parent=5 // pred_region
      %s225 = ssub.s32 %s10, 1
      %s226 = smul.u32 8, %s20
      %s227 = ssub.s32 10, %s226
      %p228 = scmp.lt.s32.totalorder %s227, 8
      %s229 = scalar_select %p228, %s227, 8
      %s230 = smul.u32 4, %s229
      %s231 = smul.u32 %s230, 2
      %p232 = scmp.lt.s32.totalorder %s19, 1
      %s233 = scalar_select %p232, %s19, 1
      %p234 = scmp.lt.s32.totalorder %s226, 9
      %s235 = scalar_select %p234, %s226, 9
      %s236 = smul.addr %s235, 2
      %s237 = smul.addr %s233, 20
      %s238 = sadd.s32 %s236, %s237
      %s239 = smul.addr %s238, 4
      %s240 = scalar_lea.vmem %s0, %s239
      %p241 = pneg %p50
      %p242 = pneg %p47
      %s243 = sadd.s32 %s20, 1
      %s244 = smul.u32 %s243, 4
      %s245 = smul.u32 2, %s244
      %p246 = scmp.lt.s32.totalorder %s19, 1
      %s247 = scalar_select %p246, %s19, 1
      %p248 = scmp.lt.s32.totalorder %s245, 9
      %s249 = scalar_select %p248, %s245, 9
      %s250 = smul.addr %s249, 2
      %s251 = smul.addr %s247, 20
      %s252 = sadd.s32 %s250, %s251
      %s253 = smul.addr %s252, 4
      %s254 = scalar_lea.vmem %s1, %s253
      %p255 = pneg %p82
      %p256 = pneg %p79
      %p257 = pneg %p103
      %p258 = pneg %p100
      %p259 = pneg %p124
      %p260 = pneg %p121
      %p261 = pneg %p152
      %p262 = pneg %p149
      %s263 = smul.u32 8, %s20
      %p264 = scmp.lt.s32.totalorder %s19, 1
      %s265 = scalar_select %p264, %s19, 1
      %p266 = scmp.lt.s32.totalorder %s263, 7
      %s267 = scalar_select %p266, %s263, 7
      %s268 = smul.addr %s265, 8
      %s269 = sadd.s32 %s267, %s268
      %s270 = smul.addr %s269, 4
      %s271 = scalar_lea.vmem %s4, %s270
      %s272 = smul.u32 8, %s20
      %s273 = ssub.s32 10, %s272
      %p274 = scmp.lt.s32.totalorder %s273, 8
      %s275 = scalar_select %p274, %s273, 8
      %s276 = smul.u32 4, %s275
      %s277 = smul.u32 %s276, 2
      %p278 = scmp.lt.s32.totalorder %s19, 1
      %s279 = scalar_select %p278, %s19, 1
      %p280 = scmp.lt.s32.totalorder %s272, 9
      %s281 = scalar_select %p280, %s272, 9
      %s282 = smul.addr %s281, 2
      %s283 = smul.addr %s279, 20
      %s284 = sadd.s32 %s282, %s283
      %s285 = smul.addr %s284, 4
      %s286 = scalar_lea.vmem %s0, %s285
      %s287 = smul.u32 8, %s20
      %s288 = ssub.s32 10, %s287
      %p289 = scmp.lt.s32.totalorder %s288, 8
      %s290 = scalar_select %p289, %s288, 8
      %s291 = smul.u32 4, %s290
      %s292 = smul.u32 %s291, 2
      %s293 = sadd.s32 %s20, 1
      %s294 = smul.u32 %s293, 4
      %s295 = smul.u32 2, %s294
      %p296 = scmp.lt.s32.totalorder %s19, 1
      %s297 = scalar_select %p296, %s19, 1
      %p298 = scmp.lt.s32.totalorder %s295, 9
      %s299 = scalar_select %p298, %s295, 9
      %s300 = smul.addr %s299, 2
      %s301 = smul.addr %s297, 20
      %s302 = sadd.s32 %s300, %s301
      %s303 = smul.addr %s302, 4
      %s304 = scalar_lea.vmem %s1, %s303
      %s305 = sadd.s32 %s20, 1
      %s306 = smul.u32 %s305, 4
      %s307 = smul.u32 2, %s306
      %s308 = smul.u32 8, %s20
      %p309 = scmp.lt.s32.totalorder %s19, 1
      %s310 = scalar_select %p309, %s19, 1
      %p311 = scmp.lt.s32.totalorder %s308, 7
      %s312 = scalar_select %p311, %s308, 7
      %s313 = smul.addr %s310, 8
      %s314 = sadd.s32 %s312, %s313
      %s315 = smul.addr %s314, 4
      %s316 = scalar_lea.vmem %s4, %s315
      %s317 = smul.u32 8, %s20
      %v319 = vld [vmem:[%s286] sm:$0xf]
      %v320 = vld [vmem:[%s286 + $0x8] sm:$0xf]
      %v321 = vld [vmem:[%s286 + $0x10] sm:$0xf]
      %v322 = vld [vmem:[%s286 + $0x18] sm:$0xf]
      %v323 = vld [vmem:[%s286 + $0x20] sm:$0xf]
      %v324 = vld [vmem:[%s286 + $0x28] sm:$0xf]
      %v325 = vld [vmem:[%s286 + $0x30] sm:$0xf]
      %v326 = vld [vmem:[%s286 + $0x38] sm:$0xf]
      %vm327 = vcmask 519168
      %328 = vst.msk [vmem:[#allocation2] sm:$0xf] %vm327, %v319
      %329 = vst.msk [vmem:[#allocation2 + $0x8] sm:$0xf] %vm327, %v320
      %330 = vst.msk [vmem:[#allocation2 + $0x10] sm:$0xf] %vm327, %v321
      %331 = vst.msk [vmem:[#allocation2 + $0x18] sm:$0xf] %vm327, %v322
      %332 = vst.msk [vmem:[#allocation2 + $0x20] sm:$0xf] %vm327, %v323
      %333 = vst.msk [vmem:[#allocation2 + $0x28] sm:$0xf] %vm327, %v324
      %334 = vst.msk [vmem:[#allocation2 + $0x30] sm:$0xf] %vm327, %v325
      %335 = vst.msk [vmem:[#allocation2 + $0x38] sm:$0xf] %vm327, %v326
      %v336 = vld [vmem:[%s304] sm:$0xf]
      %v337 = vld [vmem:[%s304 + $0x8] sm:$0xf]
      %s338 = scalar_lea.vmem [#allocation2], 64
      %339 = vst.msk [vmem:[%s338] sm:$0xf] %vm327, %v336
      %340 = vst.msk [vmem:[%s338 + $0x8] sm:$0xf] %vm327, %v337
      %v341 = vld [vmem:[%s286] sm:$0xf]
      %v342 = vld [vmem:[%s286 + $0x4] sm:$0x1]
      %v343 = vld [vmem:[%s286 + $0x8] sm:$0xf]
      %v344 = vld [vmem:[%s286 + $0xc] sm:$0x1]
      %v345 = vld [vmem:[%s286 + $0x10] sm:$0xf]
      %v346 = vld [vmem:[%s286 + $0x14] sm:$0x1]
      %v347 = vld [vmem:[%s286 + $0x18] sm:$0xf]
      %v348 = vld [vmem:[%s286 + $0x1c] sm:$0x1]
      %v349 = vld [vmem:[%s286 + $0x20] sm:$0xf]
      %v350 = vld [vmem:[%s286 + $0x24] sm:$0x1]
      %v351 = vld [vmem:[%s286 + $0x28] sm:$0xf]
      %v352 = vld [vmem:[%s286 + $0x2c] sm:$0x1]
      %v353 = vld [vmem:[%s286 + $0x30] sm:$0xf]
      %v354 = vld [vmem:[%s286 + $0x34] sm:$0x1]
      %v355 = vld [vmem:[%s286 + $0x38] sm:$0xf]
      %v356 = vld [vmem:[%s286 + $0x3c] sm:$0x1]
      %vm357 = vsmask.f32 3328
      %vm358 = vsmask.f32 7440
      %vm359 = vmor %vm357, %vm358
      %v361 = vshrl.u32 %v341, 16
      %v363 = vrot.slane %v361, 4
      %v364 = vshll.u32 %v341, 16
      %v366 = vrot.slane %v364, 5
      %v367 = vor.u32 %v363, %v366
      %v368 = vrot.slane %v367, 4
      %v370 = vshll.u32 %v342, 16
      %v372 = vrot.slane %v370, 5
      %v373 = vsel %vm359, %v368, %v372
      %v375 = vshrl.u32 %v343, 16
      %v377 = vrot.slane %v375, 4
      %v378 = vshll.u32 %v343, 16
      %v380 = vrot.slane %v378, 5
      %v381 = vor.u32 %v377, %v380
      %v382 = vrot.slane %v381, 4
      %v384 = vshll.u32 %v344, 16
      %v386 = vrot.slane %v384, 5
      %v387 = vsel %vm359, %v382, %v386
      %v389 = vshrl.u32 %v345, 16
      %v391 = vrot.slane %v389, 4
      %v392 = vshll.u32 %v345, 16
      %v394 = vrot.slane %v392, 5
      %v395 = vor.u32 %v391, %v394
      %v396 = vrot.slane %v395, 4
      %v398 = vshll.u32 %v346, 16
      %v400 = vrot.slane %v398, 5
      %v401 = vsel %vm359, %v396, %v400
      %v403 = vshrl.u32 %v347, 16
      %v405 = vrot.slane %v403, 4
      %v406 = vshll.u32 %v347, 16
      %v408 = vrot.slane %v406, 5
      %v409 = vor.u32 %v405, %v408
      %v410 = vrot.slane %v409, 4
      %v412 = vshll.u32 %v348, 16
      %v414 = vrot.slane %v412, 5
      %v415 = vsel %vm359, %v410, %v414
      %v417 = vshrl.u32 %v349, 16
      %v419 = vrot.slane %v417, 4
      %v420 = vshll.u32 %v349, 16
      %v422 = vrot.slane %v420, 5
      %v423 = vor.u32 %v419, %v422
      %v424 = vrot.slane %v423, 4
      %v426 = vshll.u32 %v350, 16
      %v428 = vrot.slane %v426, 5
      %v429 = vsel %vm359, %v424, %v428
      %v431 = vshrl.u32 %v351, 16
      %v433 = vrot.slane %v431, 4
      %v434 = vshll.u32 %v351, 16
      %v436 = vrot.slane %v434, 5
      %v437 = vor.u32 %v433, %v436
      %v438 = vrot.slane %v437, 4
      %v440 = vshll.u32 %v352, 16
      %v442 = vrot.slane %v440, 5
      %v443 = vsel %vm359, %v438, %v442
      %v445 = vshrl.u32 %v353, 16
      %v447 = vrot.slane %v445, 4
      %v448 = vshll.u32 %v353, 16
      %v450 = vrot.slane %v448, 5
      %v451 = vor.u32 %v447, %v450
      %v452 = vrot.slane %v451, 4
      %v454 = vshll.u32 %v354, 16
      %v456 = vrot.slane %v454, 5
      %v457 = vsel %vm359, %v452, %v456
      %v459 = vshrl.u32 %v355, 16
      %v461 = vrot.slane %v459, 4
      %v462 = vshll.u32 %v355, 16
      %v464 = vrot.slane %v462, 5
      %v465 = vor.u32 %v461, %v464
      %v466 = vrot.slane %v465, 4
      %v468 = vshll.u32 %v356, 16
      %v470 = vrot.slane %v468, 5
      %v471 = vsel %vm359, %v466, %v470
      %472 = vrot.lane.b32.xlu0 %v373, 64
      %v473 = vpop.permute.xlu0 %472
      %474 = vrot.lane.b32.xlu0 %v387, 64
      %v475 = vpop.permute.xlu0 %474
      %476 = vrot.lane.b32.xlu0 %v401, 64
      %v477 = vpop.permute.xlu0 %476
      %478 = vrot.lane.b32.xlu0 %v415, 64
      %v479 = vpop.permute.xlu0 %478
      %480 = vrot.lane.b32.xlu0 %v429, 64
      %v481 = vpop.permute.xlu0 %480
      %482 = vrot.lane.b32.xlu0 %v443, 64
      %v483 = vpop.permute.xlu0 %482
      %484 = vrot.lane.b32.xlu0 %v457, 64
      %v485 = vpop.permute.xlu0 %484
      %486 = vrot.lane.b32.xlu0 %v471, 64
      %v487 = vpop.permute.xlu0 %486
      %vm496 = vcmask 1043968
      %497 = vst.msk [vmem:[#allocation2] sm:$0xf] %vm496, %v473
      %498 = vst.msk [vmem:[#allocation2 + $0x8] sm:$0xf] %vm496, %v475
      %499 = vst.msk [vmem:[#allocation2 + $0x10] sm:$0xf] %vm496, %v477
      %500 = vst.msk [vmem:[#allocation2 + $0x18] sm:$0xf] %vm496, %v479
      %501 = vst.msk [vmem:[#allocation2 + $0x20] sm:$0xf] %vm496, %v481
      %502 = vst.msk [vmem:[#allocation2 + $0x28] sm:$0xf] %vm496, %v483
      %503 = vst.msk [vmem:[#allocation2 + $0x30] sm:$0xf] %vm496, %v485
      %504 = vst.msk [vmem:[#allocation2 + $0x38] sm:$0xf] %vm496, %v487
      %v505 = vld [vmem:[%s304] sm:$0xf]
      %v506 = vld [vmem:[%s304 + $0x4] sm:$0x1]
      %v507 = vld [vmem:[%s304 + $0x8] sm:$0xf]
      %v508 = vld [vmem:[%s304 + $0xc] sm:$0x1]
      %v510 = vshrl.u32 %v505, 16
      %v512 = vrot.slane %v510, 4
      %v513 = vshll.u32 %v505, 16
      %v515 = vrot.slane %v513, 5
      %v516 = vor.u32 %v512, %v515
      %v517 = vrot.slane %v516, 4
      %v519 = vshll.u32 %v506, 16
      %v521 = vrot.slane %v519, 5
      %v522 = vsel %vm359, %v517, %v521
      %v524 = vshrl.u32 %v507, 16
      %v526 = vrot.slane %v524, 4
      %v527 = vshll.u32 %v507, 16
      %v529 = vrot.slane %v527, 5
      %v530 = vor.u32 %v526, %v529
      %v531 = vrot.slane %v530, 4
      %v533 = vshll.u32 %v508, 16
      %v535 = vrot.slane %v533, 5
      %v536 = vsel %vm359, %v531, %v535
      %537 = vrot.lane.b32.xlu0 %v522, 64
      %v538 = vpop.permute.xlu0 %537
      %539 = vrot.lane.b32.xlu0 %v536, 64
      %v540 = vpop.permute.xlu0 %539
      %543 = vst.msk [vmem:[%s338] sm:$0xf] %vm496, %v538
      %544 = vst.msk [vmem:[%s338 + $0x8] sm:$0xf] %vm496, %v540
      %v545 = vld [vmem:[%s286] sm:$0xe]
      %v546 = vld [vmem:[%s286 + $0x4] sm:$0x1]
      %v547 = vld [vmem:[%s286 + $0x8] sm:$0xe]
      %v548 = vld [vmem:[%s286 + $0xc] sm:$0x1]
      %v549 = vld [vmem:[%s286 + $0x10] sm:$0xe]
      %v550 = vld [vmem:[%s286 + $0x14] sm:$0x1]
      %v551 = vld [vmem:[%s286 + $0x18] sm:$0xe]
      %v552 = vld [vmem:[%s286 + $0x1c] sm:$0x1]
      %v553 = vld [vmem:[%s286 + $0x20] sm:$0xe]
      %v554 = vld [vmem:[%s286 + $0x24] sm:$0x1]
      %v555 = vld [vmem:[%s286 + $0x28] sm:$0xe]
      %v556 = vld [vmem:[%s286 + $0x2c] sm:$0x1]
      %v557 = vld [vmem:[%s286 + $0x30] sm:$0xe]
      %v558 = vld [vmem:[%s286 + $0x34] sm:$0x1]
      %v559 = vld [vmem:[%s286 + $0x38] sm:$0xe]
      %v560 = vld [vmem:[%s286 + $0x3c] sm:$0x1]
      %vm577 = vcmask 1042432
      %vm578 = vcmask 1046532
      %vm579 = vmor %vm577, %vm578
      %v580 = vrot.slane %v545, 5
      %v581 = vrot.slane %v580, 4
      %v582 = vrot.slane %v546, 5
      %v583 = vsel %vm579, %v581, %v582
      %v584 = vrot.slane %v547, 5
      %v585 = vrot.slane %v584, 4
      %v586 = vrot.slane %v548, 5
      %v587 = vsel %vm579, %v585, %v586
      %v588 = vrot.slane %v549, 5
      %v589 = vrot.slane %v588, 4
      %v590 = vrot.slane %v550, 5
      %v591 = vsel %vm579, %v589, %v590
      %v592 = vrot.slane %v551, 5
      %v593 = vrot.slane %v592, 4
      %v594 = vrot.slane %v552, 5
      %v595 = vsel %vm579, %v593, %v594
      %v596 = vrot.slane %v553, 5
      %v597 = vrot.slane %v596, 4
      %v598 = vrot.slane %v554, 5
      %v599 = vsel %vm579, %v597, %v598
      %v600 = vrot.slane %v555, 5
      %v601 = vrot.slane %v600, 4
      %v602 = vrot.slane %v556, 5
      %v603 = vsel %vm579, %v601, %v602
      %v604 = vrot.slane %v557, 5
      %v605 = vrot.slane %v604, 4
      %v606 = vrot.slane %v558, 5
      %v607 = vsel %vm579, %v605, %v606
      %v608 = vrot.slane %v559, 5
      %v609 = vrot.slane %v608, 4
      %v610 = vrot.slane %v560, 5
      %v611 = vsel %vm579, %v609, %v610
      %620 = vst.msk [vmem:[#allocation2 + $0x4] sm:$0xf] %vm327, %v583
      %621 = vst.msk [vmem:[#allocation2 + $0xc] sm:$0xf] %vm327, %v587
      %622 = vst.msk [vmem:[#allocation2 + $0x14] sm:$0xf] %vm327, %v591
      %623 = vst.msk [vmem:[#allocation2 + $0x1c] sm:$0xf] %vm327, %v595
      %624 = vst.msk [vmem:[#allocation2 + $0x24] sm:$0xf] %vm327, %v599
      %625 = vst.msk [vmem:[#allocation2 + $0x2c] sm:$0xf] %vm327, %v603
      %626 = vst.msk [vmem:[#allocation2 + $0x34] sm:$0xf] %vm327, %v607
      %627 = vst.msk [vmem:[#allocation2 + $0x3c] sm:$0xf] %vm327, %v611
      %v628 = vld [vmem:[%s304] sm:$0xe]
      %v629 = vld [vmem:[%s304 + $0x4] sm:$0x1]
      %v630 = vld [vmem:[%s304 + $0x8] sm:$0xe]
      %v631 = vld [vmem:[%s304 + $0xc] sm:$0x1]
      %v636 = vrot.slane %v628, 5
      %v637 = vrot.slane %v636, 4
      %v638 = vrot.slane %v629, 5
      %v639 = vsel %vm579, %v637, %v638
      %v640 = vrot.slane %v630, 5
      %v641 = vrot.slane %v640, 4
      %v642 = vrot.slane %v631, 5
      %v643 = vsel %vm579, %v641, %v642
      %646 = vst.msk [vmem:[%s338 + $0x4] sm:$0xf] %vm327, %v639
      %647 = vst.msk [vmem:[%s338 + $0xc] sm:$0xf] %vm327, %v643
      %v648 = vld [vmem:[#allocation2] sm:$0xff]
      %v649 = vld [vmem:[#allocation2 + $0x8] sm:$0xff]
      %v650 = vld [vmem:[#allocation2 + $0x10] sm:$0xff]
      %v651 = vld [vmem:[#allocation2 + $0x18] sm:$0xff]
      %v652 = vld [vmem:[#allocation2 + $0x20] sm:$0xff]
      %v653 = vld [vmem:[#allocation2 + $0x28] sm:$0xff]
      %v654 = vld [vmem:[#allocation2 + $0x30] sm:$0xff]
      %v655 = vld [vmem:[#allocation2 + $0x38] sm:$0xff]
      %v656 = vld [vmem:[%s2] sm:$0xf]
      %v657 = vld [vmem:[%s2 + $0x4] sm:$0xf]
      %v658 = vld [vmem:[%s2 + $0x8] sm:$0xf]
      %v659 = vld [vmem:[%s2 + $0xc] sm:$0xf]
      %v660 = vld [vmem:[%s2 + $0x10] sm:$0xf]
      %v661 = vld [vmem:[%s2 + $0x14] sm:$0xf]
      %v662 = vld [vmem:[%s2 + $0x18] sm:$0xf]
      %v663 = vld [vmem:[%s2 + $0x1c] sm:$0xf]
      %v664 = vld [vmem:[%s2 + $0x20] sm:$0xf]
      %v665 = vld [vmem:[%s2 + $0x24] sm:$0xf]
      %v666 = vld [vmem:[%s2 + $0x28] sm:$0xf]
      %v667 = vld [vmem:[%s2 + $0x2c] sm:$0xf]
      %v668 = vld [vmem:[%s2 + $0x30] sm:$0xf]
      %v669 = vld [vmem:[%s2 + $0x34] sm:$0xf]
      %v670 = vld [vmem:[%s2 + $0x38] sm:$0xf]
      %v671 = vld [vmem:[%s2 + $0x3c] sm:$0xf]
      %v672 = vld [vmem:[%s2 + $0x40] sm:$0xf]
      %v673 = vld [vmem:[%s2 + $0x44] sm:$0xf]
      %v674 = vld [vmem:[%s2 + $0x48] sm:$0xf]
      %v675 = vld [vmem:[%s2 + $0x4c] sm:$0xf]
      %v676 = vld [vmem:[%s2 + $0x50] sm:$0xf]
      %v677 = vld [vmem:[%s2 + $0x54] sm:$0xf]
      %v678 = vld [vmem:[%s2 + $0x58] sm:$0xf]
      %v679 = vld [vmem:[%s2 + $0x5c] sm:$0xf]
      %s680 = scalar_lea.vmem [#allocation2], 8
      %v681 = vld [vmem:[%s680] sm:$0xff]
      %v682 = vld [vmem:[%s680 + $0x8] sm:$0xff]
      %v683 = vld [vmem:[%s680 + $0x10] sm:$0xff]
      %v684 = vld [vmem:[%s680 + $0x18] sm:$0xff]
      %v685 = vld [vmem:[%s680 + $0x20] sm:$0xff]
      %v686 = vld [vmem:[%s680 + $0x28] sm:$0xff]
      %v687 = vld [vmem:[%s680 + $0x30] sm:$0xff]
      %v688 = vld [vmem:[%s680 + $0x38] sm:$0xff]
      %s689 = scalar_lea.vmem %s2, 96
      %v690 = vld [vmem:[%s689] sm:$0xf]
      %v691 = vld [vmem:[%s689 + $0x4] sm:$0xf]
      %v692 = vld [vmem:[%s689 + $0x8] sm:$0xf]
      %v693 = vld [vmem:[%s689 + $0xc] sm:$0xf]
      %v694 = vld [vmem:[%s689 + $0x10] sm:$0xf]
      %v695 = vld [vmem:[%s689 + $0x14] sm:$0xf]
      %v696 = vld [vmem:[%s689 + $0x18] sm:$0xf]
      %v697 = vld [vmem:[%s689 + $0x1c] sm:$0xf]
      %v698 = vld [vmem:[%s689 + $0x20] sm:$0xf]
      %v699 = vld [vmem:[%s689 + $0x24] sm:$0xf]
      %v700 = vld [vmem:[%s689 + $0x28] sm:$0xf]
      %v701 = vld [vmem:[%s689 + $0x2c] sm:$0xf]
      %v702 = vld [vmem:[%s689 + $0x30] sm:$0xf]
      %v703 = vld [vmem:[%s689 + $0x34] sm:$0xf]
      %v704 = vld [vmem:[%s689 + $0x38] sm:$0xf]
      %v705 = vld [vmem:[%s689 + $0x3c] sm:$0xf]
      %v706 = vld [vmem:[%s689 + $0x40] sm:$0xf]
      %v707 = vld [vmem:[%s689 + $0x44] sm:$0xf]
      %v708 = vld [vmem:[%s689 + $0x48] sm:$0xf]
      %v709 = vld [vmem:[%s689 + $0x4c] sm:$0xf]
      %v710 = vld [vmem:[%s689 + $0x50] sm:$0xf]
      %v711 = vld [vmem:[%s689 + $0x54] sm:$0xf]
      %v712 = vld [vmem:[%s689 + $0x58] sm:$0xf]
      %v713 = vld [vmem:[%s689 + $0x5c] sm:$0xf]
      %v722 = vunpack.c.l.b16 %v681
      %v723 = vunpack.c.h.b16 %v681
      %v724 = vunpack.c.l.b16 %v682
      %v725 = vunpack.c.h.b16 %v682
      %v726 = vunpack.c.l.b16 %v683
      %v727 = vunpack.c.h.b16 %v683
      %v728 = vunpack.c.l.b16 %v684
      %v729 = vunpack.c.h.b16 %v684
      %v730 = vunpack.c.l.b16 %v685
      %v731 = vunpack.c.h.b16 %v685
      %v732 = vunpack.c.l.b16 %v686
      %v733 = vunpack.c.h.b16 %v686
      %v734 = vunpack.c.l.b16 %v687
      %v735 = vunpack.c.h.b16 %v687
      %v736 = vunpack.c.l.b16 %v688
      %v737 = vunpack.c.h.b16 %v688
      %v738 = vpack.c.b16 %v724, %v722
      %v739 = vpack.c.b16 %v725, %v723
      %v740 = vpack.c.b16 %v728, %v726
      %v741 = vpack.c.b16 %v729, %v727
      %v742 = vpack.c.b16 %v732, %v730
      %v743 = vpack.c.b16 %v733, %v731
      %v744 = vpack.c.b16 %v736, %v734
      %v745 = vpack.c.b16 %v737, %v735
      %v774 = vunpack.c.l.b16 %v690
      %v775 = vunpack.c.l.b16 %v691
      %v776 = vunpack.c.l.b16 %v692
      %v777 = vunpack.c.l.b16 %v693
      %v778 = vunpack.c.l.b16 %v694
      %v779 = vunpack.c.l.b16 %v695
      %v780 = vunpack.c.l.b16 %v696
      %v781 = vunpack.c.l.b16 %v697
      %v782 = vunpack.c.l.b16 %v698
      %v783 = vunpack.c.l.b16 %v699
      %v784 = vunpack.c.l.b16 %v700
      %v785 = vunpack.c.l.b16 %v701
      %v786 = vunpack.c.l.b16 %v702
      %v787 = vunpack.c.l.b16 %v703
      %v788 = vunpack.c.l.b16 %v704
      %v789 = vunpack.c.l.b16 %v705
      %v790 = vunpack.c.l.b16 %v706
      %v791 = vunpack.c.l.b16 %v707
      %v792 = vunpack.c.l.b16 %v708
      %v793 = vunpack.c.l.b16 %v709
      %v794 = vunpack.c.l.b16 %v710
      %v795 = vunpack.c.l.b16 %v711
      %v796 = vunpack.c.l.b16 %v712
      %v797 = vunpack.c.l.b16 %v713
      %v798 = vpack.c.b16 %v775, %v774
      %v799 = vpack.c.b16 %v777, %v776
      %v800 = vpack.c.b16 %v779, %v778
      %v801 = vpack.c.b16 %v781, %v780
      %v802 = vpack.c.b16 %v783, %v782
      %v803 = vpack.c.b16 %v785, %v784
      %v804 = vpack.c.b16 %v787, %v786
      %v805 = vpack.c.b16 %v789, %v788
      %v806 = vpack.c.b16 %v791, %v790
      %v807 = vpack.c.b16 %v793, %v792
      %v808 = vpack.c.b16 %v795, %v794
      %v809 = vpack.c.b16 %v797, %v796
      %vm822 = vcmask 523264
      %v824 = vsel %vm822, %v739, 0
      %v827 = vsel %vm822, %v741, 0
      %v830 = vsel %vm822, %v743, 0
      %v833 = vsel %vm822, %v745, 0
      %835 = vmatpush.bf16.msra.mxu0 %v805
      %836 = vmatpush.bf16.msra.mxu0 %v804
      %837 = vmatpush.bf16.msra.mxu0 %v803
      %838 = vmatpush.bf16.msra.mxu0 %v802
      %839 = vmatpush.bf16.msra.mxu0 %v801
      %840 = vmatpush.bf16.msra.mxu0 %v800
      %841 = vmatpush.bf16.msra.mxu0 %v799
      %842 = vmatpush.bf16.msra.mxu0 %v798
      %843 = vmatmul.bf16.gmra.mxu0 %v738
      %v844 = vpop.f32.mrf.mxu0
      %v845 = vadd.f32 0.0, %v844
      %v846 = vpop.f32.mrf.mxu0
      %v847 = vadd.f32 0.0, %v846
      %848 = vmatmul.bf16.gmra.mxu0 %v740
      %v849 = vpop.f32.mrf.mxu0
      %v850 = vadd.f32 0.0, %v849
      %v851 = vpop.f32.mrf.mxu0
      %v852 = vadd.f32 0.0, %v851
      %853 = vmatmul.bf16.gmra.mxu0 %v742
      %v854 = vpop.f32.mrf.mxu0
      %v855 = vadd.f32 0.0, %v854
      %v856 = vpop.f32.mrf.mxu0
      %v857 = vadd.f32 0.0, %v856
      %858 = vmatmul.bf16.gmra.mxu0 %v744
      %v859 = vpop.f32.mrf.mxu0
      %v860 = vadd.f32 0.0, %v859
      %v861 = vpop.f32.mrf.mxu0
      %v862 = vadd.f32 0.0, %v861
      %863 = vdwg.mxu0
      %864 = vmatpush.bf16.msra.mxu0 0
      %865 = vmatpush.bf16.msra.mxu0 0
      %866 = vmatpush.bf16.msra.mxu0 0
      %867 = vmatpush.bf16.msra.mxu0 0
      %868 = vmatpush.bf16.msra.mxu0 %v809
      %869 = vmatpush.bf16.msra.mxu0 %v808
      %870 = vmatpush.bf16.msra.mxu0 %v807
      %871 = vmatpush.bf16.msra.mxu0 %v806
      %872 = vmatmul.bf16.gmra.mxu0 %v824
      %v873 = vpop.f32.mrf.mxu0
      %v874 = vadd.f32 %v845, %v873
      %v875 = vpop.f32.mrf.mxu0
      %v876 = vadd.f32 %v847, %v875
      %877 = vmatmul.bf16.gmra.mxu0 %v827
      %v878 = vpop.f32.mrf.mxu0
      %v879 = vadd.f32 %v850, %v878
      %v880 = vpop.f32.mrf.mxu0
      %v881 = vadd.f32 %v852, %v880
      %882 = vmatmul.bf16.gmra.mxu0 %v830
      %v883 = vpop.f32.mrf.mxu0
      %v884 = vadd.f32 %v855, %v883
      %v885 = vpop.f32.mrf.mxu0
      %v886 = vadd.f32 %v857, %v885
      %887 = vmatmul.bf16.gmra.mxu0 %v833
      %v888 = vpop.f32.mrf.mxu0
      %v889 = vadd.f32 %v860, %v888
      %v890 = vpop.f32.mrf.mxu0
      %v891 = vadd.f32 %v862, %v890
      %892 = vdwg.mxu0
      %v901 = vunpack.c.l.b16 %v648
      %v902 = vunpack.c.h.b16 %v648
      %v903 = vunpack.c.l.b16 %v649
      %v904 = vunpack.c.h.b16 %v649
      %v905 = vunpack.c.l.b16 %v650
      %v906 = vunpack.c.h.b16 %v650
      %v907 = vunpack.c.l.b16 %v651
      %v908 = vunpack.c.h.b16 %v651
      %v909 = vunpack.c.l.b16 %v652
      %v910 = vunpack.c.h.b16 %v652
      %v911 = vunpack.c.l.b16 %v653
      %v912 = vunpack.c.h.b16 %v653
      %v913 = vunpack.c.l.b16 %v654
      %v914 = vunpack.c.h.b16 %v654
      %v915 = vunpack.c.l.b16 %v655
      %v916 = vunpack.c.h.b16 %v655
      %v917 = vpack.c.b16 %v903, %v901
      %v918 = vpack.c.b16 %v904, %v902
      %v919 = vpack.c.b16 %v907, %v905
      %v920 = vpack.c.b16 %v908, %v906
      %v921 = vpack.c.b16 %v911, %v909
      %v922 = vpack.c.b16 %v912, %v910
      %v923 = vpack.c.b16 %v915, %v913
      %v924 = vpack.c.b16 %v916, %v914
      %v953 = vunpack.c.l.b16 %v656
      %v954 = vunpack.c.l.b16 %v657
      %v955 = vunpack.c.l.b16 %v658
      %v956 = vunpack.c.l.b16 %v659
      %v957 = vunpack.c.l.b16 %v660
      %v958 = vunpack.c.l.b16 %v661
      %v959 = vunpack.c.l.b16 %v662
      %v960 = vunpack.c.l.b16 %v663
      %v961 = vunpack.c.l.b16 %v664
      %v962 = vunpack.c.l.b16 %v665
      %v963 = vunpack.c.l.b16 %v666
      %v964 = vunpack.c.l.b16 %v667
      %v965 = vunpack.c.l.b16 %v668
      %v966 = vunpack.c.l.b16 %v669
      %v967 = vunpack.c.l.b16 %v670
      %v968 = vunpack.c.l.b16 %v671
      %v969 = vunpack.c.l.b16 %v672
      %v970 = vunpack.c.l.b16 %v673
      %v971 = vunpack.c.l.b16 %v674
      %v972 = vunpack.c.l.b16 %v675
      %v973 = vunpack.c.l.b16 %v676
      %v974 = vunpack.c.l.b16 %v677
      %v975 = vunpack.c.l.b16 %v678
      %v976 = vunpack.c.l.b16 %v679
      %v977 = vpack.c.b16 %v954, %v953
      %v978 = vpack.c.b16 %v956, %v955
      %v979 = vpack.c.b16 %v958, %v957
      %v980 = vpack.c.b16 %v960, %v959
      %v981 = vpack.c.b16 %v962, %v961
      %v982 = vpack.c.b16 %v964, %v963
      %v983 = vpack.c.b16 %v966, %v965
      %v984 = vpack.c.b16 %v968, %v967
      %v985 = vpack.c.b16 %v970, %v969
      %v986 = vpack.c.b16 %v972, %v971
      %v987 = vpack.c.b16 %v974, %v973
      %v988 = vpack.c.b16 %v976, %v975
      %v1002 = vsel %vm822, %v918, 0
      %v1005 = vsel %vm822, %v920, 0
      %v1008 = vsel %vm822, %v922, 0
      %v1011 = vsel %vm822, %v924, 0
      %1013 = vmatpush.bf16.msra.mxu0 %v984
      %1014 = vmatpush.bf16.msra.mxu0 %v983
      %1015 = vmatpush.bf16.msra.mxu0 %v982
      %1016 = vmatpush.bf16.msra.mxu0 %v981
      %1017 = vmatpush.bf16.msra.mxu0 %v980
      %1018 = vmatpush.bf16.msra.mxu0 %v979
      %1019 = vmatpush.bf16.msra.mxu0 %v978
      %1020 = vmatpush.bf16.msra.mxu0 %v977
      %1021 = vmatmul.bf16.gmra.mxu0 %v917
      %v1022 = vpop.f32.mrf.mxu0
      %v1023 = vadd.f32 %v874, %v1022
      %v1024 = vpop.f32.mrf.mxu0
      %v1025 = vadd.f32 %v876, %v1024
      %1026 = vmatmul.bf16.gmra.mxu0 %v919
      %v1027 = vpop.f32.mrf.mxu0
      %v1028 = vadd.f32 %v879, %v1027
      %v1029 = vpop.f32.mrf.mxu0
      %v1030 = vadd.f32 %v881, %v1029
      %1031 = vmatmul.bf16.gmra.mxu0 %v921
      %v1032 = vpop.f32.mrf.mxu0
      %v1033 = vadd.f32 %v884, %v1032
      %v1034 = vpop.f32.mrf.mxu0
      %v1035 = vadd.f32 %v886, %v1034
      %1036 = vmatmul.bf16.gmra.mxu0 %v923
      %v1037 = vpop.f32.mrf.mxu0
      %v1038 = vadd.f32 %v889, %v1037
      %v1039 = vpop.f32.mrf.mxu0
      %v1040 = vadd.f32 %v891, %v1039
      %1041 = vdwg.mxu0
      %1042 = vmatpush.bf16.msra.mxu0 0
      %1043 = vmatpush.bf16.msra.mxu0 0
      %1044 = vmatpush.bf16.msra.mxu0 0
      %1045 = vmatpush.bf16.msra.mxu0 0
      %1046 = vmatpush.bf16.msra.mxu0 %v988
      %1047 = vmatpush.bf16.msra.mxu0 %v987
      %1048 = vmatpush.bf16.msra.mxu0 %v986
      %1049 = vmatpush.bf16.msra.mxu0 %v985
      %1050 = vmatmul.bf16.gmra.mxu0 %v1002
      %v1051 = vpop.f32.mrf.mxu0
      %v1052 = vadd.f32 %v1023, %v1051
      %v1053 = vpop.f32.mrf.mxu0
      %v1054 = vadd.f32 %v1025, %v1053
      %1055 = vmatmul.bf16.gmra.mxu0 %v1005
      %v1056 = vpop.f32.mrf.mxu0
      %v1057 = vadd.f32 %v1028, %v1056
      %v1058 = vpop.f32.mrf.mxu0
      %v1059 = vadd.f32 %v1030, %v1058
      %1060 = vmatmul.bf16.gmra.mxu0 %v1008
      %v1061 = vpop.f32.mrf.mxu0
      %v1062 = vadd.f32 %v1033, %v1061
      %v1063 = vpop.f32.mrf.mxu0
      %v1064 = vadd.f32 %v1035, %v1063
      %1065 = vmatmul.bf16.gmra.mxu0 %v1011
      %v1066 = vpop.f32.mrf.mxu0
      %v1067 = vadd.f32 %v1038, %v1066
      %v1068 = vpop.f32.mrf.mxu0
      %v1069 = vadd.f32 %v1040, %v1068
      %1070 = vdwg.mxu0
      %s1071 = scalar_lea.vmem [#allocation2], 16
      %v1072 = vld [vmem:[%s1071] sm:$0xff]
      %v1073 = vld [vmem:[%s1071 + $0x8] sm:$0xff]
      %v1074 = vld [vmem:[%s1071 + $0x10] sm:$0xff]
      %v1075 = vld [vmem:[%s1071 + $0x18] sm:$0xff]
      %v1076 = vld [vmem:[%s1071 + $0x20] sm:$0xff]
      %v1077 = vld [vmem:[%s1071 + $0x28] sm:$0xff]
      %v1078 = vld [vmem:[%s1071 + $0x30] sm:$0xff]
      %v1079 = vld [vmem:[%s1071 + $0x38] sm:$0xff]
      %s1080 = scalar_lea.vmem %s2, 192
      %v1081 = vld [vmem:[%s1080] sm:$0xf]
      %v1082 = vld [vmem:[%s1080 + $0x4] sm:$0xf]
      %v1083 = vld [vmem:[%s1080 + $0x8] sm:$0xf]
      %v1084 = vld [vmem:[%s1080 + $0xc] sm:$0xf]
      %v1085 = vld [vmem:[%s1080 + $0x10] sm:$0xf]
      %v1086 = vld [vmem:[%s1080 + $0x14] sm:$0xf]
      %v1087 = vld [vmem:[%s1080 + $0x18] sm:$0xf]
      %v1088 = vld [vmem:[%s1080 + $0x1c] sm:$0xf]
      %v1089 = vld [vmem:[%s1080 + $0x20] sm:$0xf]
      %v1090 = vld [vmem:[%s1080 + $0x24] sm:$0xf]
      %v1091 = vld [vmem:[%s1080 + $0x28] sm:$0xf]
      %v1092 = vld [vmem:[%s1080 + $0x2c] sm:$0xf]
      %v1093 = vld [vmem:[%s1080 + $0x30] sm:$0xf]
      %v1094 = vld [vmem:[%s1080 + $0x34] sm:$0xf]
      %v1095 = vld [vmem:[%s1080 + $0x38] sm:$0xf]
      %v1096 = vld [vmem:[%s1080 + $0x3c] sm:$0xf]
      %v1097 = vld [vmem:[%s1080 + $0x40] sm:$0xf]
      %v1098 = vld [vmem:[%s1080 + $0x44] sm:$0xf]
      %v1099 = vld [vmem:[%s1080 + $0x48] sm:$0xf]
      %v1100 = vld [vmem:[%s1080 + $0x4c] sm:$0xf]
      %v1101 = vld [vmem:[%s1080 + $0x50] sm:$0xf]
      %v1102 = vld [vmem:[%s1080 + $0x54] sm:$0xf]
      %v1103 = vld [vmem:[%s1080 + $0x58] sm:$0xf]
      %v1104 = vld [vmem:[%s1080 + $0x5c] sm:$0xf]
      %v1113 = vunpack.c.l.b16 %v1072
      %v1114 = vunpack.c.h.b16 %v1072
      %v1115 = vunpack.c.l.b16 %v1073
      %v1116 = vunpack.c.h.b16 %v1073
      %v1117 = vunpack.c.l.b16 %v1074
      %v1118 = vunpack.c.h.b16 %v1074
      %v1119 = vunpack.c.l.b16 %v1075
      %v1120 = vunpack.c.h.b16 %v1075
      %v1121 = vunpack.c.l.b16 %v1076
      %v1122 = vunpack.c.h.b16 %v1076
      %v1123 = vunpack.c.l.b16 %v1077
      %v1124 = vunpack.c.h.b16 %v1077
      %v1125 = vunpack.c.l.b16 %v1078
      %v1126 = vunpack.c.h.b16 %v1078
      %v1127 = vunpack.c.l.b16 %v1079
      %v1128 = vunpack.c.h.b16 %v1079
      %v1129 = vpack.c.b16 %v1115, %v1113
      %v1130 = vpack.c.b16 %v1116, %v1114
      %v1131 = vpack.c.b16 %v1119, %v1117
      %v1132 = vpack.c.b16 %v1120, %v1118
      %v1133 = vpack.c.b16 %v1123, %v1121
      %v1134 = vpack.c.b16 %v1124, %v1122
      %v1135 = vpack.c.b16 %v1127, %v1125
      %v1136 = vpack.c.b16 %v1128, %v1126
      %v1165 = vunpack.c.l.b16 %v1081
      %v1166 = vunpack.c.l.b16 %v1082
      %v1167 = vunpack.c.l.b16 %v1083
      %v1168 = vunpack.c.l.b16 %v1084
      %v1169 = vunpack.c.l.b16 %v1085
      %v1170 = vunpack.c.l.b16 %v1086
      %v1171 = vunpack.c.l.b16 %v1087
      %v1172 = vunpack.c.l.b16 %v1088
      %v1173 = vunpack.c.l.b16 %v1089
      %v1174 = vunpack.c.l.b16 %v1090
      %v1175 = vunpack.c.l.b16 %v1091
      %v1176 = vunpack.c.l.b16 %v1092
      %v1177 = vunpack.c.l.b16 %v1093
      %v1178 = vunpack.c.l.b16 %v1094
      %v1179 = vunpack.c.l.b16 %v1095
      %v1180 = vunpack.c.l.b16 %v1096
      %v1181 = vunpack.c.l.b16 %v1097
      %v1182 = vunpack.c.l.b16 %v1098
      %v1183 = vunpack.c.l.b16 %v1099
      %v1184 = vunpack.c.l.b16 %v1100
      %v1185 = vunpack.c.l.b16 %v1101
      %v1186 = vunpack.c.l.b16 %v1102
      %v1187 = vunpack.c.l.b16 %v1103
      %v1188 = vunpack.c.l.b16 %v1104
      %v1189 = vpack.c.b16 %v1166, %v1165
      %v1190 = vpack.c.b16 %v1168, %v1167
      %v1191 = vpack.c.b16 %v1170, %v1169
      %v1192 = vpack.c.b16 %v1172, %v1171
      %v1193 = vpack.c.b16 %v1174, %v1173
      %v1194 = vpack.c.b16 %v1176, %v1175
      %v1195 = vpack.c.b16 %v1178, %v1177
      %v1196 = vpack.c.b16 %v1180, %v1179
      %v1197 = vpack.c.b16 %v1182, %v1181
      %v1198 = vpack.c.b16 %v1184, %v1183
      %v1199 = vpack.c.b16 %v1186, %v1185
      %v1200 = vpack.c.b16 %v1188, %v1187
      %v1214 = vsel %vm822, %v1130, 0
      %v1217 = vsel %vm822, %v1132, 0
      %v1220 = vsel %vm822, %v1134, 0
      %v1223 = vsel %vm822, %v1136, 0
      %1225 = vmatpush.bf16.msra.mxu0 %v1196
      %1226 = vmatpush.bf16.msra.mxu0 %v1195
      %1227 = vmatpush.bf16.msra.mxu0 %v1194
      %1228 = vmatpush.bf16.msra.mxu0 %v1193
      %1229 = vmatpush.bf16.msra.mxu0 %v1192
      %1230 = vmatpush.bf16.msra.mxu0 %v1191
      %1231 = vmatpush.bf16.msra.mxu0 %v1190
      %1232 = vmatpush.bf16.msra.mxu0 %v1189
      %1233 = vmatmul.bf16.gmra.mxu0 %v1129
      %v1234 = vpop.f32.mrf.mxu0
      %v1235 = vadd.f32 0.0, %v1234
      %v1236 = vpop.f32.mrf.mxu0
      %v1237 = vadd.f32 0.0, %v1236
      %1238 = vmatmul.bf16.gmra.mxu0 %v1131
      %v1239 = vpop.f32.mrf.mxu0
      %v1240 = vadd.f32 0.0, %v1239
      %v1241 = vpop.f32.mrf.mxu0
      %v1242 = vadd.f32 0.0, %v1241
      %1243 = vmatmul.bf16.gmra.mxu0 %v1133
      %v1244 = vpop.f32.mrf.mxu0
      %v1245 = vadd.f32 0.0, %v1244
      %v1246 = vpop.f32.mrf.mxu0
      %v1247 = vadd.f32 0.0, %v1246
      %1248 = vmatmul.bf16.gmra.mxu0 %v1135
      %v1249 = vpop.f32.mrf.mxu0
      %v1250 = vadd.f32 0.0, %v1249
      %v1251 = vpop.f32.mrf.mxu0
      %v1252 = vadd.f32 0.0, %v1251
      %1253 = vdwg.mxu0
      %1254 = vmatpush.bf16.msra.mxu0 0
      %1255 = vmatpush.bf16.msra.mxu0 0
      %1256 = vmatpush.bf16.msra.mxu0 0
      %1257 = vmatpush.bf16.msra.mxu0 0
      %1258 = vmatpush.bf16.msra.mxu0 %v1200
      %1259 = vmatpush.bf16.msra.mxu0 %v1199
      %1260 = vmatpush.bf16.msra.mxu0 %v1198
      %1261 = vmatpush.bf16.msra.mxu0 %v1197
      %1262 = vmatmul.bf16.gmra.mxu0 %v1214
      %v1263 = vpop.f32.mrf.mxu0
      %v1264 = vadd.f32 %v1235, %v1263
      %v1265 = vpop.f32.mrf.mxu0
      %v1266 = vadd.f32 %v1237, %v1265
      %1267 = vmatmul.bf16.gmra.mxu0 %v1217
      %v1268 = vpop.f32.mrf.mxu0
      %v1269 = vadd.f32 %v1240, %v1268
      %v1270 = vpop.f32.mrf.mxu0
      %v1271 = vadd.f32 %v1242, %v1270
      %1272 = vmatmul.bf16.gmra.mxu0 %v1220
      %v1273 = vpop.f32.mrf.mxu0
      %v1274 = vadd.f32 %v1245, %v1273
      %v1275 = vpop.f32.mrf.mxu0
      %v1276 = vadd.f32 %v1247, %v1275
      %1277 = vmatmul.bf16.gmra.mxu0 %v1223
      %v1278 = vpop.f32.mrf.mxu0
      %v1279 = vadd.f32 %v1250, %v1278
      %v1280 = vpop.f32.mrf.mxu0
      %v1281 = vadd.f32 %v1252, %v1280
      %1282 = vdwg.mxu0
      %v1283 = vadd.f32 %v1052, %v1264
      %v1284 = vadd.f32 %v1054, %v1266
      %v1285 = vadd.f32 %v1057, %v1269
      %v1286 = vadd.f32 %v1059, %v1271
      %v1287 = vadd.f32 %v1062, %v1274
      %v1288 = vadd.f32 %v1064, %v1276
      %v1289 = vadd.f32 %v1067, %v1279
      %v1290 = vadd.f32 %v1069, %v1281
      %v1291 = vld [vmem:[%s3] sm:$0x1]
      %v1293 = vperm.slane %v1291, 0
      %v1295 = vadd.f32 %v1283, %v1293
      %v1296 = vadd.f32 %v1284, %v1293
      %v1297 = vadd.f32 %v1285, %v1293
      %v1298 = vadd.f32 %v1286, %v1293
      %v1299 = vadd.f32 %v1287, %v1293
      %v1300 = vadd.f32 %v1288, %v1293
      %v1301 = vadd.f32 %v1289, %v1293
      %v1302 = vadd.f32 %v1290, %v1293
      %v1303 = vmax.f32 %v1295, 0.0
      %v1304 = vmax.f32 %v1296, 0.0
      %v1305 = vmax.f32 %v1297, 0.0
      %v1306 = vmax.f32 %v1298, 0.0
      %v1307 = vmax.f32 %v1299, 0.0
      %v1308 = vmax.f32 %v1300, 0.0
      %v1309 = vmax.f32 %v1301, 0.0
      %v1310 = vmax.f32 %v1302, 0.0
      %v1311 = vpack.c.bf16 %v1303, %v1303
      %v1312 = vpack.c.bf16 %v1304, %v1304
      %v1313 = vpack.c.bf16 %v1305, %v1305
      %v1314 = vpack.c.bf16 %v1306, %v1306
      %v1315 = vpack.c.bf16 %v1307, %v1307
      %v1316 = vpack.c.bf16 %v1308, %v1308
      %v1317 = vpack.c.bf16 %v1309, %v1309
      %v1318 = vpack.c.bf16 %v1310, %v1310
      %1319 = vst [vmem:[%s316] sm:$0xf] %v1311
      %1320 = vst [vmem:[%s316 + $0x4] sm:$0xf] %v1312
      %1321 = vst [vmem:[%s316 + $0x8] sm:$0xf] %v1313
      %1322 = vst [vmem:[%s316 + $0xc] sm:$0xf] %v1314
      %1323 = vst [vmem:[%s316 + $0x10] sm:$0xf] %v1315
      %1324 = vst [vmem:[%s316 + $0x14] sm:$0xf] %v1316
      %1325 = vst [vmem:[%s316 + $0x18] sm:$0xf] %v1317
      %1326 = vst [vmem:[%s316 + $0x1c] sm:$0xf] %v1318
      %s1327 = smul.u32 8, %s20
      %p1328 = scmp.lt.s32.totalorder %s19, 1
      %s1329 = scalar_select %p1328, %s19, 1
      %p1330 = scmp.lt.s32.totalorder %s1327, 7
      %s1331 = scalar_select %p1330, %s1327, 7
      %s1332 = smul.addr %s1329, 8
      %s1333 = sadd.s32 %s1331, %s1332
      %s1334 = smul.addr %s1333, 4
      %s1335 = scalar_lea.vmem %s4, %s1334
      // Predicated region
      $region37: #{vgg_forward.8} parent=35 // pred_check
        %p1336 = pneg %p149
      $region38: #{vgg_forward.8} parent=35 // pred_check_branch
        %1338 = sbr.rel (%p1336) target = $region40
      $region39: #{vgg_forward.8} parent=35 // pred_region
        %s1339 = smul.u32 8, %s20
      $region40: #{vgg_forward.8} parent=35 // pred_fallthru
        _
    $region36: #{vgg_forward.8} parent=5 // pred_fallthru
      _
    %p1340 = scmp.le.s32.totalorder 2, %s10
    // Predicated region
    $region41: #{vgg_forward.8} parent=5 // pred_check
      %p1341 = pneg %p1340
    $region42: #{vgg_forward.8} parent=5 // pred_check_branch
      %1343 = sbr.rel (%p1341) target = $region44
    $region43: #{vgg_forward.8} parent=5 // pred_region
      %s1344 = ssub.s32 %s10, 2
      // Predicated region
      $region45: #{vgg_forward.8} parent=43 // pred_check
        %p1345 = pneg %p155
      $region46: #{vgg_forward.8} parent=43 // pred_check_branch
        %1347 = sbr.rel (%p1345) target = $region48
      $region47: #{vgg_forward.8} parent=43 // pred_region
        %s1348 = smul.u32 8, %s22
        %p1349 = scmp.lt.s32.totalorder %s21, 1
        %s1350 = scalar_select %p1349, %s21, 1
        %p1351 = scmp.lt.s32.totalorder %s1348, 7
        %s1352 = scalar_select %p1351, %s1348, 7
        %s1353 = smul.addr %s1350, 8
        %s1354 = sadd.s32 %s1352, %s1353
        %s1355 = smul.addr %s1354, 4
        %s1356 = scalar_lea.vmem %s4, %s1355
      $region48: #{vgg_forward.8} parent=43 // pred_fallthru
        _
    $region44: #{vgg_forward.8} parent=5 // pred_fallthru
      _
  $region6: #{vgg_forward.8} parent=0 // loop_footer
    %s14 = sadd.s32 1, %s10
  $region7: #{vgg_forward.8} parent=0 // loop_footer_branch
    %9 = sbr.rel target = $region3
  $region8: #{vgg_forward.8} parent=0 // loop_exit
    _

// kernel: vgg_forward.5
$region0: #{vgg_forward.5}
  #allocation0 [shape = 'u32[]', space=smem, size = 0x4, offset = 0x4, fixed_abs, tag = 'smem constant byte address 0x4 - core index']
  #allocation1 [shape = 'u32[72,128]{1,0:T(1,128)}', space=vmem, size = 0x9000, scoped, tag = 'internal scratch']
  #allocation2 [shape = 'bf16[18,16,24]{2,1,0:T(8,128)(2,1)}', space=vmem, size = 0x12000, scoped, tag = 'scratch operand']
  %s0 = inlined_call_operand.vmem [shape: bf16[2,18,18,8], index: 0, kind: input, shape index: {}, may-alias: {0,1}]
  %s1 = inlined_call_operand.vmem [shape: bf16[2,18,18,8], index: 1, kind: input, shape index: {}, may-alias: {0,1}]
  %s2 = inlined_call_operand.vmem [shape: bf16[3,24,64], index: 2, kind: input, shape index: {}]
  %s3 = inlined_call_operand.vmem [shape: f32[1,64], index: 3, kind: input, shape index: {}]
  %s4 = inlined_call_operand.vmem [shape: bf16[2,256,64], index: 4, kind: output, shape index: {}]
  %s5 = sld [smem:[#allocation0]]
  $region49: #{vgg_forward.5} parent=0
    _
  %s7 = ssub.s32 1, %s5
  %s8 = scalar_select 0, %s7, %s5
  loop: start=0, step=1, limit=4
  $region2: #{vgg_forward.5} parent=0 // loop_pre_header
    _
  $region3: #{vgg_forward.5} parent=0 // loop_header
    %s10 = sphi 0, %s14
    %p11 = scmp.ge.s32.totalorder %s10, 4
    %s17 = sphi 0, %s29
    %s18 = sphi 0, %s25
    %s19 = sphi 0, %s17
    %s20 = sphi 0, %s18
    %s21 = sphi 0, %s19
    %s22 = sphi 0, %s20
    %s34 = sphi 0, %s36
    %s37 = sphi 0, %s34
    %s38 = sphi 0, %s37
    %s54 = sphi 0, %s38
    %s66 = sphi 0, %s68
    %s69 = sphi 0, %s66
    %s70 = sphi 0, %s69
    %s86 = sphi 0, %s70
    %s90 = sphi 0, %s90
    %s92 = sphi 0, %s90
    %s93 = sphi 0, %s92
    %s107 = sphi 0, %s93
    %s111 = sphi 0, %s111
    %s113 = sphi 0, %s111
    %s114 = sphi 0, %s113
    %s128 = sphi 0, %s114
    %s136 = sphi 0, %s138
    %s139 = sphi 0, %s136
    %s140 = sphi 0, %s139
    %s156 = sphi 0, %s140
  $region4: #{vgg_forward.5} parent=0 // loop_header_branch
    %13 = sbr.rel (%p11) target = $region8
  $region5: #{vgg_forward.5} parent=0 // loop_body
    %s15 = ssub.s32 %s10, 1
    %s16 = ssub.s32 %s10, 2
    %s23 = sadd.s32 1, %s18
    %p24 = scmp.ge.s32.totalorder %s23, 1
    %s25 = scalar_select %p24, 0, %s23
    %s26 = sadd.s32 1, %s17
    %s27 = scalar_select %p24, %s26, %s17
    %p28 = scmp.ge.s32.totalorder %s27, 2
    %s29 = scalar_select %p28, 0, %s27
    %s30 = ssub.s32 %s17, %s29
    %s31 = ssub.s32 %s18, %s25
    %s32 = sor.u32 %s30, %s31
    %p33 = scmp.eq.s32.totalorder %s32, 0
    %s35 = sadd.s32 %s34, 1
    %s36 = scalar_select %p33, %s34, %s35
    %p39 = pneg %p33
    %p40 = scmp.eq.s32.totalorder %s10, 1
    %p41 = por %p39, %p40
    %p42 = scmp.ne.s32.totalorder %s34, %s37
    %p43 = scmp.eq.s32.totalorder %s10, 0
    %p44 = por %p42, %p43
    %p45 = scmp.ne.s32.totalorder %s34, %s37
    %p46 = scmp.eq.s32.totalorder %s15, 1
    %p47 = por %p45, %p46
    %p48 = scmp.ne.s32.totalorder %s37, %s38
    %p49 = scmp.eq.s32.totalorder %s15, 0
    %p50 = por %p48, %p49
    %p51 = scmp.ne.s32.totalorder %s37, %s38
    %p52 = scmp.eq.s32.totalorder %s16, 1
    %p53 = por %p51, %p52
    %p55 = scmp.ne.s32.totalorder %s38, %s54
    %p56 = scmp.eq.s32.totalorder %s16, 0
    %p57 = por %p55, %p56
    %s58 = sadd.s32 %s18, 1
    %s59 = smul.u32 %s58, 8
    %s60 = sadd.s32 %s25, 1
    %s61 = smul.u32 %s60, 8
    %s62 = ssub.s32 %s17, %s29
    %s63 = ssub.s32 %s59, %s61
    %s64 = sor.u32 %s62, %s63
    %p65 = scmp.eq.s32.totalorder %s64, 0
    %s67 = sadd.s32 %s66, 1
    %s68 = scalar_select %p65, %s66, %s67
    %p71 = pneg %p65
    %p72 = scmp.eq.s32.totalorder %s10, 1
    %p73 = por %p71, %p72
    %p74 = scmp.ne.s32.totalorder %s66, %s69
    %p75 = scmp.eq.s32.totalorder %s10, 0
    %p76 = por %p74, %p75
    %p77 = scmp.ne.s32.totalorder %s66, %s69
    %p78 = scmp.eq.s32.totalorder %s15, 1
    %p79 = por %p77, %p78
    %p80 = scmp.ne.s32.totalorder %s69, %s70
    %p81 = scmp.eq.s32.totalorder %s15, 0
    %p82 = por %p80, %p81
    %p83 = scmp.ne.s32.totalorder %s69, %s70
    %p84 = scmp.eq.s32.totalorder %s16, 1
    %p85 = por %p83, %p84
    %p87 = scmp.ne.s32.totalorder %s70, %s86
    %p88 = scmp.eq.s32.totalorder %s16, 0
    %p89 = por %p87, %p88
    %s91 = sadd.s32 %s90, 1
    %p94 = scmp.eq.s32.totalorder %s10, 1
    %p95 = scmp.ne.s32.totalorder %s90, %s92
    %p96 = scmp.eq.s32.totalorder %s10, 0
    %p97 = por %p95, %p96
    %p98 = scmp.ne.s32.totalorder %s90, %s92
    %p99 = scmp.eq.s32.totalorder %s15, 1
    %p100 = por %p98, %p99
    %p101 = scmp.ne.s32.totalorder %s92, %s93
    %p102 = scmp.eq.s32.totalorder %s15, 0
    %p103 = por %p101, %p102
    %p104 = scmp.ne.s32.totalorder %s92, %s93
    %p105 = scmp.eq.s32.totalorder %s16, 1
    %p106 = por %p104, %p105
    %p108 = scmp.ne.s32.totalorder %s93, %s107
    %p109 = scmp.eq.s32.totalorder %s16, 0
    %p110 = por %p108, %p109
    %s112 = sadd.s32 %s111, 1
    %p115 = scmp.eq.s32.totalorder %s10, 1
    %p116 = scmp.ne.s32.totalorder %s111, %s113
    %p117 = scmp.eq.s32.totalorder %s10, 0
    %p118 = por %p116, %p117
    %p119 = scmp.ne.s32.totalorder %s111, %s113
    %p120 = scmp.eq.s32.totalorder %s15, 1
    %p121 = por %p119, %p120
    %p122 = scmp.ne.s32.totalorder %s113, %s114
    %p123 = scmp.eq.s32.totalorder %s15, 0
    %p124 = por %p122, %p123
    %p125 = scmp.ne.s32.totalorder %s113, %s114
    %p126 = scmp.eq.s32.totalorder %s16, 1
    %p127 = por %p125, %p126
    %p129 = scmp.ne.s32.totalorder %s114, %s128
    %p130 = scmp.eq.s32.totalorder %s16, 0
    %p131 = por %p129, %p130
    %s132 = ssub.s32 %s17, %s29
    %s133 = ssub.s32 %s18, %s25
    %s134 = sor.u32 %s132, %s133
    %p135 = scmp.eq.s32.totalorder %s134, 0
    %s137 = sadd.s32 %s136, 1
    %s138 = scalar_select %p135, %s136, %s137
    %p141 = pneg %p135
    %p142 = scmp.eq.s32.totalorder %s10, 1
    %p143 = por %p141, %p142
    %p144 = scmp.ne.s32.totalorder %s136, %s139
    %p145 = scmp.eq.s32.totalorder %s10, 0
    %p146 = por %p144, %p145
    %p147 = scmp.ne.s32.totalorder %s136, %s139
    %p148 = scmp.eq.s32.totalorder %s15, 1
    %p149 = por %p147, %p148
    %p150 = scmp.ne.s32.totalorder %s139, %s140
    %p151 = scmp.eq.s32.totalorder %s15, 0
    %p152 = por %p150, %p151
    %p153 = scmp.ne.s32.totalorder %s139, %s140
    %p154 = scmp.eq.s32.totalorder %s16, 1
    %p155 = por %p153, %p154
    %p157 = scmp.ne.s32.totalorder %s140, %s156
    %p158 = scmp.eq.s32.totalorder %s16, 0
    %p159 = por %p157, %p158
    %p160 = scmp.le.s32.totalorder 1, %s10
    %p161 = scmp.lt.s32.totalorder %s10, 3
    %p162 = pnand %p160, %p161
    %p163 = pneg %p162
    // Predicated region
    $region9: #{vgg_forward.5} parent=5 // pred_check
      _
    $region10: #{vgg_forward.5} parent=5 // pred_check_branch
      %165 = sbr.rel (%p162) target = $region12
    $region11: #{vgg_forward.5} parent=5 // pred_region
      %s166 = ssub.s32 %s10, 1
      // Predicated region
      $region13: #{vgg_forward.5} parent=11 // pred_check
        %p167 = pneg %p103
      $region14: #{vgg_forward.5} parent=11 // pred_check_branch
        %169 = sbr.rel (%p167) target = $region16
      $region15: #{vgg_forward.5} parent=11 // pred_region
        _
      $region16: #{vgg_forward.5} parent=11 // pred_fallthru
        _
      // Predicated region
      $region17: #{vgg_forward.5} parent=11 // pred_check
        %p170 = pneg %p124
      $region18: #{vgg_forward.5} parent=11 // pred_check_branch
        %172 = sbr.rel (%p170) target = $region20
      $region19: #{vgg_forward.5} parent=11 // pred_region
        _
      $region20: #{vgg_forward.5} parent=11 // pred_fallthru
        _
    $region12: #{vgg_forward.5} parent=5 // pred_fallthru
      _
    %p173 = scmp.lt.s32.totalorder %s10, 2
    // Predicated region
    $region21: #{vgg_forward.5} parent=5 // pred_check
      %p174 = pneg %p173
    $region22: #{vgg_forward.5} parent=5 // pred_check_branch
      %176 = sbr.rel (%p174) target = $region24
    $region23: #{vgg_forward.5} parent=5 // pred_region
      // Predicated region
      $region25: #{vgg_forward.5} parent=23 // pred_check
        %p177 = pneg %p44
      $region26: #{vgg_forward.5} parent=23 // pred_check_branch
        %179 = sbr.rel (%p177) target = $region28
      $region27: #{vgg_forward.5} parent=23 // pred_region
        %s180 = smul.u32 16, %s18
        %s181 = ssub.s32 18, %s180
        %p182 = scmp.lt.s32.totalorder %s181, 16
        %s183 = scalar_select %p182, %s181, 16
        %s184 = smul.u32 4, %s183
        %s185 = smul.u32 %s184, 3
        %p186 = scmp.lt.s32.totalorder %s17, 1
        %s187 = scalar_select %p186, %s17, 1
        %p188 = scmp.lt.s32.totalorder %s180, 17
        %s189 = scalar_select %p188, %s180, 17
        %s190 = smul.addr %s189, 3
        %s191 = smul.addr %s187, 54
        %s192 = sadd.s32 %s190, %s191
        %s193 = smul.addr %s192, 4
        %s194 = scalar_lea.vmem %s0, %s193
        %s195 = smul.u32 16, %s18
        %s196 = ssub.s32 18, %s195
        %p197 = scmp.lt.s32.totalorder %s196, 16
        %s198 = scalar_select %p197, %s196, 16
        %s199 = smul.u32 4, %s198
        %s200 = smul.u32 %s199, 3
      $region28: #{vgg_forward.5} parent=23 // pred_fallthru
        _
      // Predicated region
      $region29: #{vgg_forward.5} parent=23 // pred_check
        %p201 = pneg %p76
      $region30: #{vgg_forward.5} parent=23 // pred_check_branch
        %203 = sbr.rel (%p201) target = $region32
      $region31: #{vgg_forward.5} parent=23 // pred_region
        %s204 = sadd.s32 %s18, 1
        %s205 = smul.u32 %s204, 8
        %s206 = smul.u32 2, %s205
        %p207 = scmp.lt.s32.totalorder %s17, 1
        %s208 = scalar_select %p207, %s17, 1
        %p209 = scmp.lt.s32.totalorder %s206, 17
        %s210 = scalar_select %p209, %s206, 17
        %s211 = smul.addr %s210, 3
        %s212 = smul.addr %s208, 54
        %s213 = sadd.s32 %s211, %s212
        %s214 = smul.addr %s213, 4
        %s215 = scalar_lea.vmem %s1, %s214
        %s216 = sadd.s32 %s18, 1
        %s217 = smul.u32 %s216, 8
        %s218 = smul.u32 2, %s217
      $region32: #{vgg_forward.5} parent=23 // pred_fallthru
        _
    $region24: #{vgg_forward.5} parent=5 // pred_fallthru
      _
    %p219 = scmp.le.s32.totalorder 1, %s10
    %p220 = scmp.lt.s32.totalorder %s10, 3
    %p221 = pnand %p219, %p220
    %p222 = pneg %p221
    // Predicated region
    $region33: #{vgg_forward.5} parent=5 // pred_check
      _
    $region34: #{vgg_forward.5} parent=5 // pred_check_branch
      %224 = sbr.rel (%p221) target = $region36
    $region35: #{vgg_forward.5} parent=5 // pred_region
      %s225 = ssub.s32 %s10, 1
      %s226 = smul.u32 16, %s20
      %s227 = ssub.s32 18, %s226
      %p228 = scmp.lt.s32.totalorder %s227, 16
      %s229 = scalar_select %p228, %s227, 16
      %s230 = smul.u32 4, %s229
      %s231 = smul.u32 %s230, 3
      %p232 = scmp.lt.s32.totalorder %s19, 1
      %s233 = scalar_select %p232, %s19, 1
      %p234 = scmp.lt.s32.totalorder %s226, 17
      %s235 = scalar_select %p234, %s226, 17
      %s236 = smul.addr %s235, 3
      %s237 = smul.addr %s233, 54
      %s238 = sadd.s32 %s236, %s237
      %s239 = smul.addr %s238, 4
      %s240 = scalar_lea.vmem %s0, %s239
      %p241 = pneg %p50
      %p242 = pneg %p47
      %s243 = sadd.s32 %s20, 1
      %s244 = smul.u32 %s243, 8
      %s245 = smul.u32 2, %s244
      %p246 = scmp.lt.s32.totalorder %s19, 1
      %s247 = scalar_select %p246, %s19, 1
      %p248 = scmp.lt.s32.totalorder %s245, 17
      %s249 = scalar_select %p248, %s245, 17
      %s250 = smul.addr %s249, 3
      %s251 = smul.addr %s247, 54
      %s252 = sadd.s32 %s250, %s251
      %s253 = smul.addr %s252, 4
      %s254 = scalar_lea.vmem %s1, %s253
      %p255 = pneg %p82
      %p256 = pneg %p79
      %p257 = pneg %p103
      %p258 = pneg %p100
      %p259 = pneg %p124
      %p260 = pneg %p121
      %p261 = pneg %p152
      %p262 = pneg %p149
      %s263 = smul.u32 32, %s20
      %p264 = scmp.lt.s32.totalorder %s19, 1
      %s265 = scalar_select %p264, %s19, 1
      %p266 = scmp.lt.s32.totalorder %s263, 31
      %s267 = scalar_select %p266, %s263, 31
      %s268 = smul.addr %s265, 32
      %s269 = sadd.s32 %s267, %s268
      %s270 = smul.addr %s269, 4
      %s271 = scalar_lea.vmem %s4, %s270
      %s272 = smul.u32 16, %s20
      %s273 = ssub.s32 18, %s272
      %p274 = scmp.lt.s32.totalorder %s273, 16
      %s275 = scalar_select %p274, %s273, 16
      %s276 = smul.u32 4, %s275
      %s277 = smul.u32 %s276, 3
      %p278 = scmp.lt.s32.totalorder %s19, 1
      %s279 = scalar_select %p278, %s19, 1
      %p280 = scmp.lt.s32.totalorder %s272, 17
      %s281 = scalar_select %p280, %s272, 17
      %s282 = smul.addr %s281, 3
      %s283 = smul.addr %s279, 54
      %s284 = sadd.s32 %s282, %s283
      %s285 = smul.addr %s284, 4
      %s286 = scalar_lea.vmem %s0, %s285
      %s287 = smul.u32 16, %s20
      %s288 = ssub.s32 18, %s287
      %p289 = scmp.lt.s32.totalorder %s288, 16
      %s290 = scalar_select %p289, %s288, 16
      %s291 = smul.u32 4, %s290
      %s292 = smul.u32 %s291, 3
      %s293 = sadd.s32 %s20, 1
      %s294 = smul.u32 %s293, 8
      %s295 = smul.u32 2, %s294
      %p296 = scmp.lt.s32.totalorder %s19, 1
      %s297 = scalar_select %p296, %s19, 1
      %p298 = scmp.lt.s32.totalorder %s295, 17
      %s299 = scalar_select %p298, %s295, 17
      %s300 = smul.addr %s299, 3
      %s301 = smul.addr %s297, 54
      %s302 = sadd.s32 %s300, %s301
      %s303 = smul.addr %s302, 4
      %s304 = scalar_lea.vmem %s1, %s303
      %s305 = sadd.s32 %s20, 1
      %s306 = smul.u32 %s305, 8
      %s307 = smul.u32 2, %s306
      %s308 = smul.u32 32, %s20
      %p309 = scmp.lt.s32.totalorder %s19, 1
      %s310 = scalar_select %p309, %s19, 1
      %p311 = scmp.lt.s32.totalorder %s308, 31
      %s312 = scalar_select %p311, %s308, 31
      %s313 = smul.addr %s310, 32
      %s314 = sadd.s32 %s312, %s313
      %s315 = smul.addr %s314, 4
      %s316 = scalar_lea.vmem %s4, %s315
      %s317 = smul.u32 32, %s20
      %v319 = vld [vmem:[%s286] sm:$0xf]
      %v320 = vld [vmem:[%s286 + $0x4] sm:$0xf]
      %v321 = vld [vmem:[%s286 + $0xc] sm:$0xf]
      %v322 = vld [vmem:[%s286 + $0x10] sm:$0xf]
      %v323 = vld [vmem:[%s286 + $0x18] sm:$0xf]
      %v324 = vld [vmem:[%s286 + $0x1c] sm:$0xf]
      %v325 = vld [vmem:[%s286 + $0x24] sm:$0xf]
      %v326 = vld [vmem:[%s286 + $0x28] sm:$0xf]
      %v327 = vld [vmem:[%s286 + $0x30] sm:$0xf]
      %v328 = vld [vmem:[%s286 + $0x34] sm:$0xf]
      %v329 = vld [vmem:[%s286 + $0x3c] sm:$0xf]
      %v330 = vld [vmem:[%s286 + $0x40] sm:$0xf]
      %v331 = vld [vmem:[%s286 + $0x48] sm:$0xf]
      %v332 = vld [vmem:[%s286 + $0x4c] sm:$0xf]
      %v333 = vld [vmem:[%s286 + $0x54] sm:$0xf]
      %v334 = vld [vmem:[%s286 + $0x58] sm:$0xf]
      %v335 = vld [vmem:[%s286 + $0x60] sm:$0xf]
      %v336 = vld [vmem:[%s286 + $0x64] sm:$0xf]
      %v337 = vld [vmem:[%s286 + $0x6c] sm:$0xf]
      %v338 = vld [vmem:[%s286 + $0x70] sm:$0xf]
      %v339 = vld [vmem:[%s286 + $0x78] sm:$0xf]
      %v340 = vld [vmem:[%s286 + $0x7c] sm:$0xf]
      %v341 = vld [vmem:[%s286 + $0x84] sm:$0xf]
      %v342 = vld [vmem:[%s286 + $0x88] sm:$0xf]
      %v343 = vld [vmem:[%s286 + $0x90] sm:$0xf]
      %v344 = vld [vmem:[%s286 + $0x94] sm:$0xf]
      %v345 = vld [vmem:[%s286 + $0x9c] sm:$0xf]
      %v346 = vld [vmem:[%s286 + $0xa0] sm:$0xf]
      %v347 = vld [vmem:[%s286 + $0xa8] sm:$0xf]
      %v348 = vld [vmem:[%s286 + $0xac] sm:$0xf]
      %v349 = vld [vmem:[%s286 + $0xb4] sm:$0xf]
      %v350 = vld [vmem:[%s286 + $0xb8] sm:$0xf]
      %vm351 = vcmask 60416
      %352 = vst.msk [vmem:[#allocation2] sm:$0xf] %vm351, %v319
      %353 = vst.msk [vmem:[#allocation2 + $0x4] sm:$0xf] %vm351, %v320
      %354 = vst.msk [vmem:[#allocation2 + $0x8] sm:$0xf] %vm351, %v321
      %355 = vst.msk [vmem:[#allocation2 + $0xc] sm:$0xf] %vm351, %v322
      %356 = vst.msk [vmem:[#allocation2 + $0x10] sm:$0xf] %vm351, %v323
      %357 = vst.msk [vmem:[#allocation2 + $0x14] sm:$0xf] %vm351, %v324
      %358 = vst.msk [vmem:[#allocation2 + $0x18] sm:$0xf] %vm351, %v325
      %359 = vst.msk [vmem:[#allocation2 + $0x1c] sm:$0xf] %vm351, %v326
      %360 = vst.msk [vmem:[#allocation2 + $0x20] sm:$0xf] %vm351, %v327
      %361 = vst.msk [vmem:[#allocation2 + $0x24] sm:$0xf] %vm351, %v328
      %362 = vst.msk [vmem:[#allocation2 + $0x28] sm:$0xf] %vm351, %v329
      %363 = vst.msk [vmem:[#allocation2 + $0x2c] sm:$0xf] %vm351, %v330
      %364 = vst.msk [vmem:[#allocation2 + $0x30] sm:$0xf] %vm351, %v331
      %365 = vst.msk [vmem:[#allocation2 + $0x34] sm:$0xf] %vm351, %v332
      %366 = vst.msk [vmem:[#allocation2 + $0x38] sm:$0xf] %vm351, %v333
      %367 = vst.msk [vmem:[#allocation2 + $0x3c] sm:$0xf] %vm351, %v334
      %368 = vst.msk [vmem:[#allocation2 + $0x40] sm:$0xf] %vm351, %v335
      %369 = vst.msk [vmem:[#allocation2 + $0x44] sm:$0xf] %vm351, %v336
      %370 = vst.msk [vmem:[#allocation2 + $0x48] sm:$0xf] %vm351, %v337
      %371 = vst.msk [vmem:[#allocation2 + $0x4c] sm:$0xf] %vm351, %v338
      %372 = vst.msk [vmem:[#allocation2 + $0x50] sm:$0xf] %vm351, %v339
      %373 = vst.msk [vmem:[#allocation2 + $0x54] sm:$0xf] %vm351, %v340
      %374 = vst.msk [vmem:[#allocation2 + $0x58] sm:$0xf] %vm351, %v341
      %375 = vst.msk [vmem:[#allocation2 + $0x5c] sm:$0xf] %vm351, %v342
      %376 = vst.msk [vmem:[#allocation2 + $0x60] sm:$0xf] %vm351, %v343
      %377 = vst.msk [vmem:[#allocation2 + $0x64] sm:$0xf] %vm351, %v344
      %378 = vst.msk [vmem:[#allocation2 + $0x68] sm:$0xf] %vm351, %v345
      %379 = vst.msk [vmem:[#allocation2 + $0x6c] sm:$0xf] %vm351, %v346
      %380 = vst.msk [vmem:[#allocation2 + $0x70] sm:$0xf] %vm351, %v347
      %381 = vst.msk [vmem:[#allocation2 + $0x74] sm:$0xf] %vm351, %v348
      %382 = vst.msk [vmem:[#allocation2 + $0x78] sm:$0xf] %vm351, %v349
      %383 = vst.msk [vmem:[#allocation2 + $0x7c] sm:$0xf] %vm351, %v350
      %v384 = vld [vmem:[%s304] sm:$0xf]
      %v385 = vld [vmem:[%s304 + $0x4] sm:$0xf]
      %v386 = vld [vmem:[%s304 + $0xc] sm:$0xf]
      %v387 = vld [vmem:[%s304 + $0x10] sm:$0xf]
      %s388 = scalar_lea.vmem [#allocation2], 128
      %389 = vst.msk [vmem:[%s388] sm:$0xf] %vm351, %v384
      %390 = vst.msk [vmem:[%s388 + $0x4] sm:$0xf] %vm351, %v385
      %391 = vst.msk [vmem:[%s388 + $0x8] sm:$0xf] %vm351, %v386
      %392 = vst.msk [vmem:[%s388 + $0xc] sm:$0xf] %vm351, %v387
      %v393 = vld [vmem:[%s286] sm:$0xf]
      %v394 = vld [vmem:[%s286 + $0x4] sm:$0xf]
      %v395 = vld [vmem:[%s286 + $0x8] sm:$0x1]
      %v396 = vld [vmem:[%s286 + $0xc] sm:$0xf]
      %v397 = vld [vmem:[%s286 + $0x10] sm:$0xf]
      %v398 = vld [vmem:[%s286 + $0x14] sm:$0x1]
      %v399 = vld [vmem:[%s286 + $0x18] sm:$0xf]
      %v400 = vld [vmem:[%s286 + $0x1c] sm:$0xf]
      %v401 = vld [vmem:[%s286 + $0x20] sm:$0x1]
      %v402 = vld [vmem:[%s286 + $0x24] sm:$0xf]
      %v403 = vld [vmem:[%s286 + $0x28] sm:$0xf]
      %v404 = vld [vmem:[%s286 + $0x2c] sm:$0x1]
      %v405 = vld [vmem:[%s286 + $0x30] sm:$0xf]
      %v406 = vld [vmem:[%s286 + $0x34] sm:$0xf]
      %v407 = vld [vmem:[%s286 + $0x38] sm:$0x1]
      %v408 = vld [vmem:[%s286 + $0x3c] sm:$0xf]
      %v409 = vld [vmem:[%s286 + $0x40] sm:$0xf]
      %v410 = vld [vmem:[%s286 + $0x44] sm:$0x1]
      %v411 = vld [vmem:[%s286 + $0x48] sm:$0xf]
      %v412 = vld [vmem:[%s286 + $0x4c] sm:$0xf]
      %v413 = vld [vmem:[%s286 + $0x50] sm:$0x1]
      %v414 = vld [vmem:[%s286 + $0x54] sm:$0xf]
      %v415 = vld [vmem:[%s286 + $0x58] sm:$0xf]
      %v416 = vld [vmem:[%s286 + $0x5c] sm:$0x1]
      %v417 = vld [vmem:[%s286 + $0x60] sm:$0xf]
      %v418 = vld [vmem:[%s286 + $0x64] sm:$0xf]
      %v419 = vld [vmem:[%s286 + $0x68] sm:$0x1]
      %v420 = vld [vmem:[%s286 + $0x6c] sm:$0xf]
      %v421 = vld [vmem:[%s286 + $0x70] sm:$0xf]
      %v422 = vld [vmem:[%s286 + $0x74] sm:$0x1]
      %v423 = vld [vmem:[%s286 + $0x78] sm:$0xf]
      %v424 = vld [vmem:[%s286 + $0x7c] sm:$0xf]
      %v425 = vld [vmem:[%s286 + $0x80] sm:$0x1]
      %v426 = vld [vmem:[%s286 + $0x84] sm:$0xf]
      %v427 = vld [vmem:[%s286 + $0x88] sm:$0xf]
      %v428 = vld [vmem:[%s286 + $0x8c] sm:$0x1]
      %v429 = vld [vmem:[%s286 + $0x90] sm:$0xf]
      %v430 = vld [vmem:[%s286 + $0x94] sm:$0xf]
      %v431 = vld [vmem:[%s286 + $0x98] sm:$0x1]
      %v432 = vld [vmem:[%s286 + $0x9c] sm:$0xf]
      %v433 = vld [vmem:[%s286 + $0xa0] sm:$0xf]
      %v434 = vld [vmem:[%s286 + $0xa4] sm:$0x1]
      %v435 = vld [vmem:[%s286 + $0xa8] sm:$0xf]
      %v436 = vld [vmem:[%s286 + $0xac] sm:$0xf]
      %v437 = vld [vmem:[%s286 + $0xb0] sm:$0x1]
      %v438 = vld [vmem:[%s286 + $0xb4] sm:$0xf]
      %v439 = vld [vmem:[%s286 + $0xb8] sm:$0xf]
      %v440 = vld [vmem:[%s286 + $0xbc] sm:$0x1]
      %vm441 = vsmask.f32 3328
      %vm442 = vsmask.f32 7440
      %vm443 = vmor %vm441, %vm442
      %v445 = vshrl.u32 %v393, 16
      %v447 = vrot.slane %v445, 4
      %v448 = vshll.u32 %v393, 16
      %v450 = vrot.slane %v448, 5
      %v451 = vor.u32 %v447, %v450
      %v452 = vrot.slane %v451, 4
      %v454 = vshll.u32 %v394, 16
      %v456 = vrot.slane %v454, 5
      %v457 = vsel %vm443, %v452, %v456
      %v458 = vshrl.u32 %v394, 16
      %v460 = vrot.slane %v458, 4
      %v461 = vor.u32 %v460, %v456
      %v462 = vrot.slane %v461, 4
      %v464 = vshll.u32 %v395, 16
      %v466 = vrot.slane %v464, 5
      %v467 = vsel %vm443, %v462, %v466
      %v469 = vshrl.u32 %v396, 16
      %v471 = vrot.slane %v469, 4
      %v472 = vshll.u32 %v396, 16
      %v474 = vrot.slane %v472, 5
      %v475 = vor.u32 %v471, %v474
      %v476 = vrot.slane %v475, 4
      %v478 = vshll.u32 %v397, 16
      %v480 = vrot.slane %v478, 5
      %v481 = vsel %vm443, %v476, %v480
      %v482 = vshrl.u32 %v397, 16
      %v484 = vrot.slane %v482, 4
      %v485 = vor.u32 %v484, %v480
      %v486 = vrot.slane %v485, 4
      %v488 = vshll.u32 %v398, 16
      %v490 = vrot.slane %v488, 5
      %v491 = vsel %vm443, %v486, %v490
      %v493 = vshrl.u32 %v399, 16
      %v495 = vrot.slane %v493, 4
      %v496 = vshll.u32 %v399, 16
      %v498 = vrot.slane %v496, 5
      %v499 = vor.u32 %v495, %v498
      %v500 = vrot.slane %v499, 4
      %v502 = vshll.u32 %v400, 16
      %v504 = vrot.slane %v502, 5
      %v505 = vsel %vm443, %v500, %v504
      %v506 = vshrl.u32 %v400, 16
      %v508 = vrot.slane %v506, 4
      %v509 = vor.u32 %v508, %v504
      %v510 = vrot.slane %v509, 4
      %v512 = vshll.u32 %v401, 16
      %v514 = vrot.slane %v512, 5
      %v515 = vsel %vm443, %v510, %v514
      %v517 = vshrl.u32 %v402, 16
      %v519 = vrot.slane %v517, 4
      %v520 = vshll.u32 %v402, 16
      %v522 = vrot.slane %v520, 5
      %v523 = vor.u32 %v519, %v522
      %v524 = vrot.slane %v523, 4
      %v526 = vshll.u32 %v403, 16
      %v528 = vrot.slane %v526, 5
      %v529 = vsel %vm443, %v524, %v528
      %v530 = vshrl.u32 %v403, 16
      %v532 = vrot.slane %v530, 4
      %v533 = vor.u32 %v532, %v528
      %v534 = vrot.slane %v533, 4
      %v536 = vshll.u32 %v404, 16
      %v538 = vrot.slane %v536, 5
      %v539 = vsel %vm443, %v534, %v538
      %v541 = vshrl.u32 %v405, 16
      %v543 = vrot.slane %v541, 4
      %v544 = vshll.u32 %v405, 16
      %v546 = vrot.slane %v544, 5
      %v547 = vor.u32 %v543, %v546
      %v548 = vrot.slane %v547, 4
      %v550 = vshll.u32 %v406, 16
      %v552 = vrot.slane %v550, 5
      %v553 = vsel %vm443, %v548, %v552
      %v554 = vshrl.u32 %v406, 16
      %v556 = vrot.slane %v554, 4
      %v557 = vor.u32 %v556, %v552
      %v558 = vrot.slane %v557, 4
      %v560 = vshll.u32 %v407, 16
      %v562 = vrot.slane %v560, 5
      %v563 = vsel %vm443, %v558, %v562
      %v565 = vshrl.u32 %v408, 16
      %v567 = vrot.slane %v565, 4
      %v568 = vshll.u32 %v408, 16
      %v570 = vrot.slane %v568, 5
      %v571 = vor.u32 %v567, %v570
      %v572 = vrot.slane %v571, 4
      %v574 = vshll.u32 %v409, 16
      %v576 = vrot.slane %v574, 5
      %v577 = vsel %vm443, %v572, %v576
      %v578 = vshrl.u32 %v409, 16
      %v580 = vrot.slane %v578, 4
      %v581 = vor.u32 %v580, %v576
      %v582 = vrot.slane %v581, 4
      %v584 = vshll.u32 %v410, 16
      %v586 = vrot.slane %v584, 5
      %v587 = vsel %vm443, %v582, %v586
      %v589 = vshrl.u32 %v411, 16
      %v591 = vrot.slane %v589, 4
      %v592 = vshll.u32 %v411, 16
      %v594 = vrot.slane %v592, 5
      %v595 = vor.u32 %v591, %v594
      %v596 = vrot.slane %v595, 4
      %v598 = vshll.u32 %v412, 16
      %v600 = vrot.slane %v598, 5
      %v601 = vsel %vm443, %v596, %v600
      %v602 = vshrl.u32 %v412, 16
      %v604 = vrot.slane %v602, 4
      %v605 = vor.u32 %v604, %v600
      %v606 = vrot.slane %v605, 4
      %v608 = vshll.u32 %v413, 16
      %v610 = vrot.slane %v608, 5
      %v611 = vsel %vm443, %v606, %v610
      %v613 = vshrl.u32 %v414, 16
      %v615 = vrot.slane %v613, 4
      %v616 = vshll.u32 %v414, 16
      %v618 = vrot.slane %v616, 5
      %v619 = vor.u32 %v615, %v618
      %v620 = vrot.slane %v619, 4
      %v622 = vshll.u32 %v415, 16
      %v624 = vrot.slane %v622, 5
      %v625 = vsel %vm443, %v620, %v624
      %v626 = vshrl.u32 %v415, 16
      %v628 = vrot.slane %v626, 4
      %v629 = vor.u32 %v628, %v624
      %v630 = vrot.slane %v629, 4
      %v632 = vshll.u32 %v416, 16
      %v634 = vrot.slane %v632, 5
      %v635 = vsel %vm443, %v630, %v634
      %v637 = vshrl.u32 %v417, 16
      %v639 = vrot.slane %v637, 4
      %v640 = vshll.u32 %v417, 16
      %v642 = vrot.slane %v640, 5
      %v643 = vor.u32 %v639, %v642
      %v644 = vrot.slane %v643, 4
      %v646 = vshll.u32 %v418, 16
      %v648 = vrot.slane %v646, 5
      %v649 = vsel %vm443, %v644, %v648
      %v650 = vshrl.u32 %v418, 16
      %v652 = vrot.slane %v650, 4
      %v653 = vor.u32 %v652, %v648
      %v654 = vrot.slane %v653, 4
      %v656 = vshll.u32 %v419, 16
      %v658 = vrot.slane %v656, 5
      %v659 = vsel %vm443, %v654, %v658
      %v661 = vshrl.u32 %v420, 16
      %v663 = vrot.slane %v661, 4
      %v664 = vshll.u32 %v420, 16
      %v666 = vrot.slane %v664, 5
      %v667 = vor.u32 %v663, %v666
      %v668 = vrot.slane %v667, 4
      %v670 = vshll.u32 %v421, 16
      %v672 = vrot.slane %v670, 5
      %v673 = vsel %vm443, %v668, %v672
      %v674 = vshrl.u32 %v421, 16
      %v676 = vrot.slane %v674, 4
      %v677 = vor.u32 %v676, %v672
      %v678 = vrot.slane %v677, 4
      %v680 = vshll.u32 %v422, 16
      %v682 = vrot.slane %v680, 5
      %v683 = vsel %vm443, %v678, %v682
      %v685 = vshrl.u32 %v423, 16
      %v687 = vrot.slane %v685, 4
      %v688 = vshll.u32 %v423, 16
      %v690 = vrot.slane %v688, 5
      %v691 = vor.u32 %v687, %v690
      %v692 = vrot.slane %v691, 4
      %v694 = vshll.u32 %v424, 16
      %v696 = vrot.slane %v694, 5
      %v697 = vsel %vm443, %v692, %v696
      %v698 = vshrl.u32 %v424, 16
      %v700 = vrot.slane %v698, 4
      %v701 = vor.u32 %v700, %v696
      %v702 = vrot.slane %v701, 4
      %v704 = vshll.u32 %v425, 16
      %v706 = vrot.slane %v704, 5
      %v707 = vsel %vm443, %v702, %v706
      %v709 = vshrl.u32 %v426, 16
      %v711 = vrot.slane %v709, 4
      %v712 = vshll.u32 %v426, 16
      %v714 = vrot.slane %v712, 5
      %v715 = vor.u32 %v711, %v714
      %v716 = vrot.slane %v715, 4
      %v718 = vshll.u32 %v427, 16
      %v720 = vrot.slane %v718, 5
      %v721 = vsel %vm443, %v716, %v720
      %v722 = vshrl.u32 %v427, 16
      %v724 = vrot.slane %v722, 4
      %v725 = vor.u32 %v724, %v720
      %v726 = vrot.slane %v725, 4
      %v728 = vshll.u32 %v428, 16
      %v730 = vrot.slane %v728, 5
      %v731 = vsel %vm443, %v726, %v730
      %v733 = vshrl.u32 %v429, 16
      %v735 = vrot.slane %v733, 4
      %v736 = vshll.u32 %v429, 16
      %v738 = vrot.slane %v736, 5
      %v739 = vor.u32 %v735, %v738
      %v740 = vrot.slane %v739, 4
      %v742 = vshll.u32 %v430, 16
      %v744 = vrot.slane %v742, 5
      %v745 = vsel %vm443, %v740, %v744
      %v746 = vshrl.u32 %v430, 16
      %v748 = vrot.slane %v746, 4
      %v749 = vor.u32 %v748, %v744
      %v750 = vrot.slane %v749, 4
      %v752 = vshll.u32 %v431, 16
      %v754 = vrot.slane %v752, 5
      %v755 = vsel %vm443, %v750, %v754
      %v757 = vshrl.u32 %v432, 16
      %v759 = vrot.slane %v757, 4
      %v760 = vshll.u32 %v432, 16
      %v762 = vrot.slane %v760, 5
      %v763 = vor.u32 %v759, %v762
      %v764 = vrot.slane %v763, 4
      %v766 = vshll.u32 %v433, 16
      %v768 = vrot.slane %v766, 5
      %v769 = vsel %vm443, %v764, %v768
      %v770 = vshrl.u32 %v433, 16
      %v772 = vrot.slane %v770, 4
      %v773 = vor.u32 %v772, %v768
      %v774 = vrot.slane %v773, 4
      %v776 = vshll.u32 %v434, 16
      %v778 = vrot.slane %v776, 5
      %v779 = vsel %vm443, %v774, %v778
      %v781 = vshrl.u32 %v435, 16
      %v783 = vrot.slane %v781, 4
      %v784 = vshll.u32 %v435, 16
      %v786 = vrot.slane %v784, 5
      %v787 = vor.u32 %v783, %v786
      %v788 = vrot.slane %v787, 4
      %v790 = vshll.u32 %v436, 16
      %v792 = vrot.slane %v790, 5
      %v793 = vsel %vm443, %v788, %v792
      %v794 = vshrl.u32 %v436, 16
      %v796 = vrot.slane %v794, 4
      %v797 = vor.u32 %v796, %v792
      %v798 = vrot.slane %v797, 4
      %v800 = vshll.u32 %v437, 16
      %v802 = vrot.slane %v800, 5
      %v803 = vsel %vm443, %v798, %v802
      %v805 = vshrl.u32 %v438, 16
      %v807 = vrot.slane %v805, 4
      %v808 = vshll.u32 %v438, 16
      %v810 = vrot.slane %v808, 5
      %v811 = vor.u32 %v807, %v810
      %v812 = vrot.slane %v811, 4
      %v814 = vshll.u32 %v439, 16
      %v816 = vrot.slane %v814, 5
      %v817 = vsel %vm443, %v812, %v816
      %v818 = vshrl.u32 %v439, 16
      %v820 = vrot.slane %v818, 4
      %v821 = vor.u32 %v820, %v816
      %v822 = vrot.slane %v821, 4
      %v824 = vshll.u32 %v440, 16
      %v826 = vrot.slane %v824, 5
      %v827 = vsel %vm443, %v822, %v826
      %828 = vrot.lane.b32.xlu0 %v457, 8
      %v829 = vpop.permute.xlu0 %828
      %830 = vrot.lane.b32.xlu0 %v467, 8
      %v831 = vpop.permute.xlu0 %830
      %832 = vrot.lane.b32.xlu0 %v481, 8
      %v833 = vpop.permute.xlu0 %832
      %834 = vrot.lane.b32.xlu0 %v491, 8
      %v835 = vpop.permute.xlu0 %834
      %836 = vrot.lane.b32.xlu0 %v505, 8
      %v837 = vpop.permute.xlu0 %836
      %838 = vrot.lane.b32.xlu0 %v515, 8
      %v839 = vpop.permute.xlu0 %838
      %840 = vrot.lane.b32.xlu0 %v529, 8
      %v841 = vpop.permute.xlu0 %840
      %842 = vrot.lane.b32.xlu0 %v539, 8
      %v843 = vpop.permute.xlu0 %842
      %844 = vrot.lane.b32.xlu0 %v553, 8
      %v845 = vpop.permute.xlu0 %844
      %846 = vrot.lane.b32.xlu0 %v563, 8
      %v847 = vpop.permute.xlu0 %846
      %848 = vrot.lane.b32.xlu0 %v577, 8
      %v849 = vpop.permute.xlu0 %848
      %850 = vrot.lane.b32.xlu0 %v587, 8
      %v851 = vpop.permute.xlu0 %850
      %852 = vrot.lane.b32.xlu0 %v601, 8
      %v853 = vpop.permute.xlu0 %852
      %854 = vrot.lane.b32.xlu0 %v611, 8
      %v855 = vpop.permute.xlu0 %854
      %856 = vrot.lane.b32.xlu0 %v625, 8
      %v857 = vpop.permute.xlu0 %856
      %858 = vrot.lane.b32.xlu0 %v635, 8
      %v859 = vpop.permute.xlu0 %858
      %860 = vrot.lane.b32.xlu0 %v649, 8
      %v861 = vpop.permute.xlu0 %860
      %862 = vrot.lane.b32.xlu0 %v659, 8
      %v863 = vpop.permute.xlu0 %862
      %864 = vrot.lane.b32.xlu0 %v673, 8
      %v865 = vpop.permute.xlu0 %864
      %866 = vrot.lane.b32.xlu0 %v683, 8
      %v867 = vpop.permute.xlu0 %866
      %868 = vrot.lane.b32.xlu0 %v697, 8
      %v869 = vpop.permute.xlu0 %868
      %870 = vrot.lane.b32.xlu0 %v707, 8
      %v871 = vpop.permute.xlu0 %870
      %872 = vrot.lane.b32.xlu0 %v721, 8
      %v873 = vpop.permute.xlu0 %872
      %874 = vrot.lane.b32.xlu0 %v731, 8
      %v875 = vpop.permute.xlu0 %874
      %876 = vrot.lane.b32.xlu0 %v745, 8
      %v877 = vpop.permute.xlu0 %876
      %878 = vrot.lane.b32.xlu0 %v755, 8
      %v879 = vpop.permute.xlu0 %878
      %880 = vrot.lane.b32.xlu0 %v769, 8
      %v881 = vpop.permute.xlu0 %880
      %882 = vrot.lane.b32.xlu0 %v779, 8
      %v883 = vpop.permute.xlu0 %882
      %884 = vrot.lane.b32.xlu0 %v793, 8
      %v885 = vpop.permute.xlu0 %884
      %886 = vrot.lane.b32.xlu0 %v803, 8
      %v887 = vpop.permute.xlu0 %886
      %888 = vrot.lane.b32.xlu0 %v817, 8
      %v889 = vpop.permute.xlu0 %888
      %890 = vrot.lane.b32.xlu0 %v827, 8
      %v891 = vpop.permute.xlu0 %890
      %vm924 = vcmask 126016
      %925 = vst.msk [vmem:[#allocation2] sm:$0xf] %vm924, %v829
      %926 = vst.msk [vmem:[#allocation2 + $0x4] sm:$0xf] %vm924, %v831
      %927 = vst.msk [vmem:[#allocation2 + $0x8] sm:$0xf] %vm924, %v833
      %928 = vst.msk [vmem:[#allocation2 + $0xc] sm:$0xf] %vm924, %v835
      %929 = vst.msk [vmem:[#allocation2 + $0x10] sm:$0xf] %vm924, %v837
      %930 = vst.msk [vmem:[#allocation2 + $0x14] sm:$0xf] %vm924, %v839
      %931 = vst.msk [vmem:[#allocation2 + $0x18] sm:$0xf] %vm924, %v841
      %932 = vst.msk [vmem:[#allocation2 + $0x1c] sm:$0xf] %vm924, %v843
      %933 = vst.msk [vmem:[#allocation2 + $0x20] sm:$0xf] %vm924, %v845
      %934 = vst.msk [vmem:[#allocation2 + $0x24] sm:$0xf] %vm924, %v847
      %935 = vst.msk [vmem:[#allocation2 + $0x28] sm:$0xf] %vm924, %v849
      %936 = vst.msk [vmem:[#allocation2 + $0x2c] sm:$0xf] %vm924, %v851
      %937 = vst.msk [vmem:[#allocation2 + $0x30] sm:$0xf] %vm924, %v853
      %938 = vst.msk [vmem:[#allocation2 + $0x34] sm:$0xf] %vm924, %v855
      %939 = vst.msk [vmem:[#allocation2 + $0x38] sm:$0xf] %vm924, %v857
      %940 = vst.msk [vmem:[#allocation2 + $0x3c] sm:$0xf] %vm924, %v859
      %941 = vst.msk [vmem:[#allocation2 + $0x40] sm:$0xf] %vm924, %v861
      %942 = vst.msk [vmem:[#allocation2 + $0x44] sm:$0xf] %vm924, %v863
      %943 = vst.msk [vmem:[#allocation2 + $0x48] sm:$0xf] %vm924, %v865
      %944 = vst.msk [vmem:[#allocation2 + $0x4c] sm:$0xf] %vm924, %v867
      %945 = vst.msk [vmem:[#allocation2 + $0x50] sm:$0xf] %vm924, %v869
      %946 = vst.msk [vmem:[#allocation2 + $0x54] sm:$0xf] %vm924, %v871
      %947 = vst.msk [vmem:[#allocation2 + $0x58] sm:$0xf] %vm924, %v873
      %948 = vst.msk [vmem:[#allocation2 + $0x5c] sm:$0xf] %vm924, %v875
      %949 = vst.msk [vmem:[#allocation2 + $0x60] sm:$0xf] %vm924, %v877
      %950 = vst.msk [vmem:[#allocation2 + $0x64] sm:$0xf] %vm924, %v879
      %951 = vst.msk [vmem:[#allocation2 + $0x68] sm:$0xf] %vm924, %v881
      %952 = vst.msk [vmem:[#allocation2 + $0x6c] sm:$0xf] %vm924, %v883
      %953 = vst.msk [vmem:[#allocation2 + $0x70] sm:$0xf] %vm924, %v885
      %954 = vst.msk [vmem:[#allocation2 + $0x74] sm:$0xf] %vm924, %v887
      %955 = vst.msk [vmem:[#allocation2 + $0x78] sm:$0xf] %vm924, %v889
      %956 = vst.msk [vmem:[#allocation2 + $0x7c] sm:$0xf] %vm924, %v891
      %v957 = vld [vmem:[%s304] sm:$0xf]
      %v958 = vld [vmem:[%s304 + $0x4] sm:$0xf]
      %v959 = vld [vmem:[%s304 + $0x8] sm:$0x1]
      %v960 = vld [vmem:[%s304 + $0xc] sm:$0xf]
      %v961 = vld [vmem:[%s304 + $0x10] sm:$0xf]
      %v962 = vld [vmem:[%s304 + $0x14] sm:$0x1]
      %v964 = vshrl.u32 %v957, 16
      %v966 = vrot.slane %v964, 4
      %v967 = vshll.u32 %v957, 16
      %v969 = vrot.slane %v967, 5
      %v970 = vor.u32 %v966, %v969
      %v971 = vrot.slane %v970, 4
      %v973 = vshll.u32 %v958, 16
      %v975 = vrot.slane %v973, 5
      %v976 = vsel %vm443, %v971, %v975
      %v977 = vshrl.u32 %v958, 16
      %v979 = vrot.slane %v977, 4
      %v980 = vor.u32 %v979, %v975
      %v981 = vrot.slane %v980, 4
      %v983 = vshll.u32 %v959, 16
      %v985 = vrot.slane %v983, 5
      %v986 = vsel %vm443, %v981, %v985
      %v988 = vshrl.u32 %v960, 16
      %v990 = vrot.slane %v988, 4
      %v991 = vshll.u32 %v960, 16
      %v993 = vrot.slane %v991, 5
      %v994 = vor.u32 %v990, %v993
      %v995 = vrot.slane %v994, 4
      %v997 = vshll.u32 %v961, 16
      %v999 = vrot.slane %v997, 5
      %v1000 = vsel %vm443, %v995, %v999
      %v1001 = vshrl.u32 %v961, 16
      %v1003 = vrot.slane %v1001, 4
      %v1004 = vor.u32 %v1003, %v999
      %v1005 = vrot.slane %v1004, 4
      %v1007 = vshll.u32 %v962, 16
      %v1009 = vrot.slane %v1007, 5
      %v1010 = vsel %vm443, %v1005, %v1009
      %1011 = vrot.lane.b32.xlu0 %v976, 8
      %v1012 = vpop.permute.xlu0 %1011
      %1013 = vrot.lane.b32.xlu0 %v986, 8
      %v1014 = vpop.permute.xlu0 %1013
      %1015 = vrot.lane.b32.xlu0 %v1000, 8
      %v1016 = vpop.permute.xlu0 %1015
      %1017 = vrot.lane.b32.xlu0 %v1010, 8
      %v1018 = vpop.permute.xlu0 %1017
      %1023 = vst.msk [vmem:[%s388] sm:$0xf] %vm924, %v1012
      %1024 = vst.msk [vmem:[%s388 + $0x4] sm:$0xf] %vm924, %v1014
      %1025 = vst.msk [vmem:[%s388 + $0x8] sm:$0xf] %vm924, %v1016
      %1026 = vst.msk [vmem:[%s388 + $0xc] sm:$0xf] %vm924, %v1018
      %v1027 = vld [vmem:[%s286] sm:$0xe]
      %v1028 = vld [vmem:[%s286 + $0x4] sm:$0xf]
      %v1029 = vld [vmem:[%s286 + $0x8] sm:$0x1]
      %v1030 = vld [vmem:[%s286 + $0xc] sm:$0xe]
      %v1031 = vld [vmem:[%s286 + $0x10] sm:$0xf]
      %v1032 = vld [vmem:[%s286 + $0x14] sm:$0x1]
      %v1033 = vld [vmem:[%s286 + $0x18] sm:$0xe]
      %v1034 = vld [vmem:[%s286 + $0x1c] sm:$0xf]
      %v1035 = vld [vmem:[%s286 + $0x20] sm:$0x1]
      %v1036 = vld [vmem:[%s286 + $0x24] sm:$0xe]
      %v1037 = vld [vmem:[%s286 + $0x28] sm:$0xf]
      %v1038 = vld [vmem:[%s286 + $0x2c] sm:$0x1]
      %v1039 = vld [vmem:[%s286 + $0x30] sm:$0xe]
      %v1040 = vld [vmem:[%s286 + $0x34] sm:$0xf]
      %v1041 = vld [vmem:[%s286 + $0x38] sm:$0x1]
      %v1042 = vld [vmem:[%s286 + $0x3c] sm:$0xe]
      %v1043 = vld [vmem:[%s286 + $0x40] sm:$0xf]
      %v1044 = vld [vmem:[%s286 + $0x44] sm:$0x1]
      %v1045 = vld [vmem:[%s286 + $0x48] sm:$0xe]
      %v1046 = vld [vmem:[%s286 + $0x4c] sm:$0xf]
      %v1047 = vld [vmem:[%s286 + $0x50] sm:$0x1]
      %v1048 = vld [vmem:[%s286 + $0x54] sm:$0xe]
      %v1049 = vld [vmem:[%s286 + $0x58] sm:$0xf]
      %v1050 = vld [vmem:[%s286 + $0x5c] sm:$0x1]
      %v1051 = vld [vmem:[%s286 + $0x60] sm:$0xe]
      %v1052 = vld [vmem:[%s286 + $0x64] sm:$0xf]
      %v1053 = vld [vmem:[%s286 + $0x68] sm:$0x1]
      %v1054 = vld [vmem:[%s286 + $0x6c] sm:$0xe]
      %v1055 = vld [vmem:[%s286 + $0x70] sm:$0xf]
      %v1056 = vld [vmem:[%s286 + $0x74] sm:$0x1]
      %v1057 = vld [vmem:[%s286 + $0x78] sm:$0xe]
      %v1058 = vld [vmem:[%s286 + $0x7c] sm:$0xf]
      %v1059 = vld [vmem:[%s286 + $0x80] sm:$0x1]
      %v1060 = vld [vmem:[%s286 + $0x84] sm:$0xe]
      %v1061 = vld [vmem:[%s286 + $0x88] sm:$0xf]
      %v1062 = vld [vmem:[%s286 + $0x8c] sm:$0x1]
      %v1063 = vld [vmem:[%s286 + $0x90] sm:$0xe]
      %v1064 = vld [vmem:[%s286 + $0x94] sm:$0xf]
      %v1065 = vld [vmem:[%s286 + $0x98] sm:$0x1]
      %v1066 = vld [vmem:[%s286 + $0x9c] sm:$0xe]
      %v1067 = vld [vmem:[%s286 + $0xa0] sm:$0xf]
      %v1068 = vld [vmem:[%s286 + $0xa4] sm:$0x1]
      %v1069 = vld [vmem:[%s286 + $0xa8] sm:$0xe]
      %v1070 = vld [vmem:[%s286 + $0xac] sm:$0xf]
      %v1071 = vld [vmem:[%s286 + $0xb0] sm:$0x1]
      %v1072 = vld [vmem:[%s286 + $0xb4] sm:$0xe]
      %v1073 = vld [vmem:[%s286 + $0xb8] sm:$0xf]
      %v1074 = vld [vmem:[%s286 + $0xbc] sm:$0x1]
      %vm1123 = vcmask 1042432
      %vm1124 = vcmask 1046532
      %vm1125 = vmor %vm1123, %vm1124
      %v1126 = vrot.slane %v1027, 5
      %v1127 = vrot.slane %v1126, 4
      %v1128 = vrot.slane %v1028, 5
      %v1129 = vsel %vm1125, %v1127, %v1128
      %v1130 = vrot.slane %v1128, 4
      %v1131 = vrot.slane %v1029, 5
      %v1132 = vsel %vm1125, %v1130, %v1131
      %v1133 = vrot.slane %v1030, 5
      %v1134 = vrot.slane %v1133, 4
      %v1135 = vrot.slane %v1031, 5
      %v1136 = vsel %vm1125, %v1134, %v1135
      %v1137 = vrot.slane %v1135, 4
      %v1138 = vrot.slane %v1032, 5
      %v1139 = vsel %vm1125, %v1137, %v1138
      %v1140 = vrot.slane %v1033, 5
      %v1141 = vrot.slane %v1140, 4
      %v1142 = vrot.slane %v1034, 5
      %v1143 = vsel %vm1125, %v1141, %v1142
      %v1144 = vrot.slane %v1142, 4
      %v1145 = vrot.slane %v1035, 5
      %v1146 = vsel %vm1125, %v1144, %v1145
      %v1147 = vrot.slane %v1036, 5
      %v1148 = vrot.slane %v1147, 4
      %v1149 = vrot.slane %v1037, 5
      %v1150 = vsel %vm1125, %v1148, %v1149
      %v1151 = vrot.slane %v1149, 4
      %v1152 = vrot.slane %v1038, 5
      %v1153 = vsel %vm1125, %v1151, %v1152
      %v1154 = vrot.slane %v1039, 5
      %v1155 = vrot.slane %v1154, 4
      %v1156 = vrot.slane %v1040, 5
      %v1157 = vsel %vm1125, %v1155, %v1156
      %v1158 = vrot.slane %v1156, 4
      %v1159 = vrot.slane %v1041, 5
      %v1160 = vsel %vm1125, %v1158, %v1159
      %v1161 = vrot.slane %v1042, 5
      %v1162 = vrot.slane %v1161, 4
      %v1163 = vrot.slane %v1043, 5
      %v1164 = vsel %vm1125, %v1162, %v1163
      %v1165 = vrot.slane %v1163, 4
      %v1166 = vrot.slane %v1044, 5
      %v1167 = vsel %vm1125, %v1165, %v1166
      %v1168 = vrot.slane %v1045, 5
      %v1169 = vrot.slane %v1168, 4
      %v1170 = vrot.slane %v1046, 5
      %v1171 = vsel %vm1125, %v1169, %v1170
      %v1172 = vrot.slane %v1170, 4
      %v1173 = vrot.slane %v1047, 5
      %v1174 = vsel %vm1125, %v1172, %v1173
      %v1175 = vrot.slane %v1048, 5
      %v1176 = vrot.slane %v1175, 4
      %v1177 = vrot.slane %v1049, 5
      %v1178 = vsel %vm1125, %v1176, %v1177
      %v1179 = vrot.slane %v1177, 4
      %v1180 = vrot.slane %v1050, 5
      %v1181 = vsel %vm1125, %v1179, %v1180
      %v1182 = vrot.slane %v1051, 5
      %v1183 = vrot.slane %v1182, 4
      %v1184 = vrot.slane %v1052, 5
      %v1185 = vsel %vm1125, %v1183, %v1184
      %v1186 = vrot.slane %v1184, 4
      %v1187 = vrot.slane %v1053, 5
      %v1188 = vsel %vm1125, %v1186, %v1187
      %v1189 = vrot.slane %v1054, 5
      %v1190 = vrot.slane %v1189, 4
      %v1191 = vrot.slane %v1055, 5
      %v1192 = vsel %vm1125, %v1190, %v1191
      %v1193 = vrot.slane %v1191, 4
      %v1194 = vrot.slane %v1056, 5
      %v1195 = vsel %vm1125, %v1193, %v1194
      %v1196 = vrot.slane %v1057, 5
      %v1197 = vrot.slane %v1196, 4
      %v1198 = vrot.slane %v1058, 5
      %v1199 = vsel %vm1125, %v1197, %v1198
      %v1200 = vrot.slane %v1198, 4
      %v1201 = vrot.slane %v1059, 5
      %v1202 = vsel %vm1125, %v1200, %v1201
      %v1203 = vrot.slane %v1060, 5
      %v1204 = vrot.slane %v1203, 4
      %v1205 = vrot.slane %v1061, 5
      %v1206 = vsel %vm1125, %v1204, %v1205
      %v1207 = vrot.slane %v1205, 4
      %v1208 = vrot.slane %v1062, 5
      %v1209 = vsel %vm1125, %v1207, %v1208
      %v1210 = vrot.slane %v1063, 5
      %v1211 = vrot.slane %v1210, 4
      %v1212 = vrot.slane %v1064, 5
      %v1213 = vsel %vm1125, %v1211, %v1212
      %v1214 = vrot.slane %v1212, 4
      %v1215 = vrot.slane %v1065, 5
      %v1216 = vsel %vm1125, %v1214, %v1215
      %v1217 = vrot.slane %v1066, 5
      %v1218 = vrot.slane %v1217, 4
      %v1219 = vrot.slane %v1067, 5
      %v1220 = vsel %vm1125, %v1218, %v1219
      %v1221 = vrot.slane %v1219, 4
      %v1222 = vrot.slane %v1068, 5
      %v1223 = vsel %vm1125, %v1221, %v1222
      %v1224 = vrot.slane %v1069, 5
      %v1225 = vrot.slane %v1224, 4
      %v1226 = vrot.slane %v1070, 5
      %v1227 = vsel %vm1125, %v1225, %v1226
      %v1228 = vrot.slane %v1226, 4
      %v1229 = vrot.slane %v1071, 5
      %v1230 = vsel %vm1125, %v1228, %v1229
      %v1231 = vrot.slane %v1072, 5
      %v1232 = vrot.slane %v1231, 4
      %v1233 = vrot.slane %v1073, 5
      %v1234 = vsel %vm1125, %v1232, %v1233
      %v1235 = vrot.slane %v1233, 4
      %v1236 = vrot.slane %v1074, 5
      %v1237 = vsel %vm1125, %v1235, %v1236
      %1238 = vrot.lane.b32.xlu0 %v1129, 16
      %v1239 = vpop.permute.xlu0 %1238
      %1240 = vrot.lane.b32.xlu0 %v1132, 16
      %v1241 = vpop.permute.xlu0 %1240
      %1242 = vrot.lane.b32.xlu0 %v1136, 16
      %v1243 = vpop.permute.xlu0 %1242
      %1244 = vrot.lane.b32.xlu0 %v1139, 16
      %v1245 = vpop.permute.xlu0 %1244
      %1246 = vrot.lane.b32.xlu0 %v1143, 16
      %v1247 = vpop.permute.xlu0 %1246
      %1248 = vrot.lane.b32.xlu0 %v1146, 16
      %v1249 = vpop.permute.xlu0 %1248
      %1250 = vrot.lane.b32.xlu0 %v1150, 16
      %v1251 = vpop.permute.xlu0 %1250
      %1252 = vrot.lane.b32.xlu0 %v1153, 16
      %v1253 = vpop.permute.xlu0 %1252
      %1254 = vrot.lane.b32.xlu0 %v1157, 16
      %v1255 = vpop.permute.xlu0 %1254
      %1256 = vrot.lane.b32.xlu0 %v1160, 16
      %v1257 = vpop.permute.xlu0 %1256
      %1258 = vrot.lane.b32.xlu0 %v1164, 16
      %v1259 = vpop.permute.xlu0 %1258
      %1260 = vrot.lane.b32.xlu0 %v1167, 16
      %v1261 = vpop.permute.xlu0 %1260
      %1262 = vrot.lane.b32.xlu0 %v1171, 16
      %v1263 = vpop.permute.xlu0 %1262
      %1264 = vrot.lane.b32.xlu0 %v1174, 16
      %v1265 = vpop.permute.xlu0 %1264
      %1266 = vrot.lane.b32.xlu0 %v1178, 16
      %v1267 = vpop.permute.xlu0 %1266
      %1268 = vrot.lane.b32.xlu0 %v1181, 16
      %v1269 = vpop.permute.xlu0 %1268
      %1270 = vrot.lane.b32.xlu0 %v1185, 16
      %v1271 = vpop.permute.xlu0 %1270
      %1272 = vrot.lane.b32.xlu0 %v1188, 16
      %v1273 = vpop.permute.xlu0 %1272
      %1274 = vrot.lane.b32.xlu0 %v1192, 16
      %v1275 = vpop.permute.xlu0 %1274
      %1276 = vrot.lane.b32.xlu0 %v1195, 16
      %v1277 = vpop.permute.xlu0 %1276
      %1278 = vrot.lane.b32.xlu0 %v1199, 16
      %v1279 = vpop.permute.xlu0 %1278
      %1280 = vrot.lane.b32.xlu0 %v1202, 16
      %v1281 = vpop.permute.xlu0 %1280
      %1282 = vrot.lane.b32.xlu0 %v1206, 16
      %v1283 = vpop.permute.xlu0 %1282
      %1284 = vrot.lane.b32.xlu0 %v1209, 16
      %v1285 = vpop.permute.xlu0 %1284
      %1286 = vrot.lane.b32.xlu0 %v1213, 16
      %v1287 = vpop.permute.xlu0 %1286
      %1288 = vrot.lane.b32.xlu0 %v1216, 16
      %v1289 = vpop.permute.xlu0 %1288
      %1290 = vrot.lane.b32.xlu0 %v1220, 16
      %v1291 = vpop.permute.xlu0 %1290
      %1292 = vrot.lane.b32.xlu0 %v1223, 16
      %v1293 = vpop.permute.xlu0 %1292
      %1294 = vrot.lane.b32.xlu0 %v1227, 16
      %v1295 = vpop.permute.xlu0 %1294
      %1296 = vrot.lane.b32.xlu0 %v1230, 16
      %v1297 = vpop.permute.xlu0 %1296
      %1298 = vrot.lane.b32.xlu0 %v1234, 16
      %v1299 = vpop.permute.xlu0 %1298
      %1300 = vrot.lane.b32.xlu0 %v1237, 16
      %v1301 = vpop.permute.xlu0 %1300
      %vm1334 = vcmask 191616
      %1335 = vst.msk [vmem:[#allocation2] sm:$0xf] %vm1334, %v1239
      %1336 = vst.msk [vmem:[#allocation2 + $0x4] sm:$0xf] %vm1334, %v1241
      %1337 = vst.msk [vmem:[#allocation2 + $0x8] sm:$0xf] %vm1334, %v1243
      %1338 = vst.msk [vmem:[#allocation2 + $0xc] sm:$0xf] %vm1334, %v1245
      %1339 = vst.msk [vmem:[#allocation2 + $0x10] sm:$0xf] %vm1334, %v1247
      %1340 = vst.msk [vmem:[#allocation2 + $0x14] sm:$0xf] %vm1334, %v1249
      %1341 = vst.msk [vmem:[#allocation2 + $0x18] sm:$0xf] %vm1334, %v1251
      %1342 = vst.msk [vmem:[#allocation2 + $0x1c] sm:$0xf] %vm1334, %v1253
      %1343 = vst.msk [vmem:[#allocation2 + $0x20] sm:$0xf] %vm1334, %v1255
      %1344 = vst.msk [vmem:[#allocation2 + $0x24] sm:$0xf] %vm1334, %v1257
      %1345 = vst.msk [vmem:[#allocation2 + $0x28] sm:$0xf] %vm1334, %v1259
      %1346 = vst.msk [vmem:[#allocation2 + $0x2c] sm:$0xf] %vm1334, %v1261
      %1347 = vst.msk [vmem:[#allocation2 + $0x30] sm:$0xf] %vm1334, %v1263
      %1348 = vst.msk [vmem:[#allocation2 + $0x34] sm:$0xf] %vm1334, %v1265
      %1349 = vst.msk [vmem:[#allocation2 + $0x38] sm:$0xf] %vm1334, %v1267
      %1350 = vst.msk [vmem:[#allocation2 + $0x3c] sm:$0xf] %vm1334, %v1269
      %1351 = vst.msk [vmem:[#allocation2 + $0x40] sm:$0xf] %vm1334, %v1271
      %1352 = vst.msk [vmem:[#allocation2 + $0x44] sm:$0xf] %vm1334, %v1273
      %1353 = vst.msk [vmem:[#allocation2 + $0x48] sm:$0xf] %vm1334, %v1275
      %1354 = vst.msk [vmem:[#allocation2 + $0x4c] sm:$0xf] %vm1334, %v1277
      %1355 = vst.msk [vmem:[#allocation2 + $0x50] sm:$0xf] %vm1334, %v1279
      %1356 = vst.msk [vmem:[#allocation2 + $0x54] sm:$0xf] %vm1334, %v1281
      %1357 = vst.msk [vmem:[#allocation2 + $0x58] sm:$0xf] %vm1334, %v1283
      %1358 = vst.msk [vmem:[#allocation2 + $0x5c] sm:$0xf] %vm1334, %v1285
      %1359 = vst.msk [vmem:[#allocation2 + $0x60] sm:$0xf] %vm1334, %v1287
      %1360 = vst.msk [vmem:[#allocation2 + $0x64] sm:$0xf] %vm1334, %v1289
      %1361 = vst.msk [vmem:[#allocation2 + $0x68] sm:$0xf] %vm1334, %v1291
      %1362 = vst.msk [vmem:[#allocation2 + $0x6c] sm:$0xf] %vm1334, %v1293
      %1363 = vst.msk [vmem:[#allocation2 + $0x70] sm:$0xf] %vm1334, %v1295
      %1364 = vst.msk [vmem:[#allocation2 + $0x74] sm:$0xf] %vm1334, %v1297
      %1365 = vst.msk [vmem:[#allocation2 + $0x78] sm:$0xf] %vm1334, %v1299
      %1366 = vst.msk [vmem:[#allocation2 + $0x7c] sm:$0xf] %vm1334, %v1301
      %v1367 = vld [vmem:[%s304] sm:$0xe]
      %v1368 = vld [vmem:[%s304 + $0x4] sm:$0xf]
      %v1369 = vld [vmem:[%s304 + $0x8] sm:$0x1]
      %v1370 = vld [vmem:[%s304 + $0xc] sm:$0xe]
      %v1371 = vld [vmem:[%s304 + $0x10] sm:$0xf]
      %v1372 = vld [vmem:[%s304 + $0x14] sm:$0x1]
      %v1379 = vrot.slane %v1367, 5
      %v1380 = vrot.slane %v1379, 4
      %v1381 = vrot.slane %v1368, 5
      %v1382 = vsel %vm1125, %v1380, %v1381
      %v1383 = vrot.slane %v1381, 4
      %v1384 = vrot.slane %v1369, 5
      %v1385 = vsel %vm1125, %v1383, %v1384
      %v1386 = vrot.slane %v1370, 5
      %v1387 = vrot.slane %v1386, 4
      %v1388 = vrot.slane %v1371, 5
      %v1389 = vsel %vm1125, %v1387, %v1388
      %v1390 = vrot.slane %v1388, 4
      %v1391 = vrot.slane %v1372, 5
      %v1392 = vsel %vm1125, %v1390, %v1391
      %1393 = vrot.lane.b32.xlu0 %v1382, 16
      %v1394 = vpop.permute.xlu0 %1393
      %1395 = vrot.lane.b32.xlu0 %v1385, 16
      %v1396 = vpop.permute.xlu0 %1395
      %1397 = vrot.lane.b32.xlu0 %v1389, 16
      %v1398 = vpop.permute.xlu0 %1397
      %1399 = vrot.lane.b32.xlu0 %v1392, 16
      %v1400 = vpop.permute.xlu0 %1399
      %1405 = vst.msk [vmem:[%s388] sm:$0xf] %vm1334, %v1394
      %1406 = vst.msk [vmem:[%s388 + $0x4] sm:$0xf] %vm1334, %v1396
      %1407 = vst.msk [vmem:[%s388 + $0x8] sm:$0xf] %vm1334, %v1398
      %1408 = vst.msk [vmem:[%s388 + $0xc] sm:$0xf] %vm1334, %v1400
      %v1409 = vld [vmem:[#allocation2] sm:$0xf]
      %v1410 = vld [vmem:[#allocation2 + $0x4] sm:$0xf]
      %v1411 = vld [vmem:[#allocation2 + $0x8] sm:$0xf]
      %v1412 = vld [vmem:[#allocation2 + $0xc] sm:$0xf]
      %v1413 = vld [vmem:[#allocation2 + $0x10] sm:$0xf]
      %v1414 = vld [vmem:[#allocation2 + $0x14] sm:$0xf]
      %v1415 = vld [vmem:[#allocation2 + $0x18] sm:$0xf]
      %v1416 = vld [vmem:[#allocation2 + $0x1c] sm:$0xf]
      %v1417 = vld [vmem:[#allocation2 + $0x20] sm:$0xf]
      %v1418 = vld [vmem:[#allocation2 + $0x24] sm:$0xf]
      %v1419 = vld [vmem:[#allocation2 + $0x28] sm:$0xf]
      %v1420 = vld [vmem:[#allocation2 + $0x2c] sm:$0xf]
      %v1421 = vld [vmem:[#allocation2 + $0x30] sm:$0xf]
      %v1422 = vld [vmem:[#allocation2 + $0x34] sm:$0xf]
      %v1423 = vld [vmem:[#allocation2 + $0x38] sm:$0xf]
      %v1424 = vld [vmem:[#allocation2 + $0x3c] sm:$0xf]
      %v1425 = vld [vmem:[#allocation2 + $0x40] sm:$0xf]
      %v1426 = vld [vmem:[#allocation2 + $0x44] sm:$0xf]
      %v1427 = vld [vmem:[#allocation2 + $0x48] sm:$0xf]
      %v1428 = vld [vmem:[#allocation2 + $0x4c] sm:$0xf]
      %v1429 = vld [vmem:[#allocation2 + $0x50] sm:$0xf]
      %v1430 = vld [vmem:[#allocation2 + $0x54] sm:$0xf]
      %v1431 = vld [vmem:[#allocation2 + $0x58] sm:$0xf]
      %v1432 = vld [vmem:[#allocation2 + $0x5c] sm:$0xf]
      %v1433 = vld [vmem:[#allocation2 + $0x60] sm:$0xf]
      %v1434 = vld [vmem:[#allocation2 + $0x64] sm:$0xf]
      %v1435 = vld [vmem:[#allocation2 + $0x68] sm:$0xf]
      %v1436 = vld [vmem:[#allocation2 + $0x6c] sm:$0xf]
      %v1437 = vld [vmem:[#allocation2 + $0x70] sm:$0xf]
      %v1438 = vld [vmem:[#allocation2 + $0x74] sm:$0xf]
      %v1439 = vld [vmem:[#allocation2 + $0x78] sm:$0xf]
      %v1440 = vld [vmem:[#allocation2 + $0x7c] sm:$0xf]
      %v1441 = vld [vmem:[%s2] sm:$0xf]
      %v1442 = vld [vmem:[%s2 + $0x4] sm:$0xf]
      %v1443 = vld [vmem:[%s2 + $0x8] sm:$0xf]
      %s1444 = scalar_lea.vmem [#allocation2], 8
      %v1445 = vld [vmem:[%s1444] sm:$0xf]
      %v1446 = vld [vmem:[%s1444 + $0x4] sm:$0xf]
      %v1447 = vld [vmem:[%s1444 + $0x8] sm:$0xf]
      %v1448 = vld [vmem:[%s1444 + $0xc] sm:$0xf]
      %v1449 = vld [vmem:[%s1444 + $0x10] sm:$0xf]
      %v1450 = vld [vmem:[%s1444 + $0x14] sm:$0xf]
      %v1451 = vld [vmem:[%s1444 + $0x18] sm:$0xf]
      %v1452 = vld [vmem:[%s1444 + $0x1c] sm:$0xf]
      %v1453 = vld [vmem:[%s1444 + $0x20] sm:$0xf]
      %v1454 = vld [vmem:[%s1444 + $0x24] sm:$0xf]
      %v1455 = vld [vmem:[%s1444 + $0x28] sm:$0xf]
      %v1456 = vld [vmem:[%s1444 + $0x2c] sm:$0xf]
      %v1457 = vld [vmem:[%s1444 + $0x30] sm:$0xf]
      %v1458 = vld [vmem:[%s1444 + $0x34] sm:$0xf]
      %v1459 = vld [vmem:[%s1444 + $0x38] sm:$0xf]
      %v1460 = vld [vmem:[%s1444 + $0x3c] sm:$0xf]
      %v1461 = vld [vmem:[%s1444 + $0x40] sm:$0xf]
      %v1462 = vld [vmem:[%s1444 + $0x44] sm:$0xf]
      %v1463 = vld [vmem:[%s1444 + $0x48] sm:$0xf]
      %v1464 = vld [vmem:[%s1444 + $0x4c] sm:$0xf]
      %v1465 = vld [vmem:[%s1444 + $0x50] sm:$0xf]
      %v1466 = vld [vmem:[%s1444 + $0x54] sm:$0xf]
      %v1467 = vld [vmem:[%s1444 + $0x58] sm:$0xf]
      %v1468 = vld [vmem:[%s1444 + $0x5c] sm:$0xf]
      %v1469 = vld [vmem:[%s1444 + $0x60] sm:$0xf]
      %v1470 = vld [vmem:[%s1444 + $0x64] sm:$0xf]
      %v1471 = vld [vmem:[%s1444 + $0x68] sm:$0xf]
      %v1472 = vld [vmem:[%s1444 + $0x6c] sm:$0xf]
      %v1473 = vld [vmem:[%s1444 + $0x70] sm:$0xf]
      %v1474 = vld [vmem:[%s1444 + $0x74] sm:$0xf]
      %v1475 = vld [vmem:[%s1444 + $0x78] sm:$0xf]
      %v1476 = vld [vmem:[%s1444 + $0x7c] sm:$0xf]
      %s1477 = scalar_lea.vmem %s2, 12
      %v1478 = vld [vmem:[%s1477] sm:$0xf]
      %v1479 = vld [vmem:[%s1477 + $0x4] sm:$0xf]
      %v1480 = vld [vmem:[%s1477 + $0x8] sm:$0xf]
      %v1513 = vunpack.c.l.b16 %v1445
      %v1514 = vunpack.c.l.b16 %v1446
      %v1515 = vunpack.c.l.b16 %v1447
      %v1516 = vunpack.c.l.b16 %v1448
      %v1517 = vunpack.c.l.b16 %v1449
      %v1518 = vunpack.c.l.b16 %v1450
      %v1519 = vunpack.c.l.b16 %v1451
      %v1520 = vunpack.c.l.b16 %v1452
      %v1521 = vunpack.c.l.b16 %v1453
      %v1522 = vunpack.c.l.b16 %v1454
      %v1523 = vunpack.c.l.b16 %v1455
      %v1524 = vunpack.c.l.b16 %v1456
      %v1525 = vunpack.c.l.b16 %v1457
      %v1526 = vunpack.c.l.b16 %v1458
      %v1527 = vunpack.c.l.b16 %v1459
      %v1528 = vunpack.c.l.b16 %v1460
      %v1529 = vunpack.c.l.b16 %v1461
      %v1530 = vunpack.c.l.b16 %v1462
      %v1531 = vunpack.c.l.b16 %v1463
      %v1532 = vunpack.c.l.b16 %v1464
      %v1533 = vunpack.c.l.b16 %v1465
      %v1534 = vunpack.c.l.b16 %v1466
      %v1535 = vunpack.c.l.b16 %v1467
      %v1536 = vunpack.c.l.b16 %v1468
      %v1537 = vunpack.c.l.b16 %v1469
      %v1538 = vunpack.c.l.b16 %v1470
      %v1539 = vunpack.c.l.b16 %v1471
      %v1540 = vunpack.c.l.b16 %v1472
      %v1541 = vunpack.c.l.b16 %v1473
      %v1542 = vunpack.c.l.b16 %v1474
      %v1543 = vunpack.c.l.b16 %v1475
      %v1544 = vunpack.c.l.b16 %v1476
      %v1545 = vpack.c.b16 %v1514, %v1513
      %v1546 = vpack.c.b16 %v1516, %v1515
      %v1547 = vpack.c.b16 %v1518, %v1517
      %v1548 = vpack.c.b16 %v1520, %v1519
      %v1549 = vpack.c.b16 %v1522, %v1521
      %v1550 = vpack.c.b16 %v1524, %v1523
      %v1551 = vpack.c.b16 %v1526, %v1525
      %v1552 = vpack.c.b16 %v1528, %v1527
      %v1553 = vpack.c.b16 %v1530, %v1529
      %v1554 = vpack.c.b16 %v1532, %v1531
      %v1555 = vpack.c.b16 %v1534, %v1533
      %v1556 = vpack.c.b16 %v1536, %v1535
      %v1557 = vpack.c.b16 %v1538, %v1537
      %v1558 = vpack.c.b16 %v1540, %v1539
      %v1559 = vpack.c.b16 %v1542, %v1541
      %v1560 = vpack.c.b16 %v1544, %v1543
      %v1564 = vunpack.c.l.b16 %v1478
      %v1565 = vunpack.c.l.b16 %v1479
      %v1566 = vunpack.c.l.b16 %v1480
      %v1567 = vpack.c.b16 %v1565, %v1564
      %v1568 = vpack.c.b16 %v1566, %v1566
      %vm1570 = vcmask 195584
      %v1572 = vsel %vm1570, %v1545, 0
      %v1575 = vsel %vm1570, %v1546, 0
      %v1578 = vsel %vm1570, %v1547, 0
      %v1581 = vsel %vm1570, %v1548, 0
      %v1584 = vsel %vm1570, %v1549, 0
      %v1587 = vsel %vm1570, %v1550, 0
      %v1590 = vsel %vm1570, %v1551, 0
      %v1593 = vsel %vm1570, %v1552, 0
      %v1596 = vsel %vm1570, %v1553, 0
      %v1599 = vsel %vm1570, %v1554, 0
      %v1602 = vsel %vm1570, %v1555, 0
      %v1605 = vsel %vm1570, %v1556, 0
      %v1608 = vsel %vm1570, %v1557, 0
      %v1611 = vsel %vm1570, %v1558, 0
      %v1614 = vsel %vm1570, %v1559, 0
      %v1617 = vsel %vm1570, %v1560, 0
      %vm1619 = vcmask 1043456
      %v1621 = vsel %vm1619, %v1568, 0
      %1623 = vmatpush.bf16.msra.mxu0 0
      %1624 = vmatpush.bf16.msra.mxu0 0
      %1625 = vmatpush.bf16.msra.mxu0 0
      %1626 = vmatpush.bf16.msra.mxu0 0
      %1627 = vmatpush.bf16.msra.mxu0 0
      %1628 = vmatpush.bf16.msra.mxu0 0
      %1629 = vmatpush.bf16.msra.mxu0 %v1621
      %1630 = vmatpush.bf16.msra.mxu0 %v1567
      %1631 = vmatmul.bf16.gmra.mxu0 %v1572
      %v1632 = vpop.f32.mrf.mxu0
      %v1633 = vadd.f32 0.0, %v1632
      %v1634 = vpop.f32.mrf.mxu0
      %v1635 = vadd.f32 0.0, %v1634
      %1636 = vmatmul.bf16.gmra.mxu0 %v1575
      %v1637 = vpop.f32.mrf.mxu0
      %v1638 = vadd.f32 0.0, %v1637
      %v1639 = vpop.f32.mrf.mxu0
      %v1640 = vadd.f32 0.0, %v1639
      %1641 = vmatmul.bf16.gmra.mxu0 %v1578
      %v1642 = vpop.f32.mrf.mxu0
      %v1643 = vadd.f32 0.0, %v1642
      %v1644 = vpop.f32.mrf.mxu0
      %v1645 = vadd.f32 0.0, %v1644
      %1646 = vmatmul.bf16.gmra.mxu0 %v1581
      %v1647 = vpop.f32.mrf.mxu0
      %v1648 = vadd.f32 0.0, %v1647
      %v1649 = vpop.f32.mrf.mxu0
      %v1650 = vadd.f32 0.0, %v1649
      %1651 = vmatmul.bf16.gmra.mxu0 %v1584
      %v1652 = vpop.f32.mrf.mxu0
      %v1653 = vadd.f32 0.0, %v1652
      %v1654 = vpop.f32.mrf.mxu0
      %v1655 = vadd.f32 0.0, %v1654
      %1656 = vmatmul.bf16.gmra.mxu0 %v1587
      %v1657 = vpop.f32.mrf.mxu0
      %v1658 = vadd.f32 0.0, %v1657
      %v1659 = vpop.f32.mrf.mxu0
      %v1660 = vadd.f32 0.0, %v1659
      %1661 = vmatmul.bf16.gmra.mxu0 %v1590
      %v1662 = vpop.f32.mrf.mxu0
      %v1663 = vadd.f32 0.0, %v1662
      %v1664 = vpop.f32.mrf.mxu0
      %v1665 = vadd.f32 0.0, %v1664
      %1666 = vmatmul.bf16.gmra.mxu0 %v1593
      %v1667 = vpop.f32.mrf.mxu0
      %v1668 = vadd.f32 0.0, %v1667
      %v1669 = vpop.f32.mrf.mxu0
      %v1670 = vadd.f32 0.0, %v1669
      %1671 = vmatmul.bf16.gmra.mxu0 %v1596
      %v1672 = vpop.f32.mrf.mxu0
      %v1673 = vadd.f32 0.0, %v1672
      %v1674 = vpop.f32.mrf.mxu0
      %v1675 = vadd.f32 0.0, %v1674
      %1676 = vmatmul.bf16.gmra.mxu0 %v1599
      %v1677 = vpop.f32.mrf.mxu0
      %v1678 = vadd.f32 0.0, %v1677
      %v1679 = vpop.f32.mrf.mxu0
      %v1680 = vadd.f32 0.0, %v1679
      %1681 = vmatmul.bf16.gmra.mxu0 %v1602
      %v1682 = vpop.f32.mrf.mxu0
      %v1683 = vadd.f32 0.0, %v1682
      %v1684 = vpop.f32.mrf.mxu0
      %v1685 = vadd.f32 0.0, %v1684
      %1686 = vmatmul.bf16.gmra.mxu0 %v1605
      %v1687 = vpop.f32.mrf.mxu0
      %v1688 = vadd.f32 0.0, %v1687
      %v1689 = vpop.f32.mrf.mxu0
      %v1690 = vadd.f32 0.0, %v1689
      %1691 = vmatmul.bf16.gmra.mxu0 %v1608
      %v1692 = vpop.f32.mrf.mxu0
      %v1693 = vadd.f32 0.0, %v1692
      %v1694 = vpop.f32.mrf.mxu0
      %v1695 = vadd.f32 0.0, %v1694
      %1696 = vmatmul.bf16.gmra.mxu0 %v1611
      %v1697 = vpop.f32.mrf.mxu0
      %v1698 = vadd.f32 0.0, %v1697
      %v1699 = vpop.f32.mrf.mxu0
      %v1700 = vadd.f32 0.0, %v1699
      %1701 = vmatmul.bf16.gmra.mxu0 %v1614
      %v1702 = vpop.f32.mrf.mxu0
      %v1703 = vadd.f32 0.0, %v1702
      %v1704 = vpop.f32.mrf.mxu0
      %v1705 = vadd.f32 0.0, %v1704
      %1706 = vmatmul.bf16.gmra.mxu0 %v1617
      %v1707 = vpop.f32.mrf.mxu0
      %v1708 = vadd.f32 0.0, %v1707
      %v1709 = vpop.f32.mrf.mxu0
      %v1710 = vadd.f32 0.0, %v1709
      %1711 = vdwg.mxu0
      %v1744 = vunpack.c.l.b16 %v1409
      %v1745 = vunpack.c.l.b16 %v1410
      %v1746 = vunpack.c.l.b16 %v1411
      %v1747 = vunpack.c.l.b16 %v1412
      %v1748 = vunpack.c.l.b16 %v1413
      %v1749 = vunpack.c.l.b16 %v1414
      %v1750 = vunpack.c.l.b16 %v1415
      %v1751 = vunpack.c.l.b16 %v1416
      %v1752 = vunpack.c.l.b16 %v1417
      %v1753 = vunpack.c.l.b16 %v1418
      %v1754 = vunpack.c.l.b16 %v1419
      %v1755 = vunpack.c.l.b16 %v1420
      %v1756 = vunpack.c.l.b16 %v1421
      %v1757 = vunpack.c.l.b16 %v1422
      %v1758 = vunpack.c.l.b16 %v1423
      %v1759 = vunpack.c.l.b16 %v1424
      %v1760 = vunpack.c.l.b16 %v1425
      %v1761 = vunpack.c.l.b16 %v1426
      %v1762 = vunpack.c.l.b16 %v1427
      %v1763 = vunpack.c.l.b16 %v1428
      %v1764 = vunpack.c.l.b16 %v1429
      %v1765 = vunpack.c.l.b16 %v1430
      %v1766 = vunpack.c.l.b16 %v1431
      %v1767 = vunpack.c.l.b16 %v1432
      %v1768 = vunpack.c.l.b16 %v1433
      %v1769 = vunpack.c.l.b16 %v1434
      %v1770 = vunpack.c.l.b16 %v1435
      %v1771 = vunpack.c.l.b16 %v1436
      %v1772 = vunpack.c.l.b16 %v1437
      %v1773 = vunpack.c.l.b16 %v1438
      %v1774 = vunpack.c.l.b16 %v1439
      %v1775 = vunpack.c.l.b16 %v1440
      %v1776 = vpack.c.b16 %v1745, %v1744
      %v1777 = vpack.c.b16 %v1747, %v1746
      %v1778 = vpack.c.b16 %v1749, %v1748
      %v1779 = vpack.c.b16 %v1751, %v1750
      %v1780 = vpack.c.b16 %v1753, %v1752
      %v1781 = vpack.c.b16 %v1755, %v1754
      %v1782 = vpack.c.b16 %v1757, %v1756
      %v1783 = vpack.c.b16 %v1759, %v1758
      %v1784 = vpack.c.b16 %v1761, %v1760
      %v1785 = vpack.c.b16 %v1763, %v1762
      %v1786 = vpack.c.b16 %v1765, %v1764
      %v1787 = vpack.c.b16 %v1767, %v1766
      %v1788 = vpack.c.b16 %v1769, %v1768
      %v1789 = vpack.c.b16 %v1771, %v1770
      %v1790 = vpack.c.b16 %v1773, %v1772
      %v1791 = vpack.c.b16 %v1775, %v1774
      %v1795 = vunpack.c.l.b16 %v1441
      %v1796 = vunpack.c.l.b16 %v1442
      %v1797 = vunpack.c.l.b16 %v1443
      %v1798 = vpack.c.b16 %v1796, %v1795
      %v1799 = vpack.c.b16 %v1797, %v1797
      %v1802 = vsel %vm1570, %v1776, 0
      %v1805 = vsel %vm1570, %v1777, 0
      %v1808 = vsel %vm1570, %v1778, 0
      %v1811 = vsel %vm1570, %v1779, 0
      %v1814 = vsel %vm1570, %v1780, 0
      %v1817 = vsel %vm1570, %v1781, 0
      %v1820 = vsel %vm1570, %v1782, 0
      %v1823 = vsel %vm1570, %v1783, 0
      %v1826 = vsel %vm1570, %v1784, 0
      %v1829 = vsel %vm1570, %v1785, 0
      %v1832 = vsel %vm1570, %v1786, 0
      %v1835 = vsel %vm1570, %v1787, 0
      %v1838 = vsel %vm1570, %v1788, 0
      %v1841 = vsel %vm1570, %v1789, 0
      %v1844 = vsel %vm1570, %v1790, 0
      %v1847 = vsel %vm1570, %v1791, 0
      %v1850 = vsel %vm1619, %v1799, 0
      %1852 = vmatpush.bf16.msra.mxu0 0
      %1853 = vmatpush.bf16.msra.mxu0 0
      %1854 = vmatpush.bf16.msra.mxu0 0
      %1855 = vmatpush.bf16.msra.mxu0 0
      %1856 = vmatpush.bf16.msra.mxu0 0
      %1857 = vmatpush.bf16.msra.mxu0 0
      %1858 = vmatpush.bf16.msra.mxu0 %v1850
      %1859 = vmatpush.bf16.msra.mxu0 %v1798
      %1860 = vmatmul.bf16.gmra.mxu0 %v1802
      %v1861 = vpop.f32.mrf.mxu0
      %v1862 = vadd.f32 %v1633, %v1861
      %v1863 = vpop.f32.mrf.mxu0
      %v1864 = vadd.f32 %v1635, %v1863
      %1865 = vmatmul.bf16.gmra.mxu0 %v1805
      %v1866 = vpop.f32.mrf.mxu0
      %v1867 = vadd.f32 %v1638, %v1866
      %v1868 = vpop.f32.mrf.mxu0
      %v1869 = vadd.f32 %v1640, %v1868
      %1870 = vmatmul.bf16.gmra.mxu0 %v1808
      %v1871 = vpop.f32.mrf.mxu0
      %v1872 = vadd.f32 %v1643, %v1871
      %v1873 = vpop.f32.mrf.mxu0
      %v1874 = vadd.f32 %v1645, %v1873
      %1875 = vmatmul.bf16.gmra.mxu0 %v1811
      %v1876 = vpop.f32.mrf.mxu0
      %v1877 = vadd.f32 %v1648, %v1876
      %v1878 = vpop.f32.mrf.mxu0
      %v1879 = vadd.f32 %v1650, %v1878
      %1880 = vmatmul.bf16.gmra.mxu0 %v1814
      %v1881 = vpop.f32.mrf.mxu0
      %v1882 = vadd.f32 %v1653, %v1881
      %v1883 = vpop.f32.mrf.mxu0
      %v1884 = vadd.f32 %v1655, %v1883
      %1885 = vmatmul.bf16.gmra.mxu0 %v1817
      %v1886 = vpop.f32.mrf.mxu0
      %v1887 = vadd.f32 %v1658, %v1886
      %v1888 = vpop.f32.mrf.mxu0
      %v1889 = vadd.f32 %v1660, %v1888
      %1890 = vmatmul.bf16.gmra.mxu0 %v1820
      %v1891 = vpop.f32.mrf.mxu0
      %v1892 = vadd.f32 %v1663, %v1891
      %v1893 = vpop.f32.mrf.mxu0
      %v1894 = vadd.f32 %v1665, %v1893
      %1895 = vmatmul.bf16.gmra.mxu0 %v1823
      %v1896 = vpop.f32.mrf.mxu0
      %v1897 = vadd.f32 %v1668, %v1896
      %v1898 = vpop.f32.mrf.mxu0
      %v1899 = vadd.f32 %v1670, %v1898
      %1900 = vmatmul.bf16.gmra.mxu0 %v1826
      %v1901 = vpop.f32.mrf.mxu0
      %v1902 = vadd.f32 %v1673, %v1901
      %v1903 = vpop.f32.mrf.mxu0
      %v1904 = vadd.f32 %v1675, %v1903
      %1905 = vmatmul.bf16.gmra.mxu0 %v1829
      %v1906 = vpop.f32.mrf.mxu0
      %v1907 = vadd.f32 %v1678, %v1906
      %v1908 = vpop.f32.mrf.mxu0
      %v1909 = vadd.f32 %v1680, %v1908
      %1910 = vmatmul.bf16.gmra.mxu0 %v1832
      %v1911 = vpop.f32.mrf.mxu0
      %v1912 = vadd.f32 %v1683, %v1911
      %v1913 = vpop.f32.mrf.mxu0
      %v1914 = vadd.f32 %v1685, %v1913
      %1915 = vmatmul.bf16.gmra.mxu0 %v1835
      %v1916 = vpop.f32.mrf.mxu0
      %v1917 = vadd.f32 %v1688, %v1916
      %v1918 = vpop.f32.mrf.mxu0
      %v1919 = vadd.f32 %v1690, %v1918
      %1920 = vmatmul.bf16.gmra.mxu0 %v1838
      %v1921 = vpop.f32.mrf.mxu0
      %v1922 = vadd.f32 %v1693, %v1921
      %v1923 = vpop.f32.mrf.mxu0
      %v1924 = vadd.f32 %v1695, %v1923
      %1925 = vmatmul.bf16.gmra.mxu0 %v1841
      %v1926 = vpop.f32.mrf.mxu0
      %v1927 = vadd.f32 %v1698, %v1926
      %v1928 = vpop.f32.mrf.mxu0
      %v1929 = vadd.f32 %v1700, %v1928
      %1930 = vmatmul.bf16.gmra.mxu0 %v1844
      %v1931 = vpop.f32.mrf.mxu0
      %v1932 = vadd.f32 %v1703, %v1931
      %v1933 = vpop.f32.mrf.mxu0
      %v1934 = vadd.f32 %v1705, %v1933
      %1935 = vmatmul.bf16.gmra.mxu0 %v1847
      %v1936 = vpop.f32.mrf.mxu0
      %v1937 = vadd.f32 %v1708, %v1936
      %v1938 = vpop.f32.mrf.mxu0
      %v1939 = vadd.f32 %v1710, %v1938
      %1940 = vdwg.mxu0
      %s1941 = scalar_lea.vmem [#allocation2], 16
      %v1942 = vld [vmem:[%s1941] sm:$0xf]
      %v1943 = vld [vmem:[%s1941 + $0x4] sm:$0xf]
      %v1944 = vld [vmem:[%s1941 + $0x8] sm:$0xf]
      %v1945 = vld [vmem:[%s1941 + $0xc] sm:$0xf]
      %v1946 = vld [vmem:[%s1941 + $0x10] sm:$0xf]
      %v1947 = vld [vmem:[%s1941 + $0x14] sm:$0xf]
      %v1948 = vld [vmem:[%s1941 + $0x18] sm:$0xf]
      %v1949 = vld [vmem:[%s1941 + $0x1c] sm:$0xf]
      %v1950 = vld [vmem:[%s1941 + $0x20] sm:$0xf]
      %v1951 = vld [vmem:[%s1941 + $0x24] sm:$0xf]
      %v1952 = vld [vmem:[%s1941 + $0x28] sm:$0xf]
      %v1953 = vld [vmem:[%s1941 + $0x2c] sm:$0xf]
      %v1954 = vld [vmem:[%s1941 + $0x30] sm:$0xf]
      %v1955 = vld [vmem:[%s1941 + $0x34] sm:$0xf]
      %v1956 = vld [vmem:[%s1941 + $0x38] sm:$0xf]
      %v1957 = vld [vmem:[%s1941 + $0x3c] sm:$0xf]
      %v1958 = vld [vmem:[%s1941 + $0x40] sm:$0xf]
      %v1959 = vld [vmem:[%s1941 + $0x44] sm:$0xf]
      %v1960 = vld [vmem:[%s1941 + $0x48] sm:$0xf]
      %v1961 = vld [vmem:[%s1941 + $0x4c] sm:$0xf]
      %v1962 = vld [vmem:[%s1941 + $0x50] sm:$0xf]
      %v1963 = vld [vmem:[%s1941 + $0x54] sm:$0xf]
      %v1964 = vld [vmem:[%s1941 + $0x58] sm:$0xf]
      %v1965 = vld [vmem:[%s1941 + $0x5c] sm:$0xf]
      %v1966 = vld [vmem:[%s1941 + $0x60] sm:$0xf]
      %v1967 = vld [vmem:[%s1941 + $0x64] sm:$0xf]
      %v1968 = vld [vmem:[%s1941 + $0x68] sm:$0xf]
      %v1969 = vld [vmem:[%s1941 + $0x6c] sm:$0xf]
      %v1970 = vld [vmem:[%s1941 + $0x70] sm:$0xf]
      %v1971 = vld [vmem:[%s1941 + $0x74] sm:$0xf]
      %v1972 = vld [vmem:[%s1941 + $0x78] sm:$0xf]
      %v1973 = vld [vmem:[%s1941 + $0x7c] sm:$0xf]
      %s1974 = scalar_lea.vmem %s2, 24
      %v1975 = vld [vmem:[%s1974] sm:$0xf]
      %v1976 = vld [vmem:[%s1974 + $0x4] sm:$0xf]
      %v1977 = vld [vmem:[%s1974 + $0x8] sm:$0xf]
      %v2010 = vunpack.c.l.b16 %v1942
      %v2011 = vunpack.c.l.b16 %v1943
      %v2012 = vunpack.c.l.b16 %v1944
      %v2013 = vunpack.c.l.b16 %v1945
      %v2014 = vunpack.c.l.b16 %v1946
      %v2015 = vunpack.c.l.b16 %v1947
      %v2016 = vunpack.c.l.b16 %v1948
      %v2017 = vunpack.c.l.b16 %v1949
      %v2018 = vunpack.c.l.b16 %v1950
      %v2019 = vunpack.c.l.b16 %v1951
      %v2020 = vunpack.c.l.b16 %v1952
      %v2021 = vunpack.c.l.b16 %v1953
      %v2022 = vunpack.c.l.b16 %v1954
      %v2023 = vunpack.c.l.b16 %v1955
      %v2024 = vunpack.c.l.b16 %v1956
      %v2025 = vunpack.c.l.b16 %v1957
      %v2026 = vunpack.c.l.b16 %v1958
      %v2027 = vunpack.c.l.b16 %v1959
      %v2028 = vunpack.c.l.b16 %v1960
      %v2029 = vunpack.c.l.b16 %v1961
      %v2030 = vunpack.c.l.b16 %v1962
      %v2031 = vunpack.c.l.b16 %v1963
      %v2032 = vunpack.c.l.b16 %v1964
      %v2033 = vunpack.c.l.b16 %v1965
      %v2034 = vunpack.c.l.b16 %v1966
      %v2035 = vunpack.c.l.b16 %v1967
      %v2036 = vunpack.c.l.b16 %v1968
      %v2037 = vunpack.c.l.b16 %v1969
      %v2038 = vunpack.c.l.b16 %v1970
      %v2039 = vunpack.c.l.b16 %v1971
      %v2040 = vunpack.c.l.b16 %v1972
      %v2041 = vunpack.c.l.b16 %v1973
      %v2042 = vpack.c.b16 %v2011, %v2010
      %v2043 = vpack.c.b16 %v2013, %v2012
      %v2044 = vpack.c.b16 %v2015, %v2014
      %v2045 = vpack.c.b16 %v2017, %v2016
      %v2046 = vpack.c.b16 %v2019, %v2018
      %v2047 = vpack.c.b16 %v2021, %v2020
      %v2048 = vpack.c.b16 %v2023, %v2022
      %v2049 = vpack.c.b16 %v2025, %v2024
      %v2050 = vpack.c.b16 %v2027, %v2026
      %v2051 = vpack.c.b16 %v2029, %v2028
      %v2052 = vpack.c.b16 %v2031, %v2030
      %v2053 = vpack.c.b16 %v2033, %v2032
      %v2054 = vpack.c.b16 %v2035, %v2034
      %v2055 = vpack.c.b16 %v2037, %v2036
      %v2056 = vpack.c.b16 %v2039, %v2038
      %v2057 = vpack.c.b16 %v2041, %v2040
      %v2061 = vunpack.c.l.b16 %v1975
      %v2062 = vunpack.c.l.b16 %v1976
      %v2063 = vunpack.c.l.b16 %v1977
      %v2064 = vpack.c.b16 %v2062, %v2061
      %v2065 = vpack.c.b16 %v2063, %v2063
      %v2068 = vsel %vm1570, %v2042, 0
      %v2071 = vsel %vm1570, %v2043, 0
      %v2074 = vsel %vm1570, %v2044, 0
      %v2077 = vsel %vm1570, %v2045, 0
      %v2080 = vsel %vm1570, %v2046, 0
      %v2083 = vsel %vm1570, %v2047, 0
      %v2086 = vsel %vm1570, %v2048, 0
      %v2089 = vsel %vm1570, %v2049, 0
      %v2092 = vsel %vm1570, %v2050, 0
      %v2095 = vsel %vm1570, %v2051, 0
      %v2098 = vsel %vm1570, %v2052, 0
      %v2101 = vsel %vm1570, %v2053, 0
      %v2104 = vsel %vm1570, %v2054, 0
      %v2107 = vsel %vm1570, %v2055, 0
      %v2110 = vsel %vm1570, %v2056, 0
      %v2113 = vsel %vm1570, %v2057, 0
      %v2116 = vsel %vm1619, %v2065, 0
      %2118 = vmatpush.bf16.msra.mxu0 0
      %2119 = vmatpush.bf16.msra.mxu0 0
      %2120 = vmatpush.bf16.msra.mxu0 0
      %2121 = vmatpush.bf16.msra.mxu0 0
      %2122 = vmatpush.bf16.msra.mxu0 0
      %2123 = vmatpush.bf16.msra.mxu0 0
      %2124 = vmatpush.bf16.msra.mxu0 %v2116
      %2125 = vmatpush.bf16.msra.mxu0 %v2064
      %2126 = vmatmul.bf16.gmra.mxu0 %v2068
      %v2127 = vpop.f32.mrf.mxu0
      %v2128 = vadd.f32 0.0, %v2127
      %v2129 = vpop.f32.mrf.mxu0
      %v2130 = vadd.f32 0.0, %v2129
      %2131 = vmatmul.bf16.gmra.mxu0 %v2071
      %v2132 = vpop.f32.mrf.mxu0
      %v2133 = vadd.f32 0.0, %v2132
      %v2134 = vpop.f32.mrf.mxu0
      %v2135 = vadd.f32 0.0, %v2134
      %2136 = vmatmul.bf16.gmra.mxu0 %v2074
      %v2137 = vpop.f32.mrf.mxu0
      %v2138 = vadd.f32 0.0, %v2137
      %v2139 = vpop.f32.mrf.mxu0
      %v2140 = vadd.f32 0.0, %v2139
      %2141 = vmatmul.bf16.gmra.mxu0 %v2077
      %v2142 = vpop.f32.mrf.mxu0
      %v2143 = vadd.f32 0.0, %v2142
      %v2144 = vpop.f32.mrf.mxu0
      %v2145 = vadd.f32 0.0, %v2144
      %2146 = vmatmul.bf16.gmra.mxu0 %v2080
      %v2147 = vpop.f32.mrf.mxu0
      %v2148 = vadd.f32 0.0, %v2147
      %v2149 = vpop.f32.mrf.mxu0
      %v2150 = vadd.f32 0.0, %v2149
      %2151 = vmatmul.bf16.gmra.mxu0 %v2083
      %v2152 = vpop.f32.mrf.mxu0
      %v2153 = vadd.f32 0.0, %v2152
      %v2154 = vpop.f32.mrf.mxu0
      %v2155 = vadd.f32 0.0, %v2154
      %2156 = vmatmul.bf16.gmra.mxu0 %v2086
      %v2157 = vpop.f32.mrf.mxu0
      %v2158 = vadd.f32 0.0, %v2157
      %v2159 = vpop.f32.mrf.mxu0
      %v2160 = vadd.f32 0.0, %v2159
      %2161 = vmatmul.bf16.gmra.mxu0 %v2089
      %v2162 = vpop.f32.mrf.mxu0
      %v2163 = vadd.f32 0.0, %v2162
      %v2164 = vpop.f32.mrf.mxu0
      %v2165 = vadd.f32 0.0, %v2164
      %2166 = vmatmul.bf16.gmra.mxu0 %v2092
      %v2167 = vpop.f32.mrf.mxu0
      %v2168 = vadd.f32 0.0, %v2167
      %v2169 = vpop.f32.mrf.mxu0
      %v2170 = vadd.f32 0.0, %v2169
      %2171 = vmatmul.bf16.gmra.mxu0 %v2095
      %v2172 = vpop.f32.mrf.mxu0
      %v2173 = vadd.f32 0.0, %v2172
      %v2174 = vpop.f32.mrf.mxu0
      %v2175 = vadd.f32 0.0, %v2174
      %2176 = vmatmul.bf16.gmra.mxu0 %v2098
      %v2177 = vpop.f32.mrf.mxu0
      %v2178 = vadd.f32 0.0, %v2177
      %v2179 = vpop.f32.mrf.mxu0
      %v2180 = vadd.f32 0.0, %v2179
      %2181 = vmatmul.bf16.gmra.mxu0 %v2101
      %v2182 = vpop.f32.mrf.mxu0
      %v2183 = vadd.f32 0.0, %v2182
      %v2184 = vpop.f32.mrf.mxu0
      %v2185 = vadd.f32 0.0, %v2184
      %2186 = vmatmul.bf16.gmra.mxu0 %v2104
      %v2187 = vpop.f32.mrf.mxu0
      %v2188 = vadd.f32 0.0, %v2187
      %v2189 = vpop.f32.mrf.mxu0
      %v2190 = vadd.f32 0.0, %v2189
      %2191 = vmatmul.bf16.gmra.mxu0 %v2107
      %v2192 = vpop.f32.mrf.mxu0
      %v2193 = vadd.f32 0.0, %v2192
      %v2194 = vpop.f32.mrf.mxu0
      %v2195 = vadd.f32 0.0, %v2194
      %2196 = vmatmul.bf16.gmra.mxu0 %v2110
      %v2197 = vpop.f32.mrf.mxu0
      %v2198 = vadd.f32 0.0, %v2197
      %v2199 = vpop.f32.mrf.mxu0
      %v2200 = vadd.f32 0.0, %v2199
      %2201 = vmatmul.bf16.gmra.mxu0 %v2113
      %v2202 = vpop.f32.mrf.mxu0
      %v2203 = vadd.f32 0.0, %v2202
      %v2204 = vpop.f32.mrf.mxu0
      %v2205 = vadd.f32 0.0, %v2204
      %2206 = vdwg.mxu0
      %v2207 = vadd.f32 %v1862, %v2128
      %v2208 = vadd.f32 %v1864, %v2130
      %v2209 = vadd.f32 %v1867, %v2133
      %v2210 = vadd.f32 %v1869, %v2135
      %v2211 = vadd.f32 %v1872, %v2138
      %v2212 = vadd.f32 %v1874, %v2140
      %v2213 = vadd.f32 %v1877, %v2143
      %v2214 = vadd.f32 %v1879, %v2145
      %v2215 = vadd.f32 %v1882, %v2148
      %v2216 = vadd.f32 %v1884, %v2150
      %v2217 = vadd.f32 %v1887, %v2153
      %v2218 = vadd.f32 %v1889, %v2155
      %v2219 = vadd.f32 %v1892, %v2158
      %v2220 = vadd.f32 %v1894, %v2160
      %v2221 = vadd.f32 %v1897, %v2163
      %v2222 = vadd.f32 %v1899, %v2165
      %v2223 = vadd.f32 %v1902, %v2168
      %v2224 = vadd.f32 %v1904, %v2170
      %v2225 = vadd.f32 %v1907, %v2173
      %v2226 = vadd.f32 %v1909, %v2175
      %v2227 = vadd.f32 %v1912, %v2178
      %v2228 = vadd.f32 %v1914, %v2180
      %v2229 = vadd.f32 %v1917, %v2183
      %v2230 = vadd.f32 %v1919, %v2185
      %v2231 = vadd.f32 %v1922, %v2188
      %v2232 = vadd.f32 %v1924, %v2190
      %v2233 = vadd.f32 %v1927, %v2193
      %v2234 = vadd.f32 %v1929, %v2195
      %v2235 = vadd.f32 %v1932, %v2198
      %v2236 = vadd.f32 %v1934, %v2200
      %v2237 = vadd.f32 %v1937, %v2203
      %v2238 = vadd.f32 %v1939, %v2205
      %v2239 = vld [vmem:[%s3] sm:$0x1]
      %v2241 = vperm.slane %v2239, 0
      %v2243 = vadd.f32 %v2207, %v2241
      %v2244 = vadd.f32 %v2208, %v2241
      %v2245 = vadd.f32 %v2209, %v2241
      %v2246 = vadd.f32 %v2210, %v2241
      %v2247 = vadd.f32 %v2211, %v2241
      %v2248 = vadd.f32 %v2212, %v2241
      %v2249 = vadd.f32 %v2213, %v2241
      %v2250 = vadd.f32 %v2214, %v2241
      %v2251 = vadd.f32 %v2215, %v2241
      %v2252 = vadd.f32 %v2216, %v2241
      %v2253 = vadd.f32 %v2217, %v2241
      %v2254 = vadd.f32 %v2218, %v2241
      %v2255 = vadd.f32 %v2219, %v2241
      %v2256 = vadd.f32 %v2220, %v2241
      %v2257 = vadd.f32 %v2221, %v2241
      %v2258 = vadd.f32 %v2222, %v2241
      %v2259 = vadd.f32 %v2223, %v2241
      %v2260 = vadd.f32 %v2224, %v2241
      %v2261 = vadd.f32 %v2225, %v2241
      %v2262 = vadd.f32 %v2226, %v2241
      %v2263 = vadd.f32 %v2227, %v2241
      %v2264 = vadd.f32 %v2228, %v2241
      %v2265 = vadd.f32 %v2229, %v2241
      %v2266 = vadd.f32 %v2230, %v2241
      %v2267 = vadd.f32 %v2231, %v2241
      %v2268 = vadd.f32 %v2232, %v2241
      %v2269 = vadd.f32 %v2233, %v2241
      %v2270 = vadd.f32 %v2234, %v2241
      %v2271 = vadd.f32 %v2235, %v2241
      %v2272 = vadd.f32 %v2236, %v2241
      %v2273 = vadd.f32 %v2237, %v2241
      %v2274 = vadd.f32 %v2238, %v2241
      %v2275 = vmax.f32 %v2243, 0.0
      %v2276 = vmax.f32 %v2244, 0.0
      %v2277 = vmax.f32 %v2245, 0.0
      %v2278 = vmax.f32 %v2246, 0.0
      %v2279 = vmax.f32 %v2247, 0.0
      %v2280 = vmax.f32 %v2248, 0.0
      %v2281 = vmax.f32 %v2249, 0.0
      %v2282 = vmax.f32 %v2250, 0.0
      %v2283 = vmax.f32 %v2251, 0.0
      %v2284 = vmax.f32 %v2252, 0.0
      %v2285 = vmax.f32 %v2253, 0.0
      %v2286 = vmax.f32 %v2254, 0.0
      %v2287 = vmax.f32 %v2255, 0.0
      %v2288 = vmax.f32 %v2256, 0.0
      %v2289 = vmax.f32 %v2257, 0.0
      %v2290 = vmax.f32 %v2258, 0.0
      %v2291 = vmax.f32 %v2259, 0.0
      %v2292 = vmax.f32 %v2260, 0.0
      %v2293 = vmax.f32 %v2261, 0.0
      %v2294 = vmax.f32 %v2262, 0.0
      %v2295 = vmax.f32 %v2263, 0.0
      %v2296 = vmax.f32 %v2264, 0.0
      %v2297 = vmax.f32 %v2265, 0.0
      %v2298 = vmax.f32 %v2266, 0.0
      %v2299 = vmax.f32 %v2267, 0.0
      %v2300 = vmax.f32 %v2268, 0.0
      %v2301 = vmax.f32 %v2269, 0.0
      %v2302 = vmax.f32 %v2270, 0.0
      %v2303 = vmax.f32 %v2271, 0.0
      %v2304 = vmax.f32 %v2272, 0.0
      %v2305 = vmax.f32 %v2273, 0.0
      %v2306 = vmax.f32 %v2274, 0.0
      %v2307 = vpack.c.bf16 %v2275, %v2275
      %v2308 = vpack.c.bf16 %v2276, %v2276
      %v2309 = vpack.c.bf16 %v2277, %v2277
      %v2310 = vpack.c.bf16 %v2278, %v2278
      %v2311 = vpack.c.bf16 %v2279, %v2279
      %v2312 = vpack.c.bf16 %v2280, %v2280
      %v2313 = vpack.c.bf16 %v2281, %v2281
      %v2314 = vpack.c.bf16 %v2282, %v2282
      %v2315 = vpack.c.bf16 %v2283, %v2283
      %v2316 = vpack.c.bf16 %v2284, %v2284
      %v2317 = vpack.c.bf16 %v2285, %v2285
      %v2318 = vpack.c.bf16 %v2286, %v2286
      %v2319 = vpack.c.bf16 %v2287, %v2287
      %v2320 = vpack.c.bf16 %v2288, %v2288
      %v2321 = vpack.c.bf16 %v2289, %v2289
      %v2322 = vpack.c.bf16 %v2290, %v2290
      %v2323 = vpack.c.bf16 %v2291, %v2291
      %v2324 = vpack.c.bf16 %v2292, %v2292
      %v2325 = vpack.c.bf16 %v2293, %v2293
      %v2326 = vpack.c.bf16 %v2294, %v2294
      %v2327 = vpack.c.bf16 %v2295, %v2295
      %v2328 = vpack.c.bf16 %v2296, %v2296
      %v2329 = vpack.c.bf16 %v2297, %v2297
      %v2330 = vpack.c.bf16 %v2298, %v2298
      %v2331 = vpack.c.bf16 %v2299, %v2299
      %v2332 = vpack.c.bf16 %v2300, %v2300
      %v2333 = vpack.c.bf16 %v2301, %v2301
      %v2334 = vpack.c.bf16 %v2302, %v2302
      %v2335 = vpack.c.bf16 %v2303, %v2303
      %v2336 = vpack.c.bf16 %v2304, %v2304
      %v2337 = vpack.c.bf16 %v2305, %v2305
      %v2338 = vpack.c.bf16 %v2306, %v2306
      %vm2339 = vcmask 519168
      %2340 = vst.msk [vmem:[%s316] sm:$0xf] %vm2339, %v2307
      %2341 = vst.msk [vmem:[%s316 + $0x4] sm:$0xf] %vm2339, %v2308
      %2342 = vst.msk [vmem:[%s316 + $0x8] sm:$0xf] %vm2339, %v2309
      %2343 = vst.msk [vmem:[%s316 + $0xc] sm:$0xf] %vm2339, %v2310
      %2344 = vst.msk [vmem:[%s316 + $0x10] sm:$0xf] %vm2339, %v2311
      %2345 = vst.msk [vmem:[%s316 + $0x14] sm:$0xf] %vm2339, %v2312
      %2346 = vst.msk [vmem:[%s316 + $0x18] sm:$0xf] %vm2339, %v2313
      %2347 = vst.msk [vmem:[%s316 + $0x1c] sm:$0xf] %vm2339, %v2314
      %2348 = vst.msk [vmem:[%s316 + $0x20] sm:$0xf] %vm2339, %v2315
      %2349 = vst.msk [vmem:[%s316 + $0x24] sm:$0xf] %vm2339, %v2316
      %2350 = vst.msk [vmem:[%s316 + $0x28] sm:$0xf] %vm2339, %v2317
      %2351 = vst.msk [vmem:[%s316 + $0x2c] sm:$0xf] %vm2339, %v2318
      %2352 = vst.msk [vmem:[%s316 + $0x30] sm:$0xf] %vm2339, %v2319
      %2353 = vst.msk [vmem:[%s316 + $0x34] sm:$0xf] %vm2339, %v2320
      %2354 = vst.msk [vmem:[%s316 + $0x38] sm:$0xf] %vm2339, %v2321
      %2355 = vst.msk [vmem:[%s316 + $0x3c] sm:$0xf] %vm2339, %v2322
      %2356 = vst.msk [vmem:[%s316 + $0x40] sm:$0xf] %vm2339, %v2323
      %2357 = vst.msk [vmem:[%s316 + $0x44] sm:$0xf] %vm2339, %v2324
      %2358 = vst.msk [vmem:[%s316 + $0x48] sm:$0xf] %vm2339, %v2325
      %2359 = vst.msk [vmem:[%s316 + $0x4c] sm:$0xf] %vm2339, %v2326
      %2360 = vst.msk [vmem:[%s316 + $0x50] sm:$0xf] %vm2339, %v2327
      %2361 = vst.msk [vmem:[%s316 + $0x54] sm:$0xf] %vm2339, %v2328
      %2362 = vst.msk [vmem:[%s316 + $0x58] sm:$0xf] %vm2339, %v2329
      %2363 = vst.msk [vmem:[%s316 + $0x5c] sm:$0xf] %vm2339, %v2330
      %2364 = vst.msk [vmem:[%s316 + $0x60] sm:$0xf] %vm2339, %v2331
      %2365 = vst.msk [vmem:[%s316 + $0x64] sm:$0xf] %vm2339, %v2332
      %2366 = vst.msk [vmem:[%s316 + $0x68] sm:$0xf] %vm2339, %v2333
      %2367 = vst.msk [vmem:[%s316 + $0x6c] sm:$0xf] %vm2339, %v2334
      %2368 = vst.msk [vmem:[%s316 + $0x70] sm:$0xf] %vm2339, %v2335
      %2369 = vst.msk [vmem:[%s316 + $0x74] sm:$0xf] %vm2339, %v2336
      %2370 = vst.msk [vmem:[%s316 + $0x78] sm:$0xf] %vm2339, %v2337
      %2371 = vst.msk [vmem:[%s316 + $0x7c] sm:$0xf] %vm2339, %v2338
      %s2372 = smul.u32 32, %s20
      %p2373 = scmp.lt.s32.totalorder %s19, 1
      %s2374 = scalar_select %p2373, %s19, 1
      %p2375 = scmp.lt.s32.totalorder %s2372, 31
      %s2376 = scalar_select %p2375, %s2372, 31
      %s2377 = smul.addr %s2374, 32
      %s2378 = sadd.s32 %s2376, %s2377
      %s2379 = smul.addr %s2378, 4
      %s2380 = scalar_lea.vmem %s4, %s2379
      // Predicated region
      $region37: #{vgg_forward.5} parent=35 // pred_check
        %p2381 = pneg %p149
      $region38: #{vgg_forward.5} parent=35 // pred_check_branch
        %2383 = sbr.rel (%p2381) target = $region40
      $region39: #{vgg_forward.5} parent=35 // pred_region
        %s2384 = smul.u32 32, %s20
      $region40: #{vgg_forward.5} parent=35 // pred_fallthru
        _
    $region36: #{vgg_forward.5} parent=5 // pred_fallthru
      _
    %p2385 = scmp.le.s32.totalorder 2, %s10
    // Predicated region
    $region41: #{vgg_forward.5} parent=5 // pred_check
      %p2386 = pneg %p2385
    $region42: #{vgg_forward.5} parent=5 // pred_check_branch
      %2388 = sbr.rel (%p2386) target = $region44
    $region43: #{vgg_forward.5} parent=5 // pred_region
      %s2389 = ssub.s32 %s10, 2
      // Predicated region
      $region45: #{vgg_forward.5} parent=43 // pred_check
        %p2390 = pneg %p155
      $region46: #{vgg_forward.5} parent=43 // pred_check_branch
        %2392 = sbr.rel (%p2390) target = $region48
      $region47: #{vgg_forward.5} parent=43 // pred_region
        %s2393 = smul.u32 32, %s22
        %p2394 = scmp.lt.s32.totalorder %s21, 1
        %s2395 = scalar_select %p2394, %s21, 1
        %p2396 = scmp.lt.s32.totalorder %s2393, 31
        %s2397 = scalar_select %p2396, %s2393, 31
        %s2398 = smul.addr %s2395, 32
        %s2399 = sadd.s32 %s2397, %s2398
        %s2400 = smul.addr %s2399, 4
        %s2401 = scalar_lea.vmem %s4, %s2400
      $region48: #{vgg_forward.5} parent=43 // pred_fallthru
        _
    $region44: #{vgg_forward.5} parent=5 // pred_fallthru
      _
  $region6: #{vgg_forward.5} parent=0 // loop_footer
    %s14 = sadd.s32 1, %s10
  $region7: #{vgg_forward.5} parent=0 // loop_footer_branch
    %9 = sbr.rel target = $region3
  $region8: #{vgg_forward.5} parent=0 // loop_exit
    _

// kernel: vgg_forward.6
$region0: #{vgg_forward.6}
  #allocation0 [shape = 'u32[]', space=smem, size = 0x4, offset = 0x4, fixed_abs, tag = 'smem constant byte address 0x4 - core index']
  #allocation1 [shape = 'u32[72,128]{1,0:T(1,128)}', space=vmem, size = 0x9000, scoped, tag = 'internal scratch']
  #allocation2 [shape = 'bf16[18,16,192]{2,1,0:T(8,128)(2,1)}', space=vmem, size = 0x24000, scoped, tag = 'scratch operand']
  %s0 = inlined_call_operand.vmem [shape: bf16[2,18,18,64], index: 0, kind: input, shape index: {}, may-alias: {0,1}]
  %s1 = inlined_call_operand.vmem [shape: bf16[2,18,18,64], index: 1, kind: input, shape index: {}, may-alias: {0,1}]
  %s2 = inlined_call_operand.vmem [shape: bf16[3,192,64], index: 2, kind: input, shape index: {}]
  %s3 = inlined_call_operand.vmem [shape: f32[1,64], index: 3, kind: input, shape index: {}]
  %s4 = inlined_call_operand.vmem [shape: bf16[2,256,64], index: 4, kind: output, shape index: {}]
  %s5 = sld [smem:[#allocation0]]
  $region49: #{vgg_forward.6} parent=0
    _
  %s7 = ssub.s32 1, %s5
  %s8 = scalar_select 0, %s7, %s5
  loop: start=0, step=1, limit=4
  $region2: #{vgg_forward.6} parent=0 // loop_pre_header
    _
  $region3: #{vgg_forward.6} parent=0 // loop_header
    %s10 = sphi 0, %s14
    %p11 = scmp.ge.s32.totalorder %s10, 4
    %s17 = sphi 0, %s29
    %s18 = sphi 0, %s25
    %s19 = sphi 0, %s17
    %s20 = sphi 0, %s18
    %s21 = sphi 0, %s19
    %s22 = sphi 0, %s20
    %s34 = sphi 0, %s36
    %s37 = sphi 0, %s34
    %s38 = sphi 0, %s37
    %s54 = sphi 0, %s38
    %s66 = sphi 0, %s68
    %s69 = sphi 0, %s66
    %s70 = sphi 0, %s69
    %s86 = sphi 0, %s70
    %s90 = sphi 0, %s90
    %s92 = sphi 0, %s90
    %s93 = sphi 0, %s92
    %s107 = sphi 0, %s93
    %s111 = sphi 0, %s111
    %s113 = sphi 0, %s111
    %s114 = sphi 0, %s113
    %s128 = sphi 0, %s114
    %s136 = sphi 0, %s138
    %s139 = sphi 0, %s136
    %s140 = sphi 0, %s139
    %s156 = sphi 0, %s140
  $region4: #{vgg_forward.6} parent=0 // loop_header_branch
    %13 = sbr.rel (%p11) target = $region8
  $region5: #{vgg_forward.6} parent=0 // loop_body
    %s15 = ssub.s32 %s10, 1
    %s16 = ssub.s32 %s10, 2
    %s23 = sadd.s32 1, %s18
    %p24 = scmp.ge.s32.totalorder %s23, 1
    %s25 = scalar_select %p24, 0, %s23
    %s26 = sadd.s32 1, %s17
    %s27 = scalar_select %p24, %s26, %s17
    %p28 = scmp.ge.s32.totalorder %s27, 2
    %s29 = scalar_select %p28, 0, %s27
    %s30 = ssub.s32 %s17, %s29
    %s31 = ssub.s32 %s18, %s25
    %s32 = sor.u32 %s30, %s31
    %p33 = scmp.eq.s32.totalorder %s32, 0
    %s35 = sadd.s32 %s34, 1
    %s36 = scalar_select %p33, %s34, %s35
    %p39 = pneg %p33
    %p40 = scmp.eq.s32.totalorder %s10, 1
    %p41 = por %p39, %p40
    %p42 = scmp.ne.s32.totalorder %s34, %s37
    %p43 = scmp.eq.s32.totalorder %s10, 0
    %p44 = por %p42, %p43
    %p45 = scmp.ne.s32.totalorder %s34, %s37
    %p46 = scmp.eq.s32.totalorder %s15, 1
    %p47 = por %p45, %p46
    %p48 = scmp.ne.s32.totalorder %s37, %s38
    %p49 = scmp.eq.s32.totalorder %s15, 0
    %p50 = por %p48, %p49
    %p51 = scmp.ne.s32.totalorder %s37, %s38
    %p52 = scmp.eq.s32.totalorder %s16, 1
    %p53 = por %p51, %p52
    %p55 = scmp.ne.s32.totalorder %s38, %s54
    %p56 = scmp.eq.s32.totalorder %s16, 0
    %p57 = por %p55, %p56
    %s58 = sadd.s32 %s18, 1
    %s59 = smul.u32 %s58, 8
    %s60 = sadd.s32 %s25, 1
    %s61 = smul.u32 %s60, 8
    %s62 = ssub.s32 %s17, %s29
    %s63 = ssub.s32 %s59, %s61
    %s64 = sor.u32 %s62, %s63
    %p65 = scmp.eq.s32.totalorder %s64, 0
    %s67 = sadd.s32 %s66, 1
    %s68 = scalar_select %p65, %s66, %s67
    %p71 = pneg %p65
    %p72 = scmp.eq.s32.totalorder %s10, 1
    %p73 = por %p71, %p72
    %p74 = scmp.ne.s32.totalorder %s66, %s69
    %p75 = scmp.eq.s32.totalorder %s10, 0
    %p76 = por %p74, %p75
    %p77 = scmp.ne.s32.totalorder %s66, %s69
    %p78 = scmp.eq.s32.totalorder %s15, 1
    %p79 = por %p77, %p78
    %p80 = scmp.ne.s32.totalorder %s69, %s70
    %p81 = scmp.eq.s32.totalorder %s15, 0
    %p82 = por %p80, %p81
    %p83 = scmp.ne.s32.totalorder %s69, %s70
    %p84 = scmp.eq.s32.totalorder %s16, 1
    %p85 = por %p83, %p84
    %p87 = scmp.ne.s32.totalorder %s70, %s86
    %p88 = scmp.eq.s32.totalorder %s16, 0
    %p89 = por %p87, %p88
    %s91 = sadd.s32 %s90, 1
    %p94 = scmp.eq.s32.totalorder %s10, 1
    %p95 = scmp.ne.s32.totalorder %s90, %s92
    %p96 = scmp.eq.s32.totalorder %s10, 0
    %p97 = por %p95, %p96
    %p98 = scmp.ne.s32.totalorder %s90, %s92
    %p99 = scmp.eq.s32.totalorder %s15, 1
    %p100 = por %p98, %p99
    %p101 = scmp.ne.s32.totalorder %s92, %s93
    %p102 = scmp.eq.s32.totalorder %s15, 0
    %p103 = por %p101, %p102
    %p104 = scmp.ne.s32.totalorder %s92, %s93
    %p105 = scmp.eq.s32.totalorder %s16, 1
    %p106 = por %p104, %p105
    %p108 = scmp.ne.s32.totalorder %s93, %s107
    %p109 = scmp.eq.s32.totalorder %s16, 0
    %p110 = por %p108, %p109
    %s112 = sadd.s32 %s111, 1
    %p115 = scmp.eq.s32.totalorder %s10, 1
    %p116 = scmp.ne.s32.totalorder %s111, %s113
    %p117 = scmp.eq.s32.totalorder %s10, 0
    %p118 = por %p116, %p117
    %p119 = scmp.ne.s32.totalorder %s111, %s113
    %p120 = scmp.eq.s32.totalorder %s15, 1
    %p121 = por %p119, %p120
    %p122 = scmp.ne.s32.totalorder %s113, %s114
    %p123 = scmp.eq.s32.totalorder %s15, 0
    %p124 = por %p122, %p123
    %p125 = scmp.ne.s32.totalorder %s113, %s114
    %p126 = scmp.eq.s32.totalorder %s16, 1
    %p127 = por %p125, %p126
    %p129 = scmp.ne.s32.totalorder %s114, %s128
    %p130 = scmp.eq.s32.totalorder %s16, 0
    %p131 = por %p129, %p130
    %s132 = ssub.s32 %s17, %s29
    %s133 = ssub.s32 %s18, %s25
    %s134 = sor.u32 %s132, %s133
    %p135 = scmp.eq.s32.totalorder %s134, 0
    %s137 = sadd.s32 %s136, 1
    %s138 = scalar_select %p135, %s136, %s137
    %p141 = pneg %p135
    %p142 = scmp.eq.s32.totalorder %s10, 1
    %p143 = por %p141, %p142
    %p144 = scmp.ne.s32.totalorder %s136, %s139
    %p145 = scmp.eq.s32.totalorder %s10, 0
    %p146 = por %p144, %p145
    %p147 = scmp.ne.s32.totalorder %s136, %s139
    %p148 = scmp.eq.s32.totalorder %s15, 1
    %p149 = por %p147, %p148
    %p150 = scmp.ne.s32.totalorder %s139, %s140
    %p151 = scmp.eq.s32.totalorder %s15, 0
    %p152 = por %p150, %p151
    %p153 = scmp.ne.s32.totalorder %s139, %s140
    %p154 = scmp.eq.s32.totalorder %s16, 1
    %p155 = por %p153, %p154
    %p157 = scmp.ne.s32.totalorder %s140, %s156
    %p158 = scmp.eq.s32.totalorder %s16, 0
    %p159 = por %p157, %p158
    %p160 = scmp.le.s32.totalorder 1, %s10
    %p161 = scmp.lt.s32.totalorder %s10, 3
    %p162 = pnand %p160, %p161
    %p163 = pneg %p162
    // Predicated region
    $region9: #{vgg_forward.6} parent=5 // pred_check
      _
    $region10: #{vgg_forward.6} parent=5 // pred_check_branch
      %165 = sbr.rel (%p162) target = $region12
    $region11: #{vgg_forward.6} parent=5 // pred_region
      %s166 = ssub.s32 %s10, 1
      // Predicated region
      $region13: #{vgg_forward.6} parent=11 // pred_check
        %p167 = pneg %p103
      $region14: #{vgg_forward.6} parent=11 // pred_check_branch
        %169 = sbr.rel (%p167) target = $region16
      $region15: #{vgg_forward.6} parent=11 // pred_region
        _
      $region16: #{vgg_forward.6} parent=11 // pred_fallthru
        _
      // Predicated region
      $region17: #{vgg_forward.6} parent=11 // pred_check
        %p170 = pneg %p124
      $region18: #{vgg_forward.6} parent=11 // pred_check_branch
        %172 = sbr.rel (%p170) target = $region20
      $region19: #{vgg_forward.6} parent=11 // pred_region
        _
      $region20: #{vgg_forward.6} parent=11 // pred_fallthru
        _
    $region12: #{vgg_forward.6} parent=5 // pred_fallthru
      _
    %p173 = scmp.lt.s32.totalorder %s10, 2
    // Predicated region
    $region21: #{vgg_forward.6} parent=5 // pred_check
      %p174 = pneg %p173
    $region22: #{vgg_forward.6} parent=5 // pred_check_branch
      %176 = sbr.rel (%p174) target = $region24
    $region23: #{vgg_forward.6} parent=5 // pred_region
      // Predicated region
      $region25: #{vgg_forward.6} parent=23 // pred_check
        %p177 = pneg %p44
      $region26: #{vgg_forward.6} parent=23 // pred_check_branch
        %179 = sbr.rel (%p177) target = $region28
      $region27: #{vgg_forward.6} parent=23 // pred_region
        %s180 = smul.u32 16, %s18
        %s181 = ssub.s32 18, %s180
        %p182 = scmp.lt.s32.totalorder %s181, 16
        %s183 = scalar_select %p182, %s181, 16
        %s184 = smul.u32 4, %s183
        %s185 = smul.u32 %s184, 3
        %p186 = scmp.lt.s32.totalorder %s17, 1
        %s187 = scalar_select %p186, %s17, 1
        %p188 = scmp.lt.s32.totalorder %s180, 17
        %s189 = scalar_select %p188, %s180, 17
        %s190 = smul.addr %s189, 3
        %s191 = smul.addr %s187, 54
        %s192 = sadd.s32 %s190, %s191
        %s193 = smul.addr %s192, 4
        %s194 = scalar_lea.vmem %s0, %s193
        %s195 = smul.u32 16, %s18
        %s196 = ssub.s32 18, %s195
        %p197 = scmp.lt.s32.totalorder %s196, 16
        %s198 = scalar_select %p197, %s196, 16
        %s199 = smul.u32 4, %s198
        %s200 = smul.u32 %s199, 3
      $region28: #{vgg_forward.6} parent=23 // pred_fallthru
        _
      // Predicated region
      $region29: #{vgg_forward.6} parent=23 // pred_check
        %p201 = pneg %p76
      $region30: #{vgg_forward.6} parent=23 // pred_check_branch
        %203 = sbr.rel (%p201) target = $region32
      $region31: #{vgg_forward.6} parent=23 // pred_region
        %s204 = sadd.s32 %s18, 1
        %s205 = smul.u32 %s204, 8
        %s206 = smul.u32 2, %s205
        %p207 = scmp.lt.s32.totalorder %s17, 1
        %s208 = scalar_select %p207, %s17, 1
        %p209 = scmp.lt.s32.totalorder %s206, 17
        %s210 = scalar_select %p209, %s206, 17
        %s211 = smul.addr %s210, 3
        %s212 = smul.addr %s208, 54
        %s213 = sadd.s32 %s211, %s212
        %s214 = smul.addr %s213, 4
        %s215 = scalar_lea.vmem %s1, %s214
        %s216 = sadd.s32 %s18, 1
        %s217 = smul.u32 %s216, 8
        %s218 = smul.u32 2, %s217
      $region32: #{vgg_forward.6} parent=23 // pred_fallthru
        _
    $region24: #{vgg_forward.6} parent=5 // pred_fallthru
      _
    %p219 = scmp.le.s32.totalorder 1, %s10
    %p220 = scmp.lt.s32.totalorder %s10, 3
    %p221 = pnand %p219, %p220
    %p222 = pneg %p221
    // Predicated region
    $region33: #{vgg_forward.6} parent=5 // pred_check
      _
    $region34: #{vgg_forward.6} parent=5 // pred_check_branch
      %224 = sbr.rel (%p221) target = $region36
    $region35: #{vgg_forward.6} parent=5 // pred_region
      %s225 = ssub.s32 %s10, 1
      %s226 = smul.u32 16, %s20
      %s227 = ssub.s32 18, %s226
      %p228 = scmp.lt.s32.totalorder %s227, 16
      %s229 = scalar_select %p228, %s227, 16
      %s230 = smul.u32 4, %s229
      %s231 = smul.u32 %s230, 3
      %p232 = scmp.lt.s32.totalorder %s19, 1
      %s233 = scalar_select %p232, %s19, 1
      %p234 = scmp.lt.s32.totalorder %s226, 17
      %s235 = scalar_select %p234, %s226, 17
      %s236 = smul.addr %s235, 3
      %s237 = smul.addr %s233, 54
      %s238 = sadd.s32 %s236, %s237
      %s239 = smul.addr %s238, 4
      %s240 = scalar_lea.vmem %s0, %s239
      %p241 = pneg %p50
      %p242 = pneg %p47
      %s243 = sadd.s32 %s20, 1
      %s244 = smul.u32 %s243, 8
      %s245 = smul.u32 2, %s244
      %p246 = scmp.lt.s32.totalorder %s19, 1
      %s247 = scalar_select %p246, %s19, 1
      %p248 = scmp.lt.s32.totalorder %s245, 17
      %s249 = scalar_select %p248, %s245, 17
      %s250 = smul.addr %s249, 3
      %s251 = smul.addr %s247, 54
      %s252 = sadd.s32 %s250, %s251
      %s253 = smul.addr %s252, 4
      %s254 = scalar_lea.vmem %s1, %s253
      %p255 = pneg %p82
      %p256 = pneg %p79
      %p257 = pneg %p103
      %p258 = pneg %p100
      %p259 = pneg %p124
      %p260 = pneg %p121
      %p261 = pneg %p152
      %p262 = pneg %p149
      %s263 = smul.u32 32, %s20
      %p264 = scmp.lt.s32.totalorder %s19, 1
      %s265 = scalar_select %p264, %s19, 1
      %p266 = scmp.lt.s32.totalorder %s263, 31
      %s267 = scalar_select %p266, %s263, 31
      %s268 = smul.addr %s265, 32
      %s269 = sadd.s32 %s267, %s268
      %s270 = smul.addr %s269, 4
      %s271 = scalar_lea.vmem %s4, %s270
      %s272 = smul.u32 16, %s20
      %s273 = ssub.s32 18, %s272
      %p274 = scmp.lt.s32.totalorder %s273, 16
      %s275 = scalar_select %p274, %s273, 16
      %s276 = smul.u32 4, %s275
      %s277 = smul.u32 %s276, 3
      %p278 = scmp.lt.s32.totalorder %s19, 1
      %s279 = scalar_select %p278, %s19, 1
      %p280 = scmp.lt.s32.totalorder %s272, 17
      %s281 = scalar_select %p280, %s272, 17
      %s282 = smul.addr %s281, 3
      %s283 = smul.addr %s279, 54
      %s284 = sadd.s32 %s282, %s283
      %s285 = smul.addr %s284, 4
      %s286 = scalar_lea.vmem %s0, %s285
      %s287 = smul.u32 16, %s20
      %s288 = ssub.s32 18, %s287
      %p289 = scmp.lt.s32.totalorder %s288, 16
      %s290 = scalar_select %p289, %s288, 16
      %s291 = smul.u32 4, %s290
      %s292 = smul.u32 %s291, 3
      %s293 = sadd.s32 %s20, 1
      %s294 = smul.u32 %s293, 8
      %s295 = smul.u32 2, %s294
      %p296 = scmp.lt.s32.totalorder %s19, 1
      %s297 = scalar_select %p296, %s19, 1
      %p298 = scmp.lt.s32.totalorder %s295, 17
      %s299 = scalar_select %p298, %s295, 17
      %s300 = smul.addr %s299, 3
      %s301 = smul.addr %s297, 54
      %s302 = sadd.s32 %s300, %s301
      %s303 = smul.addr %s302, 4
      %s304 = scalar_lea.vmem %s1, %s303
      %s305 = sadd.s32 %s20, 1
      %s306 = smul.u32 %s305, 8
      %s307 = smul.u32 2, %s306
      %s308 = smul.u32 32, %s20
      %p309 = scmp.lt.s32.totalorder %s19, 1
      %s310 = scalar_select %p309, %s19, 1
      %p311 = scmp.lt.s32.totalorder %s308, 31
      %s312 = scalar_select %p311, %s308, 31
      %s313 = smul.addr %s310, 32
      %s314 = sadd.s32 %s312, %s313
      %s315 = smul.addr %s314, 4
      %s316 = scalar_lea.vmem %s4, %s315
      %s317 = smul.u32 32, %s20
      %v319 = vld [vmem:[%s286] sm:$0xf]
      %v320 = vld [vmem:[%s286 + $0x4] sm:$0xf]
      %v321 = vld [vmem:[%s286 + $0xc] sm:$0xf]
      %v322 = vld [vmem:[%s286 + $0x10] sm:$0xf]
      %v323 = vld [vmem:[%s286 + $0x18] sm:$0xf]
      %v324 = vld [vmem:[%s286 + $0x1c] sm:$0xf]
      %v325 = vld [vmem:[%s286 + $0x24] sm:$0xf]
      %v326 = vld [vmem:[%s286 + $0x28] sm:$0xf]
      %v327 = vld [vmem:[%s286 + $0x30] sm:$0xf]
      %v328 = vld [vmem:[%s286 + $0x34] sm:$0xf]
      %v329 = vld [vmem:[%s286 + $0x3c] sm:$0xf]
      %v330 = vld [vmem:[%s286 + $0x40] sm:$0xf]
      %v331 = vld [vmem:[%s286 + $0x48] sm:$0xf]
      %v332 = vld [vmem:[%s286 + $0x4c] sm:$0xf]
      %v333 = vld [vmem:[%s286 + $0x54] sm:$0xf]
      %v334 = vld [vmem:[%s286 + $0x58] sm:$0xf]
      %v335 = vld [vmem:[%s286 + $0x60] sm:$0xf]
      %v336 = vld [vmem:[%s286 + $0x64] sm:$0xf]
      %v337 = vld [vmem:[%s286 + $0x6c] sm:$0xf]
      %v338 = vld [vmem:[%s286 + $0x70] sm:$0xf]
      %v339 = vld [vmem:[%s286 + $0x78] sm:$0xf]
      %v340 = vld [vmem:[%s286 + $0x7c] sm:$0xf]
      %v341 = vld [vmem:[%s286 + $0x84] sm:$0xf]
      %v342 = vld [vmem:[%s286 + $0x88] sm:$0xf]
      %v343 = vld [vmem:[%s286 + $0x90] sm:$0xf]
      %v344 = vld [vmem:[%s286 + $0x94] sm:$0xf]
      %v345 = vld [vmem:[%s286 + $0x9c] sm:$0xf]
      %v346 = vld [vmem:[%s286 + $0xa0] sm:$0xf]
      %v347 = vld [vmem:[%s286 + $0xa8] sm:$0xf]
      %v348 = vld [vmem:[%s286 + $0xac] sm:$0xf]
      %v349 = vld [vmem:[%s286 + $0xb4] sm:$0xf]
      %v350 = vld [vmem:[%s286 + $0xb8] sm:$0xf]
      %vm351 = vcmask 519168
      %352 = vst.msk [vmem:[#allocation2] sm:$0xf] %vm351, %v319
      %353 = vst.msk [vmem:[#allocation2 + $0x8] sm:$0xf] %vm351, %v320
      %354 = vst.msk [vmem:[#allocation2 + $0x10] sm:$0xf] %vm351, %v321
      %355 = vst.msk [vmem:[#allocation2 + $0x18] sm:$0xf] %vm351, %v322
      %356 = vst.msk [vmem:[#allocation2 + $0x20] sm:$0xf] %vm351, %v323
      %357 = vst.msk [vmem:[#allocation2 + $0x28] sm:$0xf] %vm351, %v324
      %358 = vst.msk [vmem:[#allocation2 + $0x30] sm:$0xf] %vm351, %v325
      %359 = vst.msk [vmem:[#allocation2 + $0x38] sm:$0xf] %vm351, %v326
      %360 = vst.msk [vmem:[#allocation2 + $0x40] sm:$0xf] %vm351, %v327
      %361 = vst.msk [vmem:[#allocation2 + $0x48] sm:$0xf] %vm351, %v328
      %362 = vst.msk [vmem:[#allocation2 + $0x50] sm:$0xf] %vm351, %v329
      %363 = vst.msk [vmem:[#allocation2 + $0x58] sm:$0xf] %vm351, %v330
      %364 = vst.msk [vmem:[#allocation2 + $0x60] sm:$0xf] %vm351, %v331
      %365 = vst.msk [vmem:[#allocation2 + $0x68] sm:$0xf] %vm351, %v332
      %366 = vst.msk [vmem:[#allocation2 + $0x70] sm:$0xf] %vm351, %v333
      %367 = vst.msk [vmem:[#allocation2 + $0x78] sm:$0xf] %vm351, %v334
      %368 = vst.msk [vmem:[#allocation2 + $0x80] sm:$0xf] %vm351, %v335
      %369 = vst.msk [vmem:[#allocation2 + $0x88] sm:$0xf] %vm351, %v336
      %370 = vst.msk [vmem:[#allocation2 + $0x90] sm:$0xf] %vm351, %v337
      %371 = vst.msk [vmem:[#allocation2 + $0x98] sm:$0xf] %vm351, %v338
      %372 = vst.msk [vmem:[#allocation2 + $0xa0] sm:$0xf] %vm351, %v339
      %373 = vst.msk [vmem:[#allocation2 + $0xa8] sm:$0xf] %vm351, %v340
      %374 = vst.msk [vmem:[#allocation2 + $0xb0] sm:$0xf] %vm351, %v341
      %375 = vst.msk [vmem:[#allocation2 + $0xb8] sm:$0xf] %vm351, %v342
      %376 = vst.msk [vmem:[#allocation2 + $0xc0] sm:$0xf] %vm351, %v343
      %377 = vst.msk [vmem:[#allocation2 + $0xc8] sm:$0xf] %vm351, %v344
      %378 = vst.msk [vmem:[#allocation2 + $0xd0] sm:$0xf] %vm351, %v345
      %379 = vst.msk [vmem:[#allocation2 + $0xd8] sm:$0xf] %vm351, %v346
      %380 = vst.msk [vmem:[#allocation2 + $0xe0] sm:$0xf] %vm351, %v347
      %381 = vst.msk [vmem:[#allocation2 + $0xe8] sm:$0xf] %vm351, %v348
      %382 = vst.msk [vmem:[#allocation2 + $0xf0] sm:$0xf] %vm351, %v349
      %383 = vst.msk [vmem:[#allocation2 + $0xf8] sm:$0xf] %vm351, %v350
      %v384 = vld [vmem:[%s304] sm:$0xf]
      %v385 = vld [vmem:[%s304 + $0x4] sm:$0xf]
      %v386 = vld [vmem:[%s304 + $0xc] sm:$0xf]
      %v387 = vld [vmem:[%s304 + $0x10] sm:$0xf]
      %s388 = scalar_lea.vmem [#allocation2], 256
      %389 = vst.msk [vmem:[%s388] sm:$0xf] %vm351, %v384
      %390 = vst.msk [vmem:[%s388 + $0x8] sm:$0xf] %vm351, %v385
      %391 = vst.msk [vmem:[%s388 + $0x10] sm:$0xf] %vm351, %v386
      %392 = vst.msk [vmem:[%s388 + $0x18] sm:$0xf] %vm351, %v387
      %v393 = vld [vmem:[%s286] sm:$0xf]
      %v394 = vld [vmem:[%s286 + $0x4] sm:$0xf]
      %v395 = vld [vmem:[%s286 + $0x8] sm:$0x1]
      %v396 = vld [vmem:[%s286 + $0xc] sm:$0xf]
      %v397 = vld [vmem:[%s286 + $0x10] sm:$0xf]
      %v398 = vld [vmem:[%s286 + $0x14] sm:$0x1]
      %v399 = vld [vmem:[%s286 + $0x18] sm:$0xf]
      %v400 = vld [vmem:[%s286 + $0x1c] sm:$0xf]
      %v401 = vld [vmem:[%s286 + $0x20] sm:$0x1]
      %v402 = vld [vmem:[%s286 + $0x24] sm:$0xf]
      %v403 = vld [vmem:[%s286 + $0x28] sm:$0xf]
      %v404 = vld [vmem:[%s286 + $0x2c] sm:$0x1]
      %v405 = vld [vmem:[%s286 + $0x30] sm:$0xf]
      %v406 = vld [vmem:[%s286 + $0x34] sm:$0xf]
      %v407 = vld [vmem:[%s286 + $0x38] sm:$0x1]
      %v408 = vld [vmem:[%s286 + $0x3c] sm:$0xf]
      %v409 = vld [vmem:[%s286 + $0x40] sm:$0xf]
      %v410 = vld [vmem:[%s286 + $0x44] sm:$0x1]
      %v411 = vld [vmem:[%s286 + $0x48] sm:$0xf]
      %v412 = vld [vmem:[%s286 + $0x4c] sm:$0xf]
      %v413 = vld [vmem:[%s286 + $0x50] sm:$0x1]
      %v414 = vld [vmem:[%s286 + $0x54] sm:$0xf]
      %v415 = vld [vmem:[%s286 + $0x58] sm:$0xf]
      %v416 = vld [vmem:[%s286 + $0x5c] sm:$0x1]
      %v417 = vld [vmem:[%s286 + $0x60] sm:$0xf]
      %v418 = vld [vmem:[%s286 + $0x64] sm:$0xf]
      %v419 = vld [vmem:[%s286 + $0x68] sm:$0x1]
      %v420 = vld [vmem:[%s286 + $0x6c] sm:$0xf]
      %v421 = vld [vmem:[%s286 + $0x70] sm:$0xf]
      %v422 = vld [vmem:[%s286 + $0x74] sm:$0x1]
      %v423 = vld [vmem:[%s286 + $0x78] sm:$0xf]
      %v424 = vld [vmem:[%s286 + $0x7c] sm:$0xf]
      %v425 = vld [vmem:[%s286 + $0x80] sm:$0x1]
      %v426 = vld [vmem:[%s286 + $0x84] sm:$0xf]
      %v427 = vld [vmem:[%s286 + $0x88] sm:$0xf]
      %v428 = vld [vmem:[%s286 + $0x8c] sm:$0x1]
      %v429 = vld [vmem:[%s286 + $0x90] sm:$0xf]
      %v430 = vld [vmem:[%s286 + $0x94] sm:$0xf]
      %v431 = vld [vmem:[%s286 + $0x98] sm:$0x1]
      %v432 = vld [vmem:[%s286 + $0x9c] sm:$0xf]
      %v433 = vld [vmem:[%s286 + $0xa0] sm:$0xf]
      %v434 = vld [vmem:[%s286 + $0xa4] sm:$0x1]
      %v435 = vld [vmem:[%s286 + $0xa8] sm:$0xf]
      %v436 = vld [vmem:[%s286 + $0xac] sm:$0xf]
      %v437 = vld [vmem:[%s286 + $0xb0] sm:$0x1]
      %v438 = vld [vmem:[%s286 + $0xb4] sm:$0xf]
      %v439 = vld [vmem:[%s286 + $0xb8] sm:$0xf]
      %v440 = vld [vmem:[%s286 + $0xbc] sm:$0x1]
      %vm441 = vsmask.f32 3328
      %vm442 = vsmask.f32 7440
      %vm443 = vmor %vm441, %vm442
      %v445 = vshrl.u32 %v393, 16
      %v447 = vrot.slane %v445, 4
      %v448 = vshll.u32 %v393, 16
      %v450 = vrot.slane %v448, 5
      %v451 = vor.u32 %v447, %v450
      %v452 = vrot.slane %v451, 4
      %v454 = vshll.u32 %v394, 16
      %v456 = vrot.slane %v454, 5
      %v457 = vsel %vm443, %v452, %v456
      %v458 = vshrl.u32 %v394, 16
      %v460 = vrot.slane %v458, 4
      %v461 = vor.u32 %v460, %v456
      %v462 = vrot.slane %v461, 4
      %v464 = vshll.u32 %v395, 16
      %v466 = vrot.slane %v464, 5
      %v467 = vsel %vm443, %v462, %v466
      %v469 = vshrl.u32 %v396, 16
      %v471 = vrot.slane %v469, 4
      %v472 = vshll.u32 %v396, 16
      %v474 = vrot.slane %v472, 5
      %v475 = vor.u32 %v471, %v474
      %v476 = vrot.slane %v475, 4
      %v478 = vshll.u32 %v397, 16
      %v480 = vrot.slane %v478, 5
      %v481 = vsel %vm443, %v476, %v480
      %v482 = vshrl.u32 %v397, 16
      %v484 = vrot.slane %v482, 4
      %v485 = vor.u32 %v484, %v480
      %v486 = vrot.slane %v485, 4
      %v488 = vshll.u32 %v398, 16
      %v490 = vrot.slane %v488, 5
      %v491 = vsel %vm443, %v486, %v490
      %v493 = vshrl.u32 %v399, 16
      %v495 = vrot.slane %v493, 4
      %v496 = vshll.u32 %v399, 16
      %v498 = vrot.slane %v496, 5
      %v499 = vor.u32 %v495, %v498
      %v500 = vrot.slane %v499, 4
      %v502 = vshll.u32 %v400, 16
      %v504 = vrot.slane %v502, 5
      %v505 = vsel %vm443, %v500, %v504
      %v506 = vshrl.u32 %v400, 16
      %v508 = vrot.slane %v506, 4
      %v509 = vor.u32 %v508, %v504
      %v510 = vrot.slane %v509, 4
      %v512 = vshll.u32 %v401, 16
      %v514 = vrot.slane %v512, 5
      %v515 = vsel %vm443, %v510, %v514
      %v517 = vshrl.u32 %v402, 16
      %v519 = vrot.slane %v517, 4
      %v520 = vshll.u32 %v402, 16
      %v522 = vrot.slane %v520, 5
      %v523 = vor.u32 %v519, %v522
      %v524 = vrot.slane %v523, 4
      %v526 = vshll.u32 %v403, 16
      %v528 = vrot.slane %v526, 5
      %v529 = vsel %vm443, %v524, %v528
      %v530 = vshrl.u32 %v403, 16
      %v532 = vrot.slane %v530, 4
      %v533 = vor.u32 %v532, %v528
      %v534 = vrot.slane %v533, 4
      %v536 = vshll.u32 %v404, 16
      %v538 = vrot.slane %v536, 5
      %v539 = vsel %vm443, %v534, %v538
      %v541 = vshrl.u32 %v405, 16
      %v543 = vrot.slane %v541, 4
      %v544 = vshll.u32 %v405, 16
      %v546 = vrot.slane %v544, 5
      %v547 = vor.u32 %v543, %v546
      %v548 = vrot.slane %v547, 4
      %v550 = vshll.u32 %v406, 16
      %v552 = vrot.slane %v550, 5
      %v553 = vsel %vm443, %v548, %v552
      %v554 = vshrl.u32 %v406, 16
      %v556 = vrot.slane %v554, 4
      %v557 = vor.u32 %v556, %v552
      %v558 = vrot.slane %v557, 4
      %v560 = vshll.u32 %v407, 16
      %v562 = vrot.slane %v560, 5
      %v563 = vsel %vm443, %v558, %v562
      %v565 = vshrl.u32 %v408, 16
      %v567 = vrot.slane %v565, 4
      %v568 = vshll.u32 %v408, 16
      %v570 = vrot.slane %v568, 5
      %v571 = vor.u32 %v567, %v570
      %v572 = vrot.slane %v571, 4
      %v574 = vshll.u32 %v409, 16
      %v576 = vrot.slane %v574, 5
      %v577 = vsel %vm443, %v572, %v576
      %v578 = vshrl.u32 %v409, 16
      %v580 = vrot.slane %v578, 4
      %v581 = vor.u32 %v580, %v576
      %v582 = vrot.slane %v581, 4
      %v584 = vshll.u32 %v410, 16
      %v586 = vrot.slane %v584, 5
      %v587 = vsel %vm443, %v582, %v586
      %v589 = vshrl.u32 %v411, 16
      %v591 = vrot.slane %v589, 4
      %v592 = vshll.u32 %v411, 16
      %v594 = vrot.slane %v592, 5
      %v595 = vor.u32 %v591, %v594
      %v596 = vrot.slane %v595, 4
      %v598 = vshll.u32 %v412, 16
      %v600 = vrot.slane %v598, 5
      %v601 = vsel %vm443, %v596, %v600
      %v602 = vshrl.u32 %v412, 16
      %v604 = vrot.slane %v602, 4
      %v605 = vor.u32 %v604, %v600
      %v606 = vrot.slane %v605, 4
      %v608 = vshll.u32 %v413, 16
      %v610 = vrot.slane %v608, 5
      %v611 = vsel %vm443, %v606, %v610
      %v613 = vshrl.u32 %v414, 16
      %v615 = vrot.slane %v613, 4
      %v616 = vshll.u32 %v414, 16
      %v618 = vrot.slane %v616, 5
      %v619 = vor.u32 %v615, %v618
      %v620 = vrot.slane %v619, 4
      %v622 = vshll.u32 %v415, 16
      %v624 = vrot.slane %v622, 5
      %v625 = vsel %vm443, %v620, %v624
      %v626 = vshrl.u32 %v415, 16
      %v628 = vrot.slane %v626, 4
      %v629 = vor.u32 %v628, %v624
      %v630 = vrot.slane %v629, 4
      %v632 = vshll.u32 %v416, 16
      %v634 = vrot.slane %v632, 5
      %v635 = vsel %vm443, %v630, %v634
      %v637 = vshrl.u32 %v417, 16
      %v639 = vrot.slane %v637, 4
      %v640 = vshll.u32 %v417, 16
      %v642 = vrot.slane %v640, 5
      %v643 = vor.u32 %v639, %v642
      %v644 = vrot.slane %v643, 4
      %v646 = vshll.u32 %v418, 16
      %v648 = vrot.slane %v646, 5
      %v649 = vsel %vm443, %v644, %v648
      %v650 = vshrl.u32 %v418, 16
      %v652 = vrot.slane %v650, 4
      %v653 = vor.u32 %v652, %v648
      %v654 = vrot.slane %v653, 4
      %v656 = vshll.u32 %v419, 16
      %v658 = vrot.slane %v656, 5
      %v659 = vsel %vm443, %v654, %v658
      %v661 = vshrl.u32 %v420, 16
      %v663 = vrot.slane %v661, 4
      %v664 = vshll.u32 %v420, 16
      %v666 = vrot.slane %v664, 5
      %v667 = vor.u32 %v663, %v666
      %v668 = vrot.slane %v667, 4
      %v670 = vshll.u32 %v421, 16
      %v672 = vrot.slane %v670, 5
      %v673 = vsel %vm443, %v668, %v672
      %v674 = vshrl.u32 %v421, 16
      %v676 = vrot.slane %v674, 4
      %v677 = vor.u32 %v676, %v672
      %v678 = vrot.slane %v677, 4
      %v680 = vshll.u32 %v422, 16
      %v682 = vrot.slane %v680, 5
      %v683 = vsel %vm443, %v678, %v682
      %v685 = vshrl.u32 %v423, 16
      %v687 = vrot.slane %v685, 4
      %v688 = vshll.u32 %v423, 16
      %v690 = vrot.slane %v688, 5
      %v691 = vor.u32 %v687, %v690
      %v692 = vrot.slane %v691, 4
      %v694 = vshll.u32 %v424, 16
      %v696 = vrot.slane %v694, 5
      %v697 = vsel %vm443, %v692, %v696
      %v698 = vshrl.u32 %v424, 16
      %v700 = vrot.slane %v698, 4
      %v701 = vor.u32 %v700, %v696
      %v702 = vrot.slane %v701, 4
      %v704 = vshll.u32 %v425, 16
      %v706 = vrot.slane %v704, 5
      %v707 = vsel %vm443, %v702, %v706
      %v709 = vshrl.u32 %v426, 16
      %v711 = vrot.slane %v709, 4
      %v712 = vshll.u32 %v426, 16
      %v714 = vrot.slane %v712, 5
      %v715 = vor.u32 %v711, %v714
      %v716 = vrot.slane %v715, 4
      %v718 = vshll.u32 %v427, 16
      %v720 = vrot.slane %v718, 5
      %v721 = vsel %vm443, %v716, %v720
      %v722 = vshrl.u32 %v427, 16
      %v724 = vrot.slane %v722, 4
      %v725 = vor.u32 %v724, %v720
      %v726 = vrot.slane %v725, 4
      %v728 = vshll.u32 %v428, 16
      %v730 = vrot.slane %v728, 5
      %v731 = vsel %vm443, %v726, %v730
      %v733 = vshrl.u32 %v429, 16
      %v735 = vrot.slane %v733, 4
      %v736 = vshll.u32 %v429, 16
      %v738 = vrot.slane %v736, 5
      %v739 = vor.u32 %v735, %v738
      %v740 = vrot.slane %v739, 4
      %v742 = vshll.u32 %v430, 16
      %v744 = vrot.slane %v742, 5
      %v745 = vsel %vm443, %v740, %v744
      %v746 = vshrl.u32 %v430, 16
      %v748 = vrot.slane %v746, 4
      %v749 = vor.u32 %v748, %v744
      %v750 = vrot.slane %v749, 4
      %v752 = vshll.u32 %v431, 16
      %v754 = vrot.slane %v752, 5
      %v755 = vsel %vm443, %v750, %v754
      %v757 = vshrl.u32 %v432, 16
      %v759 = vrot.slane %v757, 4
      %v760 = vshll.u32 %v432, 16
      %v762 = vrot.slane %v760, 5
      %v763 = vor.u32 %v759, %v762
      %v764 = vrot.slane %v763, 4
      %v766 = vshll.u32 %v433, 16
      %v768 = vrot.slane %v766, 5
      %v769 = vsel %vm443, %v764, %v768
      %v770 = vshrl.u32 %v433, 16
      %v772 = vrot.slane %v770, 4
      %v773 = vor.u32 %v772, %v768
      %v774 = vrot.slane %v773, 4
      %v776 = vshll.u32 %v434, 16
      %v778 = vrot.slane %v776, 5
      %v779 = vsel %vm443, %v774, %v778
      %v781 = vshrl.u32 %v435, 16
      %v783 = vrot.slane %v781, 4
      %v784 = vshll.u32 %v435, 16
      %v786 = vrot.slane %v784, 5
      %v787 = vor.u32 %v783, %v786
      %v788 = vrot.slane %v787, 4
      %v790 = vshll.u32 %v436, 16
      %v792 = vrot.slane %v790, 5
      %v793 = vsel %vm443, %v788, %v792
      %v794 = vshrl.u32 %v436, 16
      %v796 = vrot.slane %v794, 4
      %v797 = vor.u32 %v796, %v792
      %v798 = vrot.slane %v797, 4
      %v800 = vshll.u32 %v437, 16
      %v802 = vrot.slane %v800, 5
      %v803 = vsel %vm443, %v798, %v802
      %v805 = vshrl.u32 %v438, 16
      %v807 = vrot.slane %v805, 4
      %v808 = vshll.u32 %v438, 16
      %v810 = vrot.slane %v808, 5
      %v811 = vor.u32 %v807, %v810
      %v812 = vrot.slane %v811, 4
      %v814 = vshll.u32 %v439, 16
      %v816 = vrot.slane %v814, 5
      %v817 = vsel %vm443, %v812, %v816
      %v818 = vshrl.u32 %v439, 16
      %v820 = vrot.slane %v818, 4
      %v821 = vor.u32 %v820, %v816
      %v822 = vrot.slane %v821, 4
      %v824 = vshll.u32 %v440, 16
      %v826 = vrot.slane %v824, 5
      %v827 = vsel %vm443, %v822, %v826
      %828 = vrot.lane.b32.xlu0 %v457, 64
      %v829 = vpop.permute.xlu0 %828
      %830 = vrot.lane.b32.xlu0 %v467, 64
      %v831 = vpop.permute.xlu0 %830
      %832 = vrot.lane.b32.xlu0 %v481, 64
      %v833 = vpop.permute.xlu0 %832
      %834 = vrot.lane.b32.xlu0 %v491, 64
      %v835 = vpop.permute.xlu0 %834
      %836 = vrot.lane.b32.xlu0 %v505, 64
      %v837 = vpop.permute.xlu0 %836
      %838 = vrot.lane.b32.xlu0 %v515, 64
      %v839 = vpop.permute.xlu0 %838
      %840 = vrot.lane.b32.xlu0 %v529, 64
      %v841 = vpop.permute.xlu0 %840
      %842 = vrot.lane.b32.xlu0 %v539, 64
      %v843 = vpop.permute.xlu0 %842
      %844 = vrot.lane.b32.xlu0 %v553, 64
      %v845 = vpop.permute.xlu0 %844
      %846 = vrot.lane.b32.xlu0 %v563, 64
      %v847 = vpop.permute.xlu0 %846
      %848 = vrot.lane.b32.xlu0 %v577, 64
      %v849 = vpop.permute.xlu0 %848
      %850 = vrot.lane.b32.xlu0 %v587, 64
      %v851 = vpop.permute.xlu0 %850
      %852 = vrot.lane.b32.xlu0 %v601, 64
      %v853 = vpop.permute.xlu0 %852
      %854 = vrot.lane.b32.xlu0 %v611, 64
      %v855 = vpop.permute.xlu0 %854
      %856 = vrot.lane.b32.xlu0 %v625, 64
      %v857 = vpop.permute.xlu0 %856
      %858 = vrot.lane.b32.xlu0 %v635, 64
      %v859 = vpop.permute.xlu0 %858
      %860 = vrot.lane.b32.xlu0 %v649, 64
      %v861 = vpop.permute.xlu0 %860
      %862 = vrot.lane.b32.xlu0 %v659, 64
      %v863 = vpop.permute.xlu0 %862
      %864 = vrot.lane.b32.xlu0 %v673, 64
      %v865 = vpop.permute.xlu0 %864
      %866 = vrot.lane.b32.xlu0 %v683, 64
      %v867 = vpop.permute.xlu0 %866
      %868 = vrot.lane.b32.xlu0 %v697, 64
      %v869 = vpop.permute.xlu0 %868
      %870 = vrot.lane.b32.xlu0 %v707, 64
      %v871 = vpop.permute.xlu0 %870
      %872 = vrot.lane.b32.xlu0 %v721, 64
      %v873 = vpop.permute.xlu0 %872
      %874 = vrot.lane.b32.xlu0 %v731, 64
      %v875 = vpop.permute.xlu0 %874
      %876 = vrot.lane.b32.xlu0 %v745, 64
      %v877 = vpop.permute.xlu0 %876
      %878 = vrot.lane.b32.xlu0 %v755, 64
      %v879 = vpop.permute.xlu0 %878
      %880 = vrot.lane.b32.xlu0 %v769, 64
      %v881 = vpop.permute.xlu0 %880
      %882 = vrot.lane.b32.xlu0 %v779, 64
      %v883 = vpop.permute.xlu0 %882
      %884 = vrot.lane.b32.xlu0 %v793, 64
      %v885 = vpop.permute.xlu0 %884
      %886 = vrot.lane.b32.xlu0 %v803, 64
      %v887 = vpop.permute.xlu0 %886
      %888 = vrot.lane.b32.xlu0 %v817, 64
      %v889 = vpop.permute.xlu0 %888
      %890 = vrot.lane.b32.xlu0 %v827, 64
      %v891 = vpop.permute.xlu0 %890
      %vm924 = vcmask 1043968
      %925 = vst.msk [vmem:[#allocation2] sm:$0xf] %vm924, %v829
      %926 = vst.msk [vmem:[#allocation2 + $0x8] sm:$0xf] %vm924, %v831
      %927 = vst.msk [vmem:[#allocation2 + $0x10] sm:$0xf] %vm924, %v833
      %928 = vst.msk [vmem:[#allocation2 + $0x18] sm:$0xf] %vm924, %v835
      %929 = vst.msk [vmem:[#allocation2 + $0x20] sm:$0xf] %vm924, %v837
      %930 = vst.msk [vmem:[#allocation2 + $0x28] sm:$0xf] %vm924, %v839
      %931 = vst.msk [vmem:[#allocation2 + $0x30] sm:$0xf] %vm924, %v841
      %932 = vst.msk [vmem:[#allocation2 + $0x38] sm:$0xf] %vm924, %v843
      %933 = vst.msk [vmem:[#allocation2 + $0x40] sm:$0xf] %vm924, %v845
      %934 = vst.msk [vmem:[#allocation2 + $0x48] sm:$0xf] %vm924, %v847
      %935 = vst.msk [vmem:[#allocation2 + $0x50] sm:$0xf] %vm924, %v849
      %936 = vst.msk [vmem:[#allocation2 + $0x58] sm:$0xf] %vm924, %v851
      %937 = vst.msk [vmem:[#allocation2 + $0x60] sm:$0xf] %vm924, %v853
      %938 = vst.msk [vmem:[#allocation2 + $0x68] sm:$0xf] %vm924, %v855
      %939 = vst.msk [vmem:[#allocation2 + $0x70] sm:$0xf] %vm924, %v857
      %940 = vst.msk [vmem:[#allocation2 + $0x78] sm:$0xf] %vm924, %v859
      %941 = vst.msk [vmem:[#allocation2 + $0x80] sm:$0xf] %vm924, %v861
      %942 = vst.msk [vmem:[#allocation2 + $0x88] sm:$0xf] %vm924, %v863
      %943 = vst.msk [vmem:[#allocation2 + $0x90] sm:$0xf] %vm924, %v865
      %944 = vst.msk [vmem:[#allocation2 + $0x98] sm:$0xf] %vm924, %v867
      %945 = vst.msk [vmem:[#allocation2 + $0xa0] sm:$0xf] %vm924, %v869
      %946 = vst.msk [vmem:[#allocation2 + $0xa8] sm:$0xf] %vm924, %v871
      %947 = vst.msk [vmem:[#allocation2 + $0xb0] sm:$0xf] %vm924, %v873
      %948 = vst.msk [vmem:[#allocation2 + $0xb8] sm:$0xf] %vm924, %v875
      %949 = vst.msk [vmem:[#allocation2 + $0xc0] sm:$0xf] %vm924, %v877
      %950 = vst.msk [vmem:[#allocation2 + $0xc8] sm:$0xf] %vm924, %v879
      %951 = vst.msk [vmem:[#allocation2 + $0xd0] sm:$0xf] %vm924, %v881
      %952 = vst.msk [vmem:[#allocation2 + $0xd8] sm:$0xf] %vm924, %v883
      %953 = vst.msk [vmem:[#allocation2 + $0xe0] sm:$0xf] %vm924, %v885
      %954 = vst.msk [vmem:[#allocation2 + $0xe8] sm:$0xf] %vm924, %v887
      %955 = vst.msk [vmem:[#allocation2 + $0xf0] sm:$0xf] %vm924, %v889
      %956 = vst.msk [vmem:[#allocation2 + $0xf8] sm:$0xf] %vm924, %v891
      %v957 = vld [vmem:[%s304] sm:$0xf]
      %v958 = vld [vmem:[%s304 + $0x4] sm:$0xf]
      %v959 = vld [vmem:[%s304 + $0x8] sm:$0x1]
      %v960 = vld [vmem:[%s304 + $0xc] sm:$0xf]
      %v961 = vld [vmem:[%s304 + $0x10] sm:$0xf]
      %v962 = vld [vmem:[%s304 + $0x14] sm:$0x1]
      %v964 = vshrl.u32 %v957, 16
      %v966 = vrot.slane %v964, 4
      %v967 = vshll.u32 %v957, 16
      %v969 = vrot.slane %v967, 5
      %v970 = vor.u32 %v966, %v969
      %v971 = vrot.slane %v970, 4
      %v973 = vshll.u32 %v958, 16
      %v975 = vrot.slane %v973, 5
      %v976 = vsel %vm443, %v971, %v975
      %v977 = vshrl.u32 %v958, 16
      %v979 = vrot.slane %v977, 4
      %v980 = vor.u32 %v979, %v975
      %v981 = vrot.slane %v980, 4
      %v983 = vshll.u32 %v959, 16
      %v985 = vrot.slane %v983, 5
      %v986 = vsel %vm443, %v981, %v985
      %v988 = vshrl.u32 %v960, 16
      %v990 = vrot.slane %v988, 4
      %v991 = vshll.u32 %v960, 16
      %v993 = vrot.slane %v991, 5
      %v994 = vor.u32 %v990, %v993
      %v995 = vrot.slane %v994, 4
      %v997 = vshll.u32 %v961, 16
      %v999 = vrot.slane %v997, 5
      %v1000 = vsel %vm443, %v995, %v999
      %v1001 = vshrl.u32 %v961, 16
      %v1003 = vrot.slane %v1001, 4
      %v1004 = vor.u32 %v1003, %v999
      %v1005 = vrot.slane %v1004, 4
      %v1007 = vshll.u32 %v962, 16
      %v1009 = vrot.slane %v1007, 5
      %v1010 = vsel %vm443, %v1005, %v1009
      %1011 = vrot.lane.b32.xlu0 %v976, 64
      %v1012 = vpop.permute.xlu0 %1011
      %1013 = vrot.lane.b32.xlu0 %v986, 64
      %v1014 = vpop.permute.xlu0 %1013
      %1015 = vrot.lane.b32.xlu0 %v1000, 64
      %v1016 = vpop.permute.xlu0 %1015
      %1017 = vrot.lane.b32.xlu0 %v1010, 64
      %v1018 = vpop.permute.xlu0 %1017
      %1023 = vst.msk [vmem:[%s388] sm:$0xf] %vm924, %v1012
      %1024 = vst.msk [vmem:[%s388 + $0x8] sm:$0xf] %vm924, %v1014
      %1025 = vst.msk [vmem:[%s388 + $0x10] sm:$0xf] %vm924, %v1016
      %1026 = vst.msk [vmem:[%s388 + $0x18] sm:$0xf] %vm924, %v1018
      %v1027 = vld [vmem:[%s286] sm:$0xe]
      %v1028 = vld [vmem:[%s286 + $0x4] sm:$0xf]
      %v1029 = vld [vmem:[%s286 + $0x8] sm:$0x1]
      %v1030 = vld [vmem:[%s286 + $0xc] sm:$0xe]
      %v1031 = vld [vmem:[%s286 + $0x10] sm:$0xf]
      %v1032 = vld [vmem:[%s286 + $0x14] sm:$0x1]
      %v1033 = vld [vmem:[%s286 + $0x18] sm:$0xe]
      %v1034 = vld [vmem:[%s286 + $0x1c] sm:$0xf]
      %v1035 = vld [vmem:[%s286 + $0x20] sm:$0x1]
      %v1036 = vld [vmem:[%s286 + $0x24] sm:$0xe]
      %v1037 = vld [vmem:[%s286 + $0x28] sm:$0xf]
      %v1038 = vld [vmem:[%s286 + $0x2c] sm:$0x1]
      %v1039 = vld [vmem:[%s286 + $0x30] sm:$0xe]
      %v1040 = vld [vmem:[%s286 + $0x34] sm:$0xf]
      %v1041 = vld [vmem:[%s286 + $0x38] sm:$0x1]
      %v1042 = vld [vmem:[%s286 + $0x3c] sm:$0xe]
      %v1043 = vld [vmem:[%s286 + $0x40] sm:$0xf]
      %v1044 = vld [vmem:[%s286 + $0x44] sm:$0x1]
      %v1045 = vld [vmem:[%s286 + $0x48] sm:$0xe]
      %v1046 = vld [vmem:[%s286 + $0x4c] sm:$0xf]
      %v1047 = vld [vmem:[%s286 + $0x50] sm:$0x1]
      %v1048 = vld [vmem:[%s286 + $0x54] sm:$0xe]
      %v1049 = vld [vmem:[%s286 + $0x58] sm:$0xf]
      %v1050 = vld [vmem:[%s286 + $0x5c] sm:$0x1]
      %v1051 = vld [vmem:[%s286 + $0x60] sm:$0xe]
      %v1052 = vld [vmem:[%s286 + $0x64] sm:$0xf]
      %v1053 = vld [vmem:[%s286 + $0x68] sm:$0x1]
      %v1054 = vld [vmem:[%s286 + $0x6c] sm:$0xe]
      %v1055 = vld [vmem:[%s286 + $0x70] sm:$0xf]
      %v1056 = vld [vmem:[%s286 + $0x74] sm:$0x1]
      %v1057 = vld [vmem:[%s286 + $0x78] sm:$0xe]
      %v1058 = vld [vmem:[%s286 + $0x7c] sm:$0xf]
      %v1059 = vld [vmem:[%s286 + $0x80] sm:$0x1]
      %v1060 = vld [vmem:[%s286 + $0x84] sm:$0xe]
      %v1061 = vld [vmem:[%s286 + $0x88] sm:$0xf]
      %v1062 = vld [vmem:[%s286 + $0x8c] sm:$0x1]
      %v1063 = vld [vmem:[%s286 + $0x90] sm:$0xe]
      %v1064 = vld [vmem:[%s286 + $0x94] sm:$0xf]
      %v1065 = vld [vmem:[%s286 + $0x98] sm:$0x1]
      %v1066 = vld [vmem:[%s286 + $0x9c] sm:$0xe]
      %v1067 = vld [vmem:[%s286 + $0xa0] sm:$0xf]
      %v1068 = vld [vmem:[%s286 + $0xa4] sm:$0x1]
      %v1069 = vld [vmem:[%s286 + $0xa8] sm:$0xe]
      %v1070 = vld [vmem:[%s286 + $0xac] sm:$0xf]
      %v1071 = vld [vmem:[%s286 + $0xb0] sm:$0x1]
      %v1072 = vld [vmem:[%s286 + $0xb4] sm:$0xe]
      %v1073 = vld [vmem:[%s286 + $0xb8] sm:$0xf]
      %v1074 = vld [vmem:[%s286 + $0xbc] sm:$0x1]
      %vm1123 = vcmask 1042432
      %vm1124 = vcmask 1046532
      %vm1125 = vmor %vm1123, %vm1124
      %v1126 = vrot.slane %v1027, 5
      %v1127 = vrot.slane %v1126, 4
      %v1128 = vrot.slane %v1028, 5
      %v1129 = vsel %vm1125, %v1127, %v1128
      %v1130 = vrot.slane %v1128, 4
      %v1131 = vrot.slane %v1029, 5
      %v1132 = vsel %vm1125, %v1130, %v1131
      %v1133 = vrot.slane %v1030, 5
      %v1134 = vrot.slane %v1133, 4
      %v1135 = vrot.slane %v1031, 5
      %v1136 = vsel %vm1125, %v1134, %v1135
      %v1137 = vrot.slane %v1135, 4
      %v1138 = vrot.slane %v1032, 5
      %v1139 = vsel %vm1125, %v1137, %v1138
      %v1140 = vrot.slane %v1033, 5
      %v1141 = vrot.slane %v1140, 4
      %v1142 = vrot.slane %v1034, 5
      %v1143 = vsel %vm1125, %v1141, %v1142
      %v1144 = vrot.slane %v1142, 4
      %v1145 = vrot.slane %v1035, 5
      %v1146 = vsel %vm1125, %v1144, %v1145
      %v1147 = vrot.slane %v1036, 5
      %v1148 = vrot.slane %v1147, 4
      %v1149 = vrot.slane %v1037, 5
      %v1150 = vsel %vm1125, %v1148, %v1149
      %v1151 = vrot.slane %v1149, 4
      %v1152 = vrot.slane %v1038, 5
      %v1153 = vsel %vm1125, %v1151, %v1152
      %v1154 = vrot.slane %v1039, 5
      %v1155 = vrot.slane %v1154, 4
      %v1156 = vrot.slane %v1040, 5
      %v1157 = vsel %vm1125, %v1155, %v1156
      %v1158 = vrot.slane %v1156, 4
      %v1159 = vrot.slane %v1041, 5
      %v1160 = vsel %vm1125, %v1158, %v1159
      %v1161 = vrot.slane %v1042, 5
      %v1162 = vrot.slane %v1161, 4
      %v1163 = vrot.slane %v1043, 5
      %v1164 = vsel %vm1125, %v1162, %v1163
      %v1165 = vrot.slane %v1163, 4
      %v1166 = vrot.slane %v1044, 5
      %v1167 = vsel %vm1125, %v1165, %v1166
      %v1168 = vrot.slane %v1045, 5
      %v1169 = vrot.slane %v1168, 4
      %v1170 = vrot.slane %v1046, 5
      %v1171 = vsel %vm1125, %v1169, %v1170
      %v1172 = vrot.slane %v1170, 4
      %v1173 = vrot.slane %v1047, 5
      %v1174 = vsel %vm1125, %v1172, %v1173
      %v1175 = vrot.slane %v1048, 5
      %v1176 = vrot.slane %v1175, 4
      %v1177 = vrot.slane %v1049, 5
      %v1178 = vsel %vm1125, %v1176, %v1177
      %v1179 = vrot.slane %v1177, 4
      %v1180 = vrot.slane %v1050, 5
      %v1181 = vsel %vm1125, %v1179, %v1180
      %v1182 = vrot.slane %v1051, 5
      %v1183 = vrot.slane %v1182, 4
      %v1184 = vrot.slane %v1052, 5
      %v1185 = vsel %vm1125, %v1183, %v1184
      %v1186 = vrot.slane %v1184, 4
      %v1187 = vrot.slane %v1053, 5
      %v1188 = vsel %vm1125, %v1186, %v1187
      %v1189 = vrot.slane %v1054, 5
      %v1190 = vrot.slane %v1189, 4
      %v1191 = vrot.slane %v1055, 5
      %v1192 = vsel %vm1125, %v1190, %v1191
      %v1193 = vrot.slane %v1191, 4
      %v1194 = vrot.slane %v1056, 5
      %v1195 = vsel %vm1125, %v1193, %v1194
      %v1196 = vrot.slane %v1057, 5
      %v1197 = vrot.slane %v1196, 4
      %v1198 = vrot.slane %v1058, 5
      %v1199 = vsel %vm1125, %v1197, %v1198
      %v1200 = vrot.slane %v1198, 4
      %v1201 = vrot.slane %v1059, 5
      %v1202 = vsel %vm1125, %v1200, %v1201
      %v1203 = vrot.slane %v1060, 5
      %v1204 = vrot.slane %v1203, 4
      %v1205 = vrot.slane %v1061, 5
      %v1206 = vsel %vm1125, %v1204, %v1205
      %v1207 = vrot.slane %v1205, 4
      %v1208 = vrot.slane %v1062, 5
      %v1209 = vsel %vm1125, %v1207, %v1208
      %v1210 = vrot.slane %v1063, 5
      %v1211 = vrot.slane %v1210, 4
      %v1212 = vrot.slane %v1064, 5
      %v1213 = vsel %vm1125, %v1211, %v1212
      %v1214 = vrot.slane %v1212, 4
      %v1215 = vrot.slane %v1065, 5
      %v1216 = vsel %vm1125, %v1214, %v1215
      %v1217 = vrot.slane %v1066, 5
      %v1218 = vrot.slane %v1217, 4
      %v1219 = vrot.slane %v1067, 5
      %v1220 = vsel %vm1125, %v1218, %v1219
      %v1221 = vrot.slane %v1219, 4
      %v1222 = vrot.slane %v1068, 5
      %v1223 = vsel %vm1125, %v1221, %v1222
      %v1224 = vrot.slane %v1069, 5
      %v1225 = vrot.slane %v1224, 4
      %v1226 = vrot.slane %v1070, 5
      %v1227 = vsel %vm1125, %v1225, %v1226
      %v1228 = vrot.slane %v1226, 4
      %v1229 = vrot.slane %v1071, 5
      %v1230 = vsel %vm1125, %v1228, %v1229
      %v1231 = vrot.slane %v1072, 5
      %v1232 = vrot.slane %v1231, 4
      %v1233 = vrot.slane %v1073, 5
      %v1234 = vsel %vm1125, %v1232, %v1233
      %v1235 = vrot.slane %v1233, 4
      %v1236 = vrot.slane %v1074, 5
      %v1237 = vsel %vm1125, %v1235, %v1236
      %1270 = vst.msk [vmem:[#allocation2 + $0x4] sm:$0xf] %vm351, %v1129
      %1271 = vst.msk [vmem:[#allocation2 + $0xc] sm:$0xf] %vm351, %v1132
      %1272 = vst.msk [vmem:[#allocation2 + $0x14] sm:$0xf] %vm351, %v1136
      %1273 = vst.msk [vmem:[#allocation2 + $0x1c] sm:$0xf] %vm351, %v1139
      %1274 = vst.msk [vmem:[#allocation2 + $0x24] sm:$0xf] %vm351, %v1143
      %1275 = vst.msk [vmem:[#allocation2 + $0x2c] sm:$0xf] %vm351, %v1146
      %1276 = vst.msk [vmem:[#allocation2 + $0x34] sm:$0xf] %vm351, %v1150
      %1277 = vst.msk [vmem:[#allocation2 + $0x3c] sm:$0xf] %vm351, %v1153
      %1278 = vst.msk [vmem:[#allocation2 + $0x44] sm:$0xf] %vm351, %v1157
      %1279 = vst.msk [vmem:[#allocation2 + $0x4c] sm:$0xf] %vm351, %v1160
      %1280 = vst.msk [vmem:[#allocation2 + $0x54] sm:$0xf] %vm351, %v1164
      %1281 = vst.msk [vmem:[#allocation2 + $0x5c] sm:$0xf] %vm351, %v1167
      %1282 = vst.msk [vmem:[#allocation2 + $0x64] sm:$0xf] %vm351, %v1171
      %1283 = vst.msk [vmem:[#allocation2 + $0x6c] sm:$0xf] %vm351, %v1174
      %1284 = vst.msk [vmem:[#allocation2 + $0x74] sm:$0xf] %vm351, %v1178
      %1285 = vst.msk [vmem:[#allocation2 + $0x7c] sm:$0xf] %vm351, %v1181
      %1286 = vst.msk [vmem:[#allocation2 + $0x84] sm:$0xf] %vm351, %v1185
      %1287 = vst.msk [vmem:[#allocation2 + $0x8c] sm:$0xf] %vm351, %v1188
      %1288 = vst.msk [vmem:[#allocation2 + $0x94] sm:$0xf] %vm351, %v1192
      %1289 = vst.msk [vmem:[#allocation2 + $0x9c] sm:$0xf] %vm351, %v1195
      %1290 = vst.msk [vmem:[#allocation2 + $0xa4] sm:$0xf] %vm351, %v1199
      %1291 = vst.msk [vmem:[#allocation2 + $0xac] sm:$0xf] %vm351, %v1202
      %1292 = vst.msk [vmem:[#allocation2 + $0xb4] sm:$0xf] %vm351, %v1206
      %1293 = vst.msk [vmem:[#allocation2 + $0xbc] sm:$0xf] %vm351, %v1209
      %1294 = vst.msk [vmem:[#allocation2 + $0xc4] sm:$0xf] %vm351, %v1213
      %1295 = vst.msk [vmem:[#allocation2 + $0xcc] sm:$0xf] %vm351, %v1216
      %1296 = vst.msk [vmem:[#allocation2 + $0xd4] sm:$0xf] %vm351, %v1220
      %1297 = vst.msk [vmem:[#allocation2 + $0xdc] sm:$0xf] %vm351, %v1223
      %1298 = vst.msk [vmem:[#allocation2 + $0xe4] sm:$0xf] %vm351, %v1227
      %1299 = vst.msk [vmem:[#allocation2 + $0xec] sm:$0xf] %vm351, %v1230
      %1300 = vst.msk [vmem:[#allocation2 + $0xf4] sm:$0xf] %vm351, %v1234
      %1301 = vst.msk [vmem:[#allocation2 + $0xfc] sm:$0xf] %vm351, %v1237
      %v1302 = vld [vmem:[%s304] sm:$0xe]
      %v1303 = vld [vmem:[%s304 + $0x4] sm:$0xf]
      %v1304 = vld [vmem:[%s304 + $0x8] sm:$0x1]
      %v1305 = vld [vmem:[%s304 + $0xc] sm:$0xe]
      %v1306 = vld [vmem:[%s304 + $0x10] sm:$0xf]
      %v1307 = vld [vmem:[%s304 + $0x14] sm:$0x1]
      %v1314 = vrot.slane %v1302, 5
      %v1315 = vrot.slane %v1314, 4
      %v1316 = vrot.slane %v1303, 5
      %v1317 = vsel %vm1125, %v1315, %v1316
      %v1318 = vrot.slane %v1316, 4
      %v1319 = vrot.slane %v1304, 5
      %v1320 = vsel %vm1125, %v1318, %v1319
      %v1321 = vrot.slane %v1305, 5
      %v1322 = vrot.slane %v1321, 4
      %v1323 = vrot.slane %v1306, 5
      %v1324 = vsel %vm1125, %v1322, %v1323
      %v1325 = vrot.slane %v1323, 4
      %v1326 = vrot.slane %v1307, 5
      %v1327 = vsel %vm1125, %v1325, %v1326
      %1332 = vst.msk [vmem:[%s388 + $0x4] sm:$0xf] %vm351, %v1317
      %1333 = vst.msk [vmem:[%s388 + $0xc] sm:$0xf] %vm351, %v1320
      %1334 = vst.msk [vmem:[%s388 + $0x14] sm:$0xf] %vm351, %v1324
      %1335 = vst.msk [vmem:[%s388 + $0x1c] sm:$0xf] %vm351, %v1327
      %v1336 = vld [vmem:[#allocation2] sm:$0xff]
      %v1337 = vld [vmem:[#allocation2 + $0x8] sm:$0xff]
      %v1338 = vld [vmem:[#allocation2 + $0x10] sm:$0xff]
      %v1339 = vld [vmem:[#allocation2 + $0x18] sm:$0xff]
      %v1340 = vld [vmem:[#allocation2 + $0x20] sm:$0xff]
      %v1341 = vld [vmem:[#allocation2 + $0x28] sm:$0xff]
      %v1342 = vld [vmem:[#allocation2 + $0x30] sm:$0xff]
      %v1343 = vld [vmem:[#allocation2 + $0x38] sm:$0xff]
      %v1344 = vld [vmem:[#allocation2 + $0x40] sm:$0xff]
      %v1345 = vld [vmem:[#allocation2 + $0x48] sm:$0xff]
      %v1346 = vld [vmem:[#allocation2 + $0x50] sm:$0xff]
      %v1347 = vld [vmem:[#allocation2 + $0x58] sm:$0xff]
      %v1348 = vld [vmem:[#allocation2 + $0x60] sm:$0xff]
      %v1349 = vld [vmem:[#allocation2 + $0x68] sm:$0xff]
      %v1350 = vld [vmem:[#allocation2 + $0x70] sm:$0xff]
      %v1351 = vld [vmem:[#allocation2 + $0x78] sm:$0xff]
      %v1352 = vld [vmem:[#allocation2 + $0x80] sm:$0xff]
      %v1353 = vld [vmem:[#allocation2 + $0x88] sm:$0xff]
      %v1354 = vld [vmem:[#allocation2 + $0x90] sm:$0xff]
      %v1355 = vld [vmem:[#allocation2 + $0x98] sm:$0xff]
      %v1356 = vld [vmem:[#allocation2 + $0xa0] sm:$0xff]
      %v1357 = vld [vmem:[#allocation2 + $0xa8] sm:$0xff]
      %v1358 = vld [vmem:[#allocation2 + $0xb0] sm:$0xff]
      %v1359 = vld [vmem:[#allocation2 + $0xb8] sm:$0xff]
      %v1360 = vld [vmem:[#allocation2 + $0xc0] sm:$0xff]
      %v1361 = vld [vmem:[#allocation2 + $0xc8] sm:$0xff]
      %v1362 = vld [vmem:[#allocation2 + $0xd0] sm:$0xff]
      %v1363 = vld [vmem:[#allocation2 + $0xd8] sm:$0xff]
      %v1364 = vld [vmem:[#allocation2 + $0xe0] sm:$0xff]
      %v1365 = vld [vmem:[#allocation2 + $0xe8] sm:$0xff]
      %v1366 = vld [vmem:[#allocation2 + $0xf0] sm:$0xff]
      %v1367 = vld [vmem:[#allocation2 + $0xf8] sm:$0xff]
      %v1368 = vld [vmem:[%s2] sm:$0xf]
      %v1369 = vld [vmem:[%s2 + $0x4] sm:$0xf]
      %v1370 = vld [vmem:[%s2 + $0x8] sm:$0xf]
      %v1371 = vld [vmem:[%s2 + $0xc] sm:$0xf]
      %v1372 = vld [vmem:[%s2 + $0x10] sm:$0xf]
      %v1373 = vld [vmem:[%s2 + $0x14] sm:$0xf]
      %v1374 = vld [vmem:[%s2 + $0x18] sm:$0xf]
      %v1375 = vld [vmem:[%s2 + $0x1c] sm:$0xf]
      %v1376 = vld [vmem:[%s2 + $0x20] sm:$0xf]
      %v1377 = vld [vmem:[%s2 + $0x24] sm:$0xf]
      %v1378 = vld [vmem:[%s2 + $0x28] sm:$0xf]
      %v1379 = vld [vmem:[%s2 + $0x2c] sm:$0xf]
      %v1380 = vld [vmem:[%s2 + $0x30] sm:$0xf]
      %v1381 = vld [vmem:[%s2 + $0x34] sm:$0xf]
      %v1382 = vld [vmem:[%s2 + $0x38] sm:$0xf]
      %v1383 = vld [vmem:[%s2 + $0x3c] sm:$0xf]
      %v1384 = vld [vmem:[%s2 + $0x40] sm:$0xf]
      %v1385 = vld [vmem:[%s2 + $0x44] sm:$0xf]
      %v1386 = vld [vmem:[%s2 + $0x48] sm:$0xf]
      %v1387 = vld [vmem:[%s2 + $0x4c] sm:$0xf]
      %v1388 = vld [vmem:[%s2 + $0x50] sm:$0xf]
      %v1389 = vld [vmem:[%s2 + $0x54] sm:$0xf]
      %v1390 = vld [vmem:[%s2 + $0x58] sm:$0xf]
      %v1391 = vld [vmem:[%s2 + $0x5c] sm:$0xf]
      %s1392 = scalar_lea.vmem [#allocation2], 16
      %v1393 = vld [vmem:[%s1392] sm:$0xff]
      %v1394 = vld [vmem:[%s1392 + $0x8] sm:$0xff]
      %v1395 = vld [vmem:[%s1392 + $0x10] sm:$0xff]
      %v1396 = vld [vmem:[%s1392 + $0x18] sm:$0xff]
      %v1397 = vld [vmem:[%s1392 + $0x20] sm:$0xff]
      %v1398 = vld [vmem:[%s1392 + $0x28] sm:$0xff]
      %v1399 = vld [vmem:[%s1392 + $0x30] sm:$0xff]
      %v1400 = vld [vmem:[%s1392 + $0x38] sm:$0xff]
      %v1401 = vld [vmem:[%s1392 + $0x40] sm:$0xff]
      %v1402 = vld [vmem:[%s1392 + $0x48] sm:$0xff]
      %v1403 = vld [vmem:[%s1392 + $0x50] sm:$0xff]
      %v1404 = vld [vmem:[%s1392 + $0x58] sm:$0xff]
      %v1405 = vld [vmem:[%s1392 + $0x60] sm:$0xff]
      %v1406 = vld [vmem:[%s1392 + $0x68] sm:$0xff]
      %v1407 = vld [vmem:[%s1392 + $0x70] sm:$0xff]
      %v1408 = vld [vmem:[%s1392 + $0x78] sm:$0xff]
      %v1409 = vld [vmem:[%s1392 + $0x80] sm:$0xff]
      %v1410 = vld [vmem:[%s1392 + $0x88] sm:$0xff]
      %v1411 = vld [vmem:[%s1392 + $0x90] sm:$0xff]
      %v1412 = vld [vmem:[%s1392 + $0x98] sm:$0xff]
      %v1413 = vld [vmem:[%s1392 + $0xa0] sm:$0xff]
      %v1414 = vld [vmem:[%s1392 + $0xa8] sm:$0xff]
      %v1415 = vld [vmem:[%s1392 + $0xb0] sm:$0xff]
      %v1416 = vld [vmem:[%s1392 + $0xb8] sm:$0xff]
      %v1417 = vld [vmem:[%s1392 + $0xc0] sm:$0xff]
      %v1418 = vld [vmem:[%s1392 + $0xc8] sm:$0xff]
      %v1419 = vld [vmem:[%s1392 + $0xd0] sm:$0xff]
      %v1420 = vld [vmem:[%s1392 + $0xd8] sm:$0xff]
      %v1421 = vld [vmem:[%s1392 + $0xe0] sm:$0xff]
      %v1422 = vld [vmem:[%s1392 + $0xe8] sm:$0xff]
      %v1423 = vld [vmem:[%s1392 + $0xf0] sm:$0xff]
      %v1424 = vld [vmem:[%s1392 + $0xf8] sm:$0xff]
      %s1425 = scalar_lea.vmem %s2, 96
      %v1426 = vld [vmem:[%s1425] sm:$0xf]
      %v1427 = vld [vmem:[%s1425 + $0x4] sm:$0xf]
      %v1428 = vld [vmem:[%s1425 + $0x8] sm:$0xf]
      %v1429 = vld [vmem:[%s1425 + $0xc] sm:$0xf]
      %v1430 = vld [vmem:[%s1425 + $0x10] sm:$0xf]
      %v1431 = vld [vmem:[%s1425 + $0x14] sm:$0xf]
      %v1432 = vld [vmem:[%s1425 + $0x18] sm:$0xf]
      %v1433 = vld [vmem:[%s1425 + $0x1c] sm:$0xf]
      %v1434 = vld [vmem:[%s1425 + $0x20] sm:$0xf]
      %v1435 = vld [vmem:[%s1425 + $0x24] sm:$0xf]
      %v1436 = vld [vmem:[%s1425 + $0x28] sm:$0xf]
      %v1437 = vld [vmem:[%s1425 + $0x2c] sm:$0xf]
      %v1438 = vld [vmem:[%s1425 + $0x30] sm:$0xf]
      %v1439 = vld [vmem:[%s1425 + $0x34] sm:$0xf]
      %v1440 = vld [vmem:[%s1425 + $0x38] sm:$0xf]
      %v1441 = vld [vmem:[%s1425 + $0x3c] sm:$0xf]
      %v1442 = vld [vmem:[%s1425 + $0x40] sm:$0xf]
      %v1443 = vld [vmem:[%s1425 + $0x44] sm:$0xf]
      %v1444 = vld [vmem:[%s1425 + $0x48] sm:$0xf]
      %v1445 = vld [vmem:[%s1425 + $0x4c] sm:$0xf]
      %v1446 = vld [vmem:[%s1425 + $0x50] sm:$0xf]
      %v1447 = vld [vmem:[%s1425 + $0x54] sm:$0xf]
      %v1448 = vld [vmem:[%s1425 + $0x58] sm:$0xf]
      %v1449 = vld [vmem:[%s1425 + $0x5c] sm:$0xf]
      %v1482 = vunpack.c.l.b16 %v1393
      %v1483 = vunpack.c.h.b16 %v1393
      %v1484 = vunpack.c.l.b16 %v1394
      %v1485 = vunpack.c.h.b16 %v1394
      %v1486 = vunpack.c.l.b16 %v1395
      %v1487 = vunpack.c.h.b16 %v1395
      %v1488 = vunpack.c.l.b16 %v1396
      %v1489 = vunpack.c.h.b16 %v1396
      %v1490 = vunpack.c.l.b16 %v1397
      %v1491 = vunpack.c.h.b16 %v1397
      %v1492 = vunpack.c.l.b16 %v1398
      %v1493 = vunpack.c.h.b16 %v1398
      %v1494 = vunpack.c.l.b16 %v1399
      %v1495 = vunpack.c.h.b16 %v1399
      %v1496 = vunpack.c.l.b16 %v1400
      %v1497 = vunpack.c.h.b16 %v1400
      %v1498 = vunpack.c.l.b16 %v1401
      %v1499 = vunpack.c.h.b16 %v1401
      %v1500 = vunpack.c.l.b16 %v1402
      %v1501 = vunpack.c.h.b16 %v1402
      %v1502 = vunpack.c.l.b16 %v1403
      %v1503 = vunpack.c.h.b16 %v1403
      %v1504 = vunpack.c.l.b16 %v1404
      %v1505 = vunpack.c.h.b16 %v1404
      %v1506 = vunpack.c.l.b16 %v1405
      %v1507 = vunpack.c.h.b16 %v1405
      %v1508 = vunpack.c.l.b16 %v1406
      %v1509 = vunpack.c.h.b16 %v1406
      %v1510 = vunpack.c.l.b16 %v1407
      %v1511 = vunpack.c.h.b16 %v1407
      %v1512 = vunpack.c.l.b16 %v1408
      %v1513 = vunpack.c.h.b16 %v1408
      %v1514 = vunpack.c.l.b16 %v1409
      %v1515 = vunpack.c.h.b16 %v1409
      %v1516 = vunpack.c.l.b16 %v1410
      %v1517 = vunpack.c.h.b16 %v1410
      %v1518 = vunpack.c.l.b16 %v1411
      %v1519 = vunpack.c.h.b16 %v1411
      %v1520 = vunpack.c.l.b16 %v1412
      %v1521 = vunpack.c.h.b16 %v1412
      %v1522 = vunpack.c.l.b16 %v1413
      %v1523 = vunpack.c.h.b16 %v1413
      %v1524 = vunpack.c.l.b16 %v1414
      %v1525 = vunpack.c.h.b16 %v1414
      %v1526 = vunpack.c.l.b16 %v1415
      %v1527 = vunpack.c.h.b16 %v1415
      %v1528 = vunpack.c.l.b16 %v1416
      %v1529 = vunpack.c.h.b16 %v1416
      %v1530 = vunpack.c.l.b16 %v1417
      %v1531 = vunpack.c.h.b16 %v1417
      %v1532 = vunpack.c.l.b16 %v1418
      %v1533 = vunpack.c.h.b16 %v1418
      %v1534 = vunpack.c.l.b16 %v1419
      %v1535 = vunpack.c.h.b16 %v1419
      %v1536 = vunpack.c.l.b16 %v1420
      %v1537 = vunpack.c.h.b16 %v1420
      %v1538 = vunpack.c.l.b16 %v1421
      %v1539 = vunpack.c.h.b16 %v1421
      %v1540 = vunpack.c.l.b16 %v1422
      %v1541 = vunpack.c.h.b16 %v1422
      %v1542 = vunpack.c.l.b16 %v1423
      %v1543 = vunpack.c.h.b16 %v1423
      %v1544 = vunpack.c.l.b16 %v1424
      %v1545 = vunpack.c.h.b16 %v1424
      %v1546 = vpack.c.b16 %v1484, %v1482
      %v1547 = vpack.c.b16 %v1485, %v1483
      %v1548 = vpack.c.b16 %v1488, %v1486
      %v1549 = vpack.c.b16 %v1489, %v1487
      %v1550 = vpack.c.b16 %v1492, %v1490
      %v1551 = vpack.c.b16 %v1493, %v1491
      %v1552 = vpack.c.b16 %v1496, %v1494
      %v1553 = vpack.c.b16 %v1497, %v1495
      %v1554 = vpack.c.b16 %v1500, %v1498
      %v1555 = vpack.c.b16 %v1501, %v1499
      %v1556 = vpack.c.b16 %v1504, %v1502
      %v1557 = vpack.c.b16 %v1505, %v1503
      %v1558 = vpack.c.b16 %v1508, %v1506
      %v1559 = vpack.c.b16 %v1509, %v1507
      %v1560 = vpack.c.b16 %v1512, %v1510
      %v1561 = vpack.c.b16 %v1513, %v1511
      %v1562 = vpack.c.b16 %v1516, %v1514
      %v1563 = vpack.c.b16 %v1517, %v1515
      %v1564 = vpack.c.b16 %v1520, %v1518
      %v1565 = vpack.c.b16 %v1521, %v1519
      %v1566 = vpack.c.b16 %v1524, %v1522
      %v1567 = vpack.c.b16 %v1525, %v1523
      %v1568 = vpack.c.b16 %v1528, %v1526
      %v1569 = vpack.c.b16 %v1529, %v1527
      %v1570 = vpack.c.b16 %v1532, %v1530
      %v1571 = vpack.c.b16 %v1533, %v1531
      %v1572 = vpack.c.b16 %v1536, %v1534
      %v1573 = vpack.c.b16 %v1537, %v1535
      %v1574 = vpack.c.b16 %v1540, %v1538
      %v1575 = vpack.c.b16 %v1541, %v1539
      %v1576 = vpack.c.b16 %v1544, %v1542
      %v1577 = vpack.c.b16 %v1545, %v1543
      %v1618 = vunpack.c.l.b16 %v1426
      %v1619 = vunpack.c.l.b16 %v1427
      %v1620 = vunpack.c.l.b16 %v1428
      %v1621 = vunpack.c.l.b16 %v1429
      %v1622 = vunpack.c.l.b16 %v1430
      %v1623 = vunpack.c.l.b16 %v1431
      %v1624 = vunpack.c.l.b16 %v1432
      %v1625 = vunpack.c.l.b16 %v1433
      %v1626 = vunpack.c.l.b16 %v1434
      %v1627 = vunpack.c.l.b16 %v1435
      %v1628 = vunpack.c.l.b16 %v1436
      %v1629 = vunpack.c.l.b16 %v1437
      %v1630 = vunpack.c.l.b16 %v1438
      %v1631 = vunpack.c.l.b16 %v1439
      %v1632 = vunpack.c.l.b16 %v1440
      %v1633 = vunpack.c.l.b16 %v1441
      %v1634 = vunpack.c.l.b16 %v1442
      %v1635 = vunpack.c.l.b16 %v1443
      %v1636 = vunpack.c.l.b16 %v1444
      %v1637 = vunpack.c.l.b16 %v1445
      %v1638 = vunpack.c.l.b16 %v1446
      %v1639 = vunpack.c.l.b16 %v1447
      %v1640 = vunpack.c.l.b16 %v1448
      %v1641 = vunpack.c.l.b16 %v1449
      %v1642 = vpack.c.b16 %v1619, %v1618
      %v1643 = vpack.c.b16 %v1621, %v1620
      %v1644 = vpack.c.b16 %v1623, %v1622
      %v1645 = vpack.c.b16 %v1625, %v1624
      %v1646 = vpack.c.b16 %v1627, %v1626
      %v1647 = vpack.c.b16 %v1629, %v1628
      %v1648 = vpack.c.b16 %v1631, %v1630
      %v1649 = vpack.c.b16 %v1633, %v1632
      %v1650 = vpack.c.b16 %v1635, %v1634
      %v1651 = vpack.c.b16 %v1637, %v1636
      %v1652 = vpack.c.b16 %v1639, %v1638
      %v1653 = vpack.c.b16 %v1641, %v1640
      %vm1666 = vcmask 523264
      %v1668 = vsel %vm1666, %v1547, 0
      %v1671 = vsel %vm1666, %v1549, 0
      %v1674 = vsel %vm1666, %v1551, 0
      %v1677 = vsel %vm1666, %v1553, 0
      %v1680 = vsel %vm1666, %v1555, 0
      %v1683 = vsel %vm1666, %v1557, 0
      %v1686 = vsel %vm1666, %v1559, 0
      %v1689 = vsel %vm1666, %v1561, 0
      %v1692 = vsel %vm1666, %v1563, 0
      %v1695 = vsel %vm1666, %v1565, 0
      %v1698 = vsel %vm1666, %v1567, 0
      %v1701 = vsel %vm1666, %v1569, 0
      %v1704 = vsel %vm1666, %v1571, 0
      %v1707 = vsel %vm1666, %v1573, 0
      %v1710 = vsel %vm1666, %v1575, 0
      %v1713 = vsel %vm1666, %v1577, 0
      %1715 = vmatpush.bf16.msra.mxu0 %v1649
      %1716 = vmatpush.bf16.msra.mxu0 %v1648
      %1717 = vmatpush.bf16.msra.mxu0 %v1647
      %1718 = vmatpush.bf16.msra.mxu0 %v1646
      %1719 = vmatpush.bf16.msra.mxu0 %v1645
      %1720 = vmatpush.bf16.msra.mxu0 %v1644
      %1721 = vmatpush.bf16.msra.mxu0 %v1643
      %1722 = vmatpush.bf16.msra.mxu0 %v1642
      %1723 = vmatmul.bf16.gmra.mxu0 %v1546
      %v1724 = vpop.f32.mrf.mxu0
      %v1725 = vadd.f32 0.0, %v1724
      %v1726 = vpop.f32.mrf.mxu0
      %v1727 = vadd.f32 0.0, %v1726
      %1728 = vmatmul.bf16.gmra.mxu0 %v1548
      %v1729 = vpop.f32.mrf.mxu0
      %v1730 = vadd.f32 0.0, %v1729
      %v1731 = vpop.f32.mrf.mxu0
      %v1732 = vadd.f32 0.0, %v1731
      %1733 = vmatmul.bf16.gmra.mxu0 %v1550
      %v1734 = vpop.f32.mrf.mxu0
      %v1735 = vadd.f32 0.0, %v1734
      %v1736 = vpop.f32.mrf.mxu0
      %v1737 = vadd.f32 0.0, %v1736
      %1738 = vmatmul.bf16.gmra.mxu0 %v1552
      %v1739 = vpop.f32.mrf.mxu0
      %v1740 = vadd.f32 0.0, %v1739
      %v1741 = vpop.f32.mrf.mxu0
      %v1742 = vadd.f32 0.0, %v1741
      %1743 = vmatmul.bf16.gmra.mxu0 %v1554
      %v1744 = vpop.f32.mrf.mxu0
      %v1745 = vadd.f32 0.0, %v1744
      %v1746 = vpop.f32.mrf.mxu0
      %v1747 = vadd.f32 0.0, %v1746
      %1748 = vmatmul.bf16.gmra.mxu0 %v1556
      %v1749 = vpop.f32.mrf.mxu0
      %v1750 = vadd.f32 0.0, %v1749
      %v1751 = vpop.f32.mrf.mxu0
      %v1752 = vadd.f32 0.0, %v1751
      %1753 = vmatmul.bf16.gmra.mxu0 %v1558
      %v1754 = vpop.f32.mrf.mxu0
      %v1755 = vadd.f32 0.0, %v1754
      %v1756 = vpop.f32.mrf.mxu0
      %v1757 = vadd.f32 0.0, %v1756
      %1758 = vmatmul.bf16.gmra.mxu0 %v1560
      %v1759 = vpop.f32.mrf.mxu0
      %v1760 = vadd.f32 0.0, %v1759
      %v1761 = vpop.f32.mrf.mxu0
      %v1762 = vadd.f32 0.0, %v1761
      %1763 = vmatmul.bf16.gmra.mxu0 %v1562
      %v1764 = vpop.f32.mrf.mxu0
      %v1765 = vadd.f32 0.0, %v1764
      %v1766 = vpop.f32.mrf.mxu0
      %v1767 = vadd.f32 0.0, %v1766
      %1768 = vmatmul.bf16.gmra.mxu0 %v1564
      %v1769 = vpop.f32.mrf.mxu0
      %v1770 = vadd.f32 0.0, %v1769
      %v1771 = vpop.f32.mrf.mxu0
      %v1772 = vadd.f32 0.0, %v1771
      %1773 = vmatmul.bf16.gmra.mxu0 %v1566
      %v1774 = vpop.f32.mrf.mxu0
      %v1775 = vadd.f32 0.0, %v1774
      %v1776 = vpop.f32.mrf.mxu0
      %v1777 = vadd.f32 0.0, %v1776
      %1778 = vmatmul.bf16.gmra.mxu0 %v1568
      %v1779 = vpop.f32.mrf.mxu0
      %v1780 = vadd.f32 0.0, %v1779
      %v1781 = vpop.f32.mrf.mxu0
      %v1782 = vadd.f32 0.0, %v1781
      %1783 = vmatmul.bf16.gmra.mxu0 %v1570
      %v1784 = vpop.f32.mrf.mxu0
      %v1785 = vadd.f32 0.0, %v1784
      %v1786 = vpop.f32.mrf.mxu0
      %v1787 = vadd.f32 0.0, %v1786
      %1788 = vmatmul.bf16.gmra.mxu0 %v1572
      %v1789 = vpop.f32.mrf.mxu0
      %v1790 = vadd.f32 0.0, %v1789
      %v1791 = vpop.f32.mrf.mxu0
      %v1792 = vadd.f32 0.0, %v1791
      %1793 = vmatmul.bf16.gmra.mxu0 %v1574
      %v1794 = vpop.f32.mrf.mxu0
      %v1795 = vadd.f32 0.0, %v1794
      %v1796 = vpop.f32.mrf.mxu0
      %v1797 = vadd.f32 0.0, %v1796
      %1798 = vmatmul.bf16.gmra.mxu0 %v1576
      %v1799 = vpop.f32.mrf.mxu0
      %v1800 = vadd.f32 0.0, %v1799
      %v1801 = vpop.f32.mrf.mxu0
      %v1802 = vadd.f32 0.0, %v1801
      %1803 = vdwg.mxu0
      %1804 = vmatpush.bf16.msra.mxu0 0
      %1805 = vmatpush.bf16.msra.mxu0 0
      %1806 = vmatpush.bf16.msra.mxu0 0
      %1807 = vmatpush.bf16.msra.mxu0 0
      %1808 = vmatpush.bf16.msra.mxu0 %v1653
      %1809 = vmatpush.bf16.msra.mxu0 %v1652
      %1810 = vmatpush.bf16.msra.mxu0 %v1651
      %1811 = vmatpush.bf16.msra.mxu0 %v1650
      %1812 = vmatmul.bf16.gmra.mxu0 %v1668
      %v1813 = vpop.f32.mrf.mxu0
      %v1814 = vadd.f32 %v1725, %v1813
      %v1815 = vpop.f32.mrf.mxu0
      %v1816 = vadd.f32 %v1727, %v1815
      %1817 = vmatmul.bf16.gmra.mxu0 %v1671
      %v1818 = vpop.f32.mrf.mxu0
      %v1819 = vadd.f32 %v1730, %v1818
      %v1820 = vpop.f32.mrf.mxu0
      %v1821 = vadd.f32 %v1732, %v1820
      %1822 = vmatmul.bf16.gmra.mxu0 %v1674
      %v1823 = vpop.f32.mrf.mxu0
      %v1824 = vadd.f32 %v1735, %v1823
      %v1825 = vpop.f32.mrf.mxu0
      %v1826 = vadd.f32 %v1737, %v1825
      %1827 = vmatmul.bf16.gmra.mxu0 %v1677
      %v1828 = vpop.f32.mrf.mxu0
      %v1829 = vadd.f32 %v1740, %v1828
      %v1830 = vpop.f32.mrf.mxu0
      %v1831 = vadd.f32 %v1742, %v1830
      %1832 = vmatmul.bf16.gmra.mxu0 %v1680
      %v1833 = vpop.f32.mrf.mxu0
      %v1834 = vadd.f32 %v1745, %v1833
      %v1835 = vpop.f32.mrf.mxu0
      %v1836 = vadd.f32 %v1747, %v1835
      %1837 = vmatmul.bf16.gmra.mxu0 %v1683
      %v1838 = vpop.f32.mrf.mxu0
      %v1839 = vadd.f32 %v1750, %v1838
      %v1840 = vpop.f32.mrf.mxu0
      %v1841 = vadd.f32 %v1752, %v1840
      %1842 = vmatmul.bf16.gmra.mxu0 %v1686
      %v1843 = vpop.f32.mrf.mxu0
      %v1844 = vadd.f32 %v1755, %v1843
      %v1845 = vpop.f32.mrf.mxu0
      %v1846 = vadd.f32 %v1757, %v1845
      %1847 = vmatmul.bf16.gmra.mxu0 %v1689
      %v1848 = vpop.f32.mrf.mxu0
      %v1849 = vadd.f32 %v1760, %v1848
      %v1850 = vpop.f32.mrf.mxu0
      %v1851 = vadd.f32 %v1762, %v1850
      %1852 = vmatmul.bf16.gmra.mxu0 %v1692
      %v1853 = vpop.f32.mrf.mxu0
      %v1854 = vadd.f32 %v1765, %v1853
      %v1855 = vpop.f32.mrf.mxu0
      %v1856 = vadd.f32 %v1767, %v1855
      %1857 = vmatmul.bf16.gmra.mxu0 %v1695
      %v1858 = vpop.f32.mrf.mxu0
      %v1859 = vadd.f32 %v1770, %v1858
      %v1860 = vpop.f32.mrf.mxu0
      %v1861 = vadd.f32 %v1772, %v1860
      %1862 = vmatmul.bf16.gmra.mxu0 %v1698
      %v1863 = vpop.f32.mrf.mxu0
      %v1864 = vadd.f32 %v1775, %v1863
      %v1865 = vpop.f32.mrf.mxu0
      %v1866 = vadd.f32 %v1777, %v1865
      %1867 = vmatmul.bf16.gmra.mxu0 %v1701
      %v1868 = vpop.f32.mrf.mxu0
      %v1869 = vadd.f32 %v1780, %v1868
      %v1870 = vpop.f32.mrf.mxu0
      %v1871 = vadd.f32 %v1782, %v1870
      %1872 = vmatmul.bf16.gmra.mxu0 %v1704
      %v1873 = vpop.f32.mrf.mxu0
      %v1874 = vadd.f32 %v1785, %v1873
      %v1875 = vpop.f32.mrf.mxu0
      %v1876 = vadd.f32 %v1787, %v1875
      %1877 = vmatmul.bf16.gmra.mxu0 %v1707
      %v1878 = vpop.f32.mrf.mxu0
      %v1879 = vadd.f32 %v1790, %v1878
      %v1880 = vpop.f32.mrf.mxu0
      %v1881 = vadd.f32 %v1792, %v1880
      %1882 = vmatmul.bf16.gmra.mxu0 %v1710
      %v1883 = vpop.f32.mrf.mxu0
      %v1884 = vadd.f32 %v1795, %v1883
      %v1885 = vpop.f32.mrf.mxu0
      %v1886 = vadd.f32 %v1797, %v1885
      %1887 = vmatmul.bf16.gmra.mxu0 %v1713
      %v1888 = vpop.f32.mrf.mxu0
      %v1889 = vadd.f32 %v1800, %v1888
      %v1890 = vpop.f32.mrf.mxu0
      %v1891 = vadd.f32 %v1802, %v1890
      %1892 = vdwg.mxu0
      %v1925 = vunpack.c.l.b16 %v1336
      %v1926 = vunpack.c.h.b16 %v1336
      %v1927 = vunpack.c.l.b16 %v1337
      %v1928 = vunpack.c.h.b16 %v1337
      %v1929 = vunpack.c.l.b16 %v1338
      %v1930 = vunpack.c.h.b16 %v1338
      %v1931 = vunpack.c.l.b16 %v1339
      %v1932 = vunpack.c.h.b16 %v1339
      %v1933 = vunpack.c.l.b16 %v1340
      %v1934 = vunpack.c.h.b16 %v1340
      %v1935 = vunpack.c.l.b16 %v1341
      %v1936 = vunpack.c.h.b16 %v1341
      %v1937 = vunpack.c.l.b16 %v1342
      %v1938 = vunpack.c.h.b16 %v1342
      %v1939 = vunpack.c.l.b16 %v1343
      %v1940 = vunpack.c.h.b16 %v1343
      %v1941 = vunpack.c.l.b16 %v1344
      %v1942 = vunpack.c.h.b16 %v1344
      %v1943 = vunpack.c.l.b16 %v1345
      %v1944 = vunpack.c.h.b16 %v1345
      %v1945 = vunpack.c.l.b16 %v1346
      %v1946 = vunpack.c.h.b16 %v1346
      %v1947 = vunpack.c.l.b16 %v1347
      %v1948 = vunpack.c.h.b16 %v1347
      %v1949 = vunpack.c.l.b16 %v1348
      %v1950 = vunpack.c.h.b16 %v1348
      %v1951 = vunpack.c.l.b16 %v1349
      %v1952 = vunpack.c.h.b16 %v1349
      %v1953 = vunpack.c.l.b16 %v1350
      %v1954 = vunpack.c.h.b16 %v1350
      %v1955 = vunpack.c.l.b16 %v1351
      %v1956 = vunpack.c.h.b16 %v1351
      %v1957 = vunpack.c.l.b16 %v1352
      %v1958 = vunpack.c.h.b16 %v1352
      %v1959 = vunpack.c.l.b16 %v1353
      %v1960 = vunpack.c.h.b16 %v1353
      %v1961 = vunpack.c.l.b16 %v1354
      %v1962 = vunpack.c.h.b16 %v1354
      %v1963 = vunpack.c.l.b16 %v1355
      %v1964 = vunpack.c.h.b16 %v1355
      %v1965 = vunpack.c.l.b16 %v1356
      %v1966 = vunpack.c.h.b16 %v1356
      %v1967 = vunpack.c.l.b16 %v1357
      %v1968 = vunpack.c.h.b16 %v1357
      %v1969 = vunpack.c.l.b16 %v1358
      %v1970 = vunpack.c.h.b16 %v1358
      %v1971 = vunpack.c.l.b16 %v1359
      %v1972 = vunpack.c.h.b16 %v1359
      %v1973 = vunpack.c.l.b16 %v1360
      %v1974 = vunpack.c.h.b16 %v1360
      %v1975 = vunpack.c.l.b16 %v1361
      %v1976 = vunpack.c.h.b16 %v1361
      %v1977 = vunpack.c.l.b16 %v1362
      %v1978 = vunpack.c.h.b16 %v1362
      %v1979 = vunpack.c.l.b16 %v1363
      %v1980 = vunpack.c.h.b16 %v1363
      %v1981 = vunpack.c.l.b16 %v1364
      %v1982 = vunpack.c.h.b16 %v1364
      %v1983 = vunpack.c.l.b16 %v1365
      %v1984 = vunpack.c.h.b16 %v1365
      %v1985 = vunpack.c.l.b16 %v1366
      %v1986 = vunpack.c.h.b16 %v1366
      %v1987 = vunpack.c.l.b16 %v1367
      %v1988 = vunpack.c.h.b16 %v1367
      %v1989 = vpack.c.b16 %v1927, %v1925
      %v1990 = vpack.c.b16 %v1928, %v1926
      %v1991 = vpack.c.b16 %v1931, %v1929
      %v1992 = vpack.c.b16 %v1932, %v1930
      %v1993 = vpack.c.b16 %v1935, %v1933
      %v1994 = vpack.c.b16 %v1936, %v1934
      %v1995 = vpack.c.b16 %v1939, %v1937
      %v1996 = vpack.c.b16 %v1940, %v1938
      %v1997 = vpack.c.b16 %v1943, %v1941
      %v1998 = vpack.c.b16 %v1944, %v1942
      %v1999 = vpack.c.b16 %v1947, %v1945
      %v2000 = vpack.c.b16 %v1948, %v1946
      %v2001 = vpack.c.b16 %v1951, %v1949
      %v2002 = vpack.c.b16 %v1952, %v1950
      %v2003 = vpack.c.b16 %v1955, %v1953
      %v2004 = vpack.c.b16 %v1956, %v1954
      %v2005 = vpack.c.b16 %v1959, %v1957
      %v2006 = vpack.c.b16 %v1960, %v1958
      %v2007 = vpack.c.b16 %v1963, %v1961
      %v2008 = vpack.c.b16 %v1964, %v1962
      %v2009 = vpack.c.b16 %v1967, %v1965
      %v2010 = vpack.c.b16 %v1968, %v1966
      %v2011 = vpack.c.b16 %v1971, %v1969
      %v2012 = vpack.c.b16 %v1972, %v1970
      %v2013 = vpack.c.b16 %v1975, %v1973
      %v2014 = vpack.c.b16 %v1976, %v1974
      %v2015 = vpack.c.b16 %v1979, %v1977
      %v2016 = vpack.c.b16 %v1980, %v1978
      %v2017 = vpack.c.b16 %v1983, %v1981
      %v2018 = vpack.c.b16 %v1984, %v1982
      %v2019 = vpack.c.b16 %v1987, %v1985
      %v2020 = vpack.c.b16 %v1988, %v1986
      %v2061 = vunpack.c.l.b16 %v1368
      %v2062 = vunpack.c.l.b16 %v1369
      %v2063 = vunpack.c.l.b16 %v1370
      %v2064 = vunpack.c.l.b16 %v1371
      %v2065 = vunpack.c.l.b16 %v1372
      %v2066 = vunpack.c.l.b16 %v1373
      %v2067 = vunpack.c.l.b16 %v1374
      %v2068 = vunpack.c.l.b16 %v1375
      %v2069 = vunpack.c.l.b16 %v1376
      %v2070 = vunpack.c.l.b16 %v1377
      %v2071 = vunpack.c.l.b16 %v1378
      %v2072 = vunpack.c.l.b16 %v1379
      %v2073 = vunpack.c.l.b16 %v1380
      %v2074 = vunpack.c.l.b16 %v1381
      %v2075 = vunpack.c.l.b16 %v1382
      %v2076 = vunpack.c.l.b16 %v1383
      %v2077 = vunpack.c.l.b16 %v1384
      %v2078 = vunpack.c.l.b16 %v1385
      %v2079 = vunpack.c.l.b16 %v1386
      %v2080 = vunpack.c.l.b16 %v1387
      %v2081 = vunpack.c.l.b16 %v1388
      %v2082 = vunpack.c.l.b16 %v1389
      %v2083 = vunpack.c.l.b16 %v1390
      %v2084 = vunpack.c.l.b16 %v1391
      %v2085 = vpack.c.b16 %v2062, %v2061
      %v2086 = vpack.c.b16 %v2064, %v2063
      %v2087 = vpack.c.b16 %v2066, %v2065
      %v2088 = vpack.c.b16 %v2068, %v2067
      %v2089 = vpack.c.b16 %v2070, %v2069
      %v2090 = vpack.c.b16 %v2072, %v2071
      %v2091 = vpack.c.b16 %v2074, %v2073
      %v2092 = vpack.c.b16 %v2076, %v2075
      %v2093 = vpack.c.b16 %v2078, %v2077
      %v2094 = vpack.c.b16 %v2080, %v2079
      %v2095 = vpack.c.b16 %v2082, %v2081
      %v2096 = vpack.c.b16 %v2084, %v2083
      %v2110 = vsel %vm1666, %v1990, 0
      %v2113 = vsel %vm1666, %v1992, 0
      %v2116 = vsel %vm1666, %v1994, 0
      %v2119 = vsel %vm1666, %v1996, 0
      %v2122 = vsel %vm1666, %v1998, 0
      %v2125 = vsel %vm1666, %v2000, 0
      %v2128 = vsel %vm1666, %v2002, 0
      %v2131 = vsel %vm1666, %v2004, 0
      %v2134 = vsel %vm1666, %v2006, 0
      %v2137 = vsel %vm1666, %v2008, 0
      %v2140 = vsel %vm1666, %v2010, 0
      %v2143 = vsel %vm1666, %v2012, 0
      %v2146 = vsel %vm1666, %v2014, 0
      %v2149 = vsel %vm1666, %v2016, 0
      %v2152 = vsel %vm1666, %v2018, 0
      %v2155 = vsel %vm1666, %v2020, 0
      %2157 = vmatpush.bf16.msra.mxu0 %v2092
      %2158 = vmatpush.bf16.msra.mxu0 %v2091
      %2159 = vmatpush.bf16.msra.mxu0 %v2090
      %2160 = vmatpush.bf16.msra.mxu0 %v2089
      %2161 = vmatpush.bf16.msra.mxu0 %v2088
      %2162 = vmatpush.bf16.msra.mxu0 %v2087
      %2163 = vmatpush.bf16.msra.mxu0 %v2086
      %2164 = vmatpush.bf16.msra.mxu0 %v2085
      %2165 = vmatmul.bf16.gmra.mxu0 %v1989
      %v2166 = vpop.f32.mrf.mxu0
      %v2167 = vadd.f32 %v1814, %v2166
      %v2168 = vpop.f32.mrf.mxu0
      %v2169 = vadd.f32 %v1816, %v2168
      %2170 = vmatmul.bf16.gmra.mxu0 %v1991
      %v2171 = vpop.f32.mrf.mxu0
      %v2172 = vadd.f32 %v1819, %v2171
      %v2173 = vpop.f32.mrf.mxu0
      %v2174 = vadd.f32 %v1821, %v2173
      %2175 = vmatmul.bf16.gmra.mxu0 %v1993
      %v2176 = vpop.f32.mrf.mxu0
      %v2177 = vadd.f32 %v1824, %v2176
      %v2178 = vpop.f32.mrf.mxu0
      %v2179 = vadd.f32 %v1826, %v2178
      %2180 = vmatmul.bf16.gmra.mxu0 %v1995
      %v2181 = vpop.f32.mrf.mxu0
      %v2182 = vadd.f32 %v1829, %v2181
      %v2183 = vpop.f32.mrf.mxu0
      %v2184 = vadd.f32 %v1831, %v2183
      %2185 = vmatmul.bf16.gmra.mxu0 %v1997
      %v2186 = vpop.f32.mrf.mxu0
      %v2187 = vadd.f32 %v1834, %v2186
      %v2188 = vpop.f32.mrf.mxu0
      %v2189 = vadd.f32 %v1836, %v2188
      %2190 = vmatmul.bf16.gmra.mxu0 %v1999
      %v2191 = vpop.f32.mrf.mxu0
      %v2192 = vadd.f32 %v1839, %v2191
      %v2193 = vpop.f32.mrf.mxu0
      %v2194 = vadd.f32 %v1841, %v2193
      %2195 = vmatmul.bf16.gmra.mxu0 %v2001
      %v2196 = vpop.f32.mrf.mxu0
      %v2197 = vadd.f32 %v1844, %v2196
      %v2198 = vpop.f32.mrf.mxu0
      %v2199 = vadd.f32 %v1846, %v2198
      %2200 = vmatmul.bf16.gmra.mxu0 %v2003
      %v2201 = vpop.f32.mrf.mxu0
      %v2202 = vadd.f32 %v1849, %v2201
      %v2203 = vpop.f32.mrf.mxu0
      %v2204 = vadd.f32 %v1851, %v2203
      %2205 = vmatmul.bf16.gmra.mxu0 %v2005
      %v2206 = vpop.f32.mrf.mxu0
      %v2207 = vadd.f32 %v1854, %v2206
      %v2208 = vpop.f32.mrf.mxu0
      %v2209 = vadd.f32 %v1856, %v2208
      %2210 = vmatmul.bf16.gmra.mxu0 %v2007
      %v2211 = vpop.f32.mrf.mxu0
      %v2212 = vadd.f32 %v1859, %v2211
      %v2213 = vpop.f32.mrf.mxu0
      %v2214 = vadd.f32 %v1861, %v2213
      %2215 = vmatmul.bf16.gmra.mxu0 %v2009
      %v2216 = vpop.f32.mrf.mxu0
      %v2217 = vadd.f32 %v1864, %v2216
      %v2218 = vpop.f32.mrf.mxu0
      %v2219 = vadd.f32 %v1866, %v2218
      %2220 = vmatmul.bf16.gmra.mxu0 %v2011
      %v2221 = vpop.f32.mrf.mxu0
      %v2222 = vadd.f32 %v1869, %v2221
      %v2223 = vpop.f32.mrf.mxu0
      %v2224 = vadd.f32 %v1871, %v2223
      %2225 = vmatmul.bf16.gmra.mxu0 %v2013
      %v2226 = vpop.f32.mrf.mxu0
      %v2227 = vadd.f32 %v1874, %v2226
      %v2228 = vpop.f32.mrf.mxu0
      %v2229 = vadd.f32 %v1876, %v2228
      %2230 = vmatmul.bf16.gmra.mxu0 %v2015
      %v2231 = vpop.f32.mrf.mxu0
      %v2232 = vadd.f32 %v1879, %v2231
      %v2233 = vpop.f32.mrf.mxu0
      %v2234 = vadd.f32 %v1881, %v2233
      %2235 = vmatmul.bf16.gmra.mxu0 %v2017
      %v2236 = vpop.f32.mrf.mxu0
      %v2237 = vadd.f32 %v1884, %v2236
      %v2238 = vpop.f32.mrf.mxu0
      %v2239 = vadd.f32 %v1886, %v2238
      %2240 = vmatmul.bf16.gmra.mxu0 %v2019
      %v2241 = vpop.f32.mrf.mxu0
      %v2242 = vadd.f32 %v1889, %v2241
      %v2243 = vpop.f32.mrf.mxu0
      %v2244 = vadd.f32 %v1891, %v2243
      %2245 = vdwg.mxu0
      %2246 = vmatpush.bf16.msra.mxu0 0
      %2247 = vmatpush.bf16.msra.mxu0 0
      %2248 = vmatpush.bf16.msra.mxu0 0
      %2249 = vmatpush.bf16.msra.mxu0 0
      %2250 = vmatpush.bf16.msra.mxu0 %v2096
      %2251 = vmatpush.bf16.msra.mxu0 %v2095
      %2252 = vmatpush.bf16.msra.mxu0 %v2094
      %2253 = vmatpush.bf16.msra.mxu0 %v2093
      %2254 = vmatmul.bf16.gmra.mxu0 %v2110
      %v2255 = vpop.f32.mrf.mxu0
      %v2256 = vadd.f32 %v2167, %v2255
      %v2257 = vpop.f32.mrf.mxu0
      %v2258 = vadd.f32 %v2169, %v2257
      %2259 = vmatmul.bf16.gmra.mxu0 %v2113
      %v2260 = vpop.f32.mrf.mxu0
      %v2261 = vadd.f32 %v2172, %v2260
      %v2262 = vpop.f32.mrf.mxu0
      %v2263 = vadd.f32 %v2174, %v2262
      %2264 = vmatmul.bf16.gmra.mxu0 %v2116
      %v2265 = vpop.f32.mrf.mxu0
      %v2266 = vadd.f32 %v2177, %v2265
      %v2267 = vpop.f32.mrf.mxu0
      %v2268 = vadd.f32 %v2179, %v2267
      %2269 = vmatmul.bf16.gmra.mxu0 %v2119
      %v2270 = vpop.f32.mrf.mxu0
      %v2271 = vadd.f32 %v2182, %v2270
      %v2272 = vpop.f32.mrf.mxu0
      %v2273 = vadd.f32 %v2184, %v2272
      %2274 = vmatmul.bf16.gmra.mxu0 %v2122
      %v2275 = vpop.f32.mrf.mxu0
      %v2276 = vadd.f32 %v2187, %v2275
      %v2277 = vpop.f32.mrf.mxu0
      %v2278 = vadd.f32 %v2189, %v2277
      %2279 = vmatmul.bf16.gmra.mxu0 %v2125
      %v2280 = vpop.f32.mrf.mxu0
      %v2281 = vadd.f32 %v2192, %v2280
      %v2282 = vpop.f32.mrf.mxu0
      %v2283 = vadd.f32 %v2194, %v2282
      %2284 = vmatmul.bf16.gmra.mxu0 %v2128
      %v2285 = vpop.f32.mrf.mxu0
      %v2286 = vadd.f32 %v2197, %v2285
      %v2287 = vpop.f32.mrf.mxu0
      %v2288 = vadd.f32 %v2199, %v2287
      %2289 = vmatmul.bf16.gmra.mxu0 %v2131
      %v2290 = vpop.f32.mrf.mxu0
      %v2291 = vadd.f32 %v2202, %v2290
      %v2292 = vpop.f32.mrf.mxu0
      %v2293 = vadd.f32 %v2204, %v2292
      %2294 = vmatmul.bf16.gmra.mxu0 %v2134
      %v2295 = vpop.f32.mrf.mxu0
      %v2296 = vadd.f32 %v2207, %v2295
      %v2297 = vpop.f32.mrf.mxu0
      %v2298 = vadd.f32 %v2209, %v2297
      %2299 = vmatmul.bf16.gmra.mxu0 %v2137
      %v2300 = vpop.f32.mrf.mxu0
      %v2301 = vadd.f32 %v2212, %v2300
      %v2302 = vpop.f32.mrf.mxu0
      %v2303 = vadd.f32 %v2214, %v2302
      %2304 = vmatmul.bf16.gmra.mxu0 %v2140
      %v2305 = vpop.f32.mrf.mxu0
      %v2306 = vadd.f32 %v2217, %v2305
      %v2307 = vpop.f32.mrf.mxu0
      %v2308 = vadd.f32 %v2219, %v2307
      %2309 = vmatmul.bf16.gmra.mxu0 %v2143
      %v2310 = vpop.f32.mrf.mxu0
      %v2311 = vadd.f32 %v2222, %v2310
      %v2312 = vpop.f32.mrf.mxu0
      %v2313 = vadd.f32 %v2224, %v2312
      %2314 = vmatmul.bf16.gmra.mxu0 %v2146
      %v2315 = vpop.f32.mrf.mxu0
      %v2316 = vadd.f32 %v2227, %v2315
      %v2317 = vpop.f32.mrf.mxu0
      %v2318 = vadd.f32 %v2229, %v2317
      %2319 = vmatmul.bf16.gmra.mxu0 %v2149
      %v2320 = vpop.f32.mrf.mxu0
      %v2321 = vadd.f32 %v2232, %v2320
      %v2322 = vpop.f32.mrf.mxu0
      %v2323 = vadd.f32 %v2234, %v2322
      %2324 = vmatmul.bf16.gmra.mxu0 %v2152
      %v2325 = vpop.f32.mrf.mxu0
      %v2326 = vadd.f32 %v2237, %v2325
      %v2327 = vpop.f32.mrf.mxu0
      %v2328 = vadd.f32 %v2239, %v2327
      %2329 = vmatmul.bf16.gmra.mxu0 %v2155
      %v2330 = vpop.f32.mrf.mxu0
      %v2331 = vadd.f32 %v2242, %v2330
      %v2332 = vpop.f32.mrf.mxu0
      %v2333 = vadd.f32 %v2244, %v2332
      %2334 = vdwg.mxu0
      %s2335 = scalar_lea.vmem [#allocation2], 32
      %v2336 = vld [vmem:[%s2335] sm:$0xff]
      %v2337 = vld [vmem:[%s2335 + $0x8] sm:$0xff]
      %v2338 = vld [vmem:[%s2335 + $0x10] sm:$0xff]
      %v2339 = vld [vmem:[%s2335 + $0x18] sm:$0xff]
      %v2340 = vld [vmem:[%s2335 + $0x20] sm:$0xff]
      %v2341 = vld [vmem:[%s2335 + $0x28] sm:$0xff]
      %v2342 = vld [vmem:[%s2335 + $0x30] sm:$0xff]
      %v2343 = vld [vmem:[%s2335 + $0x38] sm:$0xff]
      %v2344 = vld [vmem:[%s2335 + $0x40] sm:$0xff]
      %v2345 = vld [vmem:[%s2335 + $0x48] sm:$0xff]
      %v2346 = vld [vmem:[%s2335 + $0x50] sm:$0xff]
      %v2347 = vld [vmem:[%s2335 + $0x58] sm:$0xff]
      %v2348 = vld [vmem:[%s2335 + $0x60] sm:$0xff]
      %v2349 = vld [vmem:[%s2335 + $0x68] sm:$0xff]
      %v2350 = vld [vmem:[%s2335 + $0x70] sm:$0xff]
      %v2351 = vld [vmem:[%s2335 + $0x78] sm:$0xff]
      %v2352 = vld [vmem:[%s2335 + $0x80] sm:$0xff]
      %v2353 = vld [vmem:[%s2335 + $0x88] sm:$0xff]
      %v2354 = vld [vmem:[%s2335 + $0x90] sm:$0xff]
      %v2355 = vld [vmem:[%s2335 + $0x98] sm:$0xff]
      %v2356 = vld [vmem:[%s2335 + $0xa0] sm:$0xff]
      %v2357 = vld [vmem:[%s2335 + $0xa8] sm:$0xff]
      %v2358 = vld [vmem:[%s2335 + $0xb0] sm:$0xff]
      %v2359 = vld [vmem:[%s2335 + $0xb8] sm:$0xff]
      %v2360 = vld [vmem:[%s2335 + $0xc0] sm:$0xff]
      %v2361 = vld [vmem:[%s2335 + $0xc8] sm:$0xff]
      %v2362 = vld [vmem:[%s2335 + $0xd0] sm:$0xff]
      %v2363 = vld [vmem:[%s2335 + $0xd8] sm:$0xff]
      %v2364 = vld [vmem:[%s2335 + $0xe0] sm:$0xff]
      %v2365 = vld [vmem:[%s2335 + $0xe8] sm:$0xff]
      %v2366 = vld [vmem:[%s2335 + $0xf0] sm:$0xff]
      %v2367 = vld [vmem:[%s2335 + $0xf8] sm:$0xff]
      %s2368 = scalar_lea.vmem %s2, 192
      %v2369 = vld [vmem:[%s2368] sm:$0xf]
      %v2370 = vld [vmem:[%s2368 + $0x4] sm:$0xf]
      %v2371 = vld [vmem:[%s2368 + $0x8] sm:$0xf]
      %v2372 = vld [vmem:[%s2368 + $0xc] sm:$0xf]
      %v2373 = vld [vmem:[%s2368 + $0x10] sm:$0xf]
      %v2374 = vld [vmem:[%s2368 + $0x14] sm:$0xf]
      %v2375 = vld [vmem:[%s2368 + $0x18] sm:$0xf]
      %v2376 = vld [vmem:[%s2368 + $0x1c] sm:$0xf]
      %v2377 = vld [vmem:[%s2368 + $0x20] sm:$0xf]
      %v2378 = vld [vmem:[%s2368 + $0x24] sm:$0xf]
      %v2379 = vld [vmem:[%s2368 + $0x28] sm:$0xf]
      %v2380 = vld [vmem:[%s2368 + $0x2c] sm:$0xf]
      %v2381 = vld [vmem:[%s2368 + $0x30] sm:$0xf]
      %v2382 = vld [vmem:[%s2368 + $0x34] sm:$0xf]
      %v2383 = vld [vmem:[%s2368 + $0x38] sm:$0xf]
      %v2384 = vld [vmem:[%s2368 + $0x3c] sm:$0xf]
      %v2385 = vld [vmem:[%s2368 + $0x40] sm:$0xf]
      %v2386 = vld [vmem:[%s2368 + $0x44] sm:$0xf]
      %v2387 = vld [vmem:[%s2368 + $0x48] sm:$0xf]
      %v2388 = vld [vmem:[%s2368 + $0x4c] sm:$0xf]
      %v2389 = vld [vmem:[%s2368 + $0x50] sm:$0xf]
      %v2390 = vld [vmem:[%s2368 + $0x54] sm:$0xf]
      %v2391 = vld [vmem:[%s2368 + $0x58] sm:$0xf]
      %v2392 = vld [vmem:[%s2368 + $0x5c] sm:$0xf]
      %v2425 = vunpack.c.l.b16 %v2336
      %v2426 = vunpack.c.h.b16 %v2336
      %v2427 = vunpack.c.l.b16 %v2337
      %v2428 = vunpack.c.h.b16 %v2337
      %v2429 = vunpack.c.l.b16 %v2338
      %v2430 = vunpack.c.h.b16 %v2338
      %v2431 = vunpack.c.l.b16 %v2339
      %v2432 = vunpack.c.h.b16 %v2339
      %v2433 = vunpack.c.l.b16 %v2340
      %v2434 = vunpack.c.h.b16 %v2340
      %v2435 = vunpack.c.l.b16 %v2341
      %v2436 = vunpack.c.h.b16 %v2341
      %v2437 = vunpack.c.l.b16 %v2342
      %v2438 = vunpack.c.h.b16 %v2342
      %v2439 = vunpack.c.l.b16 %v2343
      %v2440 = vunpack.c.h.b16 %v2343
      %v2441 = vunpack.c.l.b16 %v2344
      %v2442 = vunpack.c.h.b16 %v2344
      %v2443 = vunpack.c.l.b16 %v2345
      %v2444 = vunpack.c.h.b16 %v2345
      %v2445 = vunpack.c.l.b16 %v2346
      %v2446 = vunpack.c.h.b16 %v2346
      %v2447 = vunpack.c.l.b16 %v2347
      %v2448 = vunpack.c.h.b16 %v2347
      %v2449 = vunpack.c.l.b16 %v2348
      %v2450 = vunpack.c.h.b16 %v2348
      %v2451 = vunpack.c.l.b16 %v2349
      %v2452 = vunpack.c.h.b16 %v2349
      %v2453 = vunpack.c.l.b16 %v2350
      %v2454 = vunpack.c.h.b16 %v2350
      %v2455 = vunpack.c.l.b16 %v2351
      %v2456 = vunpack.c.h.b16 %v2351
      %v2457 = vunpack.c.l.b16 %v2352
      %v2458 = vunpack.c.h.b16 %v2352
      %v2459 = vunpack.c.l.b16 %v2353
      %v2460 = vunpack.c.h.b16 %v2353
      %v2461 = vunpack.c.l.b16 %v2354
      %v2462 = vunpack.c.h.b16 %v2354
      %v2463 = vunpack.c.l.b16 %v2355
      %v2464 = vunpack.c.h.b16 %v2355
      %v2465 = vunpack.c.l.b16 %v2356
      %v2466 = vunpack.c.h.b16 %v2356
      %v2467 = vunpack.c.l.b16 %v2357
      %v2468 = vunpack.c.h.b16 %v2357
      %v2469 = vunpack.c.l.b16 %v2358
      %v2470 = vunpack.c.h.b16 %v2358
      %v2471 = vunpack.c.l.b16 %v2359
      %v2472 = vunpack.c.h.b16 %v2359
      %v2473 = vunpack.c.l.b16 %v2360
      %v2474 = vunpack.c.h.b16 %v2360
      %v2475 = vunpack.c.l.b16 %v2361
      %v2476 = vunpack.c.h.b16 %v2361
      %v2477 = vunpack.c.l.b16 %v2362
      %v2478 = vunpack.c.h.b16 %v2362
      %v2479 = vunpack.c.l.b16 %v2363
      %v2480 = vunpack.c.h.b16 %v2363
      %v2481 = vunpack.c.l.b16 %v2364
      %v2482 = vunpack.c.h.b16 %v2364
      %v2483 = vunpack.c.l.b16 %v2365
      %v2484 = vunpack.c.h.b16 %v2365
      %v2485 = vunpack.c.l.b16 %v2366
      %v2486 = vunpack.c.h.b16 %v2366
      %v2487 = vunpack.c.l.b16 %v2367
      %v2488 = vunpack.c.h.b16 %v2367
      %v2489 = vpack.c.b16 %v2427, %v2425
      %v2490 = vpack.c.b16 %v2428, %v2426
      %v2491 = vpack.c.b16 %v2431, %v2429
      %v2492 = vpack.c.b16 %v2432, %v2430
      %v2493 = vpack.c.b16 %v2435, %v2433
      %v2494 = vpack.c.b16 %v2436, %v2434
      %v2495 = vpack.c.b16 %v2439, %v2437
      %v2496 = vpack.c.b16 %v2440, %v2438
      %v2497 = vpack.c.b16 %v2443, %v2441
      %v2498 = vpack.c.b16 %v2444, %v2442
      %v2499 = vpack.c.b16 %v2447, %v2445
      %v2500 = vpack.c.b16 %v2448, %v2446
      %v2501 = vpack.c.b16 %v2451, %v2449
      %v2502 = vpack.c.b16 %v2452, %v2450
      %v2503 = vpack.c.b16 %v2455, %v2453
      %v2504 = vpack.c.b16 %v2456, %v2454
      %v2505 = vpack.c.b16 %v2459, %v2457
      %v2506 = vpack.c.b16 %v2460, %v2458
      %v2507 = vpack.c.b16 %v2463, %v2461
      %v2508 = vpack.c.b16 %v2464, %v2462
      %v2509 = vpack.c.b16 %v2467, %v2465
      %v2510 = vpack.c.b16 %v2468, %v2466
      %v2511 = vpack.c.b16 %v2471, %v2469
      %v2512 = vpack.c.b16 %v2472, %v2470
      %v2513 = vpack.c.b16 %v2475, %v2473
      %v2514 = vpack.c.b16 %v2476, %v2474
      %v2515 = vpack.c.b16 %v2479, %v2477
      %v2516 = vpack.c.b16 %v2480, %v2478
      %v2517 = vpack.c.b16 %v2483, %v2481
      %v2518 = vpack.c.b16 %v2484, %v2482
      %v2519 = vpack.c.b16 %v2487, %v2485
      %v2520 = vpack.c.b16 %v2488, %v2486
      %v2561 = vunpack.c.l.b16 %v2369
      %v2562 = vunpack.c.l.b16 %v2370
      %v2563 = vunpack.c.l.b16 %v2371
      %v2564 = vunpack.c.l.b16 %v2372
      %v2565 = vunpack.c.l.b16 %v2373
      %v2566 = vunpack.c.l.b16 %v2374
      %v2567 = vunpack.c.l.b16 %v2375
      %v2568 = vunpack.c.l.b16 %v2376
      %v2569 = vunpack.c.l.b16 %v2377
      %v2570 = vunpack.c.l.b16 %v2378
      %v2571 = vunpack.c.l.b16 %v2379
      %v2572 = vunpack.c.l.b16 %v2380
      %v2573 = vunpack.c.l.b16 %v2381
      %v2574 = vunpack.c.l.b16 %v2382
      %v2575 = vunpack.c.l.b16 %v2383
      %v2576 = vunpack.c.l.b16 %v2384
      %v2577 = vunpack.c.l.b16 %v2385
      %v2578 = vunpack.c.l.b16 %v2386
      %v2579 = vunpack.c.l.b16 %v2387
      %v2580 = vunpack.c.l.b16 %v2388
      %v2581 = vunpack.c.l.b16 %v2389
      %v2582 = vunpack.c.l.b16 %v2390
      %v2583 = vunpack.c.l.b16 %v2391
      %v2584 = vunpack.c.l.b16 %v2392
      %v2585 = vpack.c.b16 %v2562, %v2561
      %v2586 = vpack.c.b16 %v2564, %v2563
      %v2587 = vpack.c.b16 %v2566, %v2565
      %v2588 = vpack.c.b16 %v2568, %v2567
      %v2589 = vpack.c.b16 %v2570, %v2569
      %v2590 = vpack.c.b16 %v2572, %v2571
      %v2591 = vpack.c.b16 %v2574, %v2573
      %v2592 = vpack.c.b16 %v2576, %v2575
      %v2593 = vpack.c.b16 %v2578, %v2577
      %v2594 = vpack.c.b16 %v2580, %v2579
      %v2595 = vpack.c.b16 %v2582, %v2581
      %v2596 = vpack.c.b16 %v2584, %v2583
      %v2610 = vsel %vm1666, %v2490, 0
      %v2613 = vsel %vm1666, %v2492, 0
      %v2616 = vsel %vm1666, %v2494, 0
      %v2619 = vsel %vm1666, %v2496, 0
      %v2622 = vsel %vm1666, %v2498, 0
      %v2625 = vsel %vm1666, %v2500, 0
      %v2628 = vsel %vm1666, %v2502, 0
      %v2631 = vsel %vm1666, %v2504, 0
      %v2634 = vsel %vm1666, %v2506, 0
      %v2637 = vsel %vm1666, %v2508, 0
      %v2640 = vsel %vm1666, %v2510, 0
      %v2643 = vsel %vm1666, %v2512, 0
      %v2646 = vsel %vm1666, %v2514, 0
      %v2649 = vsel %vm1666, %v2516, 0
      %v2652 = vsel %vm1666, %v2518, 0
      %v2655 = vsel %vm1666, %v2520, 0
      %2657 = vmatpush.bf16.msra.mxu0 %v2592
      %2658 = vmatpush.bf16.msra.mxu0 %v2591
      %2659 = vmatpush.bf16.msra.mxu0 %v2590
      %2660 = vmatpush.bf16.msra.mxu0 %v2589
      %2661 = vmatpush.bf16.msra.mxu0 %v2588
      %2662 = vmatpush.bf16.msra.mxu0 %v2587
      %2663 = vmatpush.bf16.msra.mxu0 %v2586
      %2664 = vmatpush.bf16.msra.mxu0 %v2585
      %2665 = vmatmul.bf16.gmra.mxu0 %v2489
      %v2666 = vpop.f32.mrf.mxu0
      %v2667 = vadd.f32 0.0, %v2666
      %v2668 = vpop.f32.mrf.mxu0
      %v2669 = vadd.f32 0.0, %v2668
      %2670 = vmatmul.bf16.gmra.mxu0 %v2491
      %v2671 = vpop.f32.mrf.mxu0
      %v2672 = vadd.f32 0.0, %v2671
      %v2673 = vpop.f32.mrf.mxu0
      %v2674 = vadd.f32 0.0, %v2673
      %2675 = vmatmul.bf16.gmra.mxu0 %v2493
      %v2676 = vpop.f32.mrf.mxu0
      %v2677 = vadd.f32 0.0, %v2676
      %v2678 = vpop.f32.mrf.mxu0
      %v2679 = vadd.f32 0.0, %v2678
      %2680 = vmatmul.bf16.gmra.mxu0 %v2495
      %v2681 = vpop.f32.mrf.mxu0
      %v2682 = vadd.f32 0.0, %v2681
      %v2683 = vpop.f32.mrf.mxu0
      %v2684 = vadd.f32 0.0, %v2683
      %2685 = vmatmul.bf16.gmra.mxu0 %v2497
      %v2686 = vpop.f32.mrf.mxu0
      %v2687 = vadd.f32 0.0, %v2686
      %v2688 = vpop.f32.mrf.mxu0
      %v2689 = vadd.f32 0.0, %v2688
      %2690 = vmatmul.bf16.gmra.mxu0 %v2499
      %v2691 = vpop.f32.mrf.mxu0
      %v2692 = vadd.f32 0.0, %v2691
      %v2693 = vpop.f32.mrf.mxu0
      %v2694 = vadd.f32 0.0, %v2693
      %2695 = vmatmul.bf16.gmra.mxu0 %v2501
      %v2696 = vpop.f32.mrf.mxu0
      %v2697 = vadd.f32 0.0, %v2696
      %v2698 = vpop.f32.mrf.mxu0
      %v2699 = vadd.f32 0.0, %v2698
      %2700 = vmatmul.bf16.gmra.mxu0 %v2503
      %v2701 = vpop.f32.mrf.mxu0
      %v2702 = vadd.f32 0.0, %v2701
      %v2703 = vpop.f32.mrf.mxu0
      %v2704 = vadd.f32 0.0, %v2703
      %2705 = vmatmul.bf16.gmra.mxu0 %v2505
      %v2706 = vpop.f32.mrf.mxu0
      %v2707 = vadd.f32 0.0, %v2706
      %v2708 = vpop.f32.mrf.mxu0
      %v2709 = vadd.f32 0.0, %v2708
      %2710 = vmatmul.bf16.gmra.mxu0 %v2507
      %v2711 = vpop.f32.mrf.mxu0
      %v2712 = vadd.f32 0.0, %v2711
      %v2713 = vpop.f32.mrf.mxu0
      %v2714 = vadd.f32 0.0, %v2713
      %2715 = vmatmul.bf16.gmra.mxu0 %v2509
      %v2716 = vpop.f32.mrf.mxu0
      %v2717 = vadd.f32 0.0, %v2716
      %v2718 = vpop.f32.mrf.mxu0
      %v2719 = vadd.f32 0.0, %v2718
      %2720 = vmatmul.bf16.gmra.mxu0 %v2511
      %v2721 = vpop.f32.mrf.mxu0
      %v2722 = vadd.f32 0.0, %v2721
      %v2723 = vpop.f32.mrf.mxu0
      %v2724 = vadd.f32 0.0, %v2723
      %2725 = vmatmul.bf16.gmra.mxu0 %v2513
      %v2726 = vpop.f32.mrf.mxu0
      %v2727 = vadd.f32 0.0, %v2726
      %v2728 = vpop.f32.mrf.mxu0
      %v2729 = vadd.f32 0.0, %v2728
      %2730 = vmatmul.bf16.gmra.mxu0 %v2515
      %v2731 = vpop.f32.mrf.mxu0
      %v2732 = vadd.f32 0.0, %v2731
      %v2733 = vpop.f32.mrf.mxu0
      %v2734 = vadd.f32 0.0, %v2733
      %2735 = vmatmul.bf16.gmra.mxu0 %v2517
      %v2736 = vpop.f32.mrf.mxu0
      %v2737 = vadd.f32 0.0, %v2736
      %v2738 = vpop.f32.mrf.mxu0
      %v2739 = vadd.f32 0.0, %v2738
      %2740 = vmatmul.bf16.gmra.mxu0 %v2519
      %v2741 = vpop.f32.mrf.mxu0
      %v2742 = vadd.f32 0.0, %v2741
      %v2743 = vpop.f32.mrf.mxu0
      %v2744 = vadd.f32 0.0, %v2743
      %2745 = vdwg.mxu0
      %2746 = vmatpush.bf16.msra.mxu0 0
      %2747 = vmatpush.bf16.msra.mxu0 0
      %2748 = vmatpush.bf16.msra.mxu0 0
      %2749 = vmatpush.bf16.msra.mxu0 0
      %2750 = vmatpush.bf16.msra.mxu0 %v2596
      %2751 = vmatpush.bf16.msra.mxu0 %v2595
      %2752 = vmatpush.bf16.msra.mxu0 %v2594
      %2753 = vmatpush.bf16.msra.mxu0 %v2593
      %2754 = vmatmul.bf16.gmra.mxu0 %v2610
      %v2755 = vpop.f32.mrf.mxu0
      %v2756 = vadd.f32 %v2667, %v2755
      %v2757 = vpop.f32.mrf.mxu0
      %v2758 = vadd.f32 %v2669, %v2757
      %2759 = vmatmul.bf16.gmra.mxu0 %v2613
      %v2760 = vpop.f32.mrf.mxu0
      %v2761 = vadd.f32 %v2672, %v2760
      %v2762 = vpop.f32.mrf.mxu0
      %v2763 = vadd.f32 %v2674, %v2762
      %2764 = vmatmul.bf16.gmra.mxu0 %v2616
      %v2765 = vpop.f32.mrf.mxu0
      %v2766 = vadd.f32 %v2677, %v2765
      %v2767 = vpop.f32.mrf.mxu0
      %v2768 = vadd.f32 %v2679, %v2767
      %2769 = vmatmul.bf16.gmra.mxu0 %v2619
      %v2770 = vpop.f32.mrf.mxu0
      %v2771 = vadd.f32 %v2682, %v2770
      %v2772 = vpop.f32.mrf.mxu0
      %v2773 = vadd.f32 %v2684, %v2772
      %2774 = vmatmul.bf16.gmra.mxu0 %v2622
      %v2775 = vpop.f32.mrf.mxu0
      %v2776 = vadd.f32 %v2687, %v2775
      %v2777 = vpop.f32.mrf.mxu0
      %v2778 = vadd.f32 %v2689, %v2777
      %2779 = vmatmul.bf16.gmra.mxu0 %v2625
      %v2780 = vpop.f32.mrf.mxu0
      %v2781 = vadd.f32 %v2692, %v2780
      %v2782 = vpop.f32.mrf.mxu0
      %v2783 = vadd.f32 %v2694, %v2782
      %2784 = vmatmul.bf16.gmra.mxu0 %v2628
      %v2785 = vpop.f32.mrf.mxu0
      %v2786 = vadd.f32 %v2697, %v2785
      %v2787 = vpop.f32.mrf.mxu0
      %v2788 = vadd.f32 %v2699, %v2787
      %2789 = vmatmul.bf16.gmra.mxu0 %v2631
      %v2790 = vpop.f32.mrf.mxu0
      %v2791 = vadd.f32 %v2702, %v2790
      %v2792 = vpop.f32.mrf.mxu0
      %v2793 = vadd.f32 %v2704, %v2792
      %2794 = vmatmul.bf16.gmra.mxu0 %v2634
      %v2795 = vpop.f32.mrf.mxu0
      %v2796 = vadd.f32 %v2707, %v2795
      %v2797 = vpop.f32.mrf.mxu0
      %v2798 = vadd.f32 %v2709, %v2797
      %2799 = vmatmul.bf16.gmra.mxu0 %v2637
      %v2800 = vpop.f32.mrf.mxu0
      %v2801 = vadd.f32 %v2712, %v2800
      %v2802 = vpop.f32.mrf.mxu0
      %v2803 = vadd.f32 %v2714, %v2802
      %2804 = vmatmul.bf16.gmra.mxu0 %v2640
      %v2805 = vpop.f32.mrf.mxu0
      %v2806 = vadd.f32 %v2717, %v2805
      %v2807 = vpop.f32.mrf.mxu0
      %v2808 = vadd.f32 %v2719, %v2807
      %2809 = vmatmul.bf16.gmra.mxu0 %v2643
      %v2810 = vpop.f32.mrf.mxu0
      %v2811 = vadd.f32 %v2722, %v2810
      %v2812 = vpop.f32.mrf.mxu0
      %v2813 = vadd.f32 %v2724, %v2812
      %2814 = vmatmul.bf16.gmra.mxu0 %v2646
      %v2815 = vpop.f32.mrf.mxu0
      %v2816 = vadd.f32 %v2727, %v2815
      %v2817 = vpop.f32.mrf.mxu0
      %v2818 = vadd.f32 %v2729, %v2817
      %2819 = vmatmul.bf16.gmra.mxu0 %v2649
      %v2820 = vpop.f32.mrf.mxu0
      %v2821 = vadd.f32 %v2732, %v2820
      %v2822 = vpop.f32.mrf.mxu0
      %v2823 = vadd.f32 %v2734, %v2822
      %2824 = vmatmul.bf16.gmra.mxu0 %v2652
      %v2825 = vpop.f32.mrf.mxu0
      %v2826 = vadd.f32 %v2737, %v2825
      %v2827 = vpop.f32.mrf.mxu0
      %v2828 = vadd.f32 %v2739, %v2827
      %2829 = vmatmul.bf16.gmra.mxu0 %v2655
      %v2830 = vpop.f32.mrf.mxu0
      %v2831 = vadd.f32 %v2742, %v2830
      %v2832 = vpop.f32.mrf.mxu0
      %v2833 = vadd.f32 %v2744, %v2832
      %2834 = vdwg.mxu0
      %v2835 = vadd.f32 %v2256, %v2756
      %v2836 = vadd.f32 %v2258, %v2758
      %v2837 = vadd.f32 %v2261, %v2761
      %v2838 = vadd.f32 %v2263, %v2763
      %v2839 = vadd.f32 %v2266, %v2766
      %v2840 = vadd.f32 %v2268, %v2768
      %v2841 = vadd.f32 %v2271, %v2771
      %v2842 = vadd.f32 %v2273, %v2773
      %v2843 = vadd.f32 %v2276, %v2776
      %v2844 = vadd.f32 %v2278, %v2778
      %v2845 = vadd.f32 %v2281, %v2781
      %v2846 = vadd.f32 %v2283, %v2783
      %v2847 = vadd.f32 %v2286, %v2786
      %v2848 = vadd.f32 %v2288, %v2788
      %v2849 = vadd.f32 %v2291, %v2791
      %v2850 = vadd.f32 %v2293, %v2793
      %v2851 = vadd.f32 %v2296, %v2796
      %v2852 = vadd.f32 %v2298, %v2798
      %v2853 = vadd.f32 %v2301, %v2801
      %v2854 = vadd.f32 %v2303, %v2803
      %v2855 = vadd.f32 %v2306, %v2806
      %v2856 = vadd.f32 %v2308, %v2808
      %v2857 = vadd.f32 %v2311, %v2811
      %v2858 = vadd.f32 %v2313, %v2813
      %v2859 = vadd.f32 %v2316, %v2816
      %v2860 = vadd.f32 %v2318, %v2818
      %v2861 = vadd.f32 %v2321, %v2821
      %v2862 = vadd.f32 %v2323, %v2823
      %v2863 = vadd.f32 %v2326, %v2826
      %v2864 = vadd.f32 %v2328, %v2828
      %v2865 = vadd.f32 %v2331, %v2831
      %v2866 = vadd.f32 %v2333, %v2833
      %v2867 = vld [vmem:[%s3] sm:$0x1]
      %v2869 = vperm.slane %v2867, 0
      %v2871 = vadd.f32 %v2835, %v2869
      %v2872 = vadd.f32 %v2836, %v2869
      %v2873 = vadd.f32 %v2837, %v2869
      %v2874 = vadd.f32 %v2838, %v2869
      %v2875 = vadd.f32 %v2839, %v2869
      %v2876 = vadd.f32 %v2840, %v2869
      %v2877 = vadd.f32 %v2841, %v2869
      %v2878 = vadd.f32 %v2842, %v2869
      %v2879 = vadd.f32 %v2843, %v2869
      %v2880 = vadd.f32 %v2844, %v2869
      %v2881 = vadd.f32 %v2845, %v2869
      %v2882 = vadd.f32 %v2846, %v2869
      %v2883 = vadd.f32 %v2847, %v2869
      %v2884 = vadd.f32 %v2848, %v2869
      %v2885 = vadd.f32 %v2849, %v2869
      %v2886 = vadd.f32 %v2850, %v2869
      %v2887 = vadd.f32 %v2851, %v2869
      %v2888 = vadd.f32 %v2852, %v2869
      %v2889 = vadd.f32 %v2853, %v2869
      %v2890 = vadd.f32 %v2854, %v2869
      %v2891 = vadd.f32 %v2855, %v2869
      %v2892 = vadd.f32 %v2856, %v2869
      %v2893 = vadd.f32 %v2857, %v2869
      %v2894 = vadd.f32 %v2858, %v2869
      %v2895 = vadd.f32 %v2859, %v2869
      %v2896 = vadd.f32 %v2860, %v2869
      %v2897 = vadd.f32 %v2861, %v2869
      %v2898 = vadd.f32 %v2862, %v2869
      %v2899 = vadd.f32 %v2863, %v2869
      %v2900 = vadd.f32 %v2864, %v2869
      %v2901 = vadd.f32 %v2865, %v2869
      %v2902 = vadd.f32 %v2866, %v2869
      %v2903 = vmax.f32 %v2871, 0.0
      %v2904 = vmax.f32 %v2872, 0.0
      %v2905 = vmax.f32 %v2873, 0.0
      %v2906 = vmax.f32 %v2874, 0.0
      %v2907 = vmax.f32 %v2875, 0.0
      %v2908 = vmax.f32 %v2876, 0.0
      %v2909 = vmax.f32 %v2877, 0.0
      %v2910 = vmax.f32 %v2878, 0.0
      %v2911 = vmax.f32 %v2879, 0.0
      %v2912 = vmax.f32 %v2880, 0.0
      %v2913 = vmax.f32 %v2881, 0.0
      %v2914 = vmax.f32 %v2882, 0.0
      %v2915 = vmax.f32 %v2883, 0.0
      %v2916 = vmax.f32 %v2884, 0.0
      %v2917 = vmax.f32 %v2885, 0.0
      %v2918 = vmax.f32 %v2886, 0.0
      %v2919 = vmax.f32 %v2887, 0.0
      %v2920 = vmax.f32 %v2888, 0.0
      %v2921 = vmax.f32 %v2889, 0.0
      %v2922 = vmax.f32 %v2890, 0.0
      %v2923 = vmax.f32 %v2891, 0.0
      %v2924 = vmax.f32 %v2892, 0.0
      %v2925 = vmax.f32 %v2893, 0.0
      %v2926 = vmax.f32 %v2894, 0.0
      %v2927 = vmax.f32 %v2895, 0.0
      %v2928 = vmax.f32 %v2896, 0.0
      %v2929 = vmax.f32 %v2897, 0.0
      %v2930 = vmax.f32 %v2898, 0.0
      %v2931 = vmax.f32 %v2899, 0.0
      %v2932 = vmax.f32 %v2900, 0.0
      %v2933 = vmax.f32 %v2901, 0.0
      %v2934 = vmax.f32 %v2902, 0.0
      %v2935 = vpack.c.bf16 %v2903, %v2903
      %v2936 = vpack.c.bf16 %v2904, %v2904
      %v2937 = vpack.c.bf16 %v2905, %v2905
      %v2938 = vpack.c.bf16 %v2906, %v2906
      %v2939 = vpack.c.bf16 %v2907, %v2907
      %v2940 = vpack.c.bf16 %v2908, %v2908
      %v2941 = vpack.c.bf16 %v2909, %v2909
      %v2942 = vpack.c.bf16 %v2910, %v2910
      %v2943 = vpack.c.bf16 %v2911, %v2911
      %v2944 = vpack.c.bf16 %v2912, %v2912
      %v2945 = vpack.c.bf16 %v2913, %v2913
      %v2946 = vpack.c.bf16 %v2914, %v2914
      %v2947 = vpack.c.bf16 %v2915, %v2915
      %v2948 = vpack.c.bf16 %v2916, %v2916
      %v2949 = vpack.c.bf16 %v2917, %v2917
      %v2950 = vpack.c.bf16 %v2918, %v2918
      %v2951 = vpack.c.bf16 %v2919, %v2919
      %v2952 = vpack.c.bf16 %v2920, %v2920
      %v2953 = vpack.c.bf16 %v2921, %v2921
      %v2954 = vpack.c.bf16 %v2922, %v2922
      %v2955 = vpack.c.bf16 %v2923, %v2923
      %v2956 = vpack.c.bf16 %v2924, %v2924
      %v2957 = vpack.c.bf16 %v2925, %v2925
      %v2958 = vpack.c.bf16 %v2926, %v2926
      %v2959 = vpack.c.bf16 %v2927, %v2927
      %v2960 = vpack.c.bf16 %v2928, %v2928
      %v2961 = vpack.c.bf16 %v2929, %v2929
      %v2962 = vpack.c.bf16 %v2930, %v2930
      %v2963 = vpack.c.bf16 %v2931, %v2931
      %v2964 = vpack.c.bf16 %v2932, %v2932
      %v2965 = vpack.c.bf16 %v2933, %v2933
      %v2966 = vpack.c.bf16 %v2934, %v2934
      %2967 = vst.msk [vmem:[%s316] sm:$0xf] %vm351, %v2935
      %2968 = vst.msk [vmem:[%s316 + $0x4] sm:$0xf] %vm351, %v2936
      %2969 = vst.msk [vmem:[%s316 + $0x8] sm:$0xf] %vm351, %v2937
      %2970 = vst.msk [vmem:[%s316 + $0xc] sm:$0xf] %vm351, %v2938
      %2971 = vst.msk [vmem:[%s316 + $0x10] sm:$0xf] %vm351, %v2939
      %2972 = vst.msk [vmem:[%s316 + $0x14] sm:$0xf] %vm351, %v2940
      %2973 = vst.msk [vmem:[%s316 + $0x18] sm:$0xf] %vm351, %v2941
      %2974 = vst.msk [vmem:[%s316 + $0x1c] sm:$0xf] %vm351, %v2942
      %2975 = vst.msk [vmem:[%s316 + $0x20] sm:$0xf] %vm351, %v2943
      %2976 = vst.msk [vmem:[%s316 + $0x24] sm:$0xf] %vm351, %v2944
      %2977 = vst.msk [vmem:[%s316 + $0x28] sm:$0xf] %vm351, %v2945
      %2978 = vst.msk [vmem:[%s316 + $0x2c] sm:$0xf] %vm351, %v2946
      %2979 = vst.msk [vmem:[%s316 + $0x30] sm:$0xf] %vm351, %v2947
      %2980 = vst.msk [vmem:[%s316 + $0x34] sm:$0xf] %vm351, %v2948
      %2981 = vst.msk [vmem:[%s316 + $0x38] sm:$0xf] %vm351, %v2949
      %2982 = vst.msk [vmem:[%s316 + $0x3c] sm:$0xf] %vm351, %v2950
      %2983 = vst.msk [vmem:[%s316 + $0x40] sm:$0xf] %vm351, %v2951
      %2984 = vst.msk [vmem:[%s316 + $0x44] sm:$0xf] %vm351, %v2952
      %2985 = vst.msk [vmem:[%s316 + $0x48] sm:$0xf] %vm351, %v2953
      %2986 = vst.msk [vmem:[%s316 + $0x4c] sm:$0xf] %vm351, %v2954
      %2987 = vst.msk [vmem:[%s316 + $0x50] sm:$0xf] %vm351, %v2955
      %2988 = vst.msk [vmem:[%s316 + $0x54] sm:$0xf] %vm351, %v2956
      %2989 = vst.msk [vmem:[%s316 + $0x58] sm:$0xf] %vm351, %v2957
      %2990 = vst.msk [vmem:[%s316 + $0x5c] sm:$0xf] %vm351, %v2958
      %2991 = vst.msk [vmem:[%s316 + $0x60] sm:$0xf] %vm351, %v2959
      %2992 = vst.msk [vmem:[%s316 + $0x64] sm:$0xf] %vm351, %v2960
      %2993 = vst.msk [vmem:[%s316 + $0x68] sm:$0xf] %vm351, %v2961
      %2994 = vst.msk [vmem:[%s316 + $0x6c] sm:$0xf] %vm351, %v2962
      %2995 = vst.msk [vmem:[%s316 + $0x70] sm:$0xf] %vm351, %v2963
      %2996 = vst.msk [vmem:[%s316 + $0x74] sm:$0xf] %vm351, %v2964
      %2997 = vst.msk [vmem:[%s316 + $0x78] sm:$0xf] %vm351, %v2965
      %2998 = vst.msk [vmem:[%s316 + $0x7c] sm:$0xf] %vm351, %v2966
      %s2999 = smul.u32 32, %s20
      %p3000 = scmp.lt.s32.totalorder %s19, 1
      %s3001 = scalar_select %p3000, %s19, 1
      %p3002 = scmp.lt.s32.totalorder %s2999, 31
      %s3003 = scalar_select %p3002, %s2999, 31
      %s3004 = smul.addr %s3001, 32
      %s3005 = sadd.s32 %s3003, %s3004
      %s3006 = smul.addr %s3005, 4
      %s3007 = scalar_lea.vmem %s4, %s3006
      // Predicated region
      $region37: #{vgg_forward.6} parent=35 // pred_check
        %p3008 = pneg %p149
      $region38: #{vgg_forward.6} parent=35 // pred_check_branch
        %3010 = sbr.rel (%p3008) target = $region40
      $region39: #{vgg_forward.6} parent=35 // pred_region
        %s3011 = smul.u32 32, %s20
      $region40: #{vgg_forward.6} parent=35 // pred_fallthru
        _
    $region36: #{vgg_forward.6} parent=5 // pred_fallthru
      _
    %p3012 = scmp.le.s32.totalorder 2, %s10
    // Predicated region
    $region41: #{vgg_forward.6} parent=5 // pred_check
      %p3013 = pneg %p3012
    $region42: #{vgg_forward.6} parent=5 // pred_check_branch
      %3015 = sbr.rel (%p3013) target = $region44
    $region43: #{vgg_forward.6} parent=5 // pred_region
      %s3016 = ssub.s32 %s10, 2
      // Predicated region
      $region45: #{vgg_forward.6} parent=43 // pred_check
        %p3017 = pneg %p155
      $region46: #{vgg_forward.6} parent=43 // pred_check_branch
        %3019 = sbr.rel (%p3017) target = $region48
      $region47: #{vgg_forward.6} parent=43 // pred_region
        %s3020 = smul.u32 32, %s22
        %p3021 = scmp.lt.s32.totalorder %s21, 1
        %s3022 = scalar_select %p3021, %s21, 1
        %p3023 = scmp.lt.s32.totalorder %s3020, 31
        %s3024 = scalar_select %p3023, %s3020, 31
        %s3025 = smul.addr %s3022, 32
        %s3026 = sadd.s32 %s3024, %s3025
        %s3027 = smul.addr %s3026, 4
        %s3028 = scalar_lea.vmem %s4, %s3027
      $region48: #{vgg_forward.6} parent=43 // pred_fallthru
        _
    $region44: #{vgg_forward.6} parent=5 // pred_fallthru
      _
  $region6: #{vgg_forward.6} parent=0 // loop_footer
    %s14 = sadd.s32 1, %s10
  $region7: #{vgg_forward.6} parent=0 // loop_footer_branch
    %9 = sbr.rel target = $region3
  $region8: #{vgg_forward.6} parent=0 // loop_exit
    _

// kernel: vgg_forward.9
$region0: #{vgg_forward.9}
  #allocation0 [shape = 'u32[]', space=smem, size = 0x4, offset = 0x4, fixed_abs, tag = 'smem constant byte address 0x4 - core index']
  #allocation1 [shape = 'u32[72,128]{1,0:T(1,128)}', space=vmem, size = 0x9000, scoped, tag = 'internal scratch']
  #allocation2 [shape = 'bf16[10,8,384]{2,1,0:T(8,128)(2,1)}', space=vmem, size = 0xf000, scoped, tag = 'scratch operand']
  %s0 = inlined_call_operand.vmem [shape: bf16[2,10,10,128], index: 0, kind: input, shape index: {}, may-alias: {0,1}]
  %s1 = inlined_call_operand.vmem [shape: bf16[2,10,10,128], index: 1, kind: input, shape index: {}, may-alias: {0,1}]
  %s2 = inlined_call_operand.vmem [shape: bf16[3,384,128], index: 2, kind: input, shape index: {}]
  %s3 = inlined_call_operand.vmem [shape: f32[1,128], index: 3, kind: input, shape index: {}]
  %s4 = inlined_call_operand.vmem [shape: bf16[2,64,128], index: 4, kind: output, shape index: {}]
  %s5 = sld [smem:[#allocation0]]
  $region49: #{vgg_forward.9} parent=0
    _
  %s7 = ssub.s32 1, %s5
  %s8 = scalar_select 0, %s7, %s5
  loop: start=0, step=1, limit=4
  $region2: #{vgg_forward.9} parent=0 // loop_pre_header
    _
  $region3: #{vgg_forward.9} parent=0 // loop_header
    %s10 = sphi 0, %s14
    %p11 = scmp.ge.s32.totalorder %s10, 4
    %s17 = sphi 0, %s29
    %s18 = sphi 0, %s25
    %s19 = sphi 0, %s17
    %s20 = sphi 0, %s18
    %s21 = sphi 0, %s19
    %s22 = sphi 0, %s20
    %s34 = sphi 0, %s36
    %s37 = sphi 0, %s34
    %s38 = sphi 0, %s37
    %s54 = sphi 0, %s38
    %s66 = sphi 0, %s68
    %s69 = sphi 0, %s66
    %s70 = sphi 0, %s69
    %s86 = sphi 0, %s70
    %s90 = sphi 0, %s90
    %s92 = sphi 0, %s90
    %s93 = sphi 0, %s92
    %s107 = sphi 0, %s93
    %s111 = sphi 0, %s111
    %s113 = sphi 0, %s111
    %s114 = sphi 0, %s113
    %s128 = sphi 0, %s114
    %s136 = sphi 0, %s138
    %s139 = sphi 0, %s136
    %s140 = sphi 0, %s139
    %s156 = sphi 0, %s140
  $region4: #{vgg_forward.9} parent=0 // loop_header_branch
    %13 = sbr.rel (%p11) target = $region8
  $region5: #{vgg_forward.9} parent=0 // loop_body
    %s15 = ssub.s32 %s10, 1
    %s16 = ssub.s32 %s10, 2
    %s23 = sadd.s32 1, %s18
    %p24 = scmp.ge.s32.totalorder %s23, 1
    %s25 = scalar_select %p24, 0, %s23
    %s26 = sadd.s32 1, %s17
    %s27 = scalar_select %p24, %s26, %s17
    %p28 = scmp.ge.s32.totalorder %s27, 2
    %s29 = scalar_select %p28, 0, %s27
    %s30 = ssub.s32 %s17, %s29
    %s31 = ssub.s32 %s18, %s25
    %s32 = sor.u32 %s30, %s31
    %p33 = scmp.eq.s32.totalorder %s32, 0
    %s35 = sadd.s32 %s34, 1
    %s36 = scalar_select %p33, %s34, %s35
    %p39 = pneg %p33
    %p40 = scmp.eq.s32.totalorder %s10, 1
    %p41 = por %p39, %p40
    %p42 = scmp.ne.s32.totalorder %s34, %s37
    %p43 = scmp.eq.s32.totalorder %s10, 0
    %p44 = por %p42, %p43
    %p45 = scmp.ne.s32.totalorder %s34, %s37
    %p46 = scmp.eq.s32.totalorder %s15, 1
    %p47 = por %p45, %p46
    %p48 = scmp.ne.s32.totalorder %s37, %s38
    %p49 = scmp.eq.s32.totalorder %s15, 0
    %p50 = por %p48, %p49
    %p51 = scmp.ne.s32.totalorder %s37, %s38
    %p52 = scmp.eq.s32.totalorder %s16, 1
    %p53 = por %p51, %p52
    %p55 = scmp.ne.s32.totalorder %s38, %s54
    %p56 = scmp.eq.s32.totalorder %s16, 0
    %p57 = por %p55, %p56
    %s58 = sadd.s32 %s18, 1
    %s59 = smul.u32 %s58, 4
    %s60 = sadd.s32 %s25, 1
    %s61 = smul.u32 %s60, 4
    %s62 = ssub.s32 %s17, %s29
    %s63 = ssub.s32 %s59, %s61
    %s64 = sor.u32 %s62, %s63
    %p65 = scmp.eq.s32.totalorder %s64, 0
    %s67 = sadd.s32 %s66, 1
    %s68 = scalar_select %p65, %s66, %s67
    %p71 = pneg %p65
    %p72 = scmp.eq.s32.totalorder %s10, 1
    %p73 = por %p71, %p72
    %p74 = scmp.ne.s32.totalorder %s66, %s69
    %p75 = scmp.eq.s32.totalorder %s10, 0
    %p76 = por %p74, %p75
    %p77 = scmp.ne.s32.totalorder %s66, %s69
    %p78 = scmp.eq.s32.totalorder %s15, 1
    %p79 = por %p77, %p78
    %p80 = scmp.ne.s32.totalorder %s69, %s70
    %p81 = scmp.eq.s32.totalorder %s15, 0
    %p82 = por %p80, %p81
    %p83 = scmp.ne.s32.totalorder %s69, %s70
    %p84 = scmp.eq.s32.totalorder %s16, 1
    %p85 = por %p83, %p84
    %p87 = scmp.ne.s32.totalorder %s70, %s86
    %p88 = scmp.eq.s32.totalorder %s16, 0
    %p89 = por %p87, %p88
    %s91 = sadd.s32 %s90, 1
    %p94 = scmp.eq.s32.totalorder %s10, 1
    %p95 = scmp.ne.s32.totalorder %s90, %s92
    %p96 = scmp.eq.s32.totalorder %s10, 0
    %p97 = por %p95, %p96
    %p98 = scmp.ne.s32.totalorder %s90, %s92
    %p99 = scmp.eq.s32.totalorder %s15, 1
    %p100 = por %p98, %p99
    %p101 = scmp.ne.s32.totalorder %s92, %s93
    %p102 = scmp.eq.s32.totalorder %s15, 0
    %p103 = por %p101, %p102
    %p104 = scmp.ne.s32.totalorder %s92, %s93
    %p105 = scmp.eq.s32.totalorder %s16, 1
    %p106 = por %p104, %p105
    %p108 = scmp.ne.s32.totalorder %s93, %s107
    %p109 = scmp.eq.s32.totalorder %s16, 0
    %p110 = por %p108, %p109
    %s112 = sadd.s32 %s111, 1
    %p115 = scmp.eq.s32.totalorder %s10, 1
    %p116 = scmp.ne.s32.totalorder %s111, %s113
    %p117 = scmp.eq.s32.totalorder %s10, 0
    %p118 = por %p116, %p117
    %p119 = scmp.ne.s32.totalorder %s111, %s113
    %p120 = scmp.eq.s32.totalorder %s15, 1
    %p121 = por %p119, %p120
    %p122 = scmp.ne.s32.totalorder %s113, %s114
    %p123 = scmp.eq.s32.totalorder %s15, 0
    %p124 = por %p122, %p123
    %p125 = scmp.ne.s32.totalorder %s113, %s114
    %p126 = scmp.eq.s32.totalorder %s16, 1
    %p127 = por %p125, %p126
    %p129 = scmp.ne.s32.totalorder %s114, %s128
    %p130 = scmp.eq.s32.totalorder %s16, 0
    %p131 = por %p129, %p130
    %s132 = ssub.s32 %s17, %s29
    %s133 = ssub.s32 %s18, %s25
    %s134 = sor.u32 %s132, %s133
    %p135 = scmp.eq.s32.totalorder %s134, 0
    %s137 = sadd.s32 %s136, 1
    %s138 = scalar_select %p135, %s136, %s137
    %p141 = pneg %p135
    %p142 = scmp.eq.s32.totalorder %s10, 1
    %p143 = por %p141, %p142
    %p144 = scmp.ne.s32.totalorder %s136, %s139
    %p145 = scmp.eq.s32.totalorder %s10, 0
    %p146 = por %p144, %p145
    %p147 = scmp.ne.s32.totalorder %s136, %s139
    %p148 = scmp.eq.s32.totalorder %s15, 1
    %p149 = por %p147, %p148
    %p150 = scmp.ne.s32.totalorder %s139, %s140
    %p151 = scmp.eq.s32.totalorder %s15, 0
    %p152 = por %p150, %p151
    %p153 = scmp.ne.s32.totalorder %s139, %s140
    %p154 = scmp.eq.s32.totalorder %s16, 1
    %p155 = por %p153, %p154
    %p157 = scmp.ne.s32.totalorder %s140, %s156
    %p158 = scmp.eq.s32.totalorder %s16, 0
    %p159 = por %p157, %p158
    %p160 = scmp.le.s32.totalorder 1, %s10
    %p161 = scmp.lt.s32.totalorder %s10, 3
    %p162 = pnand %p160, %p161
    %p163 = pneg %p162
    // Predicated region
    $region9: #{vgg_forward.9} parent=5 // pred_check
      _
    $region10: #{vgg_forward.9} parent=5 // pred_check_branch
      %165 = sbr.rel (%p162) target = $region12
    $region11: #{vgg_forward.9} parent=5 // pred_region
      %s166 = ssub.s32 %s10, 1
      // Predicated region
      $region13: #{vgg_forward.9} parent=11 // pred_check
        %p167 = pneg %p103
      $region14: #{vgg_forward.9} parent=11 // pred_check_branch
        %169 = sbr.rel (%p167) target = $region16
      $region15: #{vgg_forward.9} parent=11 // pred_region
        _
      $region16: #{vgg_forward.9} parent=11 // pred_fallthru
        _
      // Predicated region
      $region17: #{vgg_forward.9} parent=11 // pred_check
        %p170 = pneg %p124
      $region18: #{vgg_forward.9} parent=11 // pred_check_branch
        %172 = sbr.rel (%p170) target = $region20
      $region19: #{vgg_forward.9} parent=11 // pred_region
        _
      $region20: #{vgg_forward.9} parent=11 // pred_fallthru
        _
    $region12: #{vgg_forward.9} parent=5 // pred_fallthru
      _
    %p173 = scmp.lt.s32.totalorder %s10, 2
    // Predicated region
    $region21: #{vgg_forward.9} parent=5 // pred_check
      %p174 = pneg %p173
    $region22: #{vgg_forward.9} parent=5 // pred_check_branch
      %176 = sbr.rel (%p174) target = $region24
    $region23: #{vgg_forward.9} parent=5 // pred_region
      // Predicated region
      $region25: #{vgg_forward.9} parent=23 // pred_check
        %p177 = pneg %p44
      $region26: #{vgg_forward.9} parent=23 // pred_check_branch
        %179 = sbr.rel (%p177) target = $region28
      $region27: #{vgg_forward.9} parent=23 // pred_region
        %s180 = smul.u32 8, %s18
        %s181 = ssub.s32 10, %s180
        %p182 = scmp.lt.s32.totalorder %s181, 8
        %s183 = scalar_select %p182, %s181, 8
        %s184 = smul.u32 4, %s183
        %s185 = smul.u32 %s184, 2
        %p186 = scmp.lt.s32.totalorder %s17, 1
        %s187 = scalar_select %p186, %s17, 1
        %p188 = scmp.lt.s32.totalorder %s180, 9
        %s189 = scalar_select %p188, %s180, 9
        %s190 = smul.addr %s189, 2
        %s191 = smul.addr %s187, 20
        %s192 = sadd.s32 %s190, %s191
        %s193 = smul.addr %s192, 4
        %s194 = scalar_lea.vmem %s0, %s193
        %s195 = smul.u32 8, %s18
        %s196 = ssub.s32 10, %s195
        %p197 = scmp.lt.s32.totalorder %s196, 8
        %s198 = scalar_select %p197, %s196, 8
        %s199 = smul.u32 4, %s198
        %s200 = smul.u32 %s199, 2
      $region28: #{vgg_forward.9} parent=23 // pred_fallthru
        _
      // Predicated region
      $region29: #{vgg_forward.9} parent=23 // pred_check
        %p201 = pneg %p76
      $region30: #{vgg_forward.9} parent=23 // pred_check_branch
        %203 = sbr.rel (%p201) target = $region32
      $region31: #{vgg_forward.9} parent=23 // pred_region
        %s204 = sadd.s32 %s18, 1
        %s205 = smul.u32 %s204, 4
        %s206 = smul.u32 2, %s205
        %p207 = scmp.lt.s32.totalorder %s17, 1
        %s208 = scalar_select %p207, %s17, 1
        %p209 = scmp.lt.s32.totalorder %s206, 9
        %s210 = scalar_select %p209, %s206, 9
        %s211 = smul.addr %s210, 2
        %s212 = smul.addr %s208, 20
        %s213 = sadd.s32 %s211, %s212
        %s214 = smul.addr %s213, 4
        %s215 = scalar_lea.vmem %s1, %s214
        %s216 = sadd.s32 %s18, 1
        %s217 = smul.u32 %s216, 4
        %s218 = smul.u32 2, %s217
      $region32: #{vgg_forward.9} parent=23 // pred_fallthru
        _
    $region24: #{vgg_forward.9} parent=5 // pred_fallthru
      _
    %p219 = scmp.le.s32.totalorder 1, %s10
    %p220 = scmp.lt.s32.totalorder %s10, 3
    %p221 = pnand %p219, %p220
    %p222 = pneg %p221
    // Predicated region
    $region33: #{vgg_forward.9} parent=5 // pred_check
      _
    $region34: #{vgg_forward.9} parent=5 // pred_check_branch
      %224 = sbr.rel (%p221) target = $region36
    $region35: #{vgg_forward.9} parent=5 // pred_region
      %s225 = ssub.s32 %s10, 1
      %s226 = smul.u32 8, %s20
      %s227 = ssub.s32 10, %s226
      %p228 = scmp.lt.s32.totalorder %s227, 8
      %s229 = scalar_select %p228, %s227, 8
      %s230 = smul.u32 4, %s229
      %s231 = smul.u32 %s230, 2
      %p232 = scmp.lt.s32.totalorder %s19, 1
      %s233 = scalar_select %p232, %s19, 1
      %p234 = scmp.lt.s32.totalorder %s226, 9
      %s235 = scalar_select %p234, %s226, 9
      %s236 = smul.addr %s235, 2
      %s237 = smul.addr %s233, 20
      %s238 = sadd.s32 %s236, %s237
      %s239 = smul.addr %s238, 4
      %s240 = scalar_lea.vmem %s0, %s239
      %p241 = pneg %p50
      %p242 = pneg %p47
      %s243 = sadd.s32 %s20, 1
      %s244 = smul.u32 %s243, 4
      %s245 = smul.u32 2, %s244
      %p246 = scmp.lt.s32.totalorder %s19, 1
      %s247 = scalar_select %p246, %s19, 1
      %p248 = scmp.lt.s32.totalorder %s245, 9
      %s249 = scalar_select %p248, %s245, 9
      %s250 = smul.addr %s249, 2
      %s251 = smul.addr %s247, 20
      %s252 = sadd.s32 %s250, %s251
      %s253 = smul.addr %s252, 4
      %s254 = scalar_lea.vmem %s1, %s253
      %p255 = pneg %p82
      %p256 = pneg %p79
      %p257 = pneg %p103
      %p258 = pneg %p100
      %p259 = pneg %p124
      %p260 = pneg %p121
      %p261 = pneg %p152
      %p262 = pneg %p149
      %s263 = smul.u32 8, %s20
      %p264 = scmp.lt.s32.totalorder %s19, 1
      %s265 = scalar_select %p264, %s19, 1
      %p266 = scmp.lt.s32.totalorder %s263, 7
      %s267 = scalar_select %p266, %s263, 7
      %s268 = smul.addr %s265, 8
      %s269 = sadd.s32 %s267, %s268
      %s270 = smul.addr %s269, 4
      %s271 = scalar_lea.vmem %s4, %s270
      %s272 = smul.u32 8, %s20
      %s273 = ssub.s32 10, %s272
      %p274 = scmp.lt.s32.totalorder %s273, 8
      %s275 = scalar_select %p274, %s273, 8
      %s276 = smul.u32 4, %s275
      %s277 = smul.u32 %s276, 2
      %p278 = scmp.lt.s32.totalorder %s19, 1
      %s279 = scalar_select %p278, %s19, 1
      %p280 = scmp.lt.s32.totalorder %s272, 9
      %s281 = scalar_select %p280, %s272, 9
      %s282 = smul.addr %s281, 2
      %s283 = smul.addr %s279, 20
      %s284 = sadd.s32 %s282, %s283
      %s285 = smul.addr %s284, 4
      %s286 = scalar_lea.vmem %s0, %s285
      %s287 = smul.u32 8, %s20
      %s288 = ssub.s32 10, %s287
      %p289 = scmp.lt.s32.totalorder %s288, 8
      %s290 = scalar_select %p289, %s288, 8
      %s291 = smul.u32 4, %s290
      %s292 = smul.u32 %s291, 2
      %s293 = sadd.s32 %s20, 1
      %s294 = smul.u32 %s293, 4
      %s295 = smul.u32 2, %s294
      %p296 = scmp.lt.s32.totalorder %s19, 1
      %s297 = scalar_select %p296, %s19, 1
      %p298 = scmp.lt.s32.totalorder %s295, 9
      %s299 = scalar_select %p298, %s295, 9
      %s300 = smul.addr %s299, 2
      %s301 = smul.addr %s297, 20
      %s302 = sadd.s32 %s300, %s301
      %s303 = smul.addr %s302, 4
      %s304 = scalar_lea.vmem %s1, %s303
      %s305 = sadd.s32 %s20, 1
      %s306 = smul.u32 %s305, 4
      %s307 = smul.u32 2, %s306
      %s308 = smul.u32 8, %s20
      %p309 = scmp.lt.s32.totalorder %s19, 1
      %s310 = scalar_select %p309, %s19, 1
      %p311 = scmp.lt.s32.totalorder %s308, 7
      %s312 = scalar_select %p311, %s308, 7
      %s313 = smul.addr %s310, 8
      %s314 = sadd.s32 %s312, %s313
      %s315 = smul.addr %s314, 4
      %s316 = scalar_lea.vmem %s4, %s315
      %s317 = smul.u32 8, %s20
      %v318 = vld [vmem:[%s286] sm:$0xf]
      %v319 = vld [vmem:[%s286 + $0x8] sm:$0xf]
      %v320 = vld [vmem:[%s286 + $0x10] sm:$0xf]
      %v321 = vld [vmem:[%s286 + $0x18] sm:$0xf]
      %v322 = vld [vmem:[%s286 + $0x20] sm:$0xf]
      %v323 = vld [vmem:[%s286 + $0x28] sm:$0xf]
      %v324 = vld [vmem:[%s286 + $0x30] sm:$0xf]
      %v325 = vld [vmem:[%s286 + $0x38] sm:$0xf]
      %326 = vst [vmem:[#allocation2] sm:$0xf] %v318
      %327 = vst [vmem:[#allocation2 + $0xc] sm:$0xf] %v319
      %328 = vst [vmem:[#allocation2 + $0x18] sm:$0xf] %v320
      %329 = vst [vmem:[#allocation2 + $0x24] sm:$0xf] %v321
      %330 = vst [vmem:[#allocation2 + $0x30] sm:$0xf] %v322
      %331 = vst [vmem:[#allocation2 + $0x3c] sm:$0xf] %v323
      %332 = vst [vmem:[#allocation2 + $0x48] sm:$0xf] %v324
      %333 = vst [vmem:[#allocation2 + $0x54] sm:$0xf] %v325
      %v334 = vld [vmem:[%s304] sm:$0xf]
      %v335 = vld [vmem:[%s304 + $0x8] sm:$0xf]
      %s336 = scalar_lea.vmem [#allocation2], 96
      %337 = vst [vmem:[%s336] sm:$0xf] %v334
      %338 = vst [vmem:[%s336 + $0xc] sm:$0xf] %v335
      %v339 = vld [vmem:[%s286] sm:$0xf]
      %v340 = vld [vmem:[%s286 + $0x4] sm:$0x1]
      %v341 = vld [vmem:[%s286 + $0x8] sm:$0xf]
      %v342 = vld [vmem:[%s286 + $0xc] sm:$0x1]
      %v343 = vld [vmem:[%s286 + $0x10] sm:$0xf]
      %v344 = vld [vmem:[%s286 + $0x14] sm:$0x1]
      %v345 = vld [vmem:[%s286 + $0x18] sm:$0xf]
      %v346 = vld [vmem:[%s286 + $0x1c] sm:$0x1]
      %v347 = vld [vmem:[%s286 + $0x20] sm:$0xf]
      %v348 = vld [vmem:[%s286 + $0x24] sm:$0x1]
      %v349 = vld [vmem:[%s286 + $0x28] sm:$0xf]
      %v350 = vld [vmem:[%s286 + $0x2c] sm:$0x1]
      %v351 = vld [vmem:[%s286 + $0x30] sm:$0xf]
      %v352 = vld [vmem:[%s286 + $0x34] sm:$0x1]
      %v353 = vld [vmem:[%s286 + $0x38] sm:$0xf]
      %v354 = vld [vmem:[%s286 + $0x3c] sm:$0x1]
      %vm355 = vsmask.f32 3328
      %vm356 = vsmask.f32 7440
      %vm357 = vmor %vm355, %vm356
      %v359 = vshrl.u32 %v339, 16
      %v361 = vrot.slane %v359, 4
      %v362 = vshll.u32 %v339, 16
      %v364 = vrot.slane %v362, 5
      %v365 = vor.u32 %v361, %v364
      %v366 = vrot.slane %v365, 4
      %v368 = vshll.u32 %v340, 16
      %v370 = vrot.slane %v368, 5
      %v371 = vsel %vm357, %v366, %v370
      %v373 = vshrl.u32 %v341, 16
      %v375 = vrot.slane %v373, 4
      %v376 = vshll.u32 %v341, 16
      %v378 = vrot.slane %v376, 5
      %v379 = vor.u32 %v375, %v378
      %v380 = vrot.slane %v379, 4
      %v382 = vshll.u32 %v342, 16
      %v384 = vrot.slane %v382, 5
      %v385 = vsel %vm357, %v380, %v384
      %v387 = vshrl.u32 %v343, 16
      %v389 = vrot.slane %v387, 4
      %v390 = vshll.u32 %v343, 16
      %v392 = vrot.slane %v390, 5
      %v393 = vor.u32 %v389, %v392
      %v394 = vrot.slane %v393, 4
      %v396 = vshll.u32 %v344, 16
      %v398 = vrot.slane %v396, 5
      %v399 = vsel %vm357, %v394, %v398
      %v401 = vshrl.u32 %v345, 16
      %v403 = vrot.slane %v401, 4
      %v404 = vshll.u32 %v345, 16
      %v406 = vrot.slane %v404, 5
      %v407 = vor.u32 %v403, %v406
      %v408 = vrot.slane %v407, 4
      %v410 = vshll.u32 %v346, 16
      %v412 = vrot.slane %v410, 5
      %v413 = vsel %vm357, %v408, %v412
      %v415 = vshrl.u32 %v347, 16
      %v417 = vrot.slane %v415, 4
      %v418 = vshll.u32 %v347, 16
      %v420 = vrot.slane %v418, 5
      %v421 = vor.u32 %v417, %v420
      %v422 = vrot.slane %v421, 4
      %v424 = vshll.u32 %v348, 16
      %v426 = vrot.slane %v424, 5
      %v427 = vsel %vm357, %v422, %v426
      %v429 = vshrl.u32 %v349, 16
      %v431 = vrot.slane %v429, 4
      %v432 = vshll.u32 %v349, 16
      %v434 = vrot.slane %v432, 5
      %v435 = vor.u32 %v431, %v434
      %v436 = vrot.slane %v435, 4
      %v438 = vshll.u32 %v350, 16
      %v440 = vrot.slane %v438, 5
      %v441 = vsel %vm357, %v436, %v440
      %v443 = vshrl.u32 %v351, 16
      %v445 = vrot.slane %v443, 4
      %v446 = vshll.u32 %v351, 16
      %v448 = vrot.slane %v446, 5
      %v449 = vor.u32 %v445, %v448
      %v450 = vrot.slane %v449, 4
      %v452 = vshll.u32 %v352, 16
      %v454 = vrot.slane %v452, 5
      %v455 = vsel %vm357, %v450, %v454
      %v457 = vshrl.u32 %v353, 16
      %v459 = vrot.slane %v457, 4
      %v460 = vshll.u32 %v353, 16
      %v462 = vrot.slane %v460, 5
      %v463 = vor.u32 %v459, %v462
      %v464 = vrot.slane %v463, 4
      %v466 = vshll.u32 %v354, 16
      %v468 = vrot.slane %v466, 5
      %v469 = vsel %vm357, %v464, %v468
      %478 = vst [vmem:[#allocation2 + $0x4] sm:$0xf] %v371
      %479 = vst [vmem:[#allocation2 + $0x10] sm:$0xf] %v385
      %480 = vst [vmem:[#allocation2 + $0x1c] sm:$0xf] %v399
      %481 = vst [vmem:[#allocation2 + $0x28] sm:$0xf] %v413
      %482 = vst [vmem:[#allocation2 + $0x34] sm:$0xf] %v427
      %483 = vst [vmem:[#allocation2 + $0x40] sm:$0xf] %v441
      %484 = vst [vmem:[#allocation2 + $0x4c] sm:$0xf] %v455
      %485 = vst [vmem:[#allocation2 + $0x58] sm:$0xf] %v469
      %v486 = vld [vmem:[%s304] sm:$0xf]
      %v487 = vld [vmem:[%s304 + $0x4] sm:$0x1]
      %v488 = vld [vmem:[%s304 + $0x8] sm:$0xf]
      %v489 = vld [vmem:[%s304 + $0xc] sm:$0x1]
      %v491 = vshrl.u32 %v486, 16
      %v493 = vrot.slane %v491, 4
      %v494 = vshll.u32 %v486, 16
      %v496 = vrot.slane %v494, 5
      %v497 = vor.u32 %v493, %v496
      %v498 = vrot.slane %v497, 4
      %v500 = vshll.u32 %v487, 16
      %v502 = vrot.slane %v500, 5
      %v503 = vsel %vm357, %v498, %v502
      %v505 = vshrl.u32 %v488, 16
      %v507 = vrot.slane %v505, 4
      %v508 = vshll.u32 %v488, 16
      %v510 = vrot.slane %v508, 5
      %v511 = vor.u32 %v507, %v510
      %v512 = vrot.slane %v511, 4
      %v514 = vshll.u32 %v489, 16
      %v516 = vrot.slane %v514, 5
      %v517 = vsel %vm357, %v512, %v516
      %520 = vst [vmem:[%s336 + $0x4] sm:$0xf] %v503
      %521 = vst [vmem:[%s336 + $0x10] sm:$0xf] %v517
      %v522 = vld [vmem:[%s286] sm:$0xe]
      %v523 = vld [vmem:[%s286 + $0x4] sm:$0x1]
      %v524 = vld [vmem:[%s286 + $0x8] sm:$0xe]
      %v525 = vld [vmem:[%s286 + $0xc] sm:$0x1]
      %v526 = vld [vmem:[%s286 + $0x10] sm:$0xe]
      %v527 = vld [vmem:[%s286 + $0x14] sm:$0x1]
      %v528 = vld [vmem:[%s286 + $0x18] sm:$0xe]
      %v529 = vld [vmem:[%s286 + $0x1c] sm:$0x1]
      %v530 = vld [vmem:[%s286 + $0x20] sm:$0xe]
      %v531 = vld [vmem:[%s286 + $0x24] sm:$0x1]
      %v532 = vld [vmem:[%s286 + $0x28] sm:$0xe]
      %v533 = vld [vmem:[%s286 + $0x2c] sm:$0x1]
      %v534 = vld [vmem:[%s286 + $0x30] sm:$0xe]
      %v535 = vld [vmem:[%s286 + $0x34] sm:$0x1]
      %v536 = vld [vmem:[%s286 + $0x38] sm:$0xe]
      %v537 = vld [vmem:[%s286 + $0x3c] sm:$0x1]
      %vm554 = vcmask 1042432
      %vm555 = vcmask 1046532
      %vm556 = vmor %vm554, %vm555
      %v557 = vrot.slane %v522, 5
      %v558 = vrot.slane %v557, 4
      %v559 = vrot.slane %v523, 5
      %v560 = vsel %vm556, %v558, %v559
      %v561 = vrot.slane %v524, 5
      %v562 = vrot.slane %v561, 4
      %v563 = vrot.slane %v525, 5
      %v564 = vsel %vm556, %v562, %v563
      %v565 = vrot.slane %v526, 5
      %v566 = vrot.slane %v565, 4
      %v567 = vrot.slane %v527, 5
      %v568 = vsel %vm556, %v566, %v567
      %v569 = vrot.slane %v528, 5
      %v570 = vrot.slane %v569, 4
      %v571 = vrot.slane %v529, 5
      %v572 = vsel %vm556, %v570, %v571
      %v573 = vrot.slane %v530, 5
      %v574 = vrot.slane %v573, 4
      %v575 = vrot.slane %v531, 5
      %v576 = vsel %vm556, %v574, %v575
      %v577 = vrot.slane %v532, 5
      %v578 = vrot.slane %v577, 4
      %v579 = vrot.slane %v533, 5
      %v580 = vsel %vm556, %v578, %v579
      %v581 = vrot.slane %v534, 5
      %v582 = vrot.slane %v581, 4
      %v583 = vrot.slane %v535, 5
      %v584 = vsel %vm556, %v582, %v583
      %v585 = vrot.slane %v536, 5
      %v586 = vrot.slane %v585, 4
      %v587 = vrot.slane %v537, 5
      %v588 = vsel %vm556, %v586, %v587
      %597 = vst [vmem:[#allocation2 + $0x8] sm:$0xf] %v560
      %598 = vst [vmem:[#allocation2 + $0x14] sm:$0xf] %v564
      %599 = vst [vmem:[#allocation2 + $0x20] sm:$0xf] %v568
      %600 = vst [vmem:[#allocation2 + $0x2c] sm:$0xf] %v572
      %601 = vst [vmem:[#allocation2 + $0x38] sm:$0xf] %v576
      %602 = vst [vmem:[#allocation2 + $0x44] sm:$0xf] %v580
      %603 = vst [vmem:[#allocation2 + $0x50] sm:$0xf] %v584
      %604 = vst [vmem:[#allocation2 + $0x5c] sm:$0xf] %v588
      %v605 = vld [vmem:[%s304] sm:$0xe]
      %v606 = vld [vmem:[%s304 + $0x4] sm:$0x1]
      %v607 = vld [vmem:[%s304 + $0x8] sm:$0xe]
      %v608 = vld [vmem:[%s304 + $0xc] sm:$0x1]
      %v613 = vrot.slane %v605, 5
      %v614 = vrot.slane %v613, 4
      %v615 = vrot.slane %v606, 5
      %v616 = vsel %vm556, %v614, %v615
      %v617 = vrot.slane %v607, 5
      %v618 = vrot.slane %v617, 4
      %v619 = vrot.slane %v608, 5
      %v620 = vsel %vm556, %v618, %v619
      %623 = vst [vmem:[%s336 + $0x8] sm:$0xf] %v616
      %624 = vst [vmem:[%s336 + $0x14] sm:$0xf] %v620
      %v625 = vld [vmem:[#allocation2] sm:$0xff]
      %v626 = vld [vmem:[#allocation2 + $0x8] sm:$0xf]
      %v627 = vld [vmem:[#allocation2 + $0xc] sm:$0xff]
      %v628 = vld [vmem:[#allocation2 + $0x14] sm:$0xf]
      %v629 = vld [vmem:[#allocation2 + $0x18] sm:$0xff]
      %v630 = vld [vmem:[#allocation2 + $0x20] sm:$0xf]
      %v631 = vld [vmem:[#allocation2 + $0x24] sm:$0xff]
      %v632 = vld [vmem:[#allocation2 + $0x2c] sm:$0xf]
      %v633 = vld [vmem:[#allocation2 + $0x30] sm:$0xff]
      %v634 = vld [vmem:[#allocation2 + $0x38] sm:$0xf]
      %v635 = vld [vmem:[#allocation2 + $0x3c] sm:$0xff]
      %v636 = vld [vmem:[#allocation2 + $0x44] sm:$0xf]
      %v637 = vld [vmem:[#allocation2 + $0x48] sm:$0xff]
      %v638 = vld [vmem:[#allocation2 + $0x50] sm:$0xf]
      %v639 = vld [vmem:[#allocation2 + $0x54] sm:$0xff]
      %v640 = vld [vmem:[#allocation2 + $0x5c] sm:$0xf]
      %v641 = vld [vmem:[%s2] sm:$0xf]
      %v642 = vld [vmem:[%s2 + $0x4] sm:$0xf]
      %v643 = vld [vmem:[%s2 + $0x8] sm:$0xf]
      %v644 = vld [vmem:[%s2 + $0xc] sm:$0xf]
      %v645 = vld [vmem:[%s2 + $0x10] sm:$0xf]
      %v646 = vld [vmem:[%s2 + $0x14] sm:$0xf]
      %v647 = vld [vmem:[%s2 + $0x18] sm:$0xf]
      %v648 = vld [vmem:[%s2 + $0x1c] sm:$0xf]
      %v649 = vld [vmem:[%s2 + $0x20] sm:$0xf]
      %v650 = vld [vmem:[%s2 + $0x24] sm:$0xf]
      %v651 = vld [vmem:[%s2 + $0x28] sm:$0xf]
      %v652 = vld [vmem:[%s2 + $0x2c] sm:$0xf]
      %v653 = vld [vmem:[%s2 + $0x30] sm:$0xf]
      %v654 = vld [vmem:[%s2 + $0x34] sm:$0xf]
      %v655 = vld [vmem:[%s2 + $0x38] sm:$0xf]
      %v656 = vld [vmem:[%s2 + $0x3c] sm:$0xf]
      %v657 = vld [vmem:[%s2 + $0x40] sm:$0xf]
      %v658 = vld [vmem:[%s2 + $0x44] sm:$0xf]
      %v659 = vld [vmem:[%s2 + $0x48] sm:$0xf]
      %v660 = vld [vmem:[%s2 + $0x4c] sm:$0xf]
      %v661 = vld [vmem:[%s2 + $0x50] sm:$0xf]
      %v662 = vld [vmem:[%s2 + $0x54] sm:$0xf]
      %v663 = vld [vmem:[%s2 + $0x58] sm:$0xf]
      %v664 = vld [vmem:[%s2 + $0x5c] sm:$0xf]
      %v665 = vld [vmem:[%s2 + $0x60] sm:$0xf]
      %v666 = vld [vmem:[%s2 + $0x64] sm:$0xf]
      %v667 = vld [vmem:[%s2 + $0x68] sm:$0xf]
      %v668 = vld [vmem:[%s2 + $0x6c] sm:$0xf]
      %v669 = vld [vmem:[%s2 + $0x70] sm:$0xf]
      %v670 = vld [vmem:[%s2 + $0x74] sm:$0xf]
      %v671 = vld [vmem:[%s2 + $0x78] sm:$0xf]
      %v672 = vld [vmem:[%s2 + $0x7c] sm:$0xf]
      %v673 = vld [vmem:[%s2 + $0x80] sm:$0xf]
      %v674 = vld [vmem:[%s2 + $0x84] sm:$0xf]
      %v675 = vld [vmem:[%s2 + $0x88] sm:$0xf]
      %v676 = vld [vmem:[%s2 + $0x8c] sm:$0xf]
      %v677 = vld [vmem:[%s2 + $0x90] sm:$0xf]
      %v678 = vld [vmem:[%s2 + $0x94] sm:$0xf]
      %v679 = vld [vmem:[%s2 + $0x98] sm:$0xf]
      %v680 = vld [vmem:[%s2 + $0x9c] sm:$0xf]
      %v681 = vld [vmem:[%s2 + $0xa0] sm:$0xf]
      %v682 = vld [vmem:[%s2 + $0xa4] sm:$0xf]
      %v683 = vld [vmem:[%s2 + $0xa8] sm:$0xf]
      %v684 = vld [vmem:[%s2 + $0xac] sm:$0xf]
      %v685 = vld [vmem:[%s2 + $0xb0] sm:$0xf]
      %v686 = vld [vmem:[%s2 + $0xb4] sm:$0xf]
      %v687 = vld [vmem:[%s2 + $0xb8] sm:$0xf]
      %v688 = vld [vmem:[%s2 + $0xbc] sm:$0xf]
      %s689 = scalar_lea.vmem [#allocation2], 12
      %v690 = vld [vmem:[%s689] sm:$0xff]
      %v691 = vld [vmem:[%s689 + $0x8] sm:$0xf]
      %v692 = vld [vmem:[%s689 + $0xc] sm:$0xff]
      %v693 = vld [vmem:[%s689 + $0x14] sm:$0xf]
      %v694 = vld [vmem:[%s689 + $0x18] sm:$0xff]
      %v695 = vld [vmem:[%s689 + $0x20] sm:$0xf]
      %v696 = vld [vmem:[%s689 + $0x24] sm:$0xff]
      %v697 = vld [vmem:[%s689 + $0x2c] sm:$0xf]
      %v698 = vld [vmem:[%s689 + $0x30] sm:$0xff]
      %v699 = vld [vmem:[%s689 + $0x38] sm:$0xf]
      %v700 = vld [vmem:[%s689 + $0x3c] sm:$0xff]
      %v701 = vld [vmem:[%s689 + $0x44] sm:$0xf]
      %v702 = vld [vmem:[%s689 + $0x48] sm:$0xff]
      %v703 = vld [vmem:[%s689 + $0x50] sm:$0xf]
      %v704 = vld [vmem:[%s689 + $0x54] sm:$0xff]
      %v705 = vld [vmem:[%s689 + $0x5c] sm:$0xf]
      %s706 = scalar_lea.vmem %s2, 192
      %v707 = vld [vmem:[%s706] sm:$0xf]
      %v708 = vld [vmem:[%s706 + $0x4] sm:$0xf]
      %v709 = vld [vmem:[%s706 + $0x8] sm:$0xf]
      %v710 = vld [vmem:[%s706 + $0xc] sm:$0xf]
      %v711 = vld [vmem:[%s706 + $0x10] sm:$0xf]
      %v712 = vld [vmem:[%s706 + $0x14] sm:$0xf]
      %v713 = vld [vmem:[%s706 + $0x18] sm:$0xf]
      %v714 = vld [vmem:[%s706 + $0x1c] sm:$0xf]
      %v715 = vld [vmem:[%s706 + $0x20] sm:$0xf]
      %v716 = vld [vmem:[%s706 + $0x24] sm:$0xf]
      %v717 = vld [vmem:[%s706 + $0x28] sm:$0xf]
      %v718 = vld [vmem:[%s706 + $0x2c] sm:$0xf]
      %v719 = vld [vmem:[%s706 + $0x30] sm:$0xf]
      %v720 = vld [vmem:[%s706 + $0x34] sm:$0xf]
      %v721 = vld [vmem:[%s706 + $0x38] sm:$0xf]
      %v722 = vld [vmem:[%s706 + $0x3c] sm:$0xf]
      %v723 = vld [vmem:[%s706 + $0x40] sm:$0xf]
      %v724 = vld [vmem:[%s706 + $0x44] sm:$0xf]
      %v725 = vld [vmem:[%s706 + $0x48] sm:$0xf]
      %v726 = vld [vmem:[%s706 + $0x4c] sm:$0xf]
      %v727 = vld [vmem:[%s706 + $0x50] sm:$0xf]
      %v728 = vld [vmem:[%s706 + $0x54] sm:$0xf]
      %v729 = vld [vmem:[%s706 + $0x58] sm:$0xf]
      %v730 = vld [vmem:[%s706 + $0x5c] sm:$0xf]
      %v731 = vld [vmem:[%s706 + $0x60] sm:$0xf]
      %v732 = vld [vmem:[%s706 + $0x64] sm:$0xf]
      %v733 = vld [vmem:[%s706 + $0x68] sm:$0xf]
      %v734 = vld [vmem:[%s706 + $0x6c] sm:$0xf]
      %v735 = vld [vmem:[%s706 + $0x70] sm:$0xf]
      %v736 = vld [vmem:[%s706 + $0x74] sm:$0xf]
      %v737 = vld [vmem:[%s706 + $0x78] sm:$0xf]
      %v738 = vld [vmem:[%s706 + $0x7c] sm:$0xf]
      %v739 = vld [vmem:[%s706 + $0x80] sm:$0xf]
      %v740 = vld [vmem:[%s706 + $0x84] sm:$0xf]
      %v741 = vld [vmem:[%s706 + $0x88] sm:$0xf]
      %v742 = vld [vmem:[%s706 + $0x8c] sm:$0xf]
      %v743 = vld [vmem:[%s706 + $0x90] sm:$0xf]
      %v744 = vld [vmem:[%s706 + $0x94] sm:$0xf]
      %v745 = vld [vmem:[%s706 + $0x98] sm:$0xf]
      %v746 = vld [vmem:[%s706 + $0x9c] sm:$0xf]
      %v747 = vld [vmem:[%s706 + $0xa0] sm:$0xf]
      %v748 = vld [vmem:[%s706 + $0xa4] sm:$0xf]
      %v749 = vld [vmem:[%s706 + $0xa8] sm:$0xf]
      %v750 = vld [vmem:[%s706 + $0xac] sm:$0xf]
      %v751 = vld [vmem:[%s706 + $0xb0] sm:$0xf]
      %v752 = vld [vmem:[%s706 + $0xb4] sm:$0xf]
      %v753 = vld [vmem:[%s706 + $0xb8] sm:$0xf]
      %v754 = vld [vmem:[%s706 + $0xbc] sm:$0xf]
      %v771 = vunpack.c.l.b16 %v690
      %v772 = vunpack.c.h.b16 %v690
      %v773 = vunpack.c.l.b16 %v691
      %v774 = vunpack.c.l.b16 %v692
      %v775 = vunpack.c.h.b16 %v692
      %v776 = vunpack.c.l.b16 %v693
      %v777 = vunpack.c.l.b16 %v694
      %v778 = vunpack.c.h.b16 %v694
      %v779 = vunpack.c.l.b16 %v695
      %v780 = vunpack.c.l.b16 %v696
      %v781 = vunpack.c.h.b16 %v696
      %v782 = vunpack.c.l.b16 %v697
      %v783 = vunpack.c.l.b16 %v698
      %v784 = vunpack.c.h.b16 %v698
      %v785 = vunpack.c.l.b16 %v699
      %v786 = vunpack.c.l.b16 %v700
      %v787 = vunpack.c.h.b16 %v700
      %v788 = vunpack.c.l.b16 %v701
      %v789 = vunpack.c.l.b16 %v702
      %v790 = vunpack.c.h.b16 %v702
      %v791 = vunpack.c.l.b16 %v703
      %v792 = vunpack.c.l.b16 %v704
      %v793 = vunpack.c.h.b16 %v704
      %v794 = vunpack.c.l.b16 %v705
      %v795 = vpack.c.b16 %v774, %v771
      %v796 = vpack.c.b16 %v775, %v772
      %v797 = vpack.c.b16 %v776, %v773
      %v798 = vpack.c.b16 %v780, %v777
      %v799 = vpack.c.b16 %v781, %v778
      %v800 = vpack.c.b16 %v782, %v779
      %v801 = vpack.c.b16 %v786, %v783
      %v802 = vpack.c.b16 %v787, %v784
      %v803 = vpack.c.b16 %v788, %v785
      %v804 = vpack.c.b16 %v792, %v789
      %v805 = vpack.c.b16 %v793, %v790
      %v806 = vpack.c.b16 %v794, %v791
      %v867 = vunpack.c.l.b16 %v707
      %v868 = vunpack.c.l.b16 %v708
      %v869 = vunpack.c.l.b16 %v709
      %v870 = vunpack.c.l.b16 %v710
      %v871 = vunpack.c.l.b16 %v711
      %v872 = vunpack.c.l.b16 %v712
      %v873 = vunpack.c.l.b16 %v713
      %v874 = vunpack.c.l.b16 %v714
      %v875 = vunpack.c.l.b16 %v715
      %v876 = vunpack.c.l.b16 %v716
      %v877 = vunpack.c.l.b16 %v717
      %v878 = vunpack.c.l.b16 %v718
      %v879 = vunpack.c.l.b16 %v719
      %v880 = vunpack.c.l.b16 %v720
      %v881 = vunpack.c.l.b16 %v721
      %v882 = vunpack.c.l.b16 %v722
      %v883 = vunpack.c.l.b16 %v723
      %v884 = vunpack.c.l.b16 %v724
      %v885 = vunpack.c.l.b16 %v725
      %v886 = vunpack.c.l.b16 %v726
      %v887 = vunpack.c.l.b16 %v727
      %v888 = vunpack.c.l.b16 %v728
      %v889 = vunpack.c.l.b16 %v729
      %v890 = vunpack.c.l.b16 %v730
      %v891 = vunpack.c.l.b16 %v731
      %v892 = vunpack.c.l.b16 %v732
      %v893 = vunpack.c.l.b16 %v733
      %v894 = vunpack.c.l.b16 %v734
      %v895 = vunpack.c.l.b16 %v735
      %v896 = vunpack.c.l.b16 %v736
      %v897 = vunpack.c.l.b16 %v737
      %v898 = vunpack.c.l.b16 %v738
      %v899 = vunpack.c.l.b16 %v739
      %v900 = vunpack.c.l.b16 %v740
      %v901 = vunpack.c.l.b16 %v741
      %v902 = vunpack.c.l.b16 %v742
      %v903 = vunpack.c.l.b16 %v743
      %v904 = vunpack.c.l.b16 %v744
      %v905 = vunpack.c.l.b16 %v745
      %v906 = vunpack.c.l.b16 %v746
      %v907 = vunpack.c.l.b16 %v747
      %v908 = vunpack.c.l.b16 %v748
      %v909 = vunpack.c.l.b16 %v749
      %v910 = vunpack.c.l.b16 %v750
      %v911 = vunpack.c.l.b16 %v751
      %v912 = vunpack.c.l.b16 %v752
      %v913 = vunpack.c.l.b16 %v753
      %v914 = vunpack.c.l.b16 %v754
      %v915 = vpack.c.b16 %v868, %v867
      %v916 = vpack.c.b16 %v870, %v869
      %v917 = vpack.c.b16 %v872, %v871
      %v918 = vpack.c.b16 %v874, %v873
      %v919 = vpack.c.b16 %v876, %v875
      %v920 = vpack.c.b16 %v878, %v877
      %v921 = vpack.c.b16 %v880, %v879
      %v922 = vpack.c.b16 %v882, %v881
      %v923 = vpack.c.b16 %v884, %v883
      %v924 = vpack.c.b16 %v886, %v885
      %v925 = vpack.c.b16 %v888, %v887
      %v926 = vpack.c.b16 %v890, %v889
      %v927 = vpack.c.b16 %v892, %v891
      %v928 = vpack.c.b16 %v894, %v893
      %v929 = vpack.c.b16 %v896, %v895
      %v930 = vpack.c.b16 %v898, %v897
      %v931 = vpack.c.b16 %v900, %v899
      %v932 = vpack.c.b16 %v902, %v901
      %v933 = vpack.c.b16 %v904, %v903
      %v934 = vpack.c.b16 %v906, %v905
      %v935 = vpack.c.b16 %v908, %v907
      %v936 = vpack.c.b16 %v910, %v909
      %v937 = vpack.c.b16 %v912, %v911
      %v938 = vpack.c.b16 %v914, %v913
      %963 = vmatpush.bf16.msra.mxu0 %v922
      %964 = vmatpush.bf16.msra.mxu0 %v921
      %965 = vmatpush.bf16.msra.mxu0 %v920
      %966 = vmatpush.bf16.msra.mxu0 %v919
      %967 = vmatpush.bf16.msra.mxu0 %v918
      %968 = vmatpush.bf16.msra.mxu0 %v917
      %969 = vmatpush.bf16.msra.mxu0 %v916
      %970 = vmatpush.bf16.msra.mxu0 %v915
      %971 = vmatmul.bf16.gmra.mxu0 %v795
      %v972 = vpop.f32.mrf.mxu0
      %v973 = vadd.f32 0.0, %v972
      %v974 = vpop.f32.mrf.mxu0
      %v975 = vadd.f32 0.0, %v974
      %976 = vmatmul.bf16.gmra.mxu0 %v798
      %v977 = vpop.f32.mrf.mxu0
      %v978 = vadd.f32 0.0, %v977
      %v979 = vpop.f32.mrf.mxu0
      %v980 = vadd.f32 0.0, %v979
      %981 = vmatmul.bf16.gmra.mxu0 %v801
      %v982 = vpop.f32.mrf.mxu0
      %v983 = vadd.f32 0.0, %v982
      %v984 = vpop.f32.mrf.mxu0
      %v985 = vadd.f32 0.0, %v984
      %986 = vmatmul.bf16.gmra.mxu0 %v804
      %v987 = vpop.f32.mrf.mxu0
      %v988 = vadd.f32 0.0, %v987
      %v989 = vpop.f32.mrf.mxu0
      %v990 = vadd.f32 0.0, %v989
      %991 = vdwg.mxu0
      %992 = vmatpush.bf16.msra.mxu0 %v930
      %993 = vmatpush.bf16.msra.mxu0 %v929
      %994 = vmatpush.bf16.msra.mxu0 %v928
      %995 = vmatpush.bf16.msra.mxu0 %v927
      %996 = vmatpush.bf16.msra.mxu0 %v926
      %997 = vmatpush.bf16.msra.mxu0 %v925
      %998 = vmatpush.bf16.msra.mxu0 %v924
      %999 = vmatpush.bf16.msra.mxu0 %v923
      %1000 = vmatmul.bf16.gmra.mxu0 %v796
      %v1001 = vpop.f32.mrf.mxu0
      %v1002 = vadd.f32 %v973, %v1001
      %v1003 = vpop.f32.mrf.mxu0
      %v1004 = vadd.f32 %v975, %v1003
      %1005 = vmatmul.bf16.gmra.mxu0 %v799
      %v1006 = vpop.f32.mrf.mxu0
      %v1007 = vadd.f32 %v978, %v1006
      %v1008 = vpop.f32.mrf.mxu0
      %v1009 = vadd.f32 %v980, %v1008
      %1010 = vmatmul.bf16.gmra.mxu0 %v802
      %v1011 = vpop.f32.mrf.mxu0
      %v1012 = vadd.f32 %v983, %v1011
      %v1013 = vpop.f32.mrf.mxu0
      %v1014 = vadd.f32 %v985, %v1013
      %1015 = vmatmul.bf16.gmra.mxu0 %v805
      %v1016 = vpop.f32.mrf.mxu0
      %v1017 = vadd.f32 %v988, %v1016
      %v1018 = vpop.f32.mrf.mxu0
      %v1019 = vadd.f32 %v990, %v1018
      %1020 = vdwg.mxu0
      %1021 = vmatpush.bf16.msra.mxu0 %v938
      %1022 = vmatpush.bf16.msra.mxu0 %v937
      %1023 = vmatpush.bf16.msra.mxu0 %v936
      %1024 = vmatpush.bf16.msra.mxu0 %v935
      %1025 = vmatpush.bf16.msra.mxu0 %v934
      %1026 = vmatpush.bf16.msra.mxu0 %v933
      %1027 = vmatpush.bf16.msra.mxu0 %v932
      %1028 = vmatpush.bf16.msra.mxu0 %v931
      %1029 = vmatmul.bf16.gmra.mxu0 %v797
      %v1030 = vpop.f32.mrf.mxu0
      %v1031 = vadd.f32 %v1002, %v1030
      %v1032 = vpop.f32.mrf.mxu0
      %v1033 = vadd.f32 %v1004, %v1032
      %1034 = vmatmul.bf16.gmra.mxu0 %v800
      %v1035 = vpop.f32.mrf.mxu0
      %v1036 = vadd.f32 %v1007, %v1035
      %v1037 = vpop.f32.mrf.mxu0
      %v1038 = vadd.f32 %v1009, %v1037
      %1039 = vmatmul.bf16.gmra.mxu0 %v803
      %v1040 = vpop.f32.mrf.mxu0
      %v1041 = vadd.f32 %v1012, %v1040
      %v1042 = vpop.f32.mrf.mxu0
      %v1043 = vadd.f32 %v1014, %v1042
      %1044 = vmatmul.bf16.gmra.mxu0 %v806
      %v1045 = vpop.f32.mrf.mxu0
      %v1046 = vadd.f32 %v1017, %v1045
      %v1047 = vpop.f32.mrf.mxu0
      %v1048 = vadd.f32 %v1019, %v1047
      %1049 = vdwg.mxu0
      %v1066 = vunpack.c.l.b16 %v625
      %v1067 = vunpack.c.h.b16 %v625
      %v1068 = vunpack.c.l.b16 %v626
      %v1069 = vunpack.c.l.b16 %v627
      %v1070 = vunpack.c.h.b16 %v627
      %v1071 = vunpack.c.l.b16 %v628
      %v1072 = vunpack.c.l.b16 %v629
      %v1073 = vunpack.c.h.b16 %v629
      %v1074 = vunpack.c.l.b16 %v630
      %v1075 = vunpack.c.l.b16 %v631
      %v1076 = vunpack.c.h.b16 %v631
      %v1077 = vunpack.c.l.b16 %v632
      %v1078 = vunpack.c.l.b16 %v633
      %v1079 = vunpack.c.h.b16 %v633
      %v1080 = vunpack.c.l.b16 %v634
      %v1081 = vunpack.c.l.b16 %v635
      %v1082 = vunpack.c.h.b16 %v635
      %v1083 = vunpack.c.l.b16 %v636
      %v1084 = vunpack.c.l.b16 %v637
      %v1085 = vunpack.c.h.b16 %v637
      %v1086 = vunpack.c.l.b16 %v638
      %v1087 = vunpack.c.l.b16 %v639
      %v1088 = vunpack.c.h.b16 %v639
      %v1089 = vunpack.c.l.b16 %v640
      %v1090 = vpack.c.b16 %v1069, %v1066
      %v1091 = vpack.c.b16 %v1070, %v1067
      %v1092 = vpack.c.b16 %v1071, %v1068
      %v1093 = vpack.c.b16 %v1075, %v1072
      %v1094 = vpack.c.b16 %v1076, %v1073
      %v1095 = vpack.c.b16 %v1077, %v1074
      %v1096 = vpack.c.b16 %v1081, %v1078
      %v1097 = vpack.c.b16 %v1082, %v1079
      %v1098 = vpack.c.b16 %v1083, %v1080
      %v1099 = vpack.c.b16 %v1087, %v1084
      %v1100 = vpack.c.b16 %v1088, %v1085
      %v1101 = vpack.c.b16 %v1089, %v1086
      %v1162 = vunpack.c.l.b16 %v641
      %v1163 = vunpack.c.l.b16 %v642
      %v1164 = vunpack.c.l.b16 %v643
      %v1165 = vunpack.c.l.b16 %v644
      %v1166 = vunpack.c.l.b16 %v645
      %v1167 = vunpack.c.l.b16 %v646
      %v1168 = vunpack.c.l.b16 %v647
      %v1169 = vunpack.c.l.b16 %v648
      %v1170 = vunpack.c.l.b16 %v649
      %v1171 = vunpack.c.l.b16 %v650
      %v1172 = vunpack.c.l.b16 %v651
      %v1173 = vunpack.c.l.b16 %v652
      %v1174 = vunpack.c.l.b16 %v653
      %v1175 = vunpack.c.l.b16 %v654
      %v1176 = vunpack.c.l.b16 %v655
      %v1177 = vunpack.c.l.b16 %v656
      %v1178 = vunpack.c.l.b16 %v657
      %v1179 = vunpack.c.l.b16 %v658
      %v1180 = vunpack.c.l.b16 %v659
      %v1181 = vunpack.c.l.b16 %v660
      %v1182 = vunpack.c.l.b16 %v661
      %v1183 = vunpack.c.l.b16 %v662
      %v1184 = vunpack.c.l.b16 %v663
      %v1185 = vunpack.c.l.b16 %v664
      %v1186 = vunpack.c.l.b16 %v665
      %v1187 = vunpack.c.l.b16 %v666
      %v1188 = vunpack.c.l.b16 %v667
      %v1189 = vunpack.c.l.b16 %v668
      %v1190 = vunpack.c.l.b16 %v669
      %v1191 = vunpack.c.l.b16 %v670
      %v1192 = vunpack.c.l.b16 %v671
      %v1193 = vunpack.c.l.b16 %v672
      %v1194 = vunpack.c.l.b16 %v673
      %v1195 = vunpack.c.l.b16 %v674
      %v1196 = vunpack.c.l.b16 %v675
      %v1197 = vunpack.c.l.b16 %v676
      %v1198 = vunpack.c.l.b16 %v677
      %v1199 = vunpack.c.l.b16 %v678
      %v1200 = vunpack.c.l.b16 %v679
      %v1201 = vunpack.c.l.b16 %v680
      %v1202 = vunpack.c.l.b16 %v681
      %v1203 = vunpack.c.l.b16 %v682
      %v1204 = vunpack.c.l.b16 %v683
      %v1205 = vunpack.c.l.b16 %v684
      %v1206 = vunpack.c.l.b16 %v685
      %v1207 = vunpack.c.l.b16 %v686
      %v1208 = vunpack.c.l.b16 %v687
      %v1209 = vunpack.c.l.b16 %v688
      %v1210 = vpack.c.b16 %v1163, %v1162
      %v1211 = vpack.c.b16 %v1165, %v1164
      %v1212 = vpack.c.b16 %v1167, %v1166
      %v1213 = vpack.c.b16 %v1169, %v1168
      %v1214 = vpack.c.b16 %v1171, %v1170
      %v1215 = vpack.c.b16 %v1173, %v1172
      %v1216 = vpack.c.b16 %v1175, %v1174
      %v1217 = vpack.c.b16 %v1177, %v1176
      %v1218 = vpack.c.b16 %v1179, %v1178
      %v1219 = vpack.c.b16 %v1181, %v1180
      %v1220 = vpack.c.b16 %v1183, %v1182
      %v1221 = vpack.c.b16 %v1185, %v1184
      %v1222 = vpack.c.b16 %v1187, %v1186
      %v1223 = vpack.c.b16 %v1189, %v1188
      %v1224 = vpack.c.b16 %v1191, %v1190
      %v1225 = vpack.c.b16 %v1193, %v1192
      %v1226 = vpack.c.b16 %v1195, %v1194
      %v1227 = vpack.c.b16 %v1197, %v1196
      %v1228 = vpack.c.b16 %v1199, %v1198
      %v1229 = vpack.c.b16 %v1201, %v1200
      %v1230 = vpack.c.b16 %v1203, %v1202
      %v1231 = vpack.c.b16 %v1205, %v1204
      %v1232 = vpack.c.b16 %v1207, %v1206
      %v1233 = vpack.c.b16 %v1209, %v1208
      %1258 = vmatpush.bf16.msra.mxu0 %v1217
      %1259 = vmatpush.bf16.msra.mxu0 %v1216
      %1260 = vmatpush.bf16.msra.mxu0 %v1215
      %1261 = vmatpush.bf16.msra.mxu0 %v1214
      %1262 = vmatpush.bf16.msra.mxu0 %v1213
      %1263 = vmatpush.bf16.msra.mxu0 %v1212
      %1264 = vmatpush.bf16.msra.mxu0 %v1211
      %1265 = vmatpush.bf16.msra.mxu0 %v1210
      %1266 = vmatmul.bf16.gmra.mxu0 %v1090
      %v1267 = vpop.f32.mrf.mxu0
      %v1268 = vadd.f32 %v1031, %v1267
      %v1269 = vpop.f32.mrf.mxu0
      %v1270 = vadd.f32 %v1033, %v1269
      %1271 = vmatmul.bf16.gmra.mxu0 %v1093
      %v1272 = vpop.f32.mrf.mxu0
      %v1273 = vadd.f32 %v1036, %v1272
      %v1274 = vpop.f32.mrf.mxu0
      %v1275 = vadd.f32 %v1038, %v1274
      %1276 = vmatmul.bf16.gmra.mxu0 %v1096
      %v1277 = vpop.f32.mrf.mxu0
      %v1278 = vadd.f32 %v1041, %v1277
      %v1279 = vpop.f32.mrf.mxu0
      %v1280 = vadd.f32 %v1043, %v1279
      %1281 = vmatmul.bf16.gmra.mxu0 %v1099
      %v1282 = vpop.f32.mrf.mxu0
      %v1283 = vadd.f32 %v1046, %v1282
      %v1284 = vpop.f32.mrf.mxu0
      %v1285 = vadd.f32 %v1048, %v1284
      %1286 = vdwg.mxu0
      %1287 = vmatpush.bf16.msra.mxu0 %v1225
      %1288 = vmatpush.bf16.msra.mxu0 %v1224
      %1289 = vmatpush.bf16.msra.mxu0 %v1223
      %1290 = vmatpush.bf16.msra.mxu0 %v1222
      %1291 = vmatpush.bf16.msra.mxu0 %v1221
      %1292 = vmatpush.bf16.msra.mxu0 %v1220
      %1293 = vmatpush.bf16.msra.mxu0 %v1219
      %1294 = vmatpush.bf16.msra.mxu0 %v1218
      %1295 = vmatmul.bf16.gmra.mxu0 %v1091
      %v1296 = vpop.f32.mrf.mxu0
      %v1297 = vadd.f32 %v1268, %v1296
      %v1298 = vpop.f32.mrf.mxu0
      %v1299 = vadd.f32 %v1270, %v1298
      %1300 = vmatmul.bf16.gmra.mxu0 %v1094
      %v1301 = vpop.f32.mrf.mxu0
      %v1302 = vadd.f32 %v1273, %v1301
      %v1303 = vpop.f32.mrf.mxu0
      %v1304 = vadd.f32 %v1275, %v1303
      %1305 = vmatmul.bf16.gmra.mxu0 %v1097
      %v1306 = vpop.f32.mrf.mxu0
      %v1307 = vadd.f32 %v1278, %v1306
      %v1308 = vpop.f32.mrf.mxu0
      %v1309 = vadd.f32 %v1280, %v1308
      %1310 = vmatmul.bf16.gmra.mxu0 %v1100
      %v1311 = vpop.f32.mrf.mxu0
      %v1312 = vadd.f32 %v1283, %v1311
      %v1313 = vpop.f32.mrf.mxu0
      %v1314 = vadd.f32 %v1285, %v1313
      %1315 = vdwg.mxu0
      %1316 = vmatpush.bf16.msra.mxu0 %v1233
      %1317 = vmatpush.bf16.msra.mxu0 %v1232
      %1318 = vmatpush.bf16.msra.mxu0 %v1231
      %1319 = vmatpush.bf16.msra.mxu0 %v1230
      %1320 = vmatpush.bf16.msra.mxu0 %v1229
      %1321 = vmatpush.bf16.msra.mxu0 %v1228
      %1322 = vmatpush.bf16.msra.mxu0 %v1227
      %1323 = vmatpush.bf16.msra.mxu0 %v1226
      %1324 = vmatmul.bf16.gmra.mxu0 %v1092
      %v1325 = vpop.f32.mrf.mxu0
      %v1326 = vadd.f32 %v1297, %v1325
      %v1327 = vpop.f32.mrf.mxu0
      %v1328 = vadd.f32 %v1299, %v1327
      %1329 = vmatmul.bf16.gmra.mxu0 %v1095
      %v1330 = vpop.f32.mrf.mxu0
      %v1331 = vadd.f32 %v1302, %v1330
      %v1332 = vpop.f32.mrf.mxu0
      %v1333 = vadd.f32 %v1304, %v1332
      %1334 = vmatmul.bf16.gmra.mxu0 %v1098
      %v1335 = vpop.f32.mrf.mxu0
      %v1336 = vadd.f32 %v1307, %v1335
      %v1337 = vpop.f32.mrf.mxu0
      %v1338 = vadd.f32 %v1309, %v1337
      %1339 = vmatmul.bf16.gmra.mxu0 %v1101
      %v1340 = vpop.f32.mrf.mxu0
      %v1341 = vadd.f32 %v1312, %v1340
      %v1342 = vpop.f32.mrf.mxu0
      %v1343 = vadd.f32 %v1314, %v1342
      %1344 = vdwg.mxu0
      %s1345 = scalar_lea.vmem [#allocation2], 24
      %v1346 = vld [vmem:[%s1345] sm:$0xff]
      %v1347 = vld [vmem:[%s1345 + $0x8] sm:$0xf]
      %v1348 = vld [vmem:[%s1345 + $0xc] sm:$0xff]
      %v1349 = vld [vmem:[%s1345 + $0x14] sm:$0xf]
      %v1350 = vld [vmem:[%s1345 + $0x18] sm:$0xff]
      %v1351 = vld [vmem:[%s1345 + $0x20] sm:$0xf]
      %v1352 = vld [vmem:[%s1345 + $0x24] sm:$0xff]
      %v1353 = vld [vmem:[%s1345 + $0x2c] sm:$0xf]
      %v1354 = vld [vmem:[%s1345 + $0x30] sm:$0xff]
      %v1355 = vld [vmem:[%s1345 + $0x38] sm:$0xf]
      %v1356 = vld [vmem:[%s1345 + $0x3c] sm:$0xff]
      %v1357 = vld [vmem:[%s1345 + $0x44] sm:$0xf]
      %v1358 = vld [vmem:[%s1345 + $0x48] sm:$0xff]
      %v1359 = vld [vmem:[%s1345 + $0x50] sm:$0xf]
      %v1360 = vld [vmem:[%s1345 + $0x54] sm:$0xff]
      %v1361 = vld [vmem:[%s1345 + $0x5c] sm:$0xf]
      %s1362 = scalar_lea.vmem %s2, 384
      %v1363 = vld [vmem:[%s1362] sm:$0xf]
      %v1364 = vld [vmem:[%s1362 + $0x4] sm:$0xf]
      %v1365 = vld [vmem:[%s1362 + $0x8] sm:$0xf]
      %v1366 = vld [vmem:[%s1362 + $0xc] sm:$0xf]
      %v1367 = vld [vmem:[%s1362 + $0x10] sm:$0xf]
      %v1368 = vld [vmem:[%s1362 + $0x14] sm:$0xf]
      %v1369 = vld [vmem:[%s1362 + $0x18] sm:$0xf]
      %v1370 = vld [vmem:[%s1362 + $0x1c] sm:$0xf]
      %v1371 = vld [vmem:[%s1362 + $0x20] sm:$0xf]
      %v1372 = vld [vmem:[%s1362 + $0x24] sm:$0xf]
      %v1373 = vld [vmem:[%s1362 + $0x28] sm:$0xf]
      %v1374 = vld [vmem:[%s1362 + $0x2c] sm:$0xf]
      %v1375 = vld [vmem:[%s1362 + $0x30] sm:$0xf]
      %v1376 = vld [vmem:[%s1362 + $0x34] sm:$0xf]
      %v1377 = vld [vmem:[%s1362 + $0x38] sm:$0xf]
      %v1378 = vld [vmem:[%s1362 + $0x3c] sm:$0xf]
      %v1379 = vld [vmem:[%s1362 + $0x40] sm:$0xf]
      %v1380 = vld [vmem:[%s1362 + $0x44] sm:$0xf]
      %v1381 = vld [vmem:[%s1362 + $0x48] sm:$0xf]
      %v1382 = vld [vmem:[%s1362 + $0x4c] sm:$0xf]
      %v1383 = vld [vmem:[%s1362 + $0x50] sm:$0xf]
      %v1384 = vld [vmem:[%s1362 + $0x54] sm:$0xf]
      %v1385 = vld [vmem:[%s1362 + $0x58] sm:$0xf]
      %v1386 = vld [vmem:[%s1362 + $0x5c] sm:$0xf]
      %v1387 = vld [vmem:[%s1362 + $0x60] sm:$0xf]
      %v1388 = vld [vmem:[%s1362 + $0x64] sm:$0xf]
      %v1389 = vld [vmem:[%s1362 + $0x68] sm:$0xf]
      %v1390 = vld [vmem:[%s1362 + $0x6c] sm:$0xf]
      %v1391 = vld [vmem:[%s1362 + $0x70] sm:$0xf]
      %v1392 = vld [vmem:[%s1362 + $0x74] sm:$0xf]
      %v1393 = vld [vmem:[%s1362 + $0x78] sm:$0xf]
      %v1394 = vld [vmem:[%s1362 + $0x7c] sm:$0xf]
      %v1395 = vld [vmem:[%s1362 + $0x80] sm:$0xf]
      %v1396 = vld [vmem:[%s1362 + $0x84] sm:$0xf]
      %v1397 = vld [vmem:[%s1362 + $0x88] sm:$0xf]
      %v1398 = vld [vmem:[%s1362 + $0x8c] sm:$0xf]
      %v1399 = vld [vmem:[%s1362 + $0x90] sm:$0xf]
      %v1400 = vld [vmem:[%s1362 + $0x94] sm:$0xf]
      %v1401 = vld [vmem:[%s1362 + $0x98] sm:$0xf]
      %v1402 = vld [vmem:[%s1362 + $0x9c] sm:$0xf]
      %v1403 = vld [vmem:[%s1362 + $0xa0] sm:$0xf]
      %v1404 = vld [vmem:[%s1362 + $0xa4] sm:$0xf]
      %v1405 = vld [vmem:[%s1362 + $0xa8] sm:$0xf]
      %v1406 = vld [vmem:[%s1362 + $0xac] sm:$0xf]
      %v1407 = vld [vmem:[%s1362 + $0xb0] sm:$0xf]
      %v1408 = vld [vmem:[%s1362 + $0xb4] sm:$0xf]
      %v1409 = vld [vmem:[%s1362 + $0xb8] sm:$0xf]
      %v1410 = vld [vmem:[%s1362 + $0xbc] sm:$0xf]
      %v1427 = vunpack.c.l.b16 %v1346
      %v1428 = vunpack.c.h.b16 %v1346
      %v1429 = vunpack.c.l.b16 %v1347
      %v1430 = vunpack.c.l.b16 %v1348
      %v1431 = vunpack.c.h.b16 %v1348
      %v1432 = vunpack.c.l.b16 %v1349
      %v1433 = vunpack.c.l.b16 %v1350
      %v1434 = vunpack.c.h.b16 %v1350
      %v1435 = vunpack.c.l.b16 %v1351
      %v1436 = vunpack.c.l.b16 %v1352
      %v1437 = vunpack.c.h.b16 %v1352
      %v1438 = vunpack.c.l.b16 %v1353
      %v1439 = vunpack.c.l.b16 %v1354
      %v1440 = vunpack.c.h.b16 %v1354
      %v1441 = vunpack.c.l.b16 %v1355
      %v1442 = vunpack.c.l.b16 %v1356
      %v1443 = vunpack.c.h.b16 %v1356
      %v1444 = vunpack.c.l.b16 %v1357
      %v1445 = vunpack.c.l.b16 %v1358
      %v1446 = vunpack.c.h.b16 %v1358
      %v1447 = vunpack.c.l.b16 %v1359
      %v1448 = vunpack.c.l.b16 %v1360
      %v1449 = vunpack.c.h.b16 %v1360
      %v1450 = vunpack.c.l.b16 %v1361
      %v1451 = vpack.c.b16 %v1430, %v1427
      %v1452 = vpack.c.b16 %v1431, %v1428
      %v1453 = vpack.c.b16 %v1432, %v1429
      %v1454 = vpack.c.b16 %v1436, %v1433
      %v1455 = vpack.c.b16 %v1437, %v1434
      %v1456 = vpack.c.b16 %v1438, %v1435
      %v1457 = vpack.c.b16 %v1442, %v1439
      %v1458 = vpack.c.b16 %v1443, %v1440
      %v1459 = vpack.c.b16 %v1444, %v1441
      %v1460 = vpack.c.b16 %v1448, %v1445
      %v1461 = vpack.c.b16 %v1449, %v1446
      %v1462 = vpack.c.b16 %v1450, %v1447
      %v1523 = vunpack.c.l.b16 %v1363
      %v1524 = vunpack.c.l.b16 %v1364
      %v1525 = vunpack.c.l.b16 %v1365
      %v1526 = vunpack.c.l.b16 %v1366
      %v1527 = vunpack.c.l.b16 %v1367
      %v1528 = vunpack.c.l.b16 %v1368
      %v1529 = vunpack.c.l.b16 %v1369
      %v1530 = vunpack.c.l.b16 %v1370
      %v1531 = vunpack.c.l.b16 %v1371
      %v1532 = vunpack.c.l.b16 %v1372
      %v1533 = vunpack.c.l.b16 %v1373
      %v1534 = vunpack.c.l.b16 %v1374
      %v1535 = vunpack.c.l.b16 %v1375
      %v1536 = vunpack.c.l.b16 %v1376
      %v1537 = vunpack.c.l.b16 %v1377
      %v1538 = vunpack.c.l.b16 %v1378
      %v1539 = vunpack.c.l.b16 %v1379
      %v1540 = vunpack.c.l.b16 %v1380
      %v1541 = vunpack.c.l.b16 %v1381
      %v1542 = vunpack.c.l.b16 %v1382
      %v1543 = vunpack.c.l.b16 %v1383
      %v1544 = vunpack.c.l.b16 %v1384
      %v1545 = vunpack.c.l.b16 %v1385
      %v1546 = vunpack.c.l.b16 %v1386
      %v1547 = vunpack.c.l.b16 %v1387
      %v1548 = vunpack.c.l.b16 %v1388
      %v1549 = vunpack.c.l.b16 %v1389
      %v1550 = vunpack.c.l.b16 %v1390
      %v1551 = vunpack.c.l.b16 %v1391
      %v1552 = vunpack.c.l.b16 %v1392
      %v1553 = vunpack.c.l.b16 %v1393
      %v1554 = vunpack.c.l.b16 %v1394
      %v1555 = vunpack.c.l.b16 %v1395
      %v1556 = vunpack.c.l.b16 %v1396
      %v1557 = vunpack.c.l.b16 %v1397
      %v1558 = vunpack.c.l.b16 %v1398
      %v1559 = vunpack.c.l.b16 %v1399
      %v1560 = vunpack.c.l.b16 %v1400
      %v1561 = vunpack.c.l.b16 %v1401
      %v1562 = vunpack.c.l.b16 %v1402
      %v1563 = vunpack.c.l.b16 %v1403
      %v1564 = vunpack.c.l.b16 %v1404
      %v1565 = vunpack.c.l.b16 %v1405
      %v1566 = vunpack.c.l.b16 %v1406
      %v1567 = vunpack.c.l.b16 %v1407
      %v1568 = vunpack.c.l.b16 %v1408
      %v1569 = vunpack.c.l.b16 %v1409
      %v1570 = vunpack.c.l.b16 %v1410
      %v1571 = vpack.c.b16 %v1524, %v1523
      %v1572 = vpack.c.b16 %v1526, %v1525
      %v1573 = vpack.c.b16 %v1528, %v1527
      %v1574 = vpack.c.b16 %v1530, %v1529
      %v1575 = vpack.c.b16 %v1532, %v1531
      %v1576 = vpack.c.b16 %v1534, %v1533
      %v1577 = vpack.c.b16 %v1536, %v1535
      %v1578 = vpack.c.b16 %v1538, %v1537
      %v1579 = vpack.c.b16 %v1540, %v1539
      %v1580 = vpack.c.b16 %v1542, %v1541
      %v1581 = vpack.c.b16 %v1544, %v1543
      %v1582 = vpack.c.b16 %v1546, %v1545
      %v1583 = vpack.c.b16 %v1548, %v1547
      %v1584 = vpack.c.b16 %v1550, %v1549
      %v1585 = vpack.c.b16 %v1552, %v1551
      %v1586 = vpack.c.b16 %v1554, %v1553
      %v1587 = vpack.c.b16 %v1556, %v1555
      %v1588 = vpack.c.b16 %v1558, %v1557
      %v1589 = vpack.c.b16 %v1560, %v1559
      %v1590 = vpack.c.b16 %v1562, %v1561
      %v1591 = vpack.c.b16 %v1564, %v1563
      %v1592 = vpack.c.b16 %v1566, %v1565
      %v1593 = vpack.c.b16 %v1568, %v1567
      %v1594 = vpack.c.b16 %v1570, %v1569
      %1619 = vmatpush.bf16.msra.mxu0 %v1578
      %1620 = vmatpush.bf16.msra.mxu0 %v1577
      %1621 = vmatpush.bf16.msra.mxu0 %v1576
      %1622 = vmatpush.bf16.msra.mxu0 %v1575
      %1623 = vmatpush.bf16.msra.mxu0 %v1574
      %1624 = vmatpush.bf16.msra.mxu0 %v1573
      %1625 = vmatpush.bf16.msra.mxu0 %v1572
      %1626 = vmatpush.bf16.msra.mxu0 %v1571
      %1627 = vmatmul.bf16.gmra.mxu0 %v1451
      %v1628 = vpop.f32.mrf.mxu0
      %v1629 = vadd.f32 0.0, %v1628
      %v1630 = vpop.f32.mrf.mxu0
      %v1631 = vadd.f32 0.0, %v1630
      %1632 = vmatmul.bf16.gmra.mxu0 %v1454
      %v1633 = vpop.f32.mrf.mxu0
      %v1634 = vadd.f32 0.0, %v1633
      %v1635 = vpop.f32.mrf.mxu0
      %v1636 = vadd.f32 0.0, %v1635
      %1637 = vmatmul.bf16.gmra.mxu0 %v1457
      %v1638 = vpop.f32.mrf.mxu0
      %v1639 = vadd.f32 0.0, %v1638
      %v1640 = vpop.f32.mrf.mxu0
      %v1641 = vadd.f32 0.0, %v1640
      %1642 = vmatmul.bf16.gmra.mxu0 %v1460
      %v1643 = vpop.f32.mrf.mxu0
      %v1644 = vadd.f32 0.0, %v1643
      %v1645 = vpop.f32.mrf.mxu0
      %v1646 = vadd.f32 0.0, %v1645
      %1647 = vdwg.mxu0
      %1648 = vmatpush.bf16.msra.mxu0 %v1586
      %1649 = vmatpush.bf16.msra.mxu0 %v1585
      %1650 = vmatpush.bf16.msra.mxu0 %v1584
      %1651 = vmatpush.bf16.msra.mxu0 %v1583
      %1652 = vmatpush.bf16.msra.mxu0 %v1582
      %1653 = vmatpush.bf16.msra.mxu0 %v1581
      %1654 = vmatpush.bf16.msra.mxu0 %v1580
      %1655 = vmatpush.bf16.msra.mxu0 %v1579
      %1656 = vmatmul.bf16.gmra.mxu0 %v1452
      %v1657 = vpop.f32.mrf.mxu0
      %v1658 = vadd.f32 %v1629, %v1657
      %v1659 = vpop.f32.mrf.mxu0
      %v1660 = vadd.f32 %v1631, %v1659
      %1661 = vmatmul.bf16.gmra.mxu0 %v1455
      %v1662 = vpop.f32.mrf.mxu0
      %v1663 = vadd.f32 %v1634, %v1662
      %v1664 = vpop.f32.mrf.mxu0
      %v1665 = vadd.f32 %v1636, %v1664
      %1666 = vmatmul.bf16.gmra.mxu0 %v1458
      %v1667 = vpop.f32.mrf.mxu0
      %v1668 = vadd.f32 %v1639, %v1667
      %v1669 = vpop.f32.mrf.mxu0
      %v1670 = vadd.f32 %v1641, %v1669
      %1671 = vmatmul.bf16.gmra.mxu0 %v1461
      %v1672 = vpop.f32.mrf.mxu0
      %v1673 = vadd.f32 %v1644, %v1672
      %v1674 = vpop.f32.mrf.mxu0
      %v1675 = vadd.f32 %v1646, %v1674
      %1676 = vdwg.mxu0
      %1677 = vmatpush.bf16.msra.mxu0 %v1594
      %1678 = vmatpush.bf16.msra.mxu0 %v1593
      %1679 = vmatpush.bf16.msra.mxu0 %v1592
      %1680 = vmatpush.bf16.msra.mxu0 %v1591
      %1681 = vmatpush.bf16.msra.mxu0 %v1590
      %1682 = vmatpush.bf16.msra.mxu0 %v1589
      %1683 = vmatpush.bf16.msra.mxu0 %v1588
      %1684 = vmatpush.bf16.msra.mxu0 %v1587
      %1685 = vmatmul.bf16.gmra.mxu0 %v1453
      %v1686 = vpop.f32.mrf.mxu0
      %v1687 = vadd.f32 %v1658, %v1686
      %v1688 = vpop.f32.mrf.mxu0
      %v1689 = vadd.f32 %v1660, %v1688
      %1690 = vmatmul.bf16.gmra.mxu0 %v1456
      %v1691 = vpop.f32.mrf.mxu0
      %v1692 = vadd.f32 %v1663, %v1691
      %v1693 = vpop.f32.mrf.mxu0
      %v1694 = vadd.f32 %v1665, %v1693
      %1695 = vmatmul.bf16.gmra.mxu0 %v1459
      %v1696 = vpop.f32.mrf.mxu0
      %v1697 = vadd.f32 %v1668, %v1696
      %v1698 = vpop.f32.mrf.mxu0
      %v1699 = vadd.f32 %v1670, %v1698
      %1700 = vmatmul.bf16.gmra.mxu0 %v1462
      %v1701 = vpop.f32.mrf.mxu0
      %v1702 = vadd.f32 %v1673, %v1701
      %v1703 = vpop.f32.mrf.mxu0
      %v1704 = vadd.f32 %v1675, %v1703
      %1705 = vdwg.mxu0
      %v1706 = vadd.f32 %v1326, %v1687
      %v1707 = vadd.f32 %v1328, %v1689
      %v1708 = vadd.f32 %v1331, %v1692
      %v1709 = vadd.f32 %v1333, %v1694
      %v1710 = vadd.f32 %v1336, %v1697
      %v1711 = vadd.f32 %v1338, %v1699
      %v1712 = vadd.f32 %v1341, %v1702
      %v1713 = vadd.f32 %v1343, %v1704
      %v1714 = vld [vmem:[%s3] sm:$0x1]
      %v1716 = vperm.slane %v1714, 0
      %v1718 = vadd.f32 %v1706, %v1716
      %v1719 = vadd.f32 %v1707, %v1716
      %v1720 = vadd.f32 %v1708, %v1716
      %v1721 = vadd.f32 %v1709, %v1716
      %v1722 = vadd.f32 %v1710, %v1716
      %v1723 = vadd.f32 %v1711, %v1716
      %v1724 = vadd.f32 %v1712, %v1716
      %v1725 = vadd.f32 %v1713, %v1716
      %v1726 = vmax.f32 %v1718, 0.0
      %v1727 = vmax.f32 %v1719, 0.0
      %v1728 = vmax.f32 %v1720, 0.0
      %v1729 = vmax.f32 %v1721, 0.0
      %v1730 = vmax.f32 %v1722, 0.0
      %v1731 = vmax.f32 %v1723, 0.0
      %v1732 = vmax.f32 %v1724, 0.0
      %v1733 = vmax.f32 %v1725, 0.0
      %v1734 = vpack.c.bf16 %v1726, %v1726
      %v1735 = vpack.c.bf16 %v1727, %v1727
      %v1736 = vpack.c.bf16 %v1728, %v1728
      %v1737 = vpack.c.bf16 %v1729, %v1729
      %v1738 = vpack.c.bf16 %v1730, %v1730
      %v1739 = vpack.c.bf16 %v1731, %v1731
      %v1740 = vpack.c.bf16 %v1732, %v1732
      %v1741 = vpack.c.bf16 %v1733, %v1733
      %1742 = vst [vmem:[%s316] sm:$0xf] %v1734
      %1743 = vst [vmem:[%s316 + $0x4] sm:$0xf] %v1735
      %1744 = vst [vmem:[%s316 + $0x8] sm:$0xf] %v1736
      %1745 = vst [vmem:[%s316 + $0xc] sm:$0xf] %v1737
      %1746 = vst [vmem:[%s316 + $0x10] sm:$0xf] %v1738
      %1747 = vst [vmem:[%s316 + $0x14] sm:$0xf] %v1739
      %1748 = vst [vmem:[%s316 + $0x18] sm:$0xf] %v1740
      %1749 = vst [vmem:[%s316 + $0x1c] sm:$0xf] %v1741
      %s1750 = smul.u32 8, %s20
      %p1751 = scmp.lt.s32.totalorder %s19, 1
      %s1752 = scalar_select %p1751, %s19, 1
      %p1753 = scmp.lt.s32.totalorder %s1750, 7
      %s1754 = scalar_select %p1753, %s1750, 7
      %s1755 = smul.addr %s1752, 8
      %s1756 = sadd.s32 %s1754, %s1755
      %s1757 = smul.addr %s1756, 4
      %s1758 = scalar_lea.vmem %s4, %s1757
      // Predicated region
      $region37: #{vgg_forward.9} parent=35 // pred_check
        %p1759 = pneg %p149
      $region38: #{vgg_forward.9} parent=35 // pred_check_branch
        %1761 = sbr.rel (%p1759) target = $region40
      $region39: #{vgg_forward.9} parent=35 // pred_region
        %s1762 = smul.u32 8, %s20
      $region40: #{vgg_forward.9} parent=35 // pred_fallthru
        _
    $region36: #{vgg_forward.9} parent=5 // pred_fallthru
      _
    %p1763 = scmp.le.s32.totalorder 2, %s10
    // Predicated region
    $region41: #{vgg_forward.9} parent=5 // pred_check
      %p1764 = pneg %p1763
    $region42: #{vgg_forward.9} parent=5 // pred_check_branch
      %1766 = sbr.rel (%p1764) target = $region44
    $region43: #{vgg_forward.9} parent=5 // pred_region
      %s1767 = ssub.s32 %s10, 2
      // Predicated region
      $region45: #{vgg_forward.9} parent=43 // pred_check
        %p1768 = pneg %p155
      $region46: #{vgg_forward.9} parent=43 // pred_check_branch
        %1770 = sbr.rel (%p1768) target = $region48
      $region47: #{vgg_forward.9} parent=43 // pred_region
        %s1771 = smul.u32 8, %s22
        %p1772 = scmp.lt.s32.totalorder %s21, 1
        %s1773 = scalar_select %p1772, %s21, 1
        %p1774 = scmp.lt.s32.totalorder %s1771, 7
        %s1775 = scalar_select %p1774, %s1771, 7
        %s1776 = smul.addr %s1773, 8
        %s1777 = sadd.s32 %s1775, %s1776
        %s1778 = smul.addr %s1777, 4
        %s1779 = scalar_lea.vmem %s4, %s1778
      $region48: #{vgg_forward.9} parent=43 // pred_fallthru
        _
    $region44: #{vgg_forward.9} parent=5 // pred_fallthru
      _
  $region6: #{vgg_forward.9} parent=0 // loop_footer
    %s14 = sadd.s32 1, %s10
  $region7: #{vgg_forward.9} parent=0 // loop_footer_branch
    %9 = sbr.rel target = $region3
  $region8: #{vgg_forward.9} parent=0 // loop_exit
    _

</llo_original>
